<compile_context>
chip_gen: v7x
topology: tpu7x:2x2x1
jax: 0.10.0
libtpu: 0.0.40
codegen_flags: <defaults>
</compile_context>

<pallas_src>
import functools

import jax
import jax.numpy as jnp
from jax import lax
from jax.experimental import pallas as pl
from jax.experimental.pallas import tpu as pltpu


def _sigmoid(x):
    # exp + approx reciprocal both run on the EUP -> no f32 VPU divide.
    return pl.reciprocal(1.0 + jnp.exp(-x), approx=True)


# ---------------------------------------------------------------------------
# Pass 1: CNL energy (theta @ phi^T) and the reassociated PNL factor
#         S_raw = g2v @ ph2v^T, both as per-(batch, tile) partials.
# ---------------------------------------------------------------------------
def _p1_kernel(r, Cr,
               xh_ref, xl_ref,
               cthw_ref, cthb_ref, cphw_ref, cphb_ref,
               pgw_ref, pgb_ref, ppw_ref, ppb_ref,
               e_ref, s_ref,
               g2v_ref, p2v_ref):
    cthw, cthb = cthw_ref[...], cthb_ref[...]
    cphw, cphb = cphw_ref[...], cphb_ref[...]
    pgw, pgb = pgw_ref[...], pgb_ref[...]
    ppw, ppb = ppw_ref[...], ppb_ref[...]

    e_acc = None
    for q in range(r):
        xh_q = xh_ref[:, :, q, :]                      # (1, Ch, tm) bf16
        xl_q = xl_ref[:, :, q, :]                      # (1, Cl, tm) bf16
        # CNL theta / phi (biases included before the energy contraction).
        th = jnp.einsum('oc,bcm->bom', cthw, xh_q,
                        preferred_element_type=jnp.float32) + cthb
        ph = jnp.einsum('oc,bcm->bom', cphw, xl_q,
                        preferred_element_type=jnp.float32) + cphb
        e_q = jnp.einsum('bcm,bdm->bcd',
                         th.astype(jnp.bfloat16), ph.astype(jnp.bfloat16),
                         preferred_element_type=jnp.float32)
        e_acc = e_q if e_acc is None else e_acc + e_q
        # PNL g / phi, staged in the pseudo-channel view p = q*Cr + c.
        g2 = jnp.einsum('oc,bcm->bom', pgw, xl_q,
                        preferred_element_type=jnp.float32) + pgb
        p2 = jnp.einsum('oc,bcm->bom', ppw, xl_q,
                        preferred_element_type=jnp.float32) + ppb
        g2v_ref[:, q * Cr:(q + 1) * Cr, :] = g2.astype(jnp.bfloat16)
        p2v_ref[:, q * Cr:(q + 1) * Cr, :] = p2.astype(jnp.bfloat16)

    s_part = jnp.einsum('bpm,bqm->bpq', g2v_ref[...], p2v_ref[...],
                        preferred_element_type=jnp.float32)
    e_ref[...] = e_acc[:, None]                        # (1, 1, Cl, Cl)
    s_ref[...] = s_part[:, None]


# ---------------------------------------------------------------------------
# Pass 2: CNL pre-BN output  wy_pre = wa @ (c_g_w @ xl) + foldb1  plus its
#         per-tile BatchNorm partial statistics (sum, sum of squares).
# ---------------------------------------------------------------------------
def _p2_kernel(r,
               xl_ref, cgw_ref, wa_ref, fb1_ref,
               wy_ref, st_ref):
    cgw = cgw_ref[...]                                 # (Cl, Cl) bf16
    wa = wa_ref[...]                                   # (1, Ch, Cl) bf16
    fb1 = fb1_ref[...]                                 # (1, Ch, 1) f32

    s_acc = None
    ss_acc = None
    for q in range(r):
        xl_q = xl_ref[:, :, q, :]
        graw = jnp.einsum('oc,bcm->bom', cgw, xl_q,
                          preferred_element_type=jnp.float32)
        wy = jnp.einsum('bod,bdm->bom', wa, graw.astype(jnp.bfloat16),
                        preferred_element_type=jnp.float32) + fb1
        wy_ref[:, :, q, :] = wy.astype(jnp.bfloat16)
        s_q = jnp.sum(wy, axis=2)                      # (1, Ch)
        ss_q = jnp.sum(wy * wy, axis=2)
        s_acc = s_q if s_acc is None else s_acc + s_q
        ss_acc = ss_q if ss_acc is None else ss_acc + ss_q

    st_ref[:, :, 0:1, :] = s_acc[None, None, :, :]
    st_ref[:, :, 1:2, :] = ss_acc[None, None, :, :]


# ---------------------------------------------------------------------------
# Pass 3: finalize CNL (BN1 affine + gate + residual -> z), then the PNL tile
#         compute  wy2_pre[:, :, q, :] = WS_q @ th2v_raw + foldb2_q  and its
#         BN partial statistics.  th2v_raw (pseudo-channel view of p_th_w @ z)
#         is staged in VMEM scratch.
# ---------------------------------------------------------------------------
def _p3_kernel(r, Cr,
               wypre_ref, xh_ref, a1_ref, b1_ref, pthw_ref, ws_ref, fb2_ref,
               z_ref, wy2_ref, st_ref,
               th2v_ref):
    a1 = a1_ref[...]                                   # (1, Ch, 1) f32
    b1 = b1_ref[...]
    pthw = pthw_ref[...]                               # (Cr, Ch) bf16

    for q in range(r):
        wy = wypre_ref[:, :, q, :].astype(jnp.float32) * a1 + b1
        gate = _sigmoid(wy)
        xh_q = xh_ref[:, :, q, :].astype(jnp.float32)
        z_q = xh_q + gate * (wy - xh_q)                # == gate*wy + (1-gate)*xh
        z_bf = z_q.astype(jnp.bfloat16)
        z_ref[:, :, q, :] = z_bf
        th = jnp.einsum('oc,bcm->bom', pthw, z_bf,
                        preferred_element_type=jnp.float32)
        th2v_ref[:, q * Cr:(q + 1) * Cr, :] = th.astype(jnp.bfloat16)

    th2v = th2v_ref[...]                               # (1, Cl, tm) bf16
    s_acc = None
    ss_acc = None
    for q in range(r):
        ws_q = ws_ref[:, q, :, :]                      # (1, Ch, Cl) bf16
        fb2_q = fb2_ref[:, q, :, :]                    # (1, Ch, 1) f32
        wy2 = jnp.einsum('bop,bpm->bom', ws_q, th2v,
                         preferred_element_type=jnp.float32) + fb2_q
        wy2_ref[:, :, q, :] = wy2.astype(jnp.bfloat16)
        s_q = jnp.sum(wy2, axis=2)
        ss_q = jnp.sum(wy2 * wy2, axis=2)
        s_acc = s_q if s_acc is None else s_acc + s_q
        ss_acc = ss_q if ss_acc is None else ss_acc + ss_q

    st_ref[:, :, 0:1, :] = s_acc[None, None, :, :]
    st_ref[:, :, 1:2, :] = ss_acc[None, None, :, :]


# ---------------------------------------------------------------------------
# Pass 4: finalize PNL (BN2 affine + gate + residual) -> output (elementwise).
# ---------------------------------------------------------------------------
def _p4_kernel(z_ref, wy2_ref, a2_ref, b2_ref, out_ref):
    z = z_ref[...].astype(jnp.float32)
    wy2 = wy2_ref[...].astype(jnp.float32) * a2_ref[...] + b2_ref[...]
    gate2 = _sigmoid(wy2)
    out_ref[...] = z + gate2 * (wy2 - z)               # == gate2*wy2 + (1-gate2)*z


def _pick_tile_m(M, target=512):
    """Largest lane tile that is a multiple of 128, divides M and is <= target
    (falls back to the full axis, which is always a legal block)."""
    if M <= target:
        return M
    t = (target // 128) * 128
    while t >= 128:
        if M % t == 0:
            return t
        t -= 128
    return M


# ---------------------------------------------------------------------------
# Wrapper: NCHW in / NCHW out.
# ---------------------------------------------------------------------------
@functools.partial(jax.jit, static_argnames=('reduc_ratio',))
def ssm_block_forward(x_h, x_l, params, reduc_ratio=2):
    eps = 1e-5
    B, Ch, H, W = x_h.shape
    Cl = x_l.shape[1]
    r = reduc_ratio
    assert Cl % r == 0
    Cr = Cl // r
    N = H * W
    assert N % r == 0
    M = N // r
    tm = _pick_tile_m(M)
    T = M // tm
    grid = (B, T)
    f32, bf16 = jnp.float32, jnp.bfloat16

    cparams = pltpu.CompilerParams(
        dimension_semantics=("parallel", "parallel"),
        vmem_limit_bytes=32 * 1024 * 1024)

    # NCHW -> (B, C, r, M): pure reshape (no transpose / extra HBM pass).
    xh = x_h.reshape(B, Ch, r, M).astype(bf16)
    xl = x_l.reshape(B, Cl, r, M).astype(bf16)

    def wmat(name):
        return params[name].astype(bf16)

    def bvec(name, c):
        return params[name].astype(f32).reshape(1, c, 1)

    # ---- BlockSpec helpers --------------------------------------------------
    def act_spec(C):
        return pl.BlockSpec((1, C, r, tm), lambda b, t: (b, 0, 0, t))

    def const_spec(arr):
        if arr.ndim == 2:
            imap = lambda b, t: (0, 0)
        elif arr.ndim == 3:
            imap = lambda b, t: (0, 0, 0)
        else:
            imap = lambda b, t: (0, 0, 0, 0)
        return pl.BlockSpec(arr.shape, imap)

    def batch_spec(arr):
        if arr.ndim == 3:
            imap = lambda b, t: (b, 0, 0)
        else:
            imap = lambda b, t: (b, 0, 0, 0)
        return pl.BlockSpec((1,) + arr.shape[1:], imap)

    part_cc_spec = pl.BlockSpec((1, 1, Cl, Cl), lambda b, t: (b, t, 0, 0))
    stats_spec = pl.BlockSpec((1, 1, 2, Ch), lambda b, t: (b, t, 0, 0))

    # -------------------- pass 1: CNL energy + PNL S -------------------------
    cthw, cthb = wmat('c_th_w'), bvec('c_th_b', Cl)
    cphw, cphb = wmat('c_ph_w'), bvec('c_ph_b', Cl)
    pgw, pgb = wmat('p_g_w'), bvec('p_g_b', Cr)
    ppw, ppb = wmat('p_ph_w'), bvec('p_ph_b', Cr)

    e_part, s_part = pl.pallas_call(
        functools.partial(_p1_kernel, r, Cr),
        grid=grid,
        in_specs=[act_spec(Ch), act_spec(Cl),
                  const_spec(cthw), const_spec(cthb),
                  const_spec(cphw), const_spec(cphb),
                  const_spec(pgw), const_spec(pgb),
                  const_spec(ppw), const_spec(ppb)],
        out_specs=[part_cc_spec, part_cc_spec],
        out_shape=[jax.ShapeDtypeStruct((B, T, Cl, Cl), f32),
                   jax.ShapeDtypeStruct((B, T, Cl, Cl), f32)],
        scratch_shapes=[pltpu.VMEM((1, Cl, tm), bf16),
                        pltpu.VMEM((1, Cl, tm), bf16)],
        compiler_params=cparams,
    )(xh, xl, cthw, cthb, cphw, cphb, pgw, pgb, ppw, ppb)

    # Tiny cross-tile reductions + folding of the 1/Cl, 1/M scales, both "W"
    # 1x1 convs and the foldable biases into per-batch factors (all O(Ch*Cl)).
    c_w_w = params['c_w_w'].astype(f32)
    c_g_b = params['c_g_b'].astype(f32)
    c_w_b = params['c_w_b'].astype(f32)
    p_w_w = params['p_w_w'].astype(f32)
    p_th_b = params['p_th_b'].astype(f32)
    p_w_b = params['p_w_b'].astype(f32)

    att = jnp.sum(e_part, axis=1) * (1.0 / Cl)                        # (B, Cl, Cl)
    wa = jnp.einsum('oc,bcd->bod', c_w_w, att)                        # (B, Ch, Cl)
    foldb1 = (jnp.einsum('bod,d->bo', wa, c_g_b) + c_w_b)[..., None]  # (B, Ch, 1)
    wa_bf = wa.astype(bf16)

    S = jnp.sum(s_part, axis=1) * (1.0 / M)                           # (B, Cl, Cl)
    WS = jnp.einsum('oc,brcp->brop', p_w_w, S.reshape(B, r, Cr, Cl))  # (B, r, Ch, Cl)
    pthb_v = jnp.tile(p_th_b, r)                                      # (Cl,)
    foldb2 = (jnp.einsum('brop,p->bro', WS, pthb_v)
              + p_w_b[None, None, :])[..., None]                      # (B, r, Ch, 1)
    ws_bf = WS.astype(bf16)

    # ------------------- pass 2: CNL wy_pre + BN1 stats ----------------------
    cgw = wmat('c_g_w')
    wy_pre, st1 = pl.pallas_call(
        functools.partial(_p2_kernel, r),
        grid=grid,
        in_specs=[act_spec(Cl), const_spec(cgw),
                  batch_spec(wa_bf), batch_spec(foldb1)],
        out_specs=[act_spec(Ch), stats_spec],
        out_shape=[jax.ShapeDtypeStruct((B, Ch, r, M), bf16),
                   jax.ShapeDtypeStruct((B, T, 2, Ch), f32)],
        compiler_params=cparams,
    )(xl, cgw, wa_bf, foldb1)

    n_pix = float(B * N)

    def bn_affine(stats, gamma, beta):
        # Training-mode BatchNorm2d (biased variance), folded into a*x + b.
        # TODO(synk): one-pass E[x^2]-mean^2 can cancel catastrophically for
        #             large-mean activations; use Welford if this feeds training.
        s = jnp.sum(stats[:, :, 0, :], axis=(0, 1))
        ss = jnp.sum(stats[:, :, 1, :], axis=(0, 1))
        mean = s / n_pix
        var = ss / n_pix - mean * mean
        a = gamma * lax.rsqrt(var + eps)
        b = beta - mean * a
        return a, b

    a1, b1 = bn_affine(st1, params['c_bn_g'].astype(f32), params['c_bn_b'].astype(f32))
    a1_3 = a1.reshape(1, Ch, 1)
    b1_3 = b1.reshape(1, Ch, 1)

    # ---------------- pass 3: z, PNL wy2_pre + BN2 stats ---------------------
    pthw = wmat('p_th_w')
    z_bf, wy2_pre, st2 = pl.pallas_call(
        functools.partial(_p3_kernel, r, Cr),
        grid=grid,
        in_specs=[act_spec(Ch), act_spec(Ch),
                  const_spec(a1_3), const_spec(b1_3),
                  const_spec(pthw),
                  batch_spec(ws_bf), batch_spec(foldb2)],
        out_specs=[act_spec(Ch), act_spec(Ch), stats_spec],
        out_shape=[jax.ShapeDtypeStruct((B, Ch, r, M), bf16),
                   jax.ShapeDtypeStruct((B, Ch, r, M), bf16),
                   jax.ShapeDtypeStruct((B, T, 2, Ch), f32)],
        scratch_shapes=[pltpu.VMEM((1, Cl, tm), bf16)],
        compiler_params=cparams,
    )(wy_pre, xh, a1_3, b1_3, pthw, ws_bf, foldb2)

    a2, b2 = bn_affine(st2, params['p_bn_g'].astype(f32), params['p_bn_b'].astype(f32))
    a2_4 = a2.reshape(1, Ch, 1, 1)
    b2_4 = b2.reshape(1, Ch, 1, 1)

    # ------------------------ pass 4: final gate -----------------------------
    out = pl.pallas_call(
        _p4_kernel,
        grid=grid,
        in_specs=[act_spec(Ch), act_spec(Ch),
                  const_spec(a2_4), const_spec(b2_4)],
        out_specs=act_spec(Ch),
        out_shape=jax.ShapeDtypeStruct((B, Ch, r, M), f32),
        compiler_params=cparams,
    )(z_bf, wy2_pre, a2_4, b2_4)

    return out.reshape(B, Ch, H, W)


# ---------------------------------------------------------------------------
# Pure-JAX NCHW reference (mirrors the PyTorch module op-by-op, f32 throughout)
# ---------------------------------------------------------------------------
def ref_forward(x_h, x_l, p, reduc_ratio=2):
    B, Ch, H, W = x_h.shape
    Cl = x_l.shape[1]

    def conv1x1(x, w, b):
        return jnp.einsum('bchw,oc->bohw', x, w) + b[None, :, None, None]

    def bn(x, g, bt, eps=1e-5):
        mean = jnp.mean(x, axis=(0, 2, 3), keepdims=True)
        var = jnp.mean(jnp.square(x - mean), axis=(0, 2, 3), keepdims=True)
        return (x - mean) / jnp.sqrt(var + eps) * g[None, :, None, None] + bt[None, :, None, None]

    sig = lambda v: 1.0 / (1.0 + jnp.exp(-v))

    # CNL
    g_x = conv1x1(x_l, p['c_g_w'], p['c_g_b']).reshape(B, Cl, -1)
    theta = conv1x1(x_h, p['c_th_w'], p['c_th_b']).reshape(B, Cl, -1)
    phi = conv1x1(x_l, p['c_ph_w'], p['c_ph_b']).reshape(B, Cl, -1).transpose(0, 2, 1)
    energy = jnp.matmul(theta, phi)
    att = energy / energy.shape[-1]
    y = jnp.matmul(att, g_x).reshape(B, Cl, H, W)
    wy = bn(conv1x1(y, p['c_w_w'], p['c_w_b']), p['c_bn_g'], p['c_bn_b'])
    gate = sig(wy)
    z = gate * wy + (1.0 - gate) * x_h

    # PNL
    Cr = Cl // reduc_ratio
    g2 = conv1x1(x_l, p['p_g_w'], p['p_g_b']).reshape(B, Cl, -1).transpose(0, 2, 1)
    th2 = conv1x1(z, p['p_th_w'], p['p_th_b']).reshape(B, Cl, -1).transpose(0, 2, 1)
    ph2 = conv1x1(x_l, p['p_ph_w'], p['p_ph_b']).reshape(B, Cl, -1)
    e2 = jnp.matmul(th2, ph2)
    a2 = e2 / e2.shape[-1]
    y2 = jnp.matmul(a2, g2)
    y2 = y2.transpose(0, 2, 1).reshape(B, Cr, H, W)
    wy2 = bn(conv1x1(y2, p['p_w_w'], p['p_w_b']), p['p_bn_g'], p['p_bn_b'])
    gate2 = sig(wy2)
    return gate2 * wy2 + (1.0 - gate2) * z


# ---------------------------------------------------------------------------
# Deterministic parameter init (shapes from the module's __init__)
# ---------------------------------------------------------------------------
def init_params(key, high_dim, low_dim, reduc_ratio=2):
    cr = low_dim // reduc_ratio
    keys = jax.random.split(key, 12)

    def conv(k, cout, cin):
        k1, k2 = jax.random.split(k)
        bound = 1.0 / jnp.sqrt(float(cin))
        w = jax.random.uniform(k1, (cout, cin), jnp.float32, -bound, bound)
        b = jax.random.uniform(k2, (cout,), jnp.float32, -bound, bound)
        return w, b

    p = {}
    p['c_g_w'],  p['c_g_b']  = conv(keys[0], low_dim, low_dim)
    p['c_th_w'], p['c_th_b'] = conv(keys[1], low_dim, high_dim)
    p['c_ph_w'], p['c_ph_b'] = conv(keys[2], low_dim, low_dim)
    p['c_w_w'],  p['c_w_b']  = conv(keys[3], high_dim, low_dim)
    p['c_bn_g'] = 1.0 + 0.1 * jax.random.normal(keys[4], (high_dim,), jnp.float32)
    p['c_bn_b'] = 0.1 * jax.random.normal(keys[5], (high_dim,), jnp.float32)
    p['p_g_w'],  p['p_g_b']  = conv(keys[6], cr, low_dim)
    p['p_th_w'], p['p_th_b'] = conv(keys[7], cr, high_dim)
    p['p_ph_w'], p['p_ph_b'] = conv(keys[8], cr, low_dim)
    p['p_w_w'],  p['p_w_b']  = conv(keys[9], high_dim, cr)
    p['p_bn_g'] = 1.0 + 0.1 * jax.random.normal(keys[10], (high_dim,), jnp.float32)
    p['p_bn_b'] = 0.1 * jax.random.normal(keys[11], (high_dim,), jnp.float32)
    return p


if __name__ == "__main__":
    key = jax.random.PRNGKey(0)
    B, high_dim, low_dim, H, W = 2, 8, 4, 16, 16
    k1, k2, k3 = jax.random.split(key, 3)
    x_h = jax.random.normal(k1, (B, high_dim, H, W), jnp.float32)   # "x"
    x_l = jax.random.normal(k2, (B, low_dim, H, W), jnp.float32)    # "x0"
    params = init_params(k3, high_dim, low_dim)

    out = jax.block_until_ready(ssm_block_forward(x_h, x_l, params))
    ref = ref_forward(x_h, x_l, params)

    assert out.shape == (B, high_dim, H, W)
    max_err = float(jnp.max(jnp.abs(out - ref)))
    rel_err = float(jnp.linalg.norm(out - ref) / (jnp.linalg.norm(ref) + 1e-12))
    # bf16 inputs / MXU operands / HBM intermediates (f32 accumulation & stats)
    # -> allow bf16-level rounding; the relative check still catches O(1)
    # layout/semantics bugs.
    assert max_err < 2.5e-1 and rel_err < 6e-2, f"mismatch: max {max_err}, rel {rel_err}"
    print("KERNEL_OK")
</pallas_src>

<mosaic_0001>
module attributes {stable_mosaic.version = 11 : i64} {
  func.func @_p1_kernel(%arg0: i32, %arg1: i32, %arg2: memref<1x8x2x128xbf16, #tpu.memory_space<vmem>>, %arg3: memref<1x4x2x128xbf16, #tpu.memory_space<vmem>>, %arg4: memref<4x8xbf16, #tpu.memory_space<vmem>>, %arg5: memref<1x4x1xf32, #tpu.memory_space<vmem>>, %arg6: memref<4x4xbf16, #tpu.memory_space<vmem>>, %arg7: memref<1x4x1xf32, #tpu.memory_space<vmem>>, %arg8: memref<2x4xbf16, #tpu.memory_space<vmem>>, %arg9: memref<1x2x1xf32, #tpu.memory_space<vmem>>, %arg10: memref<2x4xbf16, #tpu.memory_space<vmem>>, %arg11: memref<1x2x1xf32, #tpu.memory_space<vmem>>, %arg12: memref<1x1x4x4xf32, #tpu.memory_space<vmem>>, %arg13: memref<1x1x4x4xf32, #tpu.memory_space<vmem>>, %arg14: memref<1x4x128xbf16, #tpu.memory_space<vmem>>, %arg15: memref<1x4x128xbf16, #tpu.memory_space<vmem>>) attributes {dimension_semantics = [#tpu.dimension_semantics<parallel>, #tpu.dimension_semantics<parallel>], iteration_bounds = array<i64: 2, 1>, scalar_prefetch = 0 : i64, scratch_operands = 2 : i64, tpu.core_type = #tpu.core_type<tc>, window_params = [{transform_indices = @transform_0, window_bounds = array<i64: 1, 8, 2, 128>}, {transform_indices = @transform_1, window_bounds = array<i64: 1, 4, 2, 128>}, {pipeline_mode = #tpu.pipeline_mode<synchronous>, transform_indices = @transform_2, window_bounds = array<i64: 4, 8>}, {pipeline_mode = #tpu.pipeline_mode<synchronous>, transform_indices = @transform_3, window_bounds = array<i64: 1, 4, 1>}, {pipeline_mode = #tpu.pipeline_mode<synchronous>, transform_indices = @transform_4, window_bounds = array<i64: 4, 4>}, {pipeline_mode = #tpu.pipeline_mode<synchronous>, transform_indices = @transform_5, window_bounds = array<i64: 1, 4, 1>}, {pipeline_mode = #tpu.pipeline_mode<synchronous>, transform_indices = @transform_6, window_bounds = array<i64: 2, 4>}, {pipeline_mode = #tpu.pipeline_mode<synchronous>, transform_indices = @transform_7, window_bounds = array<i64: 1, 2, 1>}, {pipeline_mode = #tpu.pipeline_mode<synchronous>, transform_indices = @transform_8, window_bounds = array<i64: 2, 4>}, {pipeline_mode = #tpu.pipeline_mode<synchronous>, transform_indices = @transform_9, window_bounds = array<i64: 1, 2, 1>}, {transform_indices = @transform_10, window_bounds = array<i64: 1, 1, 4, 4>}, {transform_indices = @transform_11, window_bounds = array<i64: 1, 1, 4, 4>}]} {
    %c0 = arith.constant 0 : index
    %c0_0 = arith.constant 0 : index
    %0 = vector.load %arg4[%c0, %c0_0] : memref<4x8xbf16, #tpu.memory_space<vmem>>, vector<4x8xbf16>
    %c0_1 = arith.constant 0 : index
    %c0_2 = arith.constant 0 : index
    %c0_3 = arith.constant 0 : index
    %1 = vector.load %arg5[%c0_1, %c0_2, %c0_3] : memref<1x4x1xf32, #tpu.memory_space<vmem>>, vector<1x4x1xf32>
    %c0_4 = arith.constant 0 : index
    %c0_5 = arith.constant 0 : index
    %2 = vector.load %arg6[%c0_4, %c0_5] : memref<4x4xbf16, #tpu.memory_space<vmem>>, vector<4x4xbf16>
    %c0_6 = arith.constant 0 : index
    %c0_7 = arith.constant 0 : index
    %c0_8 = arith.constant 0 : index
    %3 = vector.load %arg7[%c0_6, %c0_7, %c0_8] : memref<1x4x1xf32, #tpu.memory_space<vmem>>, vector<1x4x1xf32>
    %c0_9 = arith.constant 0 : index
    %c0_10 = arith.constant 0 : index
    %4 = vector.load %arg8[%c0_9, %c0_10] : memref<2x4xbf16, #tpu.memory_space<vmem>>, vector<2x4xbf16>
    %c0_11 = arith.constant 0 : index
    %c0_12 = arith.constant 0 : index
    %c0_13 = arith.constant 0 : index
    %5 = vector.load %arg9[%c0_11, %c0_12, %c0_13] : memref<1x2x1xf32, #tpu.memory_space<vmem>>, vector<1x2x1xf32>
    %c0_14 = arith.constant 0 : index
    %c0_15 = arith.constant 0 : index
    %6 = vector.load %arg10[%c0_14, %c0_15] : memref<2x4xbf16, #tpu.memory_space<vmem>>, vector<2x4xbf16>
    %c0_16 = arith.constant 0 : index
    %c0_17 = arith.constant 0 : index
    %c0_18 = arith.constant 0 : index
    %7 = vector.load %arg11[%c0_16, %c0_17, %c0_18] : memref<1x2x1xf32, #tpu.memory_space<vmem>>, vector<1x2x1xf32>
    %c0_19 = arith.constant 0 : index
    %c0_20 = arith.constant 0 : index
    %c0_21 = arith.constant 0 : index
    %c0_22 = arith.constant 0 : index
    %8 = vector.load %arg2[%c0_19, %c0_20, %c0_21, %c0_22] : memref<1x8x2x128xbf16, #tpu.memory_space<vmem>>, vector<1x8x1x128xbf16>
    %9 = vector.shape_cast %8 : vector<1x8x1x128xbf16> to vector<1x8x128xbf16>
    %c0_23 = arith.constant 0 : index
    %c0_24 = arith.constant 0 : index
    %c0_25 = arith.constant 0 : index
    %c0_26 = arith.constant 0 : index
    %10 = vector.load %arg3[%c0_23, %c0_24, %c0_25, %c0_26] : memref<1x4x2x128xbf16, #tpu.memory_space<vmem>>, vector<1x4x1x128xbf16>
    %11 = vector.shape_cast %10 : vector<1x4x1x128xbf16> to vector<1x4x128xbf16>
    "tpu.trace_start"() <{level = 10 : i32, message = "oc,bcm->bom"}> : () -> ()
    %cst = arith.constant dense<0.000000e+00> : vector<1x128x4xf32>
    %12 = tpu.matmul %9, %0, %cst {dimension_numbers = #tpu.dot_dimension_numbers<[1], [1], [0, 2], [0], [0, 0, 0, 2, 1, 0], [], []>} : vector<1x8x128xbf16>, vector<4x8xbf16>, vector<1x128x4xf32> -> vector<1x128x4xf32>
    %13 = tpu.transpose %12, [0, 2, 1] : vector<1x128x4xf32> -> vector<1x4x128xf32>
    "tpu.trace_stop"() : () -> ()
    %14 = vector.broadcast %1 : vector<1x4x1xf32> to vector<1x4x128xf32>
    %15 = arith.addf %13, %14 : vector<1x4x128xf32>
    "tpu.trace_start"() <{level = 10 : i32, message = "oc,bcm->bom"}> : () -> ()
    %cst_27 = arith.constant dense<0.000000e+00> : vector<1x128x4xf32>
    %16 = tpu.matmul %11, %2, %cst_27 {dimension_numbers = #tpu.dot_dimension_numbers<[1], [1], [0, 2], [0], [0, 0, 0, 2, 1, 0], [], []>} : vector<1x4x128xbf16>, vector<4x4xbf16>, vector<1x128x4xf32> -> vector<1x128x4xf32>
    %17 = tpu.transpose %16, [0, 2, 1] : vector<1x128x4xf32> -> vector<1x4x128xf32>
    "tpu.trace_stop"() : () -> ()
    %18 = vector.broadcast %3 : vector<1x4x1xf32> to vector<1x4x128xf32>
    %19 = arith.addf %17, %18 : vector<1x4x128xf32>
    %20 = arith.truncf %15 : vector<1x4x128xf32> to vector<1x4x128xbf16>
    %21 = arith.truncf %19 : vector<1x4x128xf32> to vector<1x4x128xbf16>
    "tpu.trace_start"() <{level = 10 : i32, message = "bcm,bdm->bcd"}> : () -> ()
    %cst_28 = arith.constant dense<0.000000e+00> : vector<1x4x4xf32>
    %22 = tpu.matmul %20, %21, %cst_28 {dimension_numbers = #tpu.dot_dimension_numbers<[2], [2], [1], [1], [0, 0, 0, 1, 1, 1], [0], [0]>} : vector<1x4x128xbf16>, vector<1x4x128xbf16>, vector<1x4x4xf32> -> vector<1x4x4xf32>
    "tpu.trace_stop"() : () -> ()
    "tpu.trace_start"() <{level = 10 : i32, message = "oc,bcm->bom"}> : () -> ()
    %cst_29 = arith.constant dense<0.000000e+00> : vector<1x128x2xf32>
    %23 = tpu.matmul %11, %4, %cst_29 {dimension_numbers = #tpu.dot_dimension_numbers<[1], [1], [0, 2], [0], [0, 0, 0, 2, 1, 0], [], []>} : vector<1x4x128xbf16>, vector<2x4xbf16>, vector<1x128x2xf32> -> vector<1x128x2xf32>
    %24 = tpu.transpose %23, [0, 2, 1] : vector<1x128x2xf32> -> vector<1x2x128xf32>
    "tpu.trace_stop"() : () -> ()
    %25 = vector.broadcast %5 : vector<1x2x1xf32> to vector<1x2x128xf32>
    %26 = arith.addf %24, %25 : vector<1x2x128xf32>
    "tpu.trace_start"() <{level = 10 : i32, message = "oc,bcm->bom"}> : () -> ()
    %cst_30 = arith.constant dense<0.000000e+00> : vector<1x128x2xf32>
    %27 = tpu.matmul %11, %6, %cst_30 {dimension_numbers = #tpu.dot_dimension_numbers<[1], [1], [0, 2], [0], [0, 0, 0, 2, 1, 0], [], []>} : vector<1x4x128xbf16>, vector<2x4xbf16>, vector<1x128x2xf32> -> vector<1x128x2xf32>
    %28 = tpu.transpose %27, [0, 2, 1] : vector<1x128x2xf32> -> vector<1x2x128xf32>
    "tpu.trace_stop"() : () -> ()
    %29 = vector.broadcast %7 : vector<1x2x1xf32> to vector<1x2x128xf32>
    %30 = arith.addf %28, %29 : vector<1x2x128xf32>
    %31 = arith.truncf %26 : vector<1x2x128xf32> to vector<1x2x128xbf16>
    %c0_31 = arith.constant 0 : index
    %c0_32 = arith.constant 0 : index
    %c0_33 = arith.constant 0 : index
    %32 = vector.load %arg14[%c0_31, %c0_32, %c0_33] : memref<1x4x128xbf16, #tpu.memory_space<vmem>>, vector<1x2x128xbf16>
    tpu.vector_store %arg14[%c0_31, %c0_32, %c0_33], %31 {strides = array<i32>} : memref<1x4x128xbf16, #tpu.memory_space<vmem>>, vector<1x2x128xbf16>,
    %33 = arith.truncf %30 : vector<1x2x128xf32> to vector<1x2x128xbf16>
    %c0_34 = arith.constant 0 : index
    %c0_35 = arith.constant 0 : index
    %c0_36 = arith.constant 0 : index
    %34 = vector.load %arg15[%c0_34, %c0_35, %c0_36] : memref<1x4x128xbf16, #tpu.memory_space<vmem>>, vector<1x2x128xbf16>
    tpu.vector_store %arg15[%c0_34, %c0_35, %c0_36], %33 {strides = array<i32>} : memref<1x4x128xbf16, #tpu.memory_space<vmem>>, vector<1x2x128xbf16>,
    %c0_37 = arith.constant 0 : index
    %c0_38 = arith.constant 0 : index
    %c1 = arith.constant 1 : index
    %c0_39 = arith.constant 0 : index
    %35 = vector.load %arg2[%c0_37, %c0_38, %c1, %c0_39] : memref<1x8x2x128xbf16, #tpu.memory_space<vmem>>, vector<1x8x1x128xbf16>
    %36 = vector.shape_cast %35 : vector<1x8x1x128xbf16> to vector<1x8x128xbf16>
    %c0_40 = arith.constant 0 : index
    %c0_41 = arith.constant 0 : index
    %c1_42 = arith.constant 1 : index
    %c0_43 = arith.constant 0 : index
    %37 = vector.load %arg3[%c0_40, %c0_41, %c1_42, %c0_43] : memref<1x4x2x128xbf16, #tpu.memory_space<vmem>>, vector<1x4x1x128xbf16>
    %38 = vector.shape_cast %37 : vector<1x4x1x128xbf16> to vector<1x4x128xbf16>
    "tpu.trace_start"() <{level = 10 : i32, message = "oc,bcm->bom"}> : () -> ()
    %cst_44 = arith.constant dense<0.000000e+00> : vector<1x128x4xf32>
    %39 = tpu.matmul %36, %0, %cst_44 {dimension_numbers = #tpu.dot_dimension_numbers<[1], [1], [0, 2], [0], [0, 0, 0, 2, 1, 0], [], []>} : vector<1x8x128xbf16>, vector<4x8xbf16>, vector<1x128x4xf32> -> vector<1x128x4xf32>
    %40 = tpu.transpose %39, [0, 2, 1] : vector<1x128x4xf32> -> vector<1x4x128xf32>
    "tpu.trace_stop"() : () -> ()
    %41 = vector.broadcast %1 : vector<1x4x1xf32> to vector<1x4x128xf32>
    %42 = arith.addf %40, %41 : vector<1x4x128xf32>
    "tpu.trace_start"() <{level = 10 : i32, message = "oc,bcm->bom"}> : () -> ()
    %cst_45 = arith.constant dense<0.000000e+00> : vector<1x128x4xf32>
    %43 = tpu.matmul %38, %2, %cst_45 {dimension_numbers = #tpu.dot_dimension_numbers<[1], [1], [0, 2], [0], [0, 0, 0, 2, 1, 0], [], []>} : vector<1x4x128xbf16>, vector<4x4xbf16>, vector<1x128x4xf32> -> vector<1x128x4xf32>
    %44 = tpu.transpose %43, [0, 2, 1] : vector<1x128x4xf32> -> vector<1x4x128xf32>
    "tpu.trace_stop"() : () -> ()
    %45 = vector.broadcast %3 : vector<1x4x1xf32> to vector<1x4x128xf32>
    %46 = arith.addf %44, %45 : vector<1x4x128xf32>
    %47 = arith.truncf %42 : vector<1x4x128xf32> to vector<1x4x128xbf16>
    %48 = arith.truncf %46 : vector<1x4x128xf32> to vector<1x4x128xbf16>
    "tpu.trace_start"() <{level = 10 : i32, message = "bcm,bdm->bcd"}> : () -> ()
    %cst_46 = arith.constant dense<0.000000e+00> : vector<1x4x4xf32>
    %49 = tpu.matmul %47, %48, %cst_46 {dimension_numbers = #tpu.dot_dimension_numbers<[2], [2], [1], [1], [0, 0, 0, 1, 1, 1], [0], [0]>} : vector<1x4x128xbf16>, vector<1x4x128xbf16>, vector<1x4x4xf32> -> vector<1x4x4xf32>
    "tpu.trace_stop"() : () -> ()
    %50 = arith.addf %22, %49 : vector<1x4x4xf32>
    "tpu.trace_start"() <{level = 10 : i32, message = "oc,bcm->bom"}> : () -> ()
    %cst_47 = arith.constant dense<0.000000e+00> : vector<1x128x2xf32>
    %51 = tpu.matmul %38, %4, %cst_47 {dimension_numbers = #tpu.dot_dimension_numbers<[1], [1], [0, 2], [0], [0, 0, 0, 2, 1, 0], [], []>} : vector<1x4x128xbf16>, vector<2x4xbf16>, vector<1x128x2xf32> -> vector<1x128x2xf32>
    %52 = tpu.transpose %51, [0, 2, 1] : vector<1x128x2xf32> -> vector<1x2x128xf32>
    "tpu.trace_stop"() : () -> ()
    %53 = vector.broadcast %5 : vector<1x2x1xf32> to vector<1x2x128xf32>
    %54 = arith.addf %52, %53 : vector<1x2x128xf32>
    "tpu.trace_start"() <{level = 10 : i32, message = "oc,bcm->bom"}> : () -> ()
    %cst_48 = arith.constant dense<0.000000e+00> : vector<1x128x2xf32>
    %55 = tpu.matmul %38, %6, %cst_48 {dimension_numbers = #tpu.dot_dimension_numbers<[1], [1], [0, 2], [0], [0, 0, 0, 2, 1, 0], [], []>} : vector<1x4x128xbf16>, vector<2x4xbf16>, vector<1x128x2xf32> -> vector<1x128x2xf32>
    %56 = tpu.transpose %55, [0, 2, 1] : vector<1x128x2xf32> -> vector<1x2x128xf32>
    "tpu.trace_stop"() : () -> ()
    %57 = vector.broadcast %7 : vector<1x2x1xf32> to vector<1x2x128xf32>
    %58 = arith.addf %56, %57 : vector<1x2x128xf32>
    %59 = arith.truncf %54 : vector<1x2x128xf32> to vector<1x2x128xbf16>
    %c0_49 = arith.constant 0 : index
    %c2 = arith.constant 2 : index
    %c0_50 = arith.constant 0 : index
    %60 = vector.load %arg14[%c0_49, %c2, %c0_50] : memref<1x4x128xbf16, #tpu.memory_space<vmem>>, vector<1x2x128xbf16>
    tpu.vector_store %arg14[%c0_49, %c2, %c0_50], %59 {strides = array<i32>} : memref<1x4x128xbf16, #tpu.memory_space<vmem>>, vector<1x2x128xbf16>,
    %61 = arith.truncf %58 : vector<1x2x128xf32> to vector<1x2x128xbf16>
    %c0_51 = arith.constant 0 : index
    %c2_52 = arith.constant 2 : index
    %c0_53 = arith.constant 0 : index
    %62 = vector.load %arg15[%c0_51, %c2_52, %c0_53] : memref<1x4x128xbf16, #tpu.memory_space<vmem>>, vector<1x2x128xbf16>
    tpu.vector_store %arg15[%c0_51, %c2_52, %c0_53], %61 {strides = array<i32>} : memref<1x4x128xbf16, #tpu.memory_space<vmem>>, vector<1x2x128xbf16>,
    %c0_54 = arith.constant 0 : index
    %c0_55 = arith.constant 0 : index
    %c0_56 = arith.constant 0 : index
    %63 = vector.load %arg14[%c0_54, %c0_55, %c0_56] : memref<1x4x128xbf16, #tpu.memory_space<vmem>>, vector<1x4x128xbf16>
    %c0_57 = arith.constant 0 : index
    %c0_58 = arith.constant 0 : index
    %c0_59 = arith.constant 0 : index
    %64 = vector.load %arg15[%c0_57, %c0_58, %c0_59] : memref<1x4x128xbf16, #tpu.memory_space<vmem>>, vector<1x4x128xbf16>
    "tpu.trace_start"() <{level = 10 : i32, message = "bpm,bqm->bpq"}> : () -> ()
    %cst_60 = arith.constant dense<0.000000e+00> : vector<1x4x4xf32>
    %65 = tpu.matmul %63, %64, %cst_60 {dimension_numbers = #tpu.dot_dimension_numbers<[2], [2], [1], [1], [0, 0, 0, 1, 1, 1], [0], [0]>} : vector<1x4x128xbf16>, vector<1x4x128xbf16>, vector<1x4x4xf32> -> vector<1x4x4xf32>
    "tpu.trace_stop"() : () -> ()
    %66 = vector.shape_cast %50 : vector<1x4x4xf32> to vector<1x1x4x4xf32>
    %c0_61 = arith.constant 0 : index
    %c0_62 = arith.constant 0 : index
    %c0_63 = arith.constant 0 : index
    %c0_64 = arith.constant 0 : index
    %67 = vector.load %arg12[%c0_61, %c0_62, %c0_63, %c0_64] : memref<1x1x4x4xf32, #tpu.memory_space<vmem>>, vector<1x1x4x4xf32>
    tpu.vector_store %arg12[%c0_61, %c0_62, %c0_63, %c0_64], %66 {strides = array<i32>} : memref<1x1x4x4xf32, #tpu.memory_space<vmem>>, vector<1x1x4x4xf32>,
    %68 = vector.shape_cast %65 : vector<1x4x4xf32> to vector<1x1x4x4xf32>
    %c0_65 = arith.constant 0 : index
    %c0_66 = arith.constant 0 : index
    %c0_67 = arith.constant 0 : index
    %c0_68 = arith.constant 0 : index
    %69 = vector.load %arg13[%c0_65, %c0_66, %c0_67, %c0_68] : memref<1x1x4x4xf32, #tpu.memory_space<vmem>>, vector<1x1x4x4xf32>
    tpu.vector_store %arg13[%c0_65, %c0_66, %c0_67, %c0_68], %68 {strides = array<i32>} : memref<1x1x4x4xf32, #tpu.memory_space<vmem>>, vector<1x1x4x4xf32>,
    return
  }
  func.func @transform_0(%arg0: i32, %arg1: i32) -> (i32, i32, i32, i32) {
    %c0_i32 = arith.constant 0 : i32
    %c0_i32_0 = arith.constant 0 : i32
    %c0_i32_1 = arith.constant 0 : i32
    return %arg0, %c0_i32, %c0_i32_0, %arg1 : i32, i32, i32, i32
  }
  func.func @transform_1(%arg0: i32, %arg1: i32) -> (i32, i32, i32, i32) {
    %c0_i32 = arith.constant 0 : i32
    %c0_i32_0 = arith.constant 0 : i32
    %c0_i32_1 = arith.constant 0 : i32
    return %arg0, %c0_i32, %c0_i32_0, %arg1 : i32, i32, i32, i32
  }
  func.func @transform_2(%arg0: i32, %arg1: i32) -> (i32, i32) {
    %c0_i32 = arith.constant 0 : i32
    %c0_i32_0 = arith.constant 0 : i32
    %c0_i32_1 = arith.constant 0 : i32
    return %c0_i32, %c0_i32_0 : i32, i32
  }
  func.func @transform_3(%arg0: i32, %arg1: i32) -> (i32, i32, i32) {
    %c0_i32 = arith.constant 0 : i32
    %c0_i32_0 = arith.constant 0 : i32
    %c0_i32_1 = arith.constant 0 : i32
    %c0_i32_2 = arith.constant 0 : i32
    return %c0_i32, %c0_i32_0, %c0_i32_1 : i32, i32, i32
  }
  func.func @transform_4(%arg0: i32, %arg1: i32) -> (i32, i32) {
    %c0_i32 = arith.constant 0 : i32
    %c0_i32_0 = arith.constant 0 : i32
    %c0_i32_1 = arith.constant 0 : i32
    return %c0_i32, %c0_i32_0 : i32, i32
  }
  func.func @transform_5(%arg0: i32, %arg1: i32) -> (i32, i32, i32) {
    %c0_i32 = arith.constant 0 : i32
    %c0_i32_0 = arith.constant 0 : i32
    %c0_i32_1 = arith.constant 0 : i32
    %c0_i32_2 = arith.constant 0 : i32
    return %c0_i32, %c0_i32_0, %c0_i32_1 : i32, i32, i32
  }
  func.func @transform_6(%arg0: i32, %arg1: i32) -> (i32, i32) {
    %c0_i32 = arith.constant 0 : i32
    %c0_i32_0 = arith.constant 0 : i32
    %c0_i32_1 = arith.constant 0 : i32
    return %c0_i32, %c0_i32_0 : i32, i32
  }
  func.func @transform_7(%arg0: i32, %arg1: i32) -> (i32, i32, i32) {
    %c0_i32 = arith.constant 0 : i32
    %c0_i32_0 = arith.constant 0 : i32
    %c0_i32_1 = arith.constant 0 : i32
    %c0_i32_2 = arith.constant 0 : i32
    return %c0_i32, %c0_i32_0, %c0_i32_1 : i32, i32, i32
  }
  func.func @transform_8(%arg0: i32, %arg1: i32) -> (i32, i32) {
    %c0_i32 = arith.constant 0 : i32
    %c0_i32_0 = arith.constant 0 : i32
    %c0_i32_1 = arith.constant 0 : i32
    return %c0_i32, %c0_i32_0 : i32, i32
  }
  func.func @transform_9(%arg0: i32, %arg1: i32) -> (i32, i32, i32) {
    %c0_i32 = arith.constant 0 : i32
    %c0_i32_0 = arith.constant 0 : i32
    %c0_i32_1 = arith.constant 0 : i32
    %c0_i32_2 = arith.constant 0 : i32
    return %c0_i32, %c0_i32_0, %c0_i32_1 : i32, i32, i32
  }
  func.func @transform_10(%arg0: i32, %arg1: i32) -> (i32, i32, i32, i32) {
    %c0_i32 = arith.constant 0 : i32
    %c0_i32_0 = arith.constant 0 : i32
    %c0_i32_1 = arith.constant 0 : i32
    return %arg0, %arg1, %c0_i32, %c0_i32_0 : i32, i32, i32, i32
  }
  func.func @transform_11(%arg0: i32, %arg1: i32) -> (i32, i32, i32, i32) {
    %c0_i32 = arith.constant 0 : i32
    %c0_i32_0 = arith.constant 0 : i32
    %c0_i32_1 = arith.constant 0 : i32
    return %arg0, %arg1, %c0_i32, %c0_i32_0 : i32, i32, i32, i32
  }
}

module attributes {stable_mosaic.version = 11 : i64} {
  func.func @_p2_kernel(%arg0: i32, %arg1: i32, %arg2: memref<1x4x2x128xbf16, #tpu.memory_space<vmem>>, %arg3: memref<4x4xbf16, #tpu.memory_space<vmem>>, %arg4: memref<1x8x4xbf16, #tpu.memory_space<vmem>>, %arg5: memref<1x8x1xf32, #tpu.memory_space<vmem>>, %arg6: memref<1x8x2x128xbf16, #tpu.memory_space<vmem>>, %arg7: memref<1x1x2x8xf32, #tpu.memory_space<vmem>>) attributes {dimension_semantics = [#tpu.dimension_semantics<parallel>, #tpu.dimension_semantics<parallel>], iteration_bounds = array<i64: 2, 1>, scalar_prefetch = 0 : i64, scratch_operands = 0 : i64, tpu.core_type = #tpu.core_type<tc>, window_params = [{transform_indices = @transform_0, window_bounds = array<i64: 1, 4, 2, 128>}, {pipeline_mode = #tpu.pipeline_mode<synchronous>, transform_indices = @transform_1, window_bounds = array<i64: 4, 4>}, {transform_indices = @transform_2, window_bounds = array<i64: 1, 8, 4>}, {transform_indices = @transform_3, window_bounds = array<i64: 1, 8, 1>}, {transform_indices = @transform_4, window_bounds = array<i64: 1, 8, 2, 128>}, {transform_indices = @transform_5, window_bounds = array<i64: 1, 1, 2, 8>}]} {
    %c0 = arith.constant 0 : index
    %c0_0 = arith.constant 0 : index
    %0 = vector.load %arg3[%c0, %c0_0] : memref<4x4xbf16, #tpu.memory_space<vmem>>, vector<4x4xbf16>
    %c0_1 = arith.constant 0 : index
    %c0_2 = arith.constant 0 : index
    %c0_3 = arith.constant 0 : index
    %1 = vector.load %arg4[%c0_1, %c0_2, %c0_3] : memref<1x8x4xbf16, #tpu.memory_space<vmem>>, vector<1x8x4xbf16>
    %c0_4 = arith.constant 0 : index
    %c0_5 = arith.constant 0 : index
    %c0_6 = arith.constant 0 : index
    %2 = vector.load %arg5[%c0_4, %c0_5, %c0_6] : memref<1x8x1xf32, #tpu.memory_space<vmem>>, vector<1x8x1xf32>
    %c0_7 = arith.constant 0 : index
    %c0_8 = arith.constant 0 : index
    %c0_9 = arith.constant 0 : index
    %c0_10 = arith.constant 0 : index
    %3 = vector.load %arg2[%c0_7, %c0_8, %c0_9, %c0_10] : memref<1x4x2x128xbf16, #tpu.memory_space<vmem>>, vector<1x4x1x128xbf16>
    %4 = vector.shape_cast %3 : vector<1x4x1x128xbf16> to vector<1x4x128xbf16>
    "tpu.trace_start"() <{level = 10 : i32, message = "oc,bcm->bom"}> : () -> ()
    %cst = arith.constant dense<0.000000e+00> : vector<1x128x4xf32>
    %5 = tpu.matmul %4, %0, %cst {dimension_numbers = #tpu.dot_dimension_numbers<[1], [1], [0, 2], [0], [0, 0, 0, 2, 1, 0], [], []>} : vector<1x4x128xbf16>, vector<4x4xbf16>, vector<1x128x4xf32> -> vector<1x128x4xf32>
    %6 = tpu.transpose %5, [0, 2, 1] : vector<1x128x4xf32> -> vector<1x4x128xf32>
    "tpu.trace_stop"() : () -> ()
    %7 = arith.truncf %6 : vector<1x4x128xf32> to vector<1x4x128xbf16>
    "tpu.trace_start"() <{level = 10 : i32, message = "bod,bdm->bom"}> : () -> ()
    %cst_11 = arith.constant dense<0.000000e+00> : vector<1x8x128xf32>
    %8 = tpu.matmul %1, %7, %cst_11 {dimension_numbers = #tpu.dot_dimension_numbers<[2], [1], [1], [2], [0, 0, 0, 1, 1, 2], [0], [0]>} : vector<1x8x4xbf16>, vector<1x4x128xbf16>, vector<1x8x128xf32> -> vector<1x8x128xf32>
    "tpu.trace_stop"() : () -> ()
    %9 = vector.broadcast %2 : vector<1x8x1xf32> to vector<1x8x128xf32>
    %10 = arith.addf %8, %9 : vector<1x8x128xf32>
    %11 = arith.truncf %10 : vector<1x8x128xf32> to vector<1x8x128xbf16>
    %c0_12 = arith.constant 0 : index
    %c0_13 = arith.constant 0 : index
    %c0_14 = arith.constant 0 : index
    %c0_15 = arith.constant 0 : index
    %12 = vector.load %arg6[%c0_12, %c0_13, %c0_14, %c0_15] : memref<1x8x2x128xbf16, #tpu.memory_space<vmem>>, vector<1x8x1x128xbf16>
    %13 = vector.shape_cast %12 : vector<1x8x1x128xbf16> to vector<1x8x128xbf16>
    %14 = vector.shape_cast %11 : vector<1x8x128xbf16> to vector<1x8x1x128xbf16>
    tpu.vector_store %arg6[%c0_12, %c0_13, %c0_14, %c0_15], %14 {strides = array<i32>} : memref<1x8x2x128xbf16, #tpu.memory_space<vmem>>, vector<1x8x1x128xbf16>,
    %cst_16 = arith.constant dense<0.000000e+00> : vector<1x8xf32>
    %15 = vector.multi_reduction <add>, %10, %cst_16 [2] : vector<1x8x128xf32> to vector<1x8xf32>
    %16 = arith.mulf %10, %10 : vector<1x8x128xf32>
    %cst_17 = arith.constant dense<0.000000e+00> : vector<1x8xf32>
    %17 = vector.multi_reduction <add>, %16, %cst_17 [2] : vector<1x8x128xf32> to vector<1x8xf32>
    %c0_18 = arith.constant 0 : index
    %c0_19 = arith.constant 0 : index
    %c1 = arith.constant 1 : index
    %c0_20 = arith.constant 0 : index
    %18 = vector.load %arg2[%c0_18, %c0_19, %c1, %c0_20] : memref<1x4x2x128xbf16, #tpu.memory_space<vmem>>, vector<1x4x1x128xbf16>
    %19 = vector.shape_cast %18 : vector<1x4x1x128xbf16> to vector<1x4x128xbf16>
    "tpu.trace_start"() <{level = 10 : i32, message = "oc,bcm->bom"}> : () -> ()
    %cst_21 = arith.constant dense<0.000000e+00> : vector<1x128x4xf32>
    %20 = tpu.matmul %19, %0, %cst_21 {dimension_numbers = #tpu.dot_dimension_numbers<[1], [1], [0, 2], [0], [0, 0, 0, 2, 1, 0], [], []>} : vector<1x4x128xbf16>, vector<4x4xbf16>, vector<1x128x4xf32> -> vector<1x128x4xf32>
    %21 = tpu.transpose %20, [0, 2, 1] : vector<1x128x4xf32> -> vector<1x4x128xf32>
    "tpu.trace_stop"() : () -> ()
    %22 = arith.truncf %21 : vector<1x4x128xf32> to vector<1x4x128xbf16>
    "tpu.trace_start"() <{level = 10 : i32, message = "bod,bdm->bom"}> : () -> ()
    %cst_22 = arith.constant dense<0.000000e+00> : vector<1x8x128xf32>
    %23 = tpu.matmul %1, %22, %cst_22 {dimension_numbers = #tpu.dot_dimension_numbers<[2], [1], [1], [2], [0, 0, 0, 1, 1, 2], [0], [0]>} : vector<1x8x4xbf16>, vector<1x4x128xbf16>, vector<1x8x128xf32> -> vector<1x8x128xf32>
    "tpu.trace_stop"() : () -> ()
    %24 = vector.broadcast %2 : vector<1x8x1xf32> to vector<1x8x128xf32>
    %25 = arith.addf %23, %24 : vector<1x8x128xf32>
    %26 = arith.truncf %25 : vector<1x8x128xf32> to vector<1x8x128xbf16>
    %c0_23 = arith.constant 0 : index
    %c0_24 = arith.constant 0 : index
    %c1_25 = arith.constant 1 : index
    %c0_26 = arith.constant 0 : index
    %27 = vector.load %arg6[%c0_23, %c0_24, %c1_25, %c0_26] : memref<1x8x2x128xbf16, #tpu.memory_space<vmem>>, vector<1x8x1x128xbf16>
    %28 = vector.shape_cast %27 : vector<1x8x1x128xbf16> to vector<1x8x128xbf16>
    %29 = vector.shape_cast %26 : vector<1x8x128xbf16> to vector<1x8x1x128xbf16>
    tpu.vector_store %arg6[%c0_23, %c0_24, %c1_25, %c0_26], %29 {strides = array<i32>} : memref<1x8x2x128xbf16, #tpu.memory_space<vmem>>, vector<1x8x1x128xbf16>,
    %cst_27 = arith.constant dense<0.000000e+00> : vector<1x8xf32>
    %30 = vector.multi_reduction <add>, %25, %cst_27 [2] : vector<1x8x128xf32> to vector<1x8xf32>
    %31 = arith.mulf %25, %25 : vector<1x8x128xf32>
    %cst_28 = arith.constant dense<0.000000e+00> : vector<1x8xf32>
    %32 = vector.multi_reduction <add>, %31, %cst_28 [2] : vector<1x8x128xf32> to vector<1x8xf32>
    %33 = arith.addf %15, %30 : vector<1x8xf32>
    %34 = arith.addf %17, %32 : vector<1x8xf32>
    %35 = vector.shape_cast %33 : vector<1x8xf32> to vector<1x1x1x8xf32>
    %c0_29 = arith.constant 0 : index
    %c0_30 = arith.constant 0 : index
    %c0_31 = arith.constant 0 : index
    %c0_32 = arith.constant 0 : index
    %36 = vector.load %arg7[%c0_29, %c0_30, %c0_31, %c0_32] : memref<1x1x2x8xf32, #tpu.memory_space<vmem>>, vector<1x1x1x8xf32>
    tpu.vector_store %arg7[%c0_29, %c0_30, %c0_31, %c0_32], %35 {strides = array<i32>} : memref<1x1x2x8xf32, #tpu.memory_space<vmem>>, vector<1x1x1x8xf32>,
    %37 = vector.shape_cast %34 : vector<1x8xf32> to vector<1x1x1x8xf32>
    %c0_33 = arith.constant 0 : index
    %c0_34 = arith.constant 0 : index
    %c1_35 = arith.constant 1 : index
    %c0_36 = arith.constant 0 : index
    %38 = vector.load %arg7[%c0_33, %c0_34, %c1_35, %c0_36] : memref<1x1x2x8xf32, #tpu.memory_space<vmem>>, vector<1x1x1x8xf32>
    tpu.vector_store %arg7[%c0_33, %c0_34, %c1_35, %c0_36], %37 {strides = array<i32>} : memref<1x1x2x8xf32, #tpu.memory_space<vmem>>, vector<1x1x1x8xf32>,
    return
  }
  func.func @transform_0(%arg0: i32, %arg1: i32) -> (i32, i32, i32, i32) {
    %c0_i32 = arith.constant 0 : i32
    %c0_i32_0 = arith.constant 0 : i32
    %c0_i32_1 = arith.constant 0 : i32
    return %arg0, %c0_i32, %c0_i32_0, %arg1 : i32, i32, i32, i32
  }
  func.func @transform_1(%arg0: i32, %arg1: i32) -> (i32, i32) {
    %c0_i32 = arith.constant 0 : i32
    %c0_i32_0 = arith.constant 0 : i32
    %c0_i32_1 = arith.constant 0 : i32
    return %c0_i32, %c0_i32_0 : i32, i32
  }
  func.func @transform_2(%arg0: i32, %arg1: i32) -> (i32, i32, i32) {
    %c0_i32 = arith.constant 0 : i32
    %c0_i32_0 = arith.constant 0 : i32
    %c0_i32_1 = arith.constant 0 : i32
    return %arg0, %c0_i32, %c0_i32_0 : i32, i32, i32
  }
  func.func @transform_3(%arg0: i32, %arg1: i32) -> (i32, i32, i32) {
    %c0_i32 = arith.constant 0 : i32
    %c0_i32_0 = arith.constant 0 : i32
    %c0_i32_1 = arith.constant 0 : i32
    return %arg0, %c0_i32, %c0_i32_0 : i32, i32, i32
  }
  func.func @transform_4(%arg0: i32, %arg1: i32) -> (i32, i32, i32, i32) {
    %c0_i32 = arith.constant 0 : i32
    %c0_i32_0 = arith.constant 0 : i32
    %c0_i32_1 = arith.constant 0 : i32
    return %arg0, %c0_i32, %c0_i32_0, %arg1 : i32, i32, i32, i32
  }
  func.func @transform_5(%arg0: i32, %arg1: i32) -> (i32, i32, i32, i32) {
    %c0_i32 = arith.constant 0 : i32
    %c0_i32_0 = arith.constant 0 : i32
    %c0_i32_1 = arith.constant 0 : i32
    return %arg0, %arg1, %c0_i32, %c0_i32_0 : i32, i32, i32, i32
  }
}

module attributes {stable_mosaic.version = 11 : i64} {
  func.func @_p3_kernel(%arg0: i32, %arg1: i32, %arg2: memref<1x8x2x128xbf16, #tpu.memory_space<vmem>>, %arg3: memref<1x8x2x128xbf16, #tpu.memory_space<vmem>>, %arg4: memref<1x8x1xf32, #tpu.memory_space<vmem>>, %arg5: memref<1x8x1xf32, #tpu.memory_space<vmem>>, %arg6: memref<2x8xbf16, #tpu.memory_space<vmem>>, %arg7: memref<1x2x8x4xbf16, #tpu.memory_space<vmem>>, %arg8: memref<1x2x8x1xf32, #tpu.memory_space<vmem>>, %arg9: memref<1x8x2x128xbf16, #tpu.memory_space<vmem>>, %arg10: memref<1x8x2x128xbf16, #tpu.memory_space<vmem>>, %arg11: memref<1x1x2x8xf32, #tpu.memory_space<vmem>>, %arg12: memref<1x4x128xbf16, #tpu.memory_space<vmem>>) attributes {dimension_semantics = [#tpu.dimension_semantics<parallel>, #tpu.dimension_semantics<parallel>], iteration_bounds = array<i64: 2, 1>, scalar_prefetch = 0 : i64, scratch_operands = 1 : i64, tpu.core_type = #tpu.core_type<tc>, window_params = [{transform_indices = @transform_0, window_bounds = array<i64: 1, 8, 2, 128>}, {transform_indices = @transform_1, window_bounds = array<i64: 1, 8, 2, 128>}, {pipeline_mode = #tpu.pipeline_mode<synchronous>, transform_indices = @transform_2, window_bounds = array<i64: 1, 8, 1>}, {pipeline_mode = #tpu.pipeline_mode<synchronous>, transform_indices = @transform_3, window_bounds = array<i64: 1, 8, 1>}, {pipeline_mode = #tpu.pipeline_mode<synchronous>, transform_indices = @transform_4, window_bounds = array<i64: 2, 8>}, {transform_indices = @transform_5, window_bounds = array<i64: 1, 2, 8, 4>}, {transform_indices = @transform_6, window_bounds = array<i64: 1, 2, 8, 1>}, {transform_indices = @transform_7, window_bounds = array<i64: 1, 8, 2, 128>}, {transform_indices = @transform_8, window_bounds = array<i64: 1, 8, 2, 128>}, {transform_indices = @transform_9, window_bounds = array<i64: 1, 1, 2, 8>}]} {
    %c0 = arith.constant 0 : index
    %c0_0 = arith.constant 0 : index
    %c0_1 = arith.constant 0 : index
    %0 = vector.load %arg4[%c0, %c0_0, %c0_1] : memref<1x8x1xf32, #tpu.memory_space<vmem>>, vector<1x8x1xf32>
    %c0_2 = arith.constant 0 : index
    %c0_3 = arith.constant 0 : index
    %c0_4 = arith.constant 0 : index
    %1 = vector.load %arg5[%c0_2, %c0_3, %c0_4] : memref<1x8x1xf32, #tpu.memory_space<vmem>>, vector<1x8x1xf32>
    %c0_5 = arith.constant 0 : index
    %c0_6 = arith.constant 0 : index
    %2 = vector.load %arg6[%c0_5, %c0_6] : memref<2x8xbf16, #tpu.memory_space<vmem>>, vector<2x8xbf16>
    %c0_7 = arith.constant 0 : index
    %c0_8 = arith.constant 0 : index
    %c0_9 = arith.constant 0 : index
    %c0_10 = arith.constant 0 : index
    %3 = vector.load %arg2[%c0_7, %c0_8, %c0_9, %c0_10] : memref<1x8x2x128xbf16, #tpu.memory_space<vmem>>, vector<1x8x1x128xbf16>
    %4 = vector.shape_cast %3 : vector<1x8x1x128xbf16> to vector<1x8x128xbf16>
    %5 = arith.extf %4 : vector<1x8x128xbf16> to vector<1x8x128xf32>
    %6 = vector.broadcast %0 : vector<1x8x1xf32> to vector<1x8x128xf32>
    %7 = arith.mulf %5, %6 : vector<1x8x128xf32>
    %8 = vector.broadcast %1 : vector<1x8x1xf32> to vector<1x8x128xf32>
    %9 = arith.addf %7, %8 : vector<1x8x128xf32>
    %cst = arith.constant 0.000000e+00 : f32
    %10 = vector.broadcast %cst : f32 to vector<1x8x128xf32>
    %11 = arith.subf %10, %9 : vector<1x8x128xf32>
    %12 = math.exp %11 : vector<1x8x128xf32>
    %cst_11 = arith.constant 1.000000e+00 : f32
    %13 = vector.broadcast %cst_11 : f32 to vector<1x8x128xf32>
    %14 = arith.addf %13, %12 : vector<1x8x128xf32>
    %15 = tpu.reciprocal %14 {approx = true} : vector<1x8x128xf32> -> vector<1x8x128xf32>
    %c0_12 = arith.constant 0 : index
    %c0_13 = arith.constant 0 : index
    %c0_14 = arith.constant 0 : index
    %c0_15 = arith.constant 0 : index
    %16 = vector.load %arg3[%c0_12, %c0_13, %c0_14, %c0_15] : memref<1x8x2x128xbf16, #tpu.memory_space<vmem>>, vector<1x8x1x128xbf16>
    %17 = vector.shape_cast %16 : vector<1x8x1x128xbf16> to vector<1x8x128xbf16>
    %18 = arith.extf %17 : vector<1x8x128xbf16> to vector<1x8x128xf32>
    %19 = arith.subf %9, %18 : vector<1x8x128xf32>
    %20 = arith.mulf %15, %19 : vector<1x8x128xf32>
    %21 = arith.addf %18, %20 : vector<1x8x128xf32>
    %22 = arith.truncf %21 : vector<1x8x128xf32> to vector<1x8x128xbf16>
    %c0_16 = arith.constant 0 : index
    %c0_17 = arith.constant 0 : index
    %c0_18 = arith.constant 0 : index
    %c0_19 = arith.constant 0 : index
    %23 = vector.load %arg9[%c0_16, %c0_17, %c0_18, %c0_19] : memref<1x8x2x128xbf16, #tpu.memory_space<vmem>>, vector<1x8x1x128xbf16>
    %24 = vector.shape_cast %23 : vector<1x8x1x128xbf16> to vector<1x8x128xbf16>
    %25 = vector.shape_cast %22 : vector<1x8x128xbf16> to vector<1x8x1x128xbf16>
    tpu.vector_store %arg9[%c0_16, %c0_17, %c0_18, %c0_19], %25 {strides = array<i32>} : memref<1x8x2x128xbf16, #tpu.memory_space<vmem>>, vector<1x8x1x128xbf16>,
    "tpu.trace_start"() <{level = 10 : i32, message = "oc,bcm->bom"}> : () -> ()
    %cst_20 = arith.constant dense<0.000000e+00> : vector<1x128x2xf32>
    %26 = tpu.matmul %22, %2, %cst_20 {dimension_numbers = #tpu.dot_dimension_numbers<[1], [1], [0, 2], [0], [0, 0, 0, 2, 1, 0], [], []>} : vector<1x8x128xbf16>, vector<2x8xbf16>, vector<1x128x2xf32> -> vector<1x128x2xf32>
    %27 = tpu.transpose %26, [0, 2, 1] : vector<1x128x2xf32> -> vector<1x2x128xf32>
    "tpu.trace_stop"() : () -> ()
    %28 = arith.truncf %27 : vector<1x2x128xf32> to vector<1x2x128xbf16>
    %c0_21 = arith.constant 0 : index
    %c0_22 = arith.constant 0 : index
    %c0_23 = arith.constant 0 : index
    %29 = vector.load %arg12[%c0_21, %c0_22, %c0_23] : memref<1x4x128xbf16, #tpu.memory_space<vmem>>, vector<1x2x128xbf16>
    tpu.vector_store %arg12[%c0_21, %c0_22, %c0_23], %28 {strides = array<i32>} : memref<1x4x128xbf16, #tpu.memory_space<vmem>>, vector<1x2x128xbf16>,
    %c0_24 = arith.constant 0 : index
    %c0_25 = arith.constant 0 : index
    %c1 = arith.constant 1 : index
    %c0_26 = arith.constant 0 : index
    %30 = vector.load %arg2[%c0_24, %c0_25, %c1, %c0_26] : memref<1x8x2x128xbf16, #tpu.memory_space<vmem>>, vector<1x8x1x128xbf16>
    %31 = vector.shape_cast %30 : vector<1x8x1x128xbf16> to vector<1x8x128xbf16>
    %32 = arith.extf %31 : vector<1x8x128xbf16> to vector<1x8x128xf32>
    %33 = vector.broadcast %0 : vector<1x8x1xf32> to vector<1x8x128xf32>
    %34 = arith.mulf %32, %33 : vector<1x8x128xf32>
    %35 = vector.broadcast %1 : vector<1x8x1xf32> to vector<1x8x128xf32>
    %36 = arith.addf %34, %35 : vector<1x8x128xf32>
    %cst_27 = arith.constant 0.000000e+00 : f32
    %37 = vector.broadcast %cst_27 : f32 to vector<1x8x128xf32>
    %38 = arith.subf %37, %36 : vector<1x8x128xf32>
    %39 = math.exp %38 : vector<1x8x128xf32>
    %cst_28 = arith.constant 1.000000e+00 : f32
    %40 = vector.broadcast %cst_28 : f32 to vector<1x8x128xf32>
    %41 = arith.addf %40, %39 : vector<1x8x128xf32>
    %42 = tpu.reciprocal %41 {approx = true} : vector<1x8x128xf32> -> vector<1x8x128xf32>
    %c0_29 = arith.constant 0 : index
    %c0_30 = arith.constant 0 : index
    %c1_31 = arith.constant 1 : index
    %c0_32 = arith.constant 0 : index
    %43 = vector.load %arg3[%c0_29, %c0_30, %c1_31, %c0_32] : memref<1x8x2x128xbf16, #tpu.memory_space<vmem>>, vector<1x8x1x128xbf16>
    %44 = vector.shape_cast %43 : vector<1x8x1x128xbf16> to vector<1x8x128xbf16>
    %45 = arith.extf %44 : vector<1x8x128xbf16> to vector<1x8x128xf32>
    %46 = arith.subf %36, %45 : vector<1x8x128xf32>
    %47 = arith.mulf %42, %46 : vector<1x8x128xf32>
    %48 = arith.addf %45, %47 : vector<1x8x128xf32>
    %49 = arith.truncf %48 : vector<1x8x128xf32> to vector<1x8x128xbf16>
    %c0_33 = arith.constant 0 : index
    %c0_34 = arith.constant 0 : index
    %c1_35 = arith.constant 1 : index
    %c0_36 = arith.constant 0 : index
    %50 = vector.load %arg9[%c0_33, %c0_34, %c1_35, %c0_36] : memref<1x8x2x128xbf16, #tpu.memory_space<vmem>>, vector<1x8x1x128xbf16>
    %51 = vector.shape_cast %50 : vector<1x8x1x128xbf16> to vector<1x8x128xbf16>
    %52 = vector.shape_cast %49 : vector<1x8x128xbf16> to vector<1x8x1x128xbf16>
    tpu.vector_store %arg9[%c0_33, %c0_34, %c1_35, %c0_36], %52 {strides = array<i32>} : memref<1x8x2x128xbf16, #tpu.memory_space<vmem>>, vector<1x8x1x128xbf16>,
    "tpu.trace_start"() <{level = 10 : i32, message = "oc,bcm->bom"}> : () -> ()
    %cst_37 = arith.constant dense<0.000000e+00> : vector<1x128x2xf32>
    %53 = tpu.matmul %49, %2, %cst_37 {dimension_numbers = #tpu.dot_dimension_numbers<[1], [1], [0, 2], [0], [0, 0, 0, 2, 1, 0], [], []>} : vector<1x8x128xbf16>, vector<2x8xbf16>, vector<1x128x2xf32> -> vector<1x128x2xf32>
    %54 = tpu.transpose %53, [0, 2, 1] : vector<1x128x2xf32> -> vector<1x2x128xf32>
    "tpu.trace_stop"() : () -> ()
    %55 = arith.truncf %54 : vector<1x2x128xf32> to vector<1x2x128xbf16>
    %c0_38 = arith.constant 0 : index
    %c2 = arith.constant 2 : index
    %c0_39 = arith.constant 0 : index
    %56 = vector.load %arg12[%c0_38, %c2, %c0_39] : memref<1x4x128xbf16, #tpu.memory_space<vmem>>, vector<1x2x128xbf16>
    tpu.vector_store %arg12[%c0_38, %c2, %c0_39], %55 {strides = array<i32>} : memref<1x4x128xbf16, #tpu.memory_space<vmem>>, vector<1x2x128xbf16>,
    %c0_40 = arith.constant 0 : index
    %c0_41 = arith.constant 0 : index
    %c0_42 = arith.constant 0 : index
    %57 = vector.load %arg12[%c0_40, %c0_41, %c0_42] : memref<1x4x128xbf16, #tpu.memory_space<vmem>>, vector<1x4x128xbf16>
    %c0_43 = arith.constant 0 : index
    %c0_44 = arith.constant 0 : index
    %c0_45 = arith.constant 0 : index
    %c0_46 = arith.constant 0 : index
    %58 = vector.load %arg7[%c0_43, %c0_44, %c0_45, %c0_46] : memref<1x2x8x4xbf16, #tpu.memory_space<vmem>>, vector<1x1x8x4xbf16>
    %59 = vector.shape_cast %58 : vector<1x1x8x4xbf16> to vector<1x8x4xbf16>
    %c0_47 = arith.constant 0 : index
    %c0_48 = arith.constant 0 : index
    %c0_49 = arith.constant 0 : index
    %c0_50 = arith.constant 0 : index
    %60 = vector.load %arg8[%c0_47, %c0_48, %c0_49, %c0_50] : memref<1x2x8x1xf32, #tpu.memory_space<vmem>>, vector<1x1x8x1xf32>
    %61 = vector.shape_cast %60 : vector<1x1x8x1xf32> to vector<1x8x1xf32>
    "tpu.trace_start"() <{level = 10 : i32, message = "bop,bpm->bom"}> : () -> ()
    %cst_51 = arith.constant dense<0.000000e+00> : vector<1x8x128xf32>
    %62 = tpu.matmul %59, %57, %cst_51 {dimension_numbers = #tpu.dot_dimension_numbers<[2], [1], [1], [2], [0, 0, 0, 1, 1, 2], [0], [0]>} : vector<1x8x4xbf16>, vector<1x4x128xbf16>, vector<1x8x128xf32> -> vector<1x8x128xf32>
    "tpu.trace_stop"() : () -> ()
    %63 = vector.broadcast %61 : vector<1x8x1xf32> to vector<1x8x128xf32>
    %64 = arith.addf %62, %63 : vector<1x8x128xf32>
    %65 = arith.truncf %64 : vector<1x8x128xf32> to vector<1x8x128xbf16>
    %c0_52 = arith.constant 0 : index
    %c0_53 = arith.constant 0 : index
    %c0_54 = arith.constant 0 : index
    %c0_55 = arith.constant 0 : index
    %66 = vector.load %arg10[%c0_52, %c0_53, %c0_54, %c0_55] : memref<1x8x2x128xbf16, #tpu.memory_space<vmem>>, vector<1x8x1x128xbf16>
    %67 = vector.shape_cast %66 : vector<1x8x1x128xbf16> to vector<1x8x128xbf16>
    %68 = vector.shape_cast %65 : vector<1x8x128xbf16> to vector<1x8x1x128xbf16>
    tpu.vector_store %arg10[%c0_52, %c0_53, %c0_54, %c0_55], %68 {strides = array<i32>} : memref<1x8x2x128xbf16, #tpu.memory_space<vmem>>, vector<1x8x1x128xbf16>,
    %cst_56 = arith.constant dense<0.000000e+00> : vector<1x8xf32>
    %69 = vector.multi_reduction <add>, %64, %cst_56 [2] : vector<1x8x128xf32> to vector<1x8xf32>
    %70 = arith.mulf %64, %64 : vector<1x8x128xf32>
    %cst_57 = arith.constant dense<0.000000e+00> : vector<1x8xf32>
    %71 = vector.multi_reduction <add>, %70, %cst_57 [2] : vector<1x8x128xf32> to vector<1x8xf32>
    %c0_58 = arith.constant 0 : index
    %c1_59 = arith.constant 1 : index
    %c0_60 = arith.constant 0 : index
    %c0_61 = arith.constant 0 : index
    %72 = vector.load %arg7[%c0_58, %c1_59, %c0_60, %c0_61] : memref<1x2x8x4xbf16, #tpu.memory_space<vmem>>, vector<1x1x8x4xbf16>
    %73 = vector.shape_cast %72 : vector<1x1x8x4xbf16> to vector<1x8x4xbf16>
    %c0_62 = arith.constant 0 : index
    %c1_63 = arith.constant 1 : index
    %c0_64 = arith.constant 0 : index
    %c0_65 = arith.constant 0 : index
    %74 = vector.load %arg8[%c0_62, %c1_63, %c0_64, %c0_65] : memref<1x2x8x1xf32, #tpu.memory_space<vmem>>, vector<1x1x8x1xf32>
    %75 = vector.shape_cast %74 : vector<1x1x8x1xf32> to vector<1x8x1xf32>
    "tpu.trace_start"() <{level = 10 : i32, message = "bop,bpm->bom"}> : () -> ()
    %cst_66 = arith.constant dense<0.000000e+00> : vector<1x8x128xf32>
    %76 = tpu.matmul %73, %57, %cst_66 {dimension_numbers = #tpu.dot_dimension_numbers<[2], [1], [1], [2], [0, 0, 0, 1, 1, 2], [0], [0]>} : vector<1x8x4xbf16>, vector<1x4x128xbf16>, vector<1x8x128xf32> -> vector<1x8x128xf32>
    "tpu.trace_stop"() : () -> ()
    %77 = vector.broadcast %75 : vector<1x8x1xf32> to vector<1x8x128xf32>
    %78 = arith.addf %76, %77 : vector<1x8x128xf32>
    %79 = arith.truncf %78 : vector<1x8x128xf32> to vector<1x8x128xbf16>
    %c0_67 = arith.constant 0 : index
    %c0_68 = arith.constant 0 : index
    %c1_69 = arith.constant 1 : index
    %c0_70 = arith.constant 0 : index
    %80 = vector.load %arg10[%c0_67, %c0_68, %c1_69, %c0_70] : memref<1x8x2x128xbf16, #tpu.memory_space<vmem>>, vector<1x8x1x128xbf16>
    %81 = vector.shape_cast %80 : vector<1x8x1x128xbf16> to vector<1x8x128xbf16>
    %82 = vector.shape_cast %79 : vector<1x8x128xbf16> to vector<1x8x1x128xbf16>
    tpu.vector_store %arg10[%c0_67, %c0_68, %c1_69, %c0_70], %82 {strides = array<i32>} : memref<1x8x2x128xbf16, #tpu.memory_space<vmem>>, vector<1x8x1x128xbf16>,
    %cst_71 = arith.constant dense<0.000000e+00> : vector<1x8xf32>
    %83 = vector.multi_reduction <add>, %78, %cst_71 [2] : vector<1x8x128xf32> to vector<1x8xf32>
    %84 = arith.mulf %78, %78 : vector<1x8x128xf32>
    %cst_72 = arith.constant dense<0.000000e+00> : vector<1x8xf32>
    %85 = vector.multi_reduction <add>, %84, %cst_72 [2] : vector<1x8x128xf32> to vector<1x8xf32>
    %86 = arith.addf %69, %83 : vector<1x8xf32>
    %87 = arith.addf %71, %85 : vector<1x8xf32>
    %88 = vector.shape_cast %86 : vector<1x8xf32> to vector<1x1x1x8xf32>
    %c0_73 = arith.constant 0 : index
    %c0_74 = arith.constant 0 : index
    %c0_75 = arith.constant 0 : index
    %c0_76 = arith.constant 0 : index
    %89 = vector.load %arg11[%c0_73, %c0_74, %c0_75, %c0_76] : memref<1x1x2x8xf32, #tpu.memory_space<vmem>>, vector<1x1x1x8xf32>
    tpu.vector_store %arg11[%c0_73, %c0_74, %c0_75, %c0_76], %88 {strides = array<i32>} : memref<1x1x2x8xf32, #tpu.memory_space<vmem>>, vector<1x1x1x8xf32>,
    %90 = vector.shape_cast %87 : vector<1x8xf32> to vector<1x1x1x8xf32>
    %c0_77 = arith.constant 0 : index
    %c0_78 = arith.constant 0 : index
    %c1_79 = arith.constant 1 : index
    %c0_80 = arith.constant 0 : index
    %91 = vector.load %arg11[%c0_77, %c0_78, %c1_79, %c0_80] : memref<1x1x2x8xf32, #tpu.memory_space<vmem>>, vector<1x1x1x8xf32>
    tpu.vector_store %arg11[%c0_77, %c0_78, %c1_79, %c0_80], %90 {strides = array<i32>} : memref<1x1x2x8xf32, #tpu.memory_space<vmem>>, vector<1x1x1x8xf32>,
    return
  }
  func.func @transform_0(%arg0: i32, %arg1: i32) -> (i32, i32, i32, i32) {
    %c0_i32 = arith.constant 0 : i32
    %c0_i32_0 = arith.constant 0 : i32
    %c0_i32_1 = arith.constant 0 : i32
    return %arg0, %c0_i32, %c0_i32_0, %arg1 : i32, i32, i32, i32
  }
  func.func @transform_1(%arg0: i32, %arg1: i32) -> (i32, i32, i32, i32) {
    %c0_i32 = arith.constant 0 : i32
    %c0_i32_0 = arith.constant 0 : i32
    %c0_i32_1 = arith.constant 0 : i32
    return %arg0, %c0_i32, %c0_i32_0, %arg1 : i32, i32, i32, i32
  }
  func.func @transform_2(%arg0: i32, %arg1: i32) -> (i32, i32, i32) {
    %c0_i32 = arith.constant 0 : i32
    %c0_i32_0 = arith.constant 0 : i32
    %c0_i32_1 = arith.constant 0 : i32
    %c0_i32_2 = arith.constant 0 : i32
    return %c0_i32, %c0_i32_0, %c0_i32_1 : i32, i32, i32
  }
  func.func @transform_3(%arg0: i32, %arg1: i32) -> (i32, i32, i32) {
    %c0_i32 = arith.constant 0 : i32
    %c0_i32_0 = arith.constant 0 : i32
    %c0_i32_1 = arith.constant 0 : i32
    %c0_i32_2 = arith.constant 0 : i32
    return %c0_i32, %c0_i32_0, %c0_i32_1 : i32, i32, i32
  }
  func.func @transform_4(%arg0: i32, %arg1: i32) -> (i32, i32) {
    %c0_i32 = arith.constant 0 : i32
    %c0_i32_0 = arith.constant 0 : i32
    %c0_i32_1 = arith.constant 0 : i32
    return %c0_i32, %c0_i32_0 : i32, i32
  }
  func.func @transform_5(%arg0: i32, %arg1: i32) -> (i32, i32, i32, i32) {
    %c0_i32 = arith.constant 0 : i32
    %c0_i32_0 = arith.constant 0 : i32
    %c0_i32_1 = arith.constant 0 : i32
    %c0_i32_2 = arith.constant 0 : i32
    return %arg0, %c0_i32, %c0_i32_0, %c0_i32_1 : i32, i32, i32, i32
  }
  func.func @transform_6(%arg0: i32, %arg1: i32) -> (i32, i32, i32, i32) {
    %c0_i32 = arith.constant 0 : i32
    %c0_i32_0 = arith.constant 0 : i32
    %c0_i32_1 = arith.constant 0 : i32
    %c0_i32_2 = arith.constant 0 : i32
    return %arg0, %c0_i32, %c0_i32_0, %c0_i32_1 : i32, i32, i32, i32
  }
  func.func @transform_7(%arg0: i32, %arg1: i32) -> (i32, i32, i32, i32) {
    %c0_i32 = arith.constant 0 : i32
    %c0_i32_0 = arith.constant 0 : i32
    %c0_i32_1 = arith.constant 0 : i32
    return %arg0, %c0_i32, %c0_i32_0, %arg1 : i32, i32, i32, i32
  }
  func.func @transform_8(%arg0: i32, %arg1: i32) -> (i32, i32, i32, i32) {
    %c0_i32 = arith.constant 0 : i32
    %c0_i32_0 = arith.constant 0 : i32
    %c0_i32_1 = arith.constant 0 : i32
    return %arg0, %c0_i32, %c0_i32_0, %arg1 : i32, i32, i32, i32
  }
  func.func @transform_9(%arg0: i32, %arg1: i32) -> (i32, i32, i32, i32) {
    %c0_i32 = arith.constant 0 : i32
    %c0_i32_0 = arith.constant 0 : i32
    %c0_i32_1 = arith.constant 0 : i32
    return %arg0, %arg1, %c0_i32, %c0_i32_0 : i32, i32, i32, i32
  }
}

module attributes {stable_mosaic.version = 11 : i64} {
  func.func @_p4_kernel(%arg0: i32, %arg1: i32, %arg2: memref<1x8x2x128xbf16, #tpu.memory_space<vmem>>, %arg3: memref<1x8x2x128xbf16, #tpu.memory_space<vmem>>, %arg4: memref<1x8x1x1xf32, #tpu.memory_space<vmem>>, %arg5: memref<1x8x1x1xf32, #tpu.memory_space<vmem>>, %arg6: memref<1x8x2x128xf32, #tpu.memory_space<vmem>>) attributes {dimension_semantics = [#tpu.dimension_semantics<parallel>, #tpu.dimension_semantics<parallel>], iteration_bounds = array<i64: 2, 1>, scalar_prefetch = 0 : i64, scratch_operands = 0 : i64, tpu.core_type = #tpu.core_type<tc>, window_params = [{transform_indices = @transform_0, window_bounds = array<i64: 1, 8, 2, 128>}, {transform_indices = @transform_1, window_bounds = array<i64: 1, 8, 2, 128>}, {pipeline_mode = #tpu.pipeline_mode<synchronous>, transform_indices = @transform_2, window_bounds = array<i64: 1, 8, 1, 1>}, {pipeline_mode = #tpu.pipeline_mode<synchronous>, transform_indices = @transform_3, window_bounds = array<i64: 1, 8, 1, 1>}, {transform_indices = @transform_4, window_bounds = array<i64: 1, 8, 2, 128>}]} {
    %c0 = arith.constant 0 : index
    %c0_0 = arith.constant 0 : index
    %c0_1 = arith.constant 0 : index
    %c0_2 = arith.constant 0 : index
    %0 = vector.load %arg2[%c0, %c0_0, %c0_1, %c0_2] : memref<1x8x2x128xbf16, #tpu.memory_space<vmem>>, vector<1x8x2x128xbf16>
    %1 = arith.extf %0 : vector<1x8x2x128xbf16> to vector<1x8x2x128xf32>
    %c0_3 = arith.constant 0 : index
    %c0_4 = arith.constant 0 : index
    %c0_5 = arith.constant 0 : index
    %c0_6 = arith.constant 0 : index
    %2 = vector.load %arg3[%c0_3, %c0_4, %c0_5, %c0_6] : memref<1x8x2x128xbf16, #tpu.memory_space<vmem>>, vector<1x8x2x128xbf16>
    %3 = arith.extf %2 : vector<1x8x2x128xbf16> to vector<1x8x2x128xf32>
    %c0_7 = arith.constant 0 : index
    %c0_8 = arith.constant 0 : index
    %c0_9 = arith.constant 0 : index
    %c0_10 = arith.constant 0 : index
    %4 = vector.load %arg4[%c0_7, %c0_8, %c0_9, %c0_10] : memref<1x8x1x1xf32, #tpu.memory_space<vmem>>, vector<1x8x1x1xf32>
    %5 = vector.broadcast %4 : vector<1x8x1x1xf32> to vector<1x8x2x128xf32>
    %6 = arith.mulf %3, %5 : vector<1x8x2x128xf32>
    %c0_11 = arith.constant 0 : index
    %c0_12 = arith.constant 0 : index
    %c0_13 = arith.constant 0 : index
    %c0_14 = arith.constant 0 : index
    %7 = vector.load %arg5[%c0_11, %c0_12, %c0_13, %c0_14] : memref<1x8x1x1xf32, #tpu.memory_space<vmem>>, vector<1x8x1x1xf32>
    %8 = vector.broadcast %7 : vector<1x8x1x1xf32> to vector<1x8x2x128xf32>
    %9 = arith.addf %6, %8 : vector<1x8x2x128xf32>
    %cst = arith.constant 0.000000e+00 : f32
    %10 = vector.broadcast %cst : f32 to vector<1x8x2x128xf32>
    %11 = arith.subf %10, %9 : vector<1x8x2x128xf32>
    %12 = math.exp %11 : vector<1x8x2x128xf32>
    %cst_15 = arith.constant 1.000000e+00 : f32
    %13 = vector.broadcast %cst_15 : f32 to vector<1x8x2x128xf32>
    %14 = arith.addf %13, %12 : vector<1x8x2x128xf32>
    %15 = tpu.reciprocal %14 {approx = true} : vector<1x8x2x128xf32> -> vector<1x8x2x128xf32>
    %16 = arith.subf %9, %1 : vector<1x8x2x128xf32>
    %17 = arith.mulf %15, %16 : vector<1x8x2x128xf32>
    %18 = arith.addf %1, %17 : vector<1x8x2x128xf32>
    %c0_16 = arith.constant 0 : index
    %c0_17 = arith.constant 0 : index
    %c0_18 = arith.constant 0 : index
    %c0_19 = arith.constant 0 : index
    %19 = vector.load %arg6[%c0_16, %c0_17, %c0_18, %c0_19] : memref<1x8x2x128xf32, #tpu.memory_space<vmem>>, vector<1x8x2x128xf32>
    tpu.vector_store %arg6[%c0_16, %c0_17, %c0_18, %c0_19], %18 {strides = array<i32>} : memref<1x8x2x128xf32, #tpu.memory_space<vmem>>, vector<1x8x2x128xf32>,
    return
  }
  func.func @transform_0(%arg0: i32, %arg1: i32) -> (i32, i32, i32, i32) {
    %c0_i32 = arith.constant 0 : i32
    %c0_i32_0 = arith.constant 0 : i32
    %c0_i32_1 = arith.constant 0 : i32
    return %arg0, %c0_i32, %c0_i32_0, %arg1 : i32, i32, i32, i32
  }
  func.func @transform_1(%arg0: i32, %arg1: i32) -> (i32, i32, i32, i32) {
    %c0_i32 = arith.constant 0 : i32
    %c0_i32_0 = arith.constant 0 : i32
    %c0_i32_1 = arith.constant 0 : i32
    return %arg0, %c0_i32, %c0_i32_0, %arg1 : i32, i32, i32, i32
  }
  func.func @transform_2(%arg0: i32, %arg1: i32) -> (i32, i32, i32, i32) {
    %c0_i32 = arith.constant 0 : i32
    %c0_i32_0 = arith.constant 0 : i32
    %c0_i32_1 = arith.constant 0 : i32
    %c0_i32_2 = arith.constant 0 : i32
    %c0_i32_3 = arith.constant 0 : i32
    return %c0_i32, %c0_i32_0, %c0_i32_1, %c0_i32_2 : i32, i32, i32, i32
  }
  func.func @transform_3(%arg0: i32, %arg1: i32) -> (i32, i32, i32, i32) {
    %c0_i32 = arith.constant 0 : i32
    %c0_i32_0 = arith.constant 0 : i32
    %c0_i32_1 = arith.constant 0 : i32
    %c0_i32_2 = arith.constant 0 : i32
    %c0_i32_3 = arith.constant 0 : i32
    return %c0_i32, %c0_i32_0, %c0_i32_1, %c0_i32_2 : i32, i32, i32, i32
  }
  func.func @transform_4(%arg0: i32, %arg1: i32) -> (i32, i32, i32, i32) {
    %c0_i32 = arith.constant 0 : i32
    %c0_i32_0 = arith.constant 0 : i32
    %c0_i32_1 = arith.constant 0 : i32
    return %arg0, %c0_i32, %c0_i32_0, %arg1 : i32, i32, i32, i32
  }
}

</mosaic_0001>

<llo_original>
// kernel: tile.8
$region0: #{tile.8}
  #allocation0 [shape = 's32[1]{0}', space=sflag, size = 0x4, scoped, tag = 'scoped memory for tile.8']
  %s0 = inlined_call_operand.vmem [shape: f32[2], index: 0, kind: input, shape index: {}]
  %s1 = inlined_call_operand.vmem [shape: f32[2,2], index: 1, kind: output, shape index: {}]
  // Predicated region
  $region2: #{tile.8} parent=0 // pred_check
    _
  $region3: #{tile.8} parent=0 // pred_check_branch
    %3 = sbr.rel (0) target = $region5
  $region4: #{tile.8} parent=0 // pred_region
    _
  $region5: #{tile.8} parent=0 // pred_fallthru
    _
  %v4 = vld [vmem:[%s0] ss:$0 sm:$0xff]
  %5 = vst [vmem:[%s1] sm:$0x3] %v4

// kernel: tile.9
$region0: #{tile.9}
  %s0 = inlined_call_operand.vmem [shape: f32[2,2], index: 0, kind: input, shape index: {}]
  %s1 = inlined_call_operand.vmem [shape: f32[4], index: 1, kind: output, shape index: {}]
  $region1: #{tile.9} parent=0
    #allocation0 [shape = 'u8[4096]{0}', space=vmem, size = 0x1000, scoped, tag = 'scoped mem for output reshape']
    #allocation1 [shape = 'u8[4096]{0}', space=vmem, size = 0x1000, scoped, tag = 'scoped mem for input reshape']
    %s3 = sshllo.u32 0, 2
    %v4 = vld [vmem:[%s0] sm:%s3]
    %5 = vst [vmem:[#allocation1] sm:%s3] %v4
    %v6 = vld [vmem:[#allocation1] sm:$0x1]
    %vm7 = vcmask 15360
    %8 = vst.msk [vmem:[#allocation0] sm:$0x1] %vm7, %v6
    %s9 = scalar_lea.vmem [#allocation1], 1
    %v10 = vld [vmem:[%s9] sm:$0x1]
    %11 = vrot.lane.b32.xlu0 %v10, 2
    %v12 = vpop.permute.xlu0 %11
    %vm13 = vcmask 31760
    %14 = vst.msk [vmem:[#allocation0] sm:$0x1] %vm13, %v12
    %s16 = sshllo.u32 0, 1
    %v18 = vld [vmem:[#allocation0] sm:%s16]
    %s19 = sshllo.u32 0, 1
    %20 = vst [vmem:[%s1] sm:%s19] %v18

// kernel: ssm_block_forward.7
$region0: #{ssm_block_forward.7}
  #allocation0 [shape = 'u32[]', space=smem, size = 0x4, offset = 0x4, fixed_abs, tag = 'smem constant byte address 0x4 - core index']
  #allocation1 [shape = 'u32[144,128]{1,0:T(1,128)}', space=vmem, size = 0x12000, scoped, tag = 'internal scratch']
  %s0 = inlined_call_operand.vmem [shape: bf16[2,8,2,128], index: 0, kind: input, shape index: {}]
  %s1 = inlined_call_operand.vmem [shape: bf16[2,8,2,128], index: 1, kind: input, shape index: {}]
  %s2 = inlined_call_operand.vmem [shape: f32[1,8,1,1], index: 2, kind: input, shape index: {}]
  %s3 = inlined_call_operand.vmem [shape: f32[1,8,1,1], index: 3, kind: input, shape index: {}]
  %s4 = inlined_call_operand.vmem [shape: f32[2,8,2,128], index: 4, kind: output, shape index: {}]
  %s5 = sld [smem:[#allocation0]]
  $region49: #{ssm_block_forward.7} parent=0
    _
  %s7 = ssub.s32 1, %s5
  %s8 = scalar_select 0, %s7, %s5
  loop: start=0, step=1, limit=4
  $region2: #{ssm_block_forward.7} parent=0 // loop_pre_header
    _
  $region3: #{ssm_block_forward.7} parent=0 // loop_header
    %s10 = sphi 0, %s14
    %p11 = scmp.ge.s32.totalorder %s10, 4
    %s17 = sphi 0, %s29
    %s18 = sphi 0, %s25
    %s19 = sphi 0, %s17
    %s20 = sphi 0, %s18
    %s21 = sphi 0, %s19
    %s22 = sphi 0, %s20
    %s34 = sphi 0, %s36
    %s37 = sphi 0, %s34
    %s38 = sphi 0, %s37
    %s54 = sphi 0, %s38
    %s62 = sphi 0, %s64
    %s65 = sphi 0, %s62
    %s66 = sphi 0, %s65
    %s82 = sphi 0, %s66
    %s86 = sphi 0, %s86
    %s88 = sphi 0, %s86
    %s89 = sphi 0, %s88
    %s103 = sphi 0, %s89
    %s107 = sphi 0, %s107
    %s109 = sphi 0, %s107
    %s110 = sphi 0, %s109
    %s124 = sphi 0, %s110
    %s132 = sphi 0, %s134
    %s135 = sphi 0, %s132
    %s136 = sphi 0, %s135
    %s152 = sphi 0, %s136
  $region4: #{ssm_block_forward.7} parent=0 // loop_header_branch
    %13 = sbr.rel (%p11) target = $region8
  $region5: #{ssm_block_forward.7} parent=0 // loop_body
    %s15 = ssub.s32 %s10, 1
    %s16 = ssub.s32 %s10, 2
    %s23 = sadd.s32 1, %s18
    %p24 = scmp.ge.s32.totalorder %s23, 1
    %s25 = scalar_select %p24, 0, %s23
    %s26 = sadd.s32 1, %s17
    %s27 = scalar_select %p24, %s26, %s17
    %p28 = scmp.ge.s32.totalorder %s27, 2
    %s29 = scalar_select %p28, 0, %s27
    %s30 = ssub.s32 %s17, %s29
    %s31 = ssub.s32 %s18, %s25
    %s32 = sor.u32 %s30, %s31
    %p33 = scmp.eq.s32.totalorder %s32, 0
    %s35 = sadd.s32 %s34, 1
    %s36 = scalar_select %p33, %s34, %s35
    %p39 = pneg %p33
    %p40 = scmp.eq.s32.totalorder %s10, 1
    %p41 = por %p39, %p40
    %p42 = scmp.ne.s32.totalorder %s34, %s37
    %p43 = scmp.eq.s32.totalorder %s10, 0
    %p44 = por %p42, %p43
    %p45 = scmp.ne.s32.totalorder %s34, %s37
    %p46 = scmp.eq.s32.totalorder %s15, 1
    %p47 = por %p45, %p46
    %p48 = scmp.ne.s32.totalorder %s37, %s38
    %p49 = scmp.eq.s32.totalorder %s15, 0
    %p50 = por %p48, %p49
    %p51 = scmp.ne.s32.totalorder %s37, %s38
    %p52 = scmp.eq.s32.totalorder %s16, 1
    %p53 = por %p51, %p52
    %p55 = scmp.ne.s32.totalorder %s38, %s54
    %p56 = scmp.eq.s32.totalorder %s16, 0
    %p57 = por %p55, %p56
    %s58 = ssub.s32 %s17, %s29
    %s59 = ssub.s32 %s18, %s25
    %s60 = sor.u32 %s58, %s59
    %p61 = scmp.eq.s32.totalorder %s60, 0
    %s63 = sadd.s32 %s62, 1
    %s64 = scalar_select %p61, %s62, %s63
    %p67 = pneg %p61
    %p68 = scmp.eq.s32.totalorder %s10, 1
    %p69 = por %p67, %p68
    %p70 = scmp.ne.s32.totalorder %s62, %s65
    %p71 = scmp.eq.s32.totalorder %s10, 0
    %p72 = por %p70, %p71
    %p73 = scmp.ne.s32.totalorder %s62, %s65
    %p74 = scmp.eq.s32.totalorder %s15, 1
    %p75 = por %p73, %p74
    %p76 = scmp.ne.s32.totalorder %s65, %s66
    %p77 = scmp.eq.s32.totalorder %s15, 0
    %p78 = por %p76, %p77
    %p79 = scmp.ne.s32.totalorder %s65, %s66
    %p80 = scmp.eq.s32.totalorder %s16, 1
    %p81 = por %p79, %p80
    %p83 = scmp.ne.s32.totalorder %s66, %s82
    %p84 = scmp.eq.s32.totalorder %s16, 0
    %p85 = por %p83, %p84
    %s87 = sadd.s32 %s86, 1
    %p90 = scmp.eq.s32.totalorder %s10, 1
    %p91 = scmp.ne.s32.totalorder %s86, %s88
    %p92 = scmp.eq.s32.totalorder %s10, 0
    %p93 = por %p91, %p92
    %p94 = scmp.ne.s32.totalorder %s86, %s88
    %p95 = scmp.eq.s32.totalorder %s15, 1
    %p96 = por %p94, %p95
    %p97 = scmp.ne.s32.totalorder %s88, %s89
    %p98 = scmp.eq.s32.totalorder %s15, 0
    %p99 = por %p97, %p98
    %p100 = scmp.ne.s32.totalorder %s88, %s89
    %p101 = scmp.eq.s32.totalorder %s16, 1
    %p102 = por %p100, %p101
    %p104 = scmp.ne.s32.totalorder %s89, %s103
    %p105 = scmp.eq.s32.totalorder %s16, 0
    %p106 = por %p104, %p105
    %s108 = sadd.s32 %s107, 1
    %p111 = scmp.eq.s32.totalorder %s10, 1
    %p112 = scmp.ne.s32.totalorder %s107, %s109
    %p113 = scmp.eq.s32.totalorder %s10, 0
    %p114 = por %p112, %p113
    %p115 = scmp.ne.s32.totalorder %s107, %s109
    %p116 = scmp.eq.s32.totalorder %s15, 1
    %p117 = por %p115, %p116
    %p118 = scmp.ne.s32.totalorder %s109, %s110
    %p119 = scmp.eq.s32.totalorder %s15, 0
    %p120 = por %p118, %p119
    %p121 = scmp.ne.s32.totalorder %s109, %s110
    %p122 = scmp.eq.s32.totalorder %s16, 1
    %p123 = por %p121, %p122
    %p125 = scmp.ne.s32.totalorder %s110, %s124
    %p126 = scmp.eq.s32.totalorder %s16, 0
    %p127 = por %p125, %p126
    %s128 = ssub.s32 %s17, %s29
    %s129 = ssub.s32 %s18, %s25
    %s130 = sor.u32 %s128, %s129
    %p131 = scmp.eq.s32.totalorder %s130, 0
    %s133 = sadd.s32 %s132, 1
    %s134 = scalar_select %p131, %s132, %s133
    %p137 = pneg %p131
    %p138 = scmp.eq.s32.totalorder %s10, 1
    %p139 = por %p137, %p138
    %p140 = scmp.ne.s32.totalorder %s132, %s135
    %p141 = scmp.eq.s32.totalorder %s10, 0
    %p142 = por %p140, %p141
    %p143 = scmp.ne.s32.totalorder %s132, %s135
    %p144 = scmp.eq.s32.totalorder %s15, 1
    %p145 = por %p143, %p144
    %p146 = scmp.ne.s32.totalorder %s135, %s136
    %p147 = scmp.eq.s32.totalorder %s15, 0
    %p148 = por %p146, %p147
    %p149 = scmp.ne.s32.totalorder %s135, %s136
    %p150 = scmp.eq.s32.totalorder %s16, 1
    %p151 = por %p149, %p150
    %p153 = scmp.ne.s32.totalorder %s136, %s152
    %p154 = scmp.eq.s32.totalorder %s16, 0
    %p155 = por %p153, %p154
    %p156 = scmp.le.s32.totalorder 1, %s10
    %p157 = scmp.lt.s32.totalorder %s10, 3
    %p158 = pnand %p156, %p157
    %p159 = pneg %p158
    // Predicated region
    $region9: #{ssm_block_forward.7} parent=5 // pred_check
      _
    $region10: #{ssm_block_forward.7} parent=5 // pred_check_branch
      %161 = sbr.rel (%p158) target = $region12
    $region11: #{ssm_block_forward.7} parent=5 // pred_region
      %s162 = ssub.s32 %s10, 1
      // Predicated region
      $region13: #{ssm_block_forward.7} parent=11 // pred_check
        %p163 = pneg %p99
      $region14: #{ssm_block_forward.7} parent=11 // pred_check_branch
        %165 = sbr.rel (%p163) target = $region16
      $region15: #{ssm_block_forward.7} parent=11 // pred_region
        _
      $region16: #{ssm_block_forward.7} parent=11 // pred_fallthru
        _
      // Predicated region
      $region17: #{ssm_block_forward.7} parent=11 // pred_check
        %p166 = pneg %p120
      $region18: #{ssm_block_forward.7} parent=11 // pred_check_branch
        %168 = sbr.rel (%p166) target = $region20
      $region19: #{ssm_block_forward.7} parent=11 // pred_region
        _
      $region20: #{ssm_block_forward.7} parent=11 // pred_fallthru
        _
    $region12: #{ssm_block_forward.7} parent=5 // pred_fallthru
      _
    %p169 = scmp.lt.s32.totalorder %s10, 2
    // Predicated region
    $region21: #{ssm_block_forward.7} parent=5 // pred_check
      %p170 = pneg %p169
    $region22: #{ssm_block_forward.7} parent=5 // pred_check_branch
      %172 = sbr.rel (%p170) target = $region24
    $region23: #{ssm_block_forward.7} parent=5 // pred_region
      // Predicated region
      $region25: #{ssm_block_forward.7} parent=23 // pred_check
        %p173 = pneg %p44
      $region26: #{ssm_block_forward.7} parent=23 // pred_check_branch
        %175 = sbr.rel (%p173) target = $region28
      $region27: #{ssm_block_forward.7} parent=23 // pred_region
        %p176 = scmp.lt.s32.totalorder %s17, 1
        %s177 = scalar_select %p176, %s17, 1
        %p178 = scmp.lt.s32.totalorder %s18, 0
        %s179 = scalar_select %p178, %s18, 0
        %s180 = smul.addr %s177, 8
        %s181 = sadd.s32 %s179, %s180
        %s182 = scalar_lea.vmem %s0, %s181
      $region28: #{ssm_block_forward.7} parent=23 // pred_fallthru
        _
      // Predicated region
      $region29: #{ssm_block_forward.7} parent=23 // pred_check
        %p183 = pneg %p72
      $region30: #{ssm_block_forward.7} parent=23 // pred_check_branch
        %185 = sbr.rel (%p183) target = $region32
      $region31: #{ssm_block_forward.7} parent=23 // pred_region
        %p186 = scmp.lt.s32.totalorder %s17, 1
        %s187 = scalar_select %p186, %s17, 1
        %p188 = scmp.lt.s32.totalorder %s18, 0
        %s189 = scalar_select %p188, %s18, 0
        %s190 = smul.addr %s187, 8
        %s191 = sadd.s32 %s189, %s190
        %s192 = scalar_lea.vmem %s1, %s191
      $region32: #{ssm_block_forward.7} parent=23 // pred_fallthru
        _
    $region24: #{ssm_block_forward.7} parent=5 // pred_fallthru
      _
    %p193 = scmp.le.s32.totalorder 1, %s10
    %p194 = scmp.lt.s32.totalorder %s10, 3
    %p195 = pnand %p193, %p194
    %p196 = pneg %p195
    // Predicated region
    $region33: #{ssm_block_forward.7} parent=5 // pred_check
      _
    $region34: #{ssm_block_forward.7} parent=5 // pred_check_branch
      %198 = sbr.rel (%p195) target = $region36
    $region35: #{ssm_block_forward.7} parent=5 // pred_region
      %s199 = ssub.s32 %s10, 1
      %p200 = scmp.lt.s32.totalorder %s19, 1
      %s201 = scalar_select %p200, %s19, 1
      %p202 = scmp.lt.s32.totalorder %s20, 0
      %s203 = scalar_select %p202, %s20, 0
      %s204 = smul.addr %s201, 8
      %s205 = sadd.s32 %s203, %s204
      %s206 = scalar_lea.vmem %s0, %s205
      %p207 = pneg %p50
      %p208 = pneg %p47
      %p209 = scmp.lt.s32.totalorder %s19, 1
      %s210 = scalar_select %p209, %s19, 1
      %p211 = scmp.lt.s32.totalorder %s20, 0
      %s212 = scalar_select %p211, %s20, 0
      %s213 = smul.addr %s210, 8
      %s214 = sadd.s32 %s212, %s213
      %s215 = scalar_lea.vmem %s1, %s214
      %p216 = pneg %p78
      %p217 = pneg %p75
      %p218 = pneg %p99
      %p219 = pneg %p96
      %p220 = pneg %p120
      %p221 = pneg %p117
      %p222 = pneg %p148
      %p223 = pneg %p145
      %p224 = scmp.lt.s32.totalorder %s19, 1
      %s225 = scalar_select %p224, %s19, 1
      %p226 = scmp.lt.s32.totalorder %s20, 0
      %s227 = scalar_select %p226, %s20, 0
      %s228 = smul.addr %s225, 8
      %s229 = sadd.s32 %s227, %s228
      %s230 = smul.addr %s229, 2
      %s231 = scalar_lea.vmem %s4, %s230
      %p232 = scmp.lt.s32.totalorder %s19, 1
      %s233 = scalar_select %p232, %s19, 1
      %p234 = scmp.lt.s32.totalorder %s20, 0
      %s235 = scalar_select %p234, %s20, 0
      %s236 = smul.addr %s233, 8
      %s237 = sadd.s32 %s235, %s236
      %s238 = scalar_lea.vmem %s0, %s237
      %p239 = scmp.lt.s32.totalorder %s19, 1
      %s240 = scalar_select %p239, %s19, 1
      %p241 = scmp.lt.s32.totalorder %s20, 0
      %s242 = scalar_select %p241, %s20, 0
      %s243 = smul.addr %s240, 8
      %s244 = sadd.s32 %s242, %s243
      %s245 = scalar_lea.vmem %s1, %s244
      %p246 = scmp.lt.s32.totalorder %s19, 1
      %s247 = scalar_select %p246, %s19, 1
      %p248 = scmp.lt.s32.totalorder %s20, 0
      %s249 = scalar_select %p248, %s20, 0
      %s250 = smul.addr %s247, 8
      %s251 = sadd.s32 %s249, %s250
      %s252 = smul.addr %s251, 2
      %s253 = scalar_lea.vmem %s4, %s252
      %v254 = vld [vmem:[%s238] sm:$0x1]
      %v255 = vld [vmem:[%s238 + $0x1] sm:$0x1]
      %v256 = vld [vmem:[%s238 + $0x2] sm:$0x1]
      %v257 = vld [vmem:[%s238 + $0x3] sm:$0x1]
      %v258 = vld [vmem:[%s238 + $0x4] sm:$0x1]
      %v259 = vld [vmem:[%s238 + $0x5] sm:$0x1]
      %v260 = vld [vmem:[%s238 + $0x6] sm:$0x1]
      %v261 = vld [vmem:[%s238 + $0x7] sm:$0x1]
      %v262 = vunpack.c.l.bf16 %v254
      %v263 = vunpack.c.l.bf16 %v255
      %v264 = vunpack.c.l.bf16 %v256
      %v265 = vunpack.c.l.bf16 %v257
      %v266 = vunpack.c.l.bf16 %v258
      %v267 = vunpack.c.l.bf16 %v259
      %v268 = vunpack.c.l.bf16 %v260
      %v269 = vunpack.c.l.bf16 %v261
      %v270 = vld [vmem:[%s245] sm:$0x1]
      %v271 = vld [vmem:[%s245 + $0x1] sm:$0x1]
      %v272 = vld [vmem:[%s245 + $0x2] sm:$0x1]
      %v273 = vld [vmem:[%s245 + $0x3] sm:$0x1]
      %v274 = vld [vmem:[%s245 + $0x4] sm:$0x1]
      %v275 = vld [vmem:[%s245 + $0x5] sm:$0x1]
      %v276 = vld [vmem:[%s245 + $0x6] sm:$0x1]
      %v277 = vld [vmem:[%s245 + $0x7] sm:$0x1]
      %v278 = vunpack.c.l.bf16 %v270
      %v279 = vunpack.c.l.bf16 %v271
      %v280 = vunpack.c.l.bf16 %v272
      %v281 = vunpack.c.l.bf16 %v273
      %v282 = vunpack.c.l.bf16 %v274
      %v283 = vunpack.c.l.bf16 %v275
      %v284 = vunpack.c.l.bf16 %v276
      %v285 = vunpack.c.l.bf16 %v277
      %v286 = vld [vmem:[%s2] sm:$0x1]
      %v287 = vld [vmem:[%s2 + $0x1] sm:$0x1]
      %v288 = vld [vmem:[%s2 + $0x2] sm:$0x1]
      %v289 = vld [vmem:[%s2 + $0x3] sm:$0x1]
      %v290 = vld [vmem:[%s2 + $0x4] sm:$0x1]
      %v291 = vld [vmem:[%s2 + $0x5] sm:$0x1]
      %v292 = vld [vmem:[%s2 + $0x6] sm:$0x1]
      %v293 = vld [vmem:[%s2 + $0x7] sm:$0x1]
      %v302 = vlaneseq
      %v303 = vshrl.u32 %v302, 7
      %v304 = vsub.s32 0, %v303
      %v305 = vrot.slane %v286, %v304
      %v306 = vlaneseq
      %v307 = vshrl.u32 %v306, 7
      %v308 = vsub.s32 0, %v307
      %v309 = vrot.slane %v287, %v308
      %v310 = vlaneseq
      %v311 = vshrl.u32 %v310, 7
      %v312 = vsub.s32 0, %v311
      %v313 = vrot.slane %v288, %v312
      %v314 = vlaneseq
      %v315 = vshrl.u32 %v314, 7
      %v316 = vsub.s32 0, %v315
      %v317 = vrot.slane %v289, %v316
      %v318 = vlaneseq
      %v319 = vshrl.u32 %v318, 7
      %v320 = vsub.s32 0, %v319
      %v321 = vrot.slane %v290, %v320
      %v322 = vlaneseq
      %v323 = vshrl.u32 %v322, 7
      %v324 = vsub.s32 0, %v323
      %v325 = vrot.slane %v291, %v324
      %v326 = vlaneseq
      %v327 = vshrl.u32 %v326, 7
      %v328 = vsub.s32 0, %v327
      %v329 = vrot.slane %v292, %v328
      %v330 = vlaneseq
      %v331 = vshrl.u32 %v330, 7
      %v332 = vsub.s32 0, %v331
      %v333 = vrot.slane %v293, %v332
      %334 = vset.pattern.permute.xlu0 0
      %335 = vperm.xlu0 %334, %v305
      %v336 = vpop.permute.xlu0 %335
      %338 = vset.pattern.permute.xlu0 0
      %339 = vperm.xlu0 %338, %v309
      %v340 = vpop.permute.xlu0 %339
      %342 = vset.pattern.permute.xlu0 0
      %343 = vperm.xlu0 %342, %v313
      %v344 = vpop.permute.xlu0 %343
      %346 = vset.pattern.permute.xlu0 0
      %347 = vperm.xlu0 %346, %v317
      %v348 = vpop.permute.xlu0 %347
      %350 = vset.pattern.permute.xlu0 0
      %351 = vperm.xlu0 %350, %v321
      %v352 = vpop.permute.xlu0 %351
      %354 = vset.pattern.permute.xlu0 0
      %355 = vperm.xlu0 %354, %v325
      %v356 = vpop.permute.xlu0 %355
      %358 = vset.pattern.permute.xlu0 0
      %359 = vperm.xlu0 %358, %v329
      %v360 = vpop.permute.xlu0 %359
      %362 = vset.pattern.permute.xlu0 0
      %363 = vperm.xlu0 %362, %v333
      %v364 = vpop.permute.xlu0 %363
      %v366 = vmul.f32 %v278, %v336
      %v367 = vmul.f32 %v279, %v340
      %v368 = vmul.f32 %v280, %v344
      %v369 = vmul.f32 %v281, %v348
      %v370 = vmul.f32 %v282, %v352
      %v371 = vmul.f32 %v283, %v356
      %v372 = vmul.f32 %v284, %v360
      %v373 = vmul.f32 %v285, %v364
      %v374 = vld [vmem:[%s3] sm:$0x1]
      %v375 = vld [vmem:[%s3 + $0x1] sm:$0x1]
      %v376 = vld [vmem:[%s3 + $0x2] sm:$0x1]
      %v377 = vld [vmem:[%s3 + $0x3] sm:$0x1]
      %v378 = vld [vmem:[%s3 + $0x4] sm:$0x1]
      %v379 = vld [vmem:[%s3 + $0x5] sm:$0x1]
      %v380 = vld [vmem:[%s3 + $0x6] sm:$0x1]
      %v381 = vld [vmem:[%s3 + $0x7] sm:$0x1]
      %v390 = vlaneseq
      %v391 = vshrl.u32 %v390, 7
      %v392 = vsub.s32 0, %v391
      %v393 = vrot.slane %v374, %v392
      %v394 = vlaneseq
      %v395 = vshrl.u32 %v394, 7
      %v396 = vsub.s32 0, %v395
      %v397 = vrot.slane %v375, %v396
      %v398 = vlaneseq
      %v399 = vshrl.u32 %v398, 7
      %v400 = vsub.s32 0, %v399
      %v401 = vrot.slane %v376, %v400
      %v402 = vlaneseq
      %v403 = vshrl.u32 %v402, 7
      %v404 = vsub.s32 0, %v403
      %v405 = vrot.slane %v377, %v404
      %v406 = vlaneseq
      %v407 = vshrl.u32 %v406, 7
      %v408 = vsub.s32 0, %v407
      %v409 = vrot.slane %v378, %v408
      %v410 = vlaneseq
      %v411 = vshrl.u32 %v410, 7
      %v412 = vsub.s32 0, %v411
      %v413 = vrot.slane %v379, %v412
      %v414 = vlaneseq
      %v415 = vshrl.u32 %v414, 7
      %v416 = vsub.s32 0, %v415
      %v417 = vrot.slane %v380, %v416
      %v418 = vlaneseq
      %v419 = vshrl.u32 %v418, 7
      %v420 = vsub.s32 0, %v419
      %v421 = vrot.slane %v381, %v420
      %422 = vset.pattern.permute.xlu0 0
      %423 = vperm.xlu0 %422, %v393
      %v424 = vpop.permute.xlu0 %423
      %426 = vset.pattern.permute.xlu0 0
      %427 = vperm.xlu0 %426, %v397
      %v428 = vpop.permute.xlu0 %427
      %430 = vset.pattern.permute.xlu0 0
      %431 = vperm.xlu0 %430, %v401
      %v432 = vpop.permute.xlu0 %431
      %434 = vset.pattern.permute.xlu0 0
      %435 = vperm.xlu0 %434, %v405
      %v436 = vpop.permute.xlu0 %435
      %438 = vset.pattern.permute.xlu0 0
      %439 = vperm.xlu0 %438, %v409
      %v440 = vpop.permute.xlu0 %439
      %442 = vset.pattern.permute.xlu0 0
      %443 = vperm.xlu0 %442, %v413
      %v444 = vpop.permute.xlu0 %443
      %446 = vset.pattern.permute.xlu0 0
      %447 = vperm.xlu0 %446, %v417
      %v448 = vpop.permute.xlu0 %447
      %450 = vset.pattern.permute.xlu0 0
      %451 = vperm.xlu0 %450, %v421
      %v452 = vpop.permute.xlu0 %451
      %v454 = vadd.f32 %v366, %v424
      %v455 = vadd.f32 %v367, %v428
      %v456 = vadd.f32 %v368, %v432
      %v457 = vadd.f32 %v369, %v436
      %v458 = vadd.f32 %v370, %v440
      %v459 = vadd.f32 %v371, %v444
      %v460 = vadd.f32 %v372, %v448
      %v461 = vadd.f32 %v373, %v452
      %v462 = vsub.f32 0.0, %v454
      %v463 = vsub.f32 0.0, %v455
      %v464 = vsub.f32 0.0, %v456
      %v465 = vsub.f32 0.0, %v457
      %v466 = vsub.f32 0.0, %v458
      %v467 = vsub.f32 0.0, %v459
      %v468 = vsub.f32 0.0, %v460
      %v469 = vsub.f32 0.0, %v461
      %v470 = vmul.f32 %v462, 1.442695
      %v471 = vpow.pop %v470
      %v472 = vmul.f32 %v463, 1.442695
      %v473 = vpow.pop %v472
      %v474 = vmul.f32 %v464, 1.442695
      %v475 = vpow.pop %v474
      %v476 = vmul.f32 %v465, 1.442695
      %v477 = vpow.pop %v476
      %v478 = vmul.f32 %v466, 1.442695
      %v479 = vpow.pop %v478
      %v480 = vmul.f32 %v467, 1.442695
      %v481 = vpow.pop %v480
      %v482 = vmul.f32 %v468, 1.442695
      %v483 = vpow.pop %v482
      %v484 = vmul.f32 %v469, 1.442695
      %v485 = vpow.pop %v484
      %v486 = vadd.f32 %v471, 1.0
      %v487 = vadd.f32 %v473, 1.0
      %v488 = vadd.f32 %v475, 1.0
      %v489 = vadd.f32 %v477, 1.0
      %v490 = vadd.f32 %v479, 1.0
      %v491 = vadd.f32 %v481, 1.0
      %v492 = vadd.f32 %v483, 1.0
      %v493 = vadd.f32 %v485, 1.0
      %v494 = vrcp.pop %v486
      %v495 = vrcp.pop %v487
      %v496 = vrcp.pop %v488
      %v497 = vrcp.pop %v489
      %v498 = vrcp.pop %v490
      %v499 = vrcp.pop %v491
      %v500 = vrcp.pop %v492
      %v501 = vrcp.pop %v493
      %v502 = vsub.f32 %v454, %v262
      %v503 = vsub.f32 %v455, %v263
      %v504 = vsub.f32 %v456, %v264
      %v505 = vsub.f32 %v457, %v265
      %v506 = vsub.f32 %v458, %v266
      %v507 = vsub.f32 %v459, %v267
      %v508 = vsub.f32 %v460, %v268
      %v509 = vsub.f32 %v461, %v269
      %v510 = vmul.f32 %v494, %v502
      %v511 = vmul.f32 %v495, %v503
      %v512 = vmul.f32 %v496, %v504
      %v513 = vmul.f32 %v497, %v505
      %v514 = vmul.f32 %v498, %v506
      %v515 = vmul.f32 %v499, %v507
      %v516 = vmul.f32 %v500, %v508
      %v517 = vmul.f32 %v501, %v509
      %v518 = vadd.f32 %v262, %v510
      %v519 = vadd.f32 %v263, %v511
      %v520 = vadd.f32 %v264, %v512
      %v521 = vadd.f32 %v265, %v513
      %v522 = vadd.f32 %v266, %v514
      %v523 = vadd.f32 %v267, %v515
      %v524 = vadd.f32 %v268, %v516
      %v525 = vadd.f32 %v269, %v517
      %526 = vst [vmem:[%s253] sm:$0x3] %v518
      %527 = vst [vmem:[%s253 + $0x2] sm:$0x3] %v519
      %528 = vst [vmem:[%s253 + $0x4] sm:$0x3] %v520
      %529 = vst [vmem:[%s253 + $0x6] sm:$0x3] %v521
      %530 = vst [vmem:[%s253 + $0x8] sm:$0x3] %v522
      %531 = vst [vmem:[%s253 + $0xa] sm:$0x3] %v523
      %532 = vst [vmem:[%s253 + $0xc] sm:$0x3] %v524
      %533 = vst [vmem:[%s253 + $0xe] sm:$0x3] %v525
      %p534 = scmp.lt.s32.totalorder %s19, 1
      %s535 = scalar_select %p534, %s19, 1
      %p536 = scmp.lt.s32.totalorder %s20, 0
      %s537 = scalar_select %p536, %s20, 0
      %s538 = smul.addr %s535, 8
      %s539 = sadd.s32 %s537, %s538
      %s540 = smul.addr %s539, 2
      %s541 = scalar_lea.vmem %s4, %s540
      // Predicated region
      $region37: #{ssm_block_forward.7} parent=35 // pred_check
        %p542 = pneg %p145
      $region38: #{ssm_block_forward.7} parent=35 // pred_check_branch
        %544 = sbr.rel (%p542) target = $region40
      $region39: #{ssm_block_forward.7} parent=35 // pred_region
        _
      $region40: #{ssm_block_forward.7} parent=35 // pred_fallthru
        _
    $region36: #{ssm_block_forward.7} parent=5 // pred_fallthru
      _
    %p545 = scmp.le.s32.totalorder 2, %s10
    // Predicated region
    $region41: #{ssm_block_forward.7} parent=5 // pred_check
      %p546 = pneg %p545
    $region42: #{ssm_block_forward.7} parent=5 // pred_check_branch
      %548 = sbr.rel (%p546) target = $region44
    $region43: #{ssm_block_forward.7} parent=5 // pred_region
      %s549 = ssub.s32 %s10, 2
      // Predicated region
      $region45: #{ssm_block_forward.7} parent=43 // pred_check
        %p550 = pneg %p151
      $region46: #{ssm_block_forward.7} parent=43 // pred_check_branch
        %552 = sbr.rel (%p550) target = $region48
      $region47: #{ssm_block_forward.7} parent=43 // pred_region
        %p553 = scmp.lt.s32.totalorder %s21, 1
        %s554 = scalar_select %p553, %s21, 1
        %p555 = scmp.lt.s32.totalorder %s22, 0
        %s556 = scalar_select %p555, %s22, 0
        %s557 = smul.addr %s554, 8
        %s558 = sadd.s32 %s556, %s557
        %s559 = smul.addr %s558, 2
        %s560 = scalar_lea.vmem %s4, %s559
      $region48: #{ssm_block_forward.7} parent=43 // pred_fallthru
        _
    $region44: #{ssm_block_forward.7} parent=5 // pred_fallthru
      _
  $region6: #{ssm_block_forward.7} parent=0 // loop_footer
    %s14 = sadd.s32 1, %s10
  $region7: #{ssm_block_forward.7} parent=0 // loop_footer_branch
    %9 = sbr.rel target = $region3
  $region8: #{ssm_block_forward.7} parent=0 // loop_exit
    _

// kernel: ssm_block_forward.5
$region0: #{ssm_block_forward.5}
  #allocation0 [shape = 'u32[]', space=smem, size = 0x4, offset = 0x4, fixed_abs, tag = 'smem constant byte address 0x4 - core index']
  #allocation1 [shape = 'u32[144,128]{1,0:T(1,128)}', space=vmem, size = 0x12000, scoped, tag = 'internal scratch']
  %s0 = inlined_call_operand.vmem [shape: bf16[2,4,2,128], index: 0, kind: input, shape index: {}]
  %s1 = inlined_call_operand.vmem [shape: bf16[4,4], index: 1, kind: input, shape index: {}]
  %s2 = inlined_call_operand.vmem [shape: bf16[2,8,4], index: 2, kind: input, shape index: {}]
  %s3 = inlined_call_operand.vmem [shape: f32[2,8,1], index: 3, kind: input, shape index: {}]
  %s4 = inlined_call_operand.vmem [shape: bf16[2,8,2,128], index: 4, kind: output, shape index: {0}]
  %s5 = inlined_call_operand.vmem [shape: f32[2,1,2,8], index: 5, kind: output, shape index: {1}]
  %6 = xla_tuple %s4, %s5
  %s7 = sld [smem:[#allocation0]]
  $region57: #{ssm_block_forward.5} parent=0
    _
  %s9 = ssub.s32 1, %s7
  %s10 = scalar_select 0, %s9, %s7
  loop: start=0, step=1, limit=4
  $region2: #{ssm_block_forward.5} parent=0 // loop_pre_header
    _
  $region3: #{ssm_block_forward.5} parent=0 // loop_header
    %s12 = sphi 0, %s16
    %p13 = scmp.ge.s32.totalorder %s12, 4
    %s19 = sphi 0, %s31
    %s20 = sphi 0, %s27
    %s21 = sphi 0, %s19
    %s22 = sphi 0, %s20
    %s23 = sphi 0, %s21
    %s24 = sphi 0, %s22
    %s36 = sphi 0, %s38
    %s39 = sphi 0, %s36
    %s40 = sphi 0, %s39
    %s56 = sphi 0, %s40
    %s60 = sphi 0, %s60
    %s62 = sphi 0, %s60
    %s63 = sphi 0, %s62
    %s77 = sphi 0, %s63
    %s83 = sphi 0, %s85
    %s86 = sphi 0, %s83
    %s87 = sphi 0, %s86
    %s103 = sphi 0, %s87
    %s109 = sphi 0, %s111
    %s112 = sphi 0, %s109
    %s113 = sphi 0, %s112
    %s129 = sphi 0, %s113
    %s137 = sphi 0, %s139
    %s140 = sphi 0, %s137
    %s141 = sphi 0, %s140
    %s157 = sphi 0, %s141
    %s165 = sphi 0, %s167
    %s168 = sphi 0, %s165
    %s169 = sphi 0, %s168
    %s185 = sphi 0, %s169
  $region4: #{ssm_block_forward.5} parent=0 // loop_header_branch
    %15 = sbr.rel (%p13) target = $region8
  $region5: #{ssm_block_forward.5} parent=0 // loop_body
    %s17 = ssub.s32 %s12, 1
    %s18 = ssub.s32 %s12, 2
    %s25 = sadd.s32 1, %s20
    %p26 = scmp.ge.s32.totalorder %s25, 1
    %s27 = scalar_select %p26, 0, %s25
    %s28 = sadd.s32 1, %s19
    %s29 = scalar_select %p26, %s28, %s19
    %p30 = scmp.ge.s32.totalorder %s29, 2
    %s31 = scalar_select %p30, 0, %s29
    %s32 = ssub.s32 %s19, %s31
    %s33 = ssub.s32 %s20, %s27
    %s34 = sor.u32 %s32, %s33
    %p35 = scmp.eq.s32.totalorder %s34, 0
    %s37 = sadd.s32 %s36, 1
    %s38 = scalar_select %p35, %s36, %s37
    %p41 = pneg %p35
    %p42 = scmp.eq.s32.totalorder %s12, 1
    %p43 = por %p41, %p42
    %p44 = scmp.ne.s32.totalorder %s36, %s39
    %p45 = scmp.eq.s32.totalorder %s12, 0
    %p46 = por %p44, %p45
    %p47 = scmp.ne.s32.totalorder %s36, %s39
    %p48 = scmp.eq.s32.totalorder %s17, 1
    %p49 = por %p47, %p48
    %p50 = scmp.ne.s32.totalorder %s39, %s40
    %p51 = scmp.eq.s32.totalorder %s17, 0
    %p52 = por %p50, %p51
    %p53 = scmp.ne.s32.totalorder %s39, %s40
    %p54 = scmp.eq.s32.totalorder %s18, 1
    %p55 = por %p53, %p54
    %p57 = scmp.ne.s32.totalorder %s40, %s56
    %p58 = scmp.eq.s32.totalorder %s18, 0
    %p59 = por %p57, %p58
    %s61 = sadd.s32 %s60, 1
    %p64 = scmp.eq.s32.totalorder %s12, 1
    %p65 = scmp.ne.s32.totalorder %s60, %s62
    %p66 = scmp.eq.s32.totalorder %s12, 0
    %p67 = por %p65, %p66
    %p68 = scmp.ne.s32.totalorder %s60, %s62
    %p69 = scmp.eq.s32.totalorder %s17, 1
    %p70 = por %p68, %p69
    %p71 = scmp.ne.s32.totalorder %s62, %s63
    %p72 = scmp.eq.s32.totalorder %s17, 0
    %p73 = por %p71, %p72
    %p74 = scmp.ne.s32.totalorder %s62, %s63
    %p75 = scmp.eq.s32.totalorder %s18, 1
    %p76 = por %p74, %p75
    %p78 = scmp.ne.s32.totalorder %s63, %s77
    %p79 = scmp.eq.s32.totalorder %s18, 0
    %p80 = por %p78, %p79
    %s81 = ssub.s32 %s19, %s31
    %p82 = scmp.eq.s32.totalorder %s81, 0
    %s84 = sadd.s32 %s83, 1
    %s85 = scalar_select %p82, %s83, %s84
    %p88 = pneg %p82
    %p89 = scmp.eq.s32.totalorder %s12, 1
    %p90 = por %p88, %p89
    %p91 = scmp.ne.s32.totalorder %s83, %s86
    %p92 = scmp.eq.s32.totalorder %s12, 0
    %p93 = por %p91, %p92
    %p94 = scmp.ne.s32.totalorder %s83, %s86
    %p95 = scmp.eq.s32.totalorder %s17, 1
    %p96 = por %p94, %p95
    %p97 = scmp.ne.s32.totalorder %s86, %s87
    %p98 = scmp.eq.s32.totalorder %s17, 0
    %p99 = por %p97, %p98
    %p100 = scmp.ne.s32.totalorder %s86, %s87
    %p101 = scmp.eq.s32.totalorder %s18, 1
    %p102 = por %p100, %p101
    %p104 = scmp.ne.s32.totalorder %s87, %s103
    %p105 = scmp.eq.s32.totalorder %s18, 0
    %p106 = por %p104, %p105
    %s107 = ssub.s32 %s19, %s31
    %p108 = scmp.eq.s32.totalorder %s107, 0
    %s110 = sadd.s32 %s109, 1
    %s111 = scalar_select %p108, %s109, %s110
    %p114 = pneg %p108
    %p115 = scmp.eq.s32.totalorder %s12, 1
    %p116 = por %p114, %p115
    %p117 = scmp.ne.s32.totalorder %s109, %s112
    %p118 = scmp.eq.s32.totalorder %s12, 0
    %p119 = por %p117, %p118
    %p120 = scmp.ne.s32.totalorder %s109, %s112
    %p121 = scmp.eq.s32.totalorder %s17, 1
    %p122 = por %p120, %p121
    %p123 = scmp.ne.s32.totalorder %s112, %s113
    %p124 = scmp.eq.s32.totalorder %s17, 0
    %p125 = por %p123, %p124
    %p126 = scmp.ne.s32.totalorder %s112, %s113
    %p127 = scmp.eq.s32.totalorder %s18, 1
    %p128 = por %p126, %p127
    %p130 = scmp.ne.s32.totalorder %s113, %s129
    %p131 = scmp.eq.s32.totalorder %s18, 0
    %p132 = por %p130, %p131
    %s133 = ssub.s32 %s19, %s31
    %s134 = ssub.s32 %s20, %s27
    %s135 = sor.u32 %s133, %s134
    %p136 = scmp.eq.s32.totalorder %s135, 0
    %s138 = sadd.s32 %s137, 1
    %s139 = scalar_select %p136, %s137, %s138
    %p142 = pneg %p136
    %p143 = scmp.eq.s32.totalorder %s12, 1
    %p144 = por %p142, %p143
    %p145 = scmp.ne.s32.totalorder %s137, %s140
    %p146 = scmp.eq.s32.totalorder %s12, 0
    %p147 = por %p145, %p146
    %p148 = scmp.ne.s32.totalorder %s137, %s140
    %p149 = scmp.eq.s32.totalorder %s17, 1
    %p150 = por %p148, %p149
    %p151 = scmp.ne.s32.totalorder %s140, %s141
    %p152 = scmp.eq.s32.totalorder %s17, 0
    %p153 = por %p151, %p152
    %p154 = scmp.ne.s32.totalorder %s140, %s141
    %p155 = scmp.eq.s32.totalorder %s18, 1
    %p156 = por %p154, %p155
    %p158 = scmp.ne.s32.totalorder %s141, %s157
    %p159 = scmp.eq.s32.totalorder %s18, 0
    %p160 = por %p158, %p159
    %s161 = ssub.s32 %s19, %s31
    %s162 = ssub.s32 %s20, %s27
    %s163 = sor.u32 %s161, %s162
    %p164 = scmp.eq.s32.totalorder %s163, 0
    %s166 = sadd.s32 %s165, 1
    %s167 = scalar_select %p164, %s165, %s166
    %p170 = pneg %p164
    %p171 = scmp.eq.s32.totalorder %s12, 1
    %p172 = por %p170, %p171
    %p173 = scmp.ne.s32.totalorder %s165, %s168
    %p174 = scmp.eq.s32.totalorder %s12, 0
    %p175 = por %p173, %p174
    %p176 = scmp.ne.s32.totalorder %s165, %s168
    %p177 = scmp.eq.s32.totalorder %s17, 1
    %p178 = por %p176, %p177
    %p179 = scmp.ne.s32.totalorder %s168, %s169
    %p180 = scmp.eq.s32.totalorder %s17, 0
    %p181 = por %p179, %p180
    %p182 = scmp.ne.s32.totalorder %s168, %s169
    %p183 = scmp.eq.s32.totalorder %s18, 1
    %p184 = por %p182, %p183
    %p186 = scmp.ne.s32.totalorder %s169, %s185
    %p187 = scmp.eq.s32.totalorder %s18, 0
    %p188 = por %p186, %p187
    %p189 = scmp.le.s32.totalorder 1, %s12
    %p190 = scmp.lt.s32.totalorder %s12, 3
    %p191 = pnand %p189, %p190
    %p192 = pneg %p191
    // Predicated region
    $region9: #{ssm_block_forward.5} parent=5 // pred_check
      _
    $region10: #{ssm_block_forward.5} parent=5 // pred_check_branch
      %194 = sbr.rel (%p191) target = $region12
    $region11: #{ssm_block_forward.5} parent=5 // pred_region
      %s195 = ssub.s32 %s12, 1
      // Predicated region
      $region13: #{ssm_block_forward.5} parent=11 // pred_check
        %p196 = pneg %p73
      $region14: #{ssm_block_forward.5} parent=11 // pred_check_branch
        %198 = sbr.rel (%p196) target = $region16
      $region15: #{ssm_block_forward.5} parent=11 // pred_region
        _
      $region16: #{ssm_block_forward.5} parent=11 // pred_fallthru
        _
    $region12: #{ssm_block_forward.5} parent=5 // pred_fallthru
      _
    %p199 = scmp.lt.s32.totalorder %s12, 2
    // Predicated region
    $region17: #{ssm_block_forward.5} parent=5 // pred_check
      %p200 = pneg %p199
    $region18: #{ssm_block_forward.5} parent=5 // pred_check_branch
      %202 = sbr.rel (%p200) target = $region20
    $region19: #{ssm_block_forward.5} parent=5 // pred_region
      // Predicated region
      $region21: #{ssm_block_forward.5} parent=19 // pred_check
        %p203 = pneg %p46
      $region22: #{ssm_block_forward.5} parent=19 // pred_check_branch
        %205 = sbr.rel (%p203) target = $region24
      $region23: #{ssm_block_forward.5} parent=19 // pred_region
        %p206 = scmp.lt.s32.totalorder %s19, 1
        %s207 = scalar_select %p206, %s19, 1
        %p208 = scmp.lt.s32.totalorder %s20, 0
        %s209 = scalar_select %p208, %s20, 0
        %s210 = smul.addr %s207, 4
        %s211 = sadd.s32 %s209, %s210
        %s212 = scalar_lea.vmem %s0, %s211
      $region24: #{ssm_block_forward.5} parent=19 // pred_fallthru
        _
      // Predicated region
      $region25: #{ssm_block_forward.5} parent=19 // pred_check
        %p213 = pneg %p93
      $region26: #{ssm_block_forward.5} parent=19 // pred_check_branch
        %215 = sbr.rel (%p213) target = $region28
      $region27: #{ssm_block_forward.5} parent=19 // pred_region
        %p216 = scmp.lt.s32.totalorder %s19, 1
        %s217 = scalar_select %p216, %s19, 1
        %s218 = smul.addr %s217, 4
        %s219 = scalar_lea.vmem %s2, %s218
      $region28: #{ssm_block_forward.5} parent=19 // pred_fallthru
        _
      // Predicated region
      $region29: #{ssm_block_forward.5} parent=19 // pred_check
        %p220 = pneg %p119
      $region30: #{ssm_block_forward.5} parent=19 // pred_check_branch
        %222 = sbr.rel (%p220) target = $region32
      $region31: #{ssm_block_forward.5} parent=19 // pred_region
        %p223 = scmp.lt.s32.totalorder %s19, 1
        %s224 = scalar_select %p223, %s19, 1
        %s225 = smul.addr %s224, 8
        %s226 = scalar_lea.vmem %s3, %s225
      $region32: #{ssm_block_forward.5} parent=19 // pred_fallthru
        _
    $region20: #{ssm_block_forward.5} parent=5 // pred_fallthru
      _
    %p227 = scmp.le.s32.totalorder 1, %s12
    %p228 = scmp.lt.s32.totalorder %s12, 3
    %p229 = pnand %p227, %p228
    %p230 = pneg %p229
    // Predicated region
    $region33: #{ssm_block_forward.5} parent=5 // pred_check
      _
    $region34: #{ssm_block_forward.5} parent=5 // pred_check_branch
      %232 = sbr.rel (%p229) target = $region36
    $region35: #{ssm_block_forward.5} parent=5 // pred_region
      %s233 = ssub.s32 %s12, 1
      %p234 = scmp.lt.s32.totalorder %s21, 1
      %s235 = scalar_select %p234, %s21, 1
      %p236 = scmp.lt.s32.totalorder %s22, 0
      %s237 = scalar_select %p236, %s22, 0
      %s238 = smul.addr %s235, 4
      %s239 = sadd.s32 %s237, %s238
      %s240 = scalar_lea.vmem %s0, %s239
      %p241 = pneg %p52
      %p242 = pneg %p49
      %p243 = pneg %p73
      %p244 = pneg %p70
      %p245 = scmp.lt.s32.totalorder %s21, 1
      %s246 = scalar_select %p245, %s21, 1
      %s247 = smul.addr %s246, 4
      %s248 = scalar_lea.vmem %s2, %s247
      %p249 = pneg %p99
      %p250 = pneg %p96
      %p251 = scmp.lt.s32.totalorder %s21, 1
      %s252 = scalar_select %p251, %s21, 1
      %s253 = smul.addr %s252, 8
      %s254 = scalar_lea.vmem %s3, %s253
      %p255 = pneg %p125
      %p256 = pneg %p122
      %p257 = pneg %p153
      %p258 = pneg %p150
      %p259 = scmp.lt.s32.totalorder %s21, 1
      %s260 = scalar_select %p259, %s21, 1
      %p261 = scmp.lt.s32.totalorder %s22, 0
      %s262 = scalar_select %p261, %s22, 0
      %s263 = smul.addr %s260, 8
      %s264 = sadd.s32 %s262, %s263
      %s265 = scalar_lea.vmem %s4, %s264
      %p266 = pneg %p181
      %p267 = pneg %p178
      %p268 = scmp.lt.s32.totalorder %s21, 1
      %s269 = scalar_select %p268, %s21, 1
      %p270 = scmp.lt.s32.totalorder %s22, 0
      %s271 = scalar_select %p270, %s22, 0
      %s272 = sadd.s32 %s271, %s269
      %s273 = smul.addr %s272, 2
      %s274 = scalar_lea.vmem %s5, %s273
      %p275 = scmp.lt.s32.totalorder %s21, 1
      %s276 = scalar_select %p275, %s21, 1
      %p277 = scmp.lt.s32.totalorder %s22, 0
      %s278 = scalar_select %p277, %s22, 0
      %s279 = smul.addr %s276, 4
      %s280 = sadd.s32 %s278, %s279
      %s281 = scalar_lea.vmem %s0, %s280
      %p282 = scmp.lt.s32.totalorder %s21, 1
      %s283 = scalar_select %p282, %s21, 1
      %s284 = smul.addr %s283, 4
      %s285 = scalar_lea.vmem %s2, %s284
      %p286 = scmp.lt.s32.totalorder %s21, 1
      %s287 = scalar_select %p286, %s21, 1
      %s288 = smul.addr %s287, 8
      %s289 = scalar_lea.vmem %s3, %s288
      %p290 = scmp.lt.s32.totalorder %s21, 1
      %s291 = scalar_select %p290, %s21, 1
      %p292 = scmp.lt.s32.totalorder %s22, 0
      %s293 = scalar_select %p292, %s22, 0
      %s294 = smul.addr %s291, 8
      %s295 = sadd.s32 %s293, %s294
      %s296 = scalar_lea.vmem %s4, %s295
      %p297 = scmp.lt.s32.totalorder %s21, 1
      %s298 = scalar_select %p297, %s21, 1
      %p299 = scmp.lt.s32.totalorder %s22, 0
      %s300 = scalar_select %p299, %s22, 0
      %s301 = sadd.s32 %s300, %s298
      %s302 = smul.addr %s301, 2
      %s303 = scalar_lea.vmem %s5, %s302
      %v305 = vld [vmem:[%s1] sm:$0x3]
      %v306 = vld [vmem:[%s285] sm:$0xf]
      %v307 = vld [vmem:[%s289] sm:$0xff]
      %v308 = vld [vmem:[%s281] sm:$0x1]
      %v309 = vld [vmem:[%s281 + $0x1] sm:$0x1]
      %v310 = vld [vmem:[%s281 + $0x2] sm:$0x1]
      %v311 = vld [vmem:[%s281 + $0x3] sm:$0x1]
      %v317 = vunpack.c.l.s4 1966171168
      %v318 = vunpack.c.0.s8 %v317
      %v319 = vlaneseq
      %v320 = vshrl.u32 %v319, 7
      %v321 = vsub.s32 %v318, %v320
      %v322 = vrot.slane %v308, %v321
      %v324 = vunpack.c.l.s4 1966171168
      %v325 = vunpack.c.0.s8 %v324
      %v326 = vlaneseq
      %v327 = vshrl.u32 %v326, 7
      %v328 = vsub.s32 %v325, %v327
      %v329 = vrot.slane %v322, %v328
      %v331 = vunpack.c.l.s4 1966171168
      %v332 = vunpack.c.0.s8 %v331
      %v333 = vlaneseq
      %v334 = vshrl.u32 %v333, 7
      %v335 = vsub.s32 %v332, %v334
      %v336 = vrot.slane %v309, %v335
      %v338 = vunpack.c.l.s4 1966171168
      %v339 = vunpack.c.0.s8 %v338
      %v340 = vlaneseq
      %v341 = vshrl.u32 %v340, 7
      %v342 = vsub.s32 %v339, %v341
      %v343 = vrot.slane %v336, %v342
      %v345 = vunpack.c.l.s4 1966171168
      %v346 = vunpack.c.0.s8 %v345
      %v347 = vlaneseq
      %v348 = vshrl.u32 %v347, 7
      %v349 = vsub.s32 %v346, %v348
      %v350 = vrot.slane %v310, %v349
      %v352 = vunpack.c.l.s4 1966171168
      %v353 = vunpack.c.0.s8 %v352
      %v354 = vlaneseq
      %v355 = vshrl.u32 %v354, 7
      %v356 = vsub.s32 %v353, %v355
      %v357 = vrot.slane %v350, %v356
      %v359 = vunpack.c.l.s4 1966171168
      %v360 = vunpack.c.0.s8 %v359
      %v361 = vlaneseq
      %v362 = vshrl.u32 %v361, 7
      %v363 = vsub.s32 %v360, %v362
      %v364 = vrot.slane %v311, %v363
      %v366 = vunpack.c.l.s4 1966171168
      %v367 = vunpack.c.0.s8 %v366
      %v368 = vlaneseq
      %v369 = vshrl.u32 %v368, 7
      %v370 = vsub.s32 %v367, %v369
      %v371 = vrot.slane %v364, %v370
      %v372 = vunpack.c.l.b16 %v329
      %v373 = vunpack.c.l.b16 %v343
      %v374 = vunpack.c.l.b16 %v357
      %v375 = vunpack.c.l.b16 %v371
      %v376 = vrot.slane %v373, 7
      %vm377 = vcmask 1041409
      %v378 = vsel %vm377, %v376, %v372
      %v379 = vrot.slane %v374, 6
      %vm380 = vcmask 1042434
      %v381 = vsel %vm380, %v379, %v378
      %v382 = vrot.slane %v375, 5
      %vm383 = vcmask 1043459
      %v384 = vsel %vm383, %v382, %v381
      %v385 = vpack.c.b16 %v384, %v384
      %387 = vxpose.xlu0.c.b16.start [1/8] %v385, 128
      %388 = vxpose.xlu0.c.b16.cont [2/8] 0, 128
      %389 = vxpose.xlu0.c.b16.cont [3/8] 0, 128
      %390 = vxpose.xlu0.c.b16.cont [4/8] 0, 128
      %391 = vxpose.xlu0.c.b16.cont [5/8] 0, 128
      %392 = vxpose.xlu0.c.b16.cont [6/8] 0, 128
      %393 = vxpose.xlu0.c.b16.cont [7/8] 0, 128
      %394 = vxpose.xlu0.c.b16.end [8/8] 0, 128
      %v395 = vpop.trf.xlu0
      %v396 = vpop.trf.xlu0
      %v397 = vpop.trf.xlu0
      %v398 = vpop.trf.xlu0
      %v399 = vpop.trf.xlu0
      %v400 = vpop.trf.xlu0
      %v401 = vpop.trf.xlu0
      %v402 = vpop.trf.xlu0
      %vm403 = vcmask 31744
      %v405 = vsel %vm403, %v395, 0
      %v408 = vsel %vm403, %v396, 0
      %v411 = vsel %vm403, %v397, 0
      %v414 = vsel %vm403, %v398, 0
      %v417 = vsel %vm403, %v399, 0
      %v420 = vsel %vm403, %v400, 0
      %v423 = vsel %vm403, %v401, 0
      %v426 = vsel %vm403, %v402, 0
      %v429 = vsel %vm403, %v305, 0
      %431 = vmatprep.subr.bf16.mxu0 0
      %432 = vmatpush1.bf16.xpose.msra.mxu0 %v429
      %433 = vmatprep.subr.bf16.mxu0 0
      %434 = vmatpush1.bf16.xpose.msra.mxu0 0
      %435 = vmatprep.subr.bf16.mxu0 0
      %436 = vmatpush1.bf16.xpose.msra.mxu0 0
      %437 = vmatprep.subr.bf16.mxu0 0
      %438 = vmatpush1.bf16.xpose.msra.mxu0 0
      %439 = vmatprep.subr.bf16.mxu0 0
      %440 = vmatpush1.bf16.xpose.msra.mxu0 0
      %441 = vmatprep.subr.bf16.mxu0 0
      %442 = vmatpush1.bf16.xpose.msra.mxu0 0
      %443 = vmatprep.subr.bf16.mxu0 0
      %444 = vmatpush1.bf16.xpose.msra.mxu0 0
      %445 = vmatprep.subr.bf16.mxu0 0
      %446 = vmatpush1.bf16.xpose.msra.mxu0 0
      %447 = vmatprep.subr.bf16.mxu0 0
      %448 = vmatpush1.bf16.xpose.msra.mxu0 0
      %449 = vmatprep.subr.bf16.mxu0 0
      %450 = vmatpush1.bf16.xpose.msra.mxu0 0
      %451 = vmatprep.subr.bf16.mxu0 0
      %452 = vmatpush1.bf16.xpose.msra.mxu0 0
      %453 = vmatprep.subr.bf16.mxu0 0
      %454 = vmatpush1.bf16.xpose.msra.mxu0 0
      %455 = vmatprep.subr.bf16.mxu0 0
      %456 = vmatpush1.bf16.xpose.msra.mxu0 0
      %457 = vmatprep.subr.bf16.mxu0 0
      %458 = vmatpush1.bf16.xpose.msra.mxu0 0
      %459 = vmatprep.subr.bf16.mxu0 0
      %460 = vmatpush1.bf16.xpose.msra.mxu0 0
      %461 = vmatprep.subr.bf16.mxu0 0
      %462 = vmatpush1.bf16.xpose.msra.mxu0 0
      %463 = vmatprep.mubr.bf16.mxu0 0
      %464 = vmatmul.mubr.bf16.gmra.mrb[0].mxu0 %v405
      %v465 = vpop.f32.mrb[0].mxu0
      %v466 = vadd.f32 0.0, %v465
      %v467 = vpop.f32.mrb[0].mxu0
      %v468 = vpop.f32.mrb[0].mxu0
      %v469 = vadd.f32 0.0, %v468
      %v470 = vpop.f32.mrb[0].mxu0
      %471 = vmatprep.mubr.bf16.mxu0 0
      %472 = vmatmul.mubr.bf16.gmra.mrb[0].mxu0 %v408
      %v473 = vpop.f32.mrb[0].mxu0
      %v474 = vadd.f32 0.0, %v473
      %v475 = vpop.f32.mrb[0].mxu0
      %v476 = vpop.f32.mrb[0].mxu0
      %v477 = vadd.f32 0.0, %v476
      %v478 = vpop.f32.mrb[0].mxu0
      %479 = vmatprep.mubr.bf16.mxu0 0
      %480 = vmatmul.mubr.bf16.gmra.mrb[0].mxu0 %v411
      %v481 = vpop.f32.mrb[0].mxu0
      %v482 = vadd.f32 0.0, %v481
      %v483 = vpop.f32.mrb[0].mxu0
      %v484 = vpop.f32.mrb[0].mxu0
      %v485 = vadd.f32 0.0, %v484
      %v486 = vpop.f32.mrb[0].mxu0
      %487 = vmatprep.mubr.bf16.mxu0 0
      %488 = vmatmul.mubr.bf16.gmra.mrb[0].mxu0 %v414
      %v489 = vpop.f32.mrb[0].mxu0
      %v490 = vadd.f32 0.0, %v489
      %v491 = vpop.f32.mrb[0].mxu0
      %v492 = vpop.f32.mrb[0].mxu0
      %v493 = vadd.f32 0.0, %v492
      %v494 = vpop.f32.mrb[0].mxu0
      %495 = vmatprep.mubr.bf16.mxu0 0
      %496 = vmatmul.mubr.bf16.gmra.mrb[0].mxu0 %v417
      %v497 = vpop.f32.mrb[0].mxu0
      %v498 = vadd.f32 0.0, %v497
      %v499 = vpop.f32.mrb[0].mxu0
      %v500 = vpop.f32.mrb[0].mxu0
      %v501 = vadd.f32 0.0, %v500
      %v502 = vpop.f32.mrb[0].mxu0
      %503 = vmatprep.mubr.bf16.mxu0 0
      %504 = vmatmul.mubr.bf16.gmra.mrb[0].mxu0 %v420
      %v505 = vpop.f32.mrb[0].mxu0
      %v506 = vadd.f32 0.0, %v505
      %v507 = vpop.f32.mrb[0].mxu0
      %v508 = vpop.f32.mrb[0].mxu0
      %v509 = vadd.f32 0.0, %v508
      %v510 = vpop.f32.mrb[0].mxu0
      %511 = vmatprep.mubr.bf16.mxu0 0
      %512 = vmatmul.mubr.bf16.gmra.mrb[0].mxu0 %v423
      %v513 = vpop.f32.mrb[0].mxu0
      %v514 = vadd.f32 0.0, %v513
      %v515 = vpop.f32.mrb[0].mxu0
      %v516 = vpop.f32.mrb[0].mxu0
      %v517 = vadd.f32 0.0, %v516
      %v518 = vpop.f32.mrb[0].mxu0
      %519 = vmatprep.mubr.bf16.mxu0 0
      %520 = vmatmul.mubr.bf16.gmra.mrb[0].mxu0 %v426
      %v521 = vpop.f32.mrb[0].mxu0
      %v522 = vadd.f32 0.0, %v521
      %v523 = vpop.f32.mrb[0].mxu0
      %v524 = vpop.f32.mrb[0].mxu0
      %v525 = vadd.f32 0.0, %v524
      %v526 = vpop.f32.mrb[0].mxu0
      %527 = vdwg.mxu0
      %528 = vxpose.xlu0.b32.start [1/16] %v466, 128
      %529 = vxpose.xlu0.b32.cont [2/16] %v469, 128
      %530 = vxpose.xlu0.b32.cont [3/16] %v474, 128
      %531 = vxpose.xlu0.b32.cont [4/16] %v477, 128
      %532 = vxpose.xlu0.b32.cont [5/16] %v482, 128
      %533 = vxpose.xlu0.b32.cont [6/16] %v485, 128
      %534 = vxpose.xlu0.b32.cont [7/16] %v490, 128
      %535 = vxpose.xlu0.b32.cont [8/16] %v493, 128
      %536 = vxpose.xlu0.b32.cont [9/16] %v498, 128
      %537 = vxpose.xlu0.b32.cont [10/16] %v501, 128
      %538 = vxpose.xlu0.b32.cont [11/16] %v506, 128
      %539 = vxpose.xlu0.b32.cont [12/16] %v509, 128
      %540 = vxpose.xlu0.b32.cont [13/16] %v514, 128
      %541 = vxpose.xlu0.b32.cont [14/16] %v517, 128
      %542 = vxpose.xlu0.b32.cont [15/16] %v522, 128
      %543 = vxpose.xlu0.b32.end [16/16] %v525, 128
      %v544 = vpop.trf.xlu0
      %v545 = vpop.trf.xlu0
      %v546 = vpop.trf.xlu0
      %v547 = vpop.trf.xlu0
      %v548 = vpop.trf.xlu0
      %v549 = vpop.trf.xlu0
      %v550 = vpop.trf.xlu0
      %v551 = vpop.trf.xlu0
      %v552 = vpop.trf.xlu0
      %v553 = vpop.trf.xlu0
      %v554 = vpop.trf.xlu0
      %v555 = vpop.trf.xlu0
      %v556 = vpop.trf.xlu0
      %v557 = vpop.trf.xlu0
      %v558 = vpop.trf.xlu0
      %v559 = vpop.trf.xlu0
      %v560 = vpack.c.bf16 %v544, %v544
      %562 = vset.pattern.permute.xlu0 0
      %563 = vperm.xlu0 %562, %v307
      %v564 = vpop.permute.xlu0 %563
      %v567 = vsel %vm403, %v306, 0
      %vm569 = vcmask 1041408
      %v571 = vsel %vm569, %v560, 0
      %573 = vmatprep.subr.bf16.mxu0 0
      %574 = vmatpush1.bf16.msra.mxu0 %v571
      %575 = vmatprep.subr.bf16.mxu0 0
      %576 = vmatpush1.bf16.msra.mxu0 0
      %577 = vmatprep.subr.bf16.mxu0 0
      %578 = vmatpush1.bf16.msra.mxu0 0
      %579 = vmatprep.subr.bf16.mxu0 0
      %580 = vmatpush1.bf16.msra.mxu0 0
      %581 = vmatprep.subr.bf16.mxu0 0
      %582 = vmatpush1.bf16.msra.mxu0 0
      %583 = vmatprep.subr.bf16.mxu0 0
      %584 = vmatpush1.bf16.msra.mxu0 0
      %585 = vmatprep.subr.bf16.mxu0 0
      %586 = vmatpush1.bf16.msra.mxu0 0
      %587 = vmatprep.subr.bf16.mxu0 0
      %588 = vmatpush1.bf16.msra.mxu0 0
      %589 = vmatprep.subr.bf16.mxu0 0
      %590 = vmatpush1.bf16.msra.mxu0 0
      %591 = vmatprep.subr.bf16.mxu0 0
      %592 = vmatpush1.bf16.msra.mxu0 0
      %593 = vmatprep.subr.bf16.mxu0 0
      %594 = vmatpush1.bf16.msra.mxu0 0
      %595 = vmatprep.subr.bf16.mxu0 0
      %596 = vmatpush1.bf16.msra.mxu0 0
      %597 = vmatprep.subr.bf16.mxu0 0
      %598 = vmatpush1.bf16.msra.mxu0 0
      %599 = vmatprep.subr.bf16.mxu0 0
      %600 = vmatpush1.bf16.msra.mxu0 0
      %601 = vmatprep.subr.bf16.mxu0 0
      %602 = vmatpush1.bf16.msra.mxu0 0
      %603 = vmatprep.subr.bf16.mxu0 0
      %604 = vmatpush1.bf16.msra.mxu0 0
      %605 = vmatprep.mubr.bf16.mxu0 0
      %606 = vmatmul.mubr.bf16.gmra.mrb[0].mxu0 %v567
      %v607 = vpop.f32.mrb[0].mxu0
      %v608 = vadd.f32 %v564, %v607
      %v609 = vpop.f32.mrb[0].mxu0
      %v610 = vpop.f32.mrb[0].mxu0
      %v611 = vpop.f32.mrb[0].mxu0
      %612 = vdwg.mxu0
      %v613 = vpack.c.bf16 %v608, %v608
      %v616 = vunpack.c.l.s4 1966171168
      %v617 = vunpack.c.0.s8 %v616
      %v618 = vlaneseq
      %v619 = vshrl.u32 %v618, 7
      %v620 = vsub.s32 %v617, %v619
      %v621 = vrot.slane %v613, %v620
      %v622 = vcombine.high %v621, %v621
      %v624 = vunpack.c.l.s4 1966171168
      %v625 = vunpack.c.0.s8 %v624
      %v626 = vlaneseq
      %v627 = vshrl.u32 %v626, 7
      %v628 = vsub.s32 %v625, %v627
      %v629 = vrot.slane %v621, %v628
      %v631 = vunpack.c.l.s4 1966171168
      %v632 = vunpack.c.0.s8 %v631
      %v633 = vlaneseq
      %v634 = vshrl.u32 %v633, 7
      %v635 = vsub.s32 %v632, %v634
      %v636 = vrot.slane %v622, %v635
      %v637 = vcombine.high %v629, %v629
      %v638 = vcombine.high %v636, %v636
      %v639 = vunpack.i.l.s16 %v629
      %v640 = vunpack.i.h.s16 %v629
      %v641 = vunpack.i.l.s16 %v636
      %v642 = vunpack.i.h.s16 %v636
      %v643 = vunpack.i.l.s16 %v637
      %v644 = vunpack.i.h.s16 %v637
      %v645 = vunpack.i.l.s16 %v638
      %v646 = vunpack.i.h.s16 %v638
      %v647 = vpack.i.b16 %v639, %v639
      %v648 = vpack.i.b16 %v640, %v640
      %v649 = vpack.i.b16 %v641, %v641
      %v650 = vpack.i.b16 %v642, %v642
      %v651 = vpack.i.b16 %v643, %v643
      %v652 = vpack.i.b16 %v644, %v644
      %v653 = vpack.i.b16 %v645, %v645
      %v654 = vpack.i.b16 %v646, %v646
      %vm663 = vcmask 1040384
      %vm664 = vsmask.f32 256
      %vm665 = vmand %vm663, %vm664
      %v666 = vld [vmem:[%s296] sm:$0x1]
      %v667 = vsel %vm665, %v647, %v666
      %668 = vst [vmem:[%s296] sm:$0x1] %v667
      %v669 = vld [vmem:[%s296 + $0x1] sm:$0x1]
      %v670 = vsel %vm665, %v648, %v669
      %671 = vst [vmem:[%s296 + $0x1] sm:$0x1] %v670
      %v672 = vld [vmem:[%s296 + $0x2] sm:$0x1]
      %v673 = vsel %vm665, %v649, %v672
      %674 = vst [vmem:[%s296 + $0x2] sm:$0x1] %v673
      %v675 = vld [vmem:[%s296 + $0x3] sm:$0x1]
      %v676 = vsel %vm665, %v650, %v675
      %677 = vst [vmem:[%s296 + $0x3] sm:$0x1] %v676
      %v678 = vld [vmem:[%s296 + $0x4] sm:$0x1]
      %v679 = vsel %vm665, %v651, %v678
      %680 = vst [vmem:[%s296 + $0x4] sm:$0x1] %v679
      %v681 = vld [vmem:[%s296 + $0x5] sm:$0x1]
      %v682 = vsel %vm665, %v652, %v681
      %683 = vst [vmem:[%s296 + $0x5] sm:$0x1] %v682
      %v684 = vld [vmem:[%s296 + $0x6] sm:$0x1]
      %v685 = vsel %vm665, %v653, %v684
      %686 = vst [vmem:[%s296 + $0x6] sm:$0x1] %v685
      %v687 = vld [vmem:[%s296 + $0x7] sm:$0x1]
      %v688 = vsel %vm665, %v654, %v687
      %689 = vst [vmem:[%s296 + $0x7] sm:$0x1] %v688
      %690 = vadd.xlane.f32.xlu0 %v608
      %v691 = vpop.xlane.xlu0 %690
      %v692 = vmul.f32 %v608, %v608
      %693 = vadd.xlane.f32.xlu0 %v692
      %v694 = vpop.xlane.xlu0 %693
      %v695 = vld [vmem:[%s281] sm:$0x1]
      %v696 = vld [vmem:[%s281 + $0x1] sm:$0x1]
      %v697 = vld [vmem:[%s281 + $0x2] sm:$0x1]
      %v698 = vld [vmem:[%s281 + $0x3] sm:$0x1]
      %v704 = vunpack.c.l.s4 1966171168
      %v705 = vunpack.c.0.s8 %v704
      %v706 = vlaneseq
      %v707 = vshrl.u32 %v706, 7
      %v708 = vsub.s32 %v705, %v707
      %v709 = vrot.slane %v695, %v708
      %v711 = vunpack.c.l.s4 1966171168
      %v712 = vunpack.c.0.s8 %v711
      %v713 = vlaneseq
      %v714 = vshrl.u32 %v713, 7
      %v715 = vsub.s32 %v712, %v714
      %v716 = vrot.slane %v709, %v715
      %v718 = vunpack.c.l.s4 1966171168
      %v719 = vunpack.c.0.s8 %v718
      %v720 = vlaneseq
      %v721 = vshrl.u32 %v720, 7
      %v722 = vsub.s32 %v719, %v721
      %v723 = vrot.slane %v696, %v722
      %v725 = vunpack.c.l.s4 1966171168
      %v726 = vunpack.c.0.s8 %v725
      %v727 = vlaneseq
      %v728 = vshrl.u32 %v727, 7
      %v729 = vsub.s32 %v726, %v728
      %v730 = vrot.slane %v723, %v729
      %v732 = vunpack.c.l.s4 1966171168
      %v733 = vunpack.c.0.s8 %v732
      %v734 = vlaneseq
      %v735 = vshrl.u32 %v734, 7
      %v736 = vsub.s32 %v733, %v735
      %v737 = vrot.slane %v697, %v736
      %v739 = vunpack.c.l.s4 1966171168
      %v740 = vunpack.c.0.s8 %v739
      %v741 = vlaneseq
      %v742 = vshrl.u32 %v741, 7
      %v743 = vsub.s32 %v740, %v742
      %v744 = vrot.slane %v737, %v743
      %v746 = vunpack.c.l.s4 1966171168
      %v747 = vunpack.c.0.s8 %v746
      %v748 = vlaneseq
      %v749 = vshrl.u32 %v748, 7
      %v750 = vsub.s32 %v747, %v749
      %v751 = vrot.slane %v698, %v750
      %v753 = vunpack.c.l.s4 1966171168
      %v754 = vunpack.c.0.s8 %v753
      %v755 = vlaneseq
      %v756 = vshrl.u32 %v755, 7
      %v757 = vsub.s32 %v754, %v756
      %v758 = vrot.slane %v751, %v757
      %v759 = vunpack.c.l.b16 %v716
      %v760 = vunpack.c.l.b16 %v730
      %v761 = vunpack.c.l.b16 %v744
      %v762 = vunpack.c.l.b16 %v758
      %v763 = vrot.slane %v759, 1
      %v764 = vsel %vm377, %v760, %v763
      %v765 = vrot.slane %v761, 7
      %v766 = vsel %vm380, %v765, %v764
      %v767 = vrot.slane %v762, 6
      %v768 = vsel %vm383, %v767, %v766
      %v769 = vpack.c.b16 %v768, %v768
      %771 = vxpose.xlu0.c.b16.start [1/8] %v769, 128
      %772 = vxpose.xlu0.c.b16.cont [2/8] 0, 128
      %773 = vxpose.xlu0.c.b16.cont [3/8] 0, 128
      %774 = vxpose.xlu0.c.b16.cont [4/8] 0, 128
      %775 = vxpose.xlu0.c.b16.cont [5/8] 0, 128
      %776 = vxpose.xlu0.c.b16.cont [6/8] 0, 128
      %777 = vxpose.xlu0.c.b16.cont [7/8] 0, 128
      %778 = vxpose.xlu0.c.b16.end [8/8] 0, 128
      %v779 = vpop.trf.xlu0
      %v780 = vpop.trf.xlu0
      %v781 = vpop.trf.xlu0
      %v782 = vpop.trf.xlu0
      %v783 = vpop.trf.xlu0
      %v784 = vpop.trf.xlu0
      %v785 = vpop.trf.xlu0
      %v786 = vpop.trf.xlu0
      %v788 = vsel %vm403, %v779, 0
      %v791 = vsel %vm403, %v780, 0
      %v794 = vsel %vm403, %v781, 0
      %v797 = vsel %vm403, %v782, 0
      %v800 = vsel %vm403, %v783, 0
      %v803 = vsel %vm403, %v784, 0
      %v806 = vsel %vm403, %v785, 0
      %v809 = vsel %vm403, %v786, 0
      %811 = vmatprep.subr.bf16.mxu0 0
      %812 = vmatpush1.bf16.xpose.msra.mxu0 %v429
      %813 = vmatprep.subr.bf16.mxu0 0
      %814 = vmatpush1.bf16.xpose.msra.mxu0 0
      %815 = vmatprep.subr.bf16.mxu0 0
      %816 = vmatpush1.bf16.xpose.msra.mxu0 0
      %817 = vmatprep.subr.bf16.mxu0 0
      %818 = vmatpush1.bf16.xpose.msra.mxu0 0
      %819 = vmatprep.subr.bf16.mxu0 0
      %820 = vmatpush1.bf16.xpose.msra.mxu0 0
      %821 = vmatprep.subr.bf16.mxu0 0
      %822 = vmatpush1.bf16.xpose.msra.mxu0 0
      %823 = vmatprep.subr.bf16.mxu0 0
      %824 = vmatpush1.bf16.xpose.msra.mxu0 0
      %825 = vmatprep.subr.bf16.mxu0 0
      %826 = vmatpush1.bf16.xpose.msra.mxu0 0
      %827 = vmatprep.subr.bf16.mxu0 0
      %828 = vmatpush1.bf16.xpose.msra.mxu0 0
      %829 = vmatprep.subr.bf16.mxu0 0
      %830 = vmatpush1.bf16.xpose.msra.mxu0 0
      %831 = vmatprep.subr.bf16.mxu0 0
      %832 = vmatpush1.bf16.xpose.msra.mxu0 0
      %833 = vmatprep.subr.bf16.mxu0 0
      %834 = vmatpush1.bf16.xpose.msra.mxu0 0
      %835 = vmatprep.subr.bf16.mxu0 0
      %836 = vmatpush1.bf16.xpose.msra.mxu0 0
      %837 = vmatprep.subr.bf16.mxu0 0
      %838 = vmatpush1.bf16.xpose.msra.mxu0 0
      %839 = vmatprep.subr.bf16.mxu0 0
      %840 = vmatpush1.bf16.xpose.msra.mxu0 0
      %841 = vmatprep.subr.bf16.mxu0 0
      %842 = vmatpush1.bf16.xpose.msra.mxu0 0
      %843 = vmatprep.mubr.bf16.mxu0 0
      %844 = vmatmul.mubr.bf16.gmra.mrb[0].mxu0 %v788
      %v845 = vpop.f32.mrb[0].mxu0
      %v846 = vadd.f32 0.0, %v845
      %v847 = vpop.f32.mrb[0].mxu0
      %v848 = vpop.f32.mrb[0].mxu0
      %v849 = vadd.f32 0.0, %v848
      %v850 = vpop.f32.mrb[0].mxu0
      %851 = vmatprep.mubr.bf16.mxu0 0
      %852 = vmatmul.mubr.bf16.gmra.mrb[0].mxu0 %v791
      %v853 = vpop.f32.mrb[0].mxu0
      %v854 = vadd.f32 0.0, %v853
      %v855 = vpop.f32.mrb[0].mxu0
      %v856 = vpop.f32.mrb[0].mxu0
      %v857 = vadd.f32 0.0, %v856
      %v858 = vpop.f32.mrb[0].mxu0
      %859 = vmatprep.mubr.bf16.mxu0 0
      %860 = vmatmul.mubr.bf16.gmra.mrb[0].mxu0 %v794
      %v861 = vpop.f32.mrb[0].mxu0
      %v862 = vadd.f32 0.0, %v861
      %v863 = vpop.f32.mrb[0].mxu0
      %v864 = vpop.f32.mrb[0].mxu0
      %v865 = vadd.f32 0.0, %v864
      %v866 = vpop.f32.mrb[0].mxu0
      %867 = vmatprep.mubr.bf16.mxu0 0
      %868 = vmatmul.mubr.bf16.gmra.mrb[0].mxu0 %v797
      %v869 = vpop.f32.mrb[0].mxu0
      %v870 = vadd.f32 0.0, %v869
      %v871 = vpop.f32.mrb[0].mxu0
      %v872 = vpop.f32.mrb[0].mxu0
      %v873 = vadd.f32 0.0, %v872
      %v874 = vpop.f32.mrb[0].mxu0
      %875 = vmatprep.mubr.bf16.mxu0 0
      %876 = vmatmul.mubr.bf16.gmra.mrb[0].mxu0 %v800
      %v877 = vpop.f32.mrb[0].mxu0
      %v878 = vadd.f32 0.0, %v877
      %v879 = vpop.f32.mrb[0].mxu0
      %v880 = vpop.f32.mrb[0].mxu0
      %v881 = vadd.f32 0.0, %v880
      %v882 = vpop.f32.mrb[0].mxu0
      %883 = vmatprep.mubr.bf16.mxu0 0
      %884 = vmatmul.mubr.bf16.gmra.mrb[0].mxu0 %v803
      %v885 = vpop.f32.mrb[0].mxu0
      %v886 = vadd.f32 0.0, %v885
      %v887 = vpop.f32.mrb[0].mxu0
      %v888 = vpop.f32.mrb[0].mxu0
      %v889 = vadd.f32 0.0, %v888
      %v890 = vpop.f32.mrb[0].mxu0
      %891 = vmatprep.mubr.bf16.mxu0 0
      %892 = vmatmul.mubr.bf16.gmra.mrb[0].mxu0 %v806
      %v893 = vpop.f32.mrb[0].mxu0
      %v894 = vadd.f32 0.0, %v893
      %v895 = vpop.f32.mrb[0].mxu0
      %v896 = vpop.f32.mrb[0].mxu0
      %v897 = vadd.f32 0.0, %v896
      %v898 = vpop.f32.mrb[0].mxu0
      %899 = vmatprep.mubr.bf16.mxu0 0
      %900 = vmatmul.mubr.bf16.gmra.mrb[0].mxu0 %v809
      %v901 = vpop.f32.mrb[0].mxu0
      %v902 = vadd.f32 0.0, %v901
      %v903 = vpop.f32.mrb[0].mxu0
      %v904 = vpop.f32.mrb[0].mxu0
      %v905 = vadd.f32 0.0, %v904
      %v906 = vpop.f32.mrb[0].mxu0
      %907 = vdwg.mxu0
      %908 = vxpose.xlu0.b32.start [1/16] %v846, 128
      %909 = vxpose.xlu0.b32.cont [2/16] %v849, 128
      %910 = vxpose.xlu0.b32.cont [3/16] %v854, 128
      %911 = vxpose.xlu0.b32.cont [4/16] %v857, 128
      %912 = vxpose.xlu0.b32.cont [5/16] %v862, 128
      %913 = vxpose.xlu0.b32.cont [6/16] %v865, 128
      %914 = vxpose.xlu0.b32.cont [7/16] %v870, 128
      %915 = vxpose.xlu0.b32.cont [8/16] %v873, 128
      %916 = vxpose.xlu0.b32.cont [9/16] %v878, 128
      %917 = vxpose.xlu0.b32.cont [10/16] %v881, 128
      %918 = vxpose.xlu0.b32.cont [11/16] %v886, 128
      %919 = vxpose.xlu0.b32.cont [12/16] %v889, 128
      %920 = vxpose.xlu0.b32.cont [13/16] %v894, 128
      %921 = vxpose.xlu0.b32.cont [14/16] %v897, 128
      %922 = vxpose.xlu0.b32.cont [15/16] %v902, 128
      %923 = vxpose.xlu0.b32.end [16/16] %v905, 128
      %v924 = vpop.trf.xlu0
      %v925 = vpop.trf.xlu0
      %v926 = vpop.trf.xlu0
      %v927 = vpop.trf.xlu0
      %v928 = vpop.trf.xlu0
      %v929 = vpop.trf.xlu0
      %v930 = vpop.trf.xlu0
      %v931 = vpop.trf.xlu0
      %v932 = vpop.trf.xlu0
      %v933 = vpop.trf.xlu0
      %v934 = vpop.trf.xlu0
      %v935 = vpop.trf.xlu0
      %v936 = vpop.trf.xlu0
      %v937 = vpop.trf.xlu0
      %v938 = vpop.trf.xlu0
      %v939 = vpop.trf.xlu0
      %v940 = vpack.c.bf16 %v924, %v924
      %v942 = vsel %vm569, %v940, 0
      %944 = vmatprep.subr.bf16.mxu0 0
      %945 = vmatpush1.bf16.msra.mxu0 %v942
      %946 = vmatprep.subr.bf16.mxu0 0
      %947 = vmatpush1.bf16.msra.mxu0 0
      %948 = vmatprep.subr.bf16.mxu0 0
      %949 = vmatpush1.bf16.msra.mxu0 0
      %950 = vmatprep.subr.bf16.mxu0 0
      %951 = vmatpush1.bf16.msra.mxu0 0
      %952 = vmatprep.subr.bf16.mxu0 0
      %953 = vmatpush1.bf16.msra.mxu0 0
      %954 = vmatprep.subr.bf16.mxu0 0
      %955 = vmatpush1.bf16.msra.mxu0 0
      %956 = vmatprep.subr.bf16.mxu0 0
      %957 = vmatpush1.bf16.msra.mxu0 0
      %958 = vmatprep.subr.bf16.mxu0 0
      %959 = vmatpush1.bf16.msra.mxu0 0
      %960 = vmatprep.subr.bf16.mxu0 0
      %961 = vmatpush1.bf16.msra.mxu0 0
      %962 = vmatprep.subr.bf16.mxu0 0
      %963 = vmatpush1.bf16.msra.mxu0 0
      %964 = vmatprep.subr.bf16.mxu0 0
      %965 = vmatpush1.bf16.msra.mxu0 0
      %966 = vmatprep.subr.bf16.mxu0 0
      %967 = vmatpush1.bf16.msra.mxu0 0
      %968 = vmatprep.subr.bf16.mxu0 0
      %969 = vmatpush1.bf16.msra.mxu0 0
      %970 = vmatprep.subr.bf16.mxu0 0
      %971 = vmatpush1.bf16.msra.mxu0 0
      %972 = vmatprep.subr.bf16.mxu0 0
      %973 = vmatpush1.bf16.msra.mxu0 0
      %974 = vmatprep.subr.bf16.mxu0 0
      %975 = vmatpush1.bf16.msra.mxu0 0
      %976 = vmatprep.mubr.bf16.mxu0 0
      %977 = vmatmul.mubr.bf16.gmra.mrb[0].mxu0 %v567
      %v978 = vpop.f32.mrb[0].mxu0
      %v979 = vadd.f32 %v564, %v978
      %v980 = vpop.f32.mrb[0].mxu0
      %v981 = vpop.f32.mrb[0].mxu0
      %v982 = vpop.f32.mrb[0].mxu0
      %983 = vdwg.mxu0
      %v984 = vpack.c.bf16 %v979, %v979
      %v987 = vunpack.c.l.s4 1966171168
      %v988 = vunpack.c.0.s8 %v987
      %v989 = vlaneseq
      %v990 = vshrl.u32 %v989, 7
      %v991 = vsub.s32 %v988, %v990
      %v992 = vrot.slane %v984, %v991
      %v993 = vcombine.high %v992, %v992
      %v995 = vunpack.c.l.s4 1966171168
      %v996 = vunpack.c.0.s8 %v995
      %v997 = vlaneseq
      %v998 = vshrl.u32 %v997, 7
      %v999 = vsub.s32 %v996, %v998
      %v1000 = vrot.slane %v992, %v999
      %v1002 = vunpack.c.l.s4 1966171168
      %v1003 = vunpack.c.0.s8 %v1002
      %v1004 = vlaneseq
      %v1005 = vshrl.u32 %v1004, 7
      %v1006 = vsub.s32 %v1003, %v1005
      %v1007 = vrot.slane %v993, %v1006
      %v1008 = vcombine.high %v1000, %v1000
      %v1009 = vcombine.high %v1007, %v1007
      %v1010 = vunpack.i.l.s16 %v1000
      %v1011 = vunpack.i.h.s16 %v1000
      %v1012 = vunpack.i.l.s16 %v1007
      %v1013 = vunpack.i.h.s16 %v1007
      %v1014 = vunpack.i.l.s16 %v1008
      %v1015 = vunpack.i.h.s16 %v1008
      %v1016 = vunpack.i.l.s16 %v1009
      %v1017 = vunpack.i.h.s16 %v1009
      %v1018 = vpack.i.b16 %v1010, %v1010
      %v1019 = vpack.i.b16 %v1011, %v1011
      %v1020 = vpack.i.b16 %v1012, %v1012
      %v1021 = vpack.i.b16 %v1013, %v1013
      %v1022 = vpack.i.b16 %v1014, %v1014
      %v1023 = vpack.i.b16 %v1015, %v1015
      %v1024 = vpack.i.b16 %v1016, %v1016
      %v1025 = vpack.i.b16 %v1017, %v1017
      %vm1034 = vsmask.f32 7938
      %vm1035 = vmand %vm663, %vm1034
      %v1036 = vld [vmem:[%s296] sm:$0x1]
      %v1037 = vsel %vm1035, %v1018, %v1036
      %1038 = vst [vmem:[%s296] sm:$0x1] %v1037
      %v1039 = vld [vmem:[%s296 + $0x1] sm:$0x1]
      %v1040 = vsel %vm1035, %v1019, %v1039
      %1041 = vst [vmem:[%s296 + $0x1] sm:$0x1] %v1040
      %v1042 = vld [vmem:[%s296 + $0x2] sm:$0x1]
      %v1043 = vsel %vm1035, %v1020, %v1042
      %1044 = vst [vmem:[%s296 + $0x2] sm:$0x1] %v1043
      %v1045 = vld [vmem:[%s296 + $0x3] sm:$0x1]
      %v1046 = vsel %vm1035, %v1021, %v1045
      %1047 = vst [vmem:[%s296 + $0x3] sm:$0x1] %v1046
      %v1048 = vld [vmem:[%s296 + $0x4] sm:$0x1]
      %v1049 = vsel %vm1035, %v1022, %v1048
      %1050 = vst [vmem:[%s296 + $0x4] sm:$0x1] %v1049
      %v1051 = vld [vmem:[%s296 + $0x5] sm:$0x1]
      %v1052 = vsel %vm1035, %v1023, %v1051
      %1053 = vst [vmem:[%s296 + $0x5] sm:$0x1] %v1052
      %v1054 = vld [vmem:[%s296 + $0x6] sm:$0x1]
      %v1055 = vsel %vm1035, %v1024, %v1054
      %1056 = vst [vmem:[%s296 + $0x6] sm:$0x1] %v1055
      %v1057 = vld [vmem:[%s296 + $0x7] sm:$0x1]
      %v1058 = vsel %vm1035, %v1025, %v1057
      %1059 = vst [vmem:[%s296 + $0x7] sm:$0x1] %v1058
      %1060 = vadd.xlane.f32.xlu0 %v979
      %v1061 = vpop.xlane.xlu0 %1060
      %v1062 = vmul.f32 %v979, %v979
      %1063 = vadd.xlane.f32.xlu0 %v1062
      %v1064 = vpop.xlane.xlu0 %1063
      %v1065 = vadd.f32 %v691, %v1061
      %v1066 = vadd.f32 %v694, %v1064
      %v1068 = vlaneseq
      %v1069 = vand.u32 %v1068, 127
      %v1070 = vlaneseq
      %v1071 = vshrl.u32 %v1070, 7
      %v1072 = vsub.s32 %v1069, %v1071
      %v1073 = vrot.slane %v1065, %v1072
      %vm1075 = vcmask 57344
      %1076 = vst.msk [vmem:[%s303] sm:$0x1] %vm1075, %v1073
      %v1078 = vlaneseq
      %v1079 = vshrl.u32 %v1078, 7
      %v1080 = vsub.s32 %v1069, %v1079
      %v1081 = vrot.slane %v1066, %v1080
      %1083 = vst.msk [vmem:[%s303 + $0x1] sm:$0x1] %vm1075, %v1081
      %p1084 = scmp.lt.s32.totalorder %s21, 1
      %s1085 = scalar_select %p1084, %s21, 1
      %p1086 = scmp.lt.s32.totalorder %s22, 0
      %s1087 = scalar_select %p1086, %s22, 0
      %s1088 = smul.addr %s1085, 8
      %s1089 = sadd.s32 %s1087, %s1088
      %s1090 = scalar_lea.vmem %s4, %s1089
      %p1091 = scmp.lt.s32.totalorder %s21, 1
      %s1092 = scalar_select %p1091, %s21, 1
      %p1093 = scmp.lt.s32.totalorder %s22, 0
      %s1094 = scalar_select %p1093, %s22, 0
      %s1095 = sadd.s32 %s1094, %s1092
      %s1096 = smul.addr %s1095, 2
      %s1097 = scalar_lea.vmem %s5, %s1096
      // Predicated region
      $region37: #{ssm_block_forward.5} parent=35 // pred_check
        %p1098 = pneg %p150
      $region38: #{ssm_block_forward.5} parent=35 // pred_check_branch
        %1100 = sbr.rel (%p1098) target = $region40
      $region39: #{ssm_block_forward.5} parent=35 // pred_region
        _
      $region40: #{ssm_block_forward.5} parent=35 // pred_fallthru
        _
      // Predicated region
      $region41: #{ssm_block_forward.5} parent=35 // pred_check
        %p1101 = pneg %p178
      $region42: #{ssm_block_forward.5} parent=35 // pred_check_branch
        %1103 = sbr.rel (%p1101) target = $region44
      $region43: #{ssm_block_forward.5} parent=35 // pred_region
        _
      $region44: #{ssm_block_forward.5} parent=35 // pred_fallthru
        _
    $region36: #{ssm_block_forward.5} parent=5 // pred_fallthru
      _
    %p1104 = scmp.le.s32.totalorder 2, %s12
    // Predicated region
    $region45: #{ssm_block_forward.5} parent=5 // pred_check
      %p1105 = pneg %p1104
    $region46: #{ssm_block_forward.5} parent=5 // pred_check_branch
      %1107 = sbr.rel (%p1105) target = $region48
    $region47: #{ssm_block_forward.5} parent=5 // pred_region
      %s1108 = ssub.s32 %s12, 2
      // Predicated region
      $region49: #{ssm_block_forward.5} parent=47 // pred_check
        %p1109 = pneg %p156
      $region50: #{ssm_block_forward.5} parent=47 // pred_check_branch
        %1111 = sbr.rel (%p1109) target = $region52
      $region51: #{ssm_block_forward.5} parent=47 // pred_region
        %p1112 = scmp.lt.s32.totalorder %s23, 1
        %s1113 = scalar_select %p1112, %s23, 1
        %p1114 = scmp.lt.s32.totalorder %s24, 0
        %s1115 = scalar_select %p1114, %s24, 0
        %s1116 = smul.addr %s1113, 8
        %s1117 = sadd.s32 %s1115, %s1116
        %s1118 = scalar_lea.vmem %s4, %s1117
      $region52: #{ssm_block_forward.5} parent=47 // pred_fallthru
        _
      // Predicated region
      $region53: #{ssm_block_forward.5} parent=47 // pred_check
        %p1119 = pneg %p184
      $region54: #{ssm_block_forward.5} parent=47 // pred_check_branch
        %1121 = sbr.rel (%p1119) target = $region56
      $region55: #{ssm_block_forward.5} parent=47 // pred_region
        %p1122 = scmp.lt.s32.totalorder %s23, 1
        %s1123 = scalar_select %p1122, %s23, 1
        %p1124 = scmp.lt.s32.totalorder %s24, 0
        %s1125 = scalar_select %p1124, %s24, 0
        %s1126 = sadd.s32 %s1125, %s1123
        %s1127 = smul.addr %s1126, 2
        %s1128 = scalar_lea.vmem %s5, %s1127
      $region56: #{ssm_block_forward.5} parent=47 // pred_fallthru
        _
    $region48: #{ssm_block_forward.5} parent=5 // pred_fallthru
      _
  $region6: #{ssm_block_forward.5} parent=0 // loop_footer
    %s16 = sadd.s32 1, %s12
  $region7: #{ssm_block_forward.5} parent=0 // loop_footer_branch
    %11 = sbr.rel target = $region3
  $region8: #{ssm_block_forward.5} parent=0 // loop_exit
    _

// kernel: ssm_block_forward.4
$region0: #{ssm_block_forward.4}
  #allocation0 [shape = 'u32[]', space=smem, size = 0x4, offset = 0x4, fixed_abs, tag = 'smem constant byte address 0x4 - core index']
  #allocation1 [shape = 'u32[144,128]{1,0:T(1,128)}', space=vmem, size = 0x12000, scoped, tag = 'internal scratch']
  #allocation2 [shape = 'bf16[1,4,128]{2,1,0:T(4,128)(2,1)}', space=vmem, size = 0x400, scoped, tag = 'scratch operand']
  #allocation3 [shape = 'bf16[1,4,128]{2,1,0:T(4,128)(2,1)}', space=vmem, size = 0x400, scoped, tag = 'scratch operand']
  %s0 = inlined_call_operand.vmem [shape: bf16[2,8,2,128], index: 0, kind: input, shape index: {}]
  %s1 = inlined_call_operand.vmem [shape: bf16[2,4,2,128], index: 1, kind: input, shape index: {}]
  %s2 = inlined_call_operand.vmem [shape: bf16[4,8], index: 2, kind: input, shape index: {}]
  %s3 = inlined_call_operand.vmem [shape: f32[1,4,1], index: 3, kind: input, shape index: {}]
  %s4 = inlined_call_operand.vmem [shape: bf16[4,4], index: 4, kind: input, shape index: {}]
  %s5 = inlined_call_operand.vmem [shape: f32[1,4,1], index: 5, kind: input, shape index: {}]
  %s6 = inlined_call_operand.vmem [shape: bf16[2,4], index: 6, kind: input, shape index: {}]
  %s7 = inlined_call_operand.vmem [shape: f32[1,2,1], index: 7, kind: input, shape index: {}]
  %s8 = inlined_call_operand.vmem [shape: bf16[2,4], index: 8, kind: input, shape index: {}]
  %s9 = inlined_call_operand.vmem [shape: f32[1,2,1], index: 9, kind: input, shape index: {}]
  %s10 = inlined_call_operand.vmem [shape: f32[2,1,4,4], index: 10, kind: output, shape index: {0}]
  %s11 = inlined_call_operand.vmem [shape: f32[2,1,4,4], index: 11, kind: output, shape index: {1}]
  %12 = xla_tuple %s10, %s11
  %s13 = sld [smem:[#allocation0]]
  $region81: #{ssm_block_forward.4} parent=0
    _
  %s15 = ssub.s32 1, %s13
  %s16 = scalar_select 0, %s15, %s13
  loop: start=0, step=1, limit=4
  $region2: #{ssm_block_forward.4} parent=0 // loop_pre_header
    _
  $region3: #{ssm_block_forward.4} parent=0 // loop_header
    %s18 = sphi 0, %s22
    %p19 = scmp.ge.s32.totalorder %s18, 4
    %s25 = sphi 0, %s37
    %s26 = sphi 0, %s33
    %s27 = sphi 0, %s25
    %s28 = sphi 0, %s26
    %s29 = sphi 0, %s27
    %s30 = sphi 0, %s28
    %s42 = sphi 0, %s44
    %s45 = sphi 0, %s42
    %s46 = sphi 0, %s45
    %s62 = sphi 0, %s46
    %s70 = sphi 0, %s72
    %s73 = sphi 0, %s70
    %s74 = sphi 0, %s73
    %s90 = sphi 0, %s74
    %s94 = sphi 0, %s94
    %s96 = sphi 0, %s94
    %s97 = sphi 0, %s96
    %s111 = sphi 0, %s97
    %s115 = sphi 0, %s115
    %s117 = sphi 0, %s115
    %s118 = sphi 0, %s117
    %s132 = sphi 0, %s118
    %s136 = sphi 0, %s136
    %s138 = sphi 0, %s136
    %s139 = sphi 0, %s138
    %s153 = sphi 0, %s139
    %s157 = sphi 0, %s157
    %s159 = sphi 0, %s157
    %s160 = sphi 0, %s159
    %s174 = sphi 0, %s160
    %s178 = sphi 0, %s178
    %s180 = sphi 0, %s178
    %s181 = sphi 0, %s180
    %s195 = sphi 0, %s181
    %s199 = sphi 0, %s199
    %s201 = sphi 0, %s199
    %s202 = sphi 0, %s201
    %s216 = sphi 0, %s202
    %s220 = sphi 0, %s220
    %s222 = sphi 0, %s220
    %s223 = sphi 0, %s222
    %s237 = sphi 0, %s223
    %s241 = sphi 0, %s241
    %s243 = sphi 0, %s241
    %s244 = sphi 0, %s243
    %s258 = sphi 0, %s244
    %s266 = sphi 0, %s268
    %s269 = sphi 0, %s266
    %s270 = sphi 0, %s269
    %s286 = sphi 0, %s270
    %s294 = sphi 0, %s296
    %s297 = sphi 0, %s294
    %s298 = sphi 0, %s297
    %s314 = sphi 0, %s298
  $region4: #{ssm_block_forward.4} parent=0 // loop_header_branch
    %21 = sbr.rel (%p19) target = $region8
  $region5: #{ssm_block_forward.4} parent=0 // loop_body
    %s23 = ssub.s32 %s18, 1
    %s24 = ssub.s32 %s18, 2
    %s31 = sadd.s32 1, %s26
    %p32 = scmp.ge.s32.totalorder %s31, 1
    %s33 = scalar_select %p32, 0, %s31
    %s34 = sadd.s32 1, %s25
    %s35 = scalar_select %p32, %s34, %s25
    %p36 = scmp.ge.s32.totalorder %s35, 2
    %s37 = scalar_select %p36, 0, %s35
    %s38 = ssub.s32 %s25, %s37
    %s39 = ssub.s32 %s26, %s33
    %s40 = sor.u32 %s38, %s39
    %p41 = scmp.eq.s32.totalorder %s40, 0
    %s43 = sadd.s32 %s42, 1
    %s44 = scalar_select %p41, %s42, %s43
    %p47 = pneg %p41
    %p48 = scmp.eq.s32.totalorder %s18, 1
    %p49 = por %p47, %p48
    %p50 = scmp.ne.s32.totalorder %s42, %s45
    %p51 = scmp.eq.s32.totalorder %s18, 0
    %p52 = por %p50, %p51
    %p53 = scmp.ne.s32.totalorder %s42, %s45
    %p54 = scmp.eq.s32.totalorder %s23, 1
    %p55 = por %p53, %p54
    %p56 = scmp.ne.s32.totalorder %s45, %s46
    %p57 = scmp.eq.s32.totalorder %s23, 0
    %p58 = por %p56, %p57
    %p59 = scmp.ne.s32.totalorder %s45, %s46
    %p60 = scmp.eq.s32.totalorder %s24, 1
    %p61 = por %p59, %p60
    %p63 = scmp.ne.s32.totalorder %s46, %s62
    %p64 = scmp.eq.s32.totalorder %s24, 0
    %p65 = por %p63, %p64
    %s66 = ssub.s32 %s25, %s37
    %s67 = ssub.s32 %s26, %s33
    %s68 = sor.u32 %s66, %s67
    %p69 = scmp.eq.s32.totalorder %s68, 0
    %s71 = sadd.s32 %s70, 1
    %s72 = scalar_select %p69, %s70, %s71
    %p75 = pneg %p69
    %p76 = scmp.eq.s32.totalorder %s18, 1
    %p77 = por %p75, %p76
    %p78 = scmp.ne.s32.totalorder %s70, %s73
    %p79 = scmp.eq.s32.totalorder %s18, 0
    %p80 = por %p78, %p79
    %p81 = scmp.ne.s32.totalorder %s70, %s73
    %p82 = scmp.eq.s32.totalorder %s23, 1
    %p83 = por %p81, %p82
    %p84 = scmp.ne.s32.totalorder %s73, %s74
    %p85 = scmp.eq.s32.totalorder %s23, 0
    %p86 = por %p84, %p85
    %p87 = scmp.ne.s32.totalorder %s73, %s74
    %p88 = scmp.eq.s32.totalorder %s24, 1
    %p89 = por %p87, %p88
    %p91 = scmp.ne.s32.totalorder %s74, %s90
    %p92 = scmp.eq.s32.totalorder %s24, 0
    %p93 = por %p91, %p92
    %s95 = sadd.s32 %s94, 1
    %p98 = scmp.eq.s32.totalorder %s18, 1
    %p99 = scmp.ne.s32.totalorder %s94, %s96
    %p100 = scmp.eq.s32.totalorder %s18, 0
    %p101 = por %p99, %p100
    %p102 = scmp.ne.s32.totalorder %s94, %s96
    %p103 = scmp.eq.s32.totalorder %s23, 1
    %p104 = por %p102, %p103
    %p105 = scmp.ne.s32.totalorder %s96, %s97
    %p106 = scmp.eq.s32.totalorder %s23, 0
    %p107 = por %p105, %p106
    %p108 = scmp.ne.s32.totalorder %s96, %s97
    %p109 = scmp.eq.s32.totalorder %s24, 1
    %p110 = por %p108, %p109
    %p112 = scmp.ne.s32.totalorder %s97, %s111
    %p113 = scmp.eq.s32.totalorder %s24, 0
    %p114 = por %p112, %p113
    %s116 = sadd.s32 %s115, 1
    %p119 = scmp.eq.s32.totalorder %s18, 1
    %p120 = scmp.ne.s32.totalorder %s115, %s117
    %p121 = scmp.eq.s32.totalorder %s18, 0
    %p122 = por %p120, %p121
    %p123 = scmp.ne.s32.totalorder %s115, %s117
    %p124 = scmp.eq.s32.totalorder %s23, 1
    %p125 = por %p123, %p124
    %p126 = scmp.ne.s32.totalorder %s117, %s118
    %p127 = scmp.eq.s32.totalorder %s23, 0
    %p128 = por %p126, %p127
    %p129 = scmp.ne.s32.totalorder %s117, %s118
    %p130 = scmp.eq.s32.totalorder %s24, 1
    %p131 = por %p129, %p130
    %p133 = scmp.ne.s32.totalorder %s118, %s132
    %p134 = scmp.eq.s32.totalorder %s24, 0
    %p135 = por %p133, %p134
    %s137 = sadd.s32 %s136, 1
    %p140 = scmp.eq.s32.totalorder %s18, 1
    %p141 = scmp.ne.s32.totalorder %s136, %s138
    %p142 = scmp.eq.s32.totalorder %s18, 0
    %p143 = por %p141, %p142
    %p144 = scmp.ne.s32.totalorder %s136, %s138
    %p145 = scmp.eq.s32.totalorder %s23, 1
    %p146 = por %p144, %p145
    %p147 = scmp.ne.s32.totalorder %s138, %s139
    %p148 = scmp.eq.s32.totalorder %s23, 0
    %p149 = por %p147, %p148
    %p150 = scmp.ne.s32.totalorder %s138, %s139
    %p151 = scmp.eq.s32.totalorder %s24, 1
    %p152 = por %p150, %p151
    %p154 = scmp.ne.s32.totalorder %s139, %s153
    %p155 = scmp.eq.s32.totalorder %s24, 0
    %p156 = por %p154, %p155
    %s158 = sadd.s32 %s157, 1
    %p161 = scmp.eq.s32.totalorder %s18, 1
    %p162 = scmp.ne.s32.totalorder %s157, %s159
    %p163 = scmp.eq.s32.totalorder %s18, 0
    %p164 = por %p162, %p163
    %p165 = scmp.ne.s32.totalorder %s157, %s159
    %p166 = scmp.eq.s32.totalorder %s23, 1
    %p167 = por %p165, %p166
    %p168 = scmp.ne.s32.totalorder %s159, %s160
    %p169 = scmp.eq.s32.totalorder %s23, 0
    %p170 = por %p168, %p169
    %p171 = scmp.ne.s32.totalorder %s159, %s160
    %p172 = scmp.eq.s32.totalorder %s24, 1
    %p173 = por %p171, %p172
    %p175 = scmp.ne.s32.totalorder %s160, %s174
    %p176 = scmp.eq.s32.totalorder %s24, 0
    %p177 = por %p175, %p176
    %s179 = sadd.s32 %s178, 1
    %p182 = scmp.eq.s32.totalorder %s18, 1
    %p183 = scmp.ne.s32.totalorder %s178, %s180
    %p184 = scmp.eq.s32.totalorder %s18, 0
    %p185 = por %p183, %p184
    %p186 = scmp.ne.s32.totalorder %s178, %s180
    %p187 = scmp.eq.s32.totalorder %s23, 1
    %p188 = por %p186, %p187
    %p189 = scmp.ne.s32.totalorder %s180, %s181
    %p190 = scmp.eq.s32.totalorder %s23, 0
    %p191 = por %p189, %p190
    %p192 = scmp.ne.s32.totalorder %s180, %s181
    %p193 = scmp.eq.s32.totalorder %s24, 1
    %p194 = por %p192, %p193
    %p196 = scmp.ne.s32.totalorder %s181, %s195
    %p197 = scmp.eq.s32.totalorder %s24, 0
    %p198 = por %p196, %p197
    %s200 = sadd.s32 %s199, 1
    %p203 = scmp.eq.s32.totalorder %s18, 1
    %p204 = scmp.ne.s32.totalorder %s199, %s201
    %p205 = scmp.eq.s32.totalorder %s18, 0
    %p206 = por %p204, %p205
    %p207 = scmp.ne.s32.totalorder %s199, %s201
    %p208 = scmp.eq.s32.totalorder %s23, 1
    %p209 = por %p207, %p208
    %p210 = scmp.ne.s32.totalorder %s201, %s202
    %p211 = scmp.eq.s32.totalorder %s23, 0
    %p212 = por %p210, %p211
    %p213 = scmp.ne.s32.totalorder %s201, %s202
    %p214 = scmp.eq.s32.totalorder %s24, 1
    %p215 = por %p213, %p214
    %p217 = scmp.ne.s32.totalorder %s202, %s216
    %p218 = scmp.eq.s32.totalorder %s24, 0
    %p219 = por %p217, %p218
    %s221 = sadd.s32 %s220, 1
    %p224 = scmp.eq.s32.totalorder %s18, 1
    %p225 = scmp.ne.s32.totalorder %s220, %s222
    %p226 = scmp.eq.s32.totalorder %s18, 0
    %p227 = por %p225, %p226
    %p228 = scmp.ne.s32.totalorder %s220, %s222
    %p229 = scmp.eq.s32.totalorder %s23, 1
    %p230 = por %p228, %p229
    %p231 = scmp.ne.s32.totalorder %s222, %s223
    %p232 = scmp.eq.s32.totalorder %s23, 0
    %p233 = por %p231, %p232
    %p234 = scmp.ne.s32.totalorder %s222, %s223
    %p235 = scmp.eq.s32.totalorder %s24, 1
    %p236 = por %p234, %p235
    %p238 = scmp.ne.s32.totalorder %s223, %s237
    %p239 = scmp.eq.s32.totalorder %s24, 0
    %p240 = por %p238, %p239
    %s242 = sadd.s32 %s241, 1
    %p245 = scmp.eq.s32.totalorder %s18, 1
    %p246 = scmp.ne.s32.totalorder %s241, %s243
    %p247 = scmp.eq.s32.totalorder %s18, 0
    %p248 = por %p246, %p247
    %p249 = scmp.ne.s32.totalorder %s241, %s243
    %p250 = scmp.eq.s32.totalorder %s23, 1
    %p251 = por %p249, %p250
    %p252 = scmp.ne.s32.totalorder %s243, %s244
    %p253 = scmp.eq.s32.totalorder %s23, 0
    %p254 = por %p252, %p253
    %p255 = scmp.ne.s32.totalorder %s243, %s244
    %p256 = scmp.eq.s32.totalorder %s24, 1
    %p257 = por %p255, %p256
    %p259 = scmp.ne.s32.totalorder %s244, %s258
    %p260 = scmp.eq.s32.totalorder %s24, 0
    %p261 = por %p259, %p260
    %s262 = ssub.s32 %s25, %s37
    %s263 = ssub.s32 %s26, %s33
    %s264 = sor.u32 %s262, %s263
    %p265 = scmp.eq.s32.totalorder %s264, 0
    %s267 = sadd.s32 %s266, 1
    %s268 = scalar_select %p265, %s266, %s267
    %p271 = pneg %p265
    %p272 = scmp.eq.s32.totalorder %s18, 1
    %p273 = por %p271, %p272
    %p274 = scmp.ne.s32.totalorder %s266, %s269
    %p275 = scmp.eq.s32.totalorder %s18, 0
    %p276 = por %p274, %p275
    %p277 = scmp.ne.s32.totalorder %s266, %s269
    %p278 = scmp.eq.s32.totalorder %s23, 1
    %p279 = por %p277, %p278
    %p280 = scmp.ne.s32.totalorder %s269, %s270
    %p281 = scmp.eq.s32.totalorder %s23, 0
    %p282 = por %p280, %p281
    %p283 = scmp.ne.s32.totalorder %s269, %s270
    %p284 = scmp.eq.s32.totalorder %s24, 1
    %p285 = por %p283, %p284
    %p287 = scmp.ne.s32.totalorder %s270, %s286
    %p288 = scmp.eq.s32.totalorder %s24, 0
    %p289 = por %p287, %p288
    %s290 = ssub.s32 %s25, %s37
    %s291 = ssub.s32 %s26, %s33
    %s292 = sor.u32 %s290, %s291
    %p293 = scmp.eq.s32.totalorder %s292, 0
    %s295 = sadd.s32 %s294, 1
    %s296 = scalar_select %p293, %s294, %s295
    %p299 = pneg %p293
    %p300 = scmp.eq.s32.totalorder %s18, 1
    %p301 = por %p299, %p300
    %p302 = scmp.ne.s32.totalorder %s294, %s297
    %p303 = scmp.eq.s32.totalorder %s18, 0
    %p304 = por %p302, %p303
    %p305 = scmp.ne.s32.totalorder %s294, %s297
    %p306 = scmp.eq.s32.totalorder %s23, 1
    %p307 = por %p305, %p306
    %p308 = scmp.ne.s32.totalorder %s297, %s298
    %p309 = scmp.eq.s32.totalorder %s23, 0
    %p310 = por %p308, %p309
    %p311 = scmp.ne.s32.totalorder %s297, %s298
    %p312 = scmp.eq.s32.totalorder %s24, 1
    %p313 = por %p311, %p312
    %p315 = scmp.ne.s32.totalorder %s298, %s314
    %p316 = scmp.eq.s32.totalorder %s24, 0
    %p317 = por %p315, %p316
    %p318 = scmp.le.s32.totalorder 1, %s18
    %p319 = scmp.lt.s32.totalorder %s18, 3
    %p320 = pnand %p318, %p319
    %p321 = pneg %p320
    // Predicated region
    $region9: #{ssm_block_forward.4} parent=5 // pred_check
      _
    $region10: #{ssm_block_forward.4} parent=5 // pred_check_branch
      %323 = sbr.rel (%p320) target = $region12
    $region11: #{ssm_block_forward.4} parent=5 // pred_region
      %s324 = ssub.s32 %s18, 1
      // Predicated region
      $region13: #{ssm_block_forward.4} parent=11 // pred_check
        %p325 = pneg %p107
      $region14: #{ssm_block_forward.4} parent=11 // pred_check_branch
        %327 = sbr.rel (%p325) target = $region16
      $region15: #{ssm_block_forward.4} parent=11 // pred_region
        _
      $region16: #{ssm_block_forward.4} parent=11 // pred_fallthru
        _
      // Predicated region
      $region17: #{ssm_block_forward.4} parent=11 // pred_check
        %p328 = pneg %p128
      $region18: #{ssm_block_forward.4} parent=11 // pred_check_branch
        %330 = sbr.rel (%p328) target = $region20
      $region19: #{ssm_block_forward.4} parent=11 // pred_region
        _
      $region20: #{ssm_block_forward.4} parent=11 // pred_fallthru
        _
      // Predicated region
      $region21: #{ssm_block_forward.4} parent=11 // pred_check
        %p331 = pneg %p149
      $region22: #{ssm_block_forward.4} parent=11 // pred_check_branch
        %333 = sbr.rel (%p331) target = $region24
      $region23: #{ssm_block_forward.4} parent=11 // pred_region
        _
      $region24: #{ssm_block_forward.4} parent=11 // pred_fallthru
        _
      // Predicated region
      $region25: #{ssm_block_forward.4} parent=11 // pred_check
        %p334 = pneg %p170
      $region26: #{ssm_block_forward.4} parent=11 // pred_check_branch
        %336 = sbr.rel (%p334) target = $region28
      $region27: #{ssm_block_forward.4} parent=11 // pred_region
        _
      $region28: #{ssm_block_forward.4} parent=11 // pred_fallthru
        _
      // Predicated region
      $region29: #{ssm_block_forward.4} parent=11 // pred_check
        %p337 = pneg %p191
      $region30: #{ssm_block_forward.4} parent=11 // pred_check_branch
        %339 = sbr.rel (%p337) target = $region32
      $region31: #{ssm_block_forward.4} parent=11 // pred_region
        _
      $region32: #{ssm_block_forward.4} parent=11 // pred_fallthru
        _
      // Predicated region
      $region33: #{ssm_block_forward.4} parent=11 // pred_check
        %p340 = pneg %p212
      $region34: #{ssm_block_forward.4} parent=11 // pred_check_branch
        %342 = sbr.rel (%p340) target = $region36
      $region35: #{ssm_block_forward.4} parent=11 // pred_region
        _
      $region36: #{ssm_block_forward.4} parent=11 // pred_fallthru
        _
      // Predicated region
      $region37: #{ssm_block_forward.4} parent=11 // pred_check
        %p343 = pneg %p233
      $region38: #{ssm_block_forward.4} parent=11 // pred_check_branch
        %345 = sbr.rel (%p343) target = $region40
      $region39: #{ssm_block_forward.4} parent=11 // pred_region
        _
      $region40: #{ssm_block_forward.4} parent=11 // pred_fallthru
        _
      // Predicated region
      $region41: #{ssm_block_forward.4} parent=11 // pred_check
        %p346 = pneg %p254
      $region42: #{ssm_block_forward.4} parent=11 // pred_check_branch
        %348 = sbr.rel (%p346) target = $region44
      $region43: #{ssm_block_forward.4} parent=11 // pred_region
        _
      $region44: #{ssm_block_forward.4} parent=11 // pred_fallthru
        _
    $region12: #{ssm_block_forward.4} parent=5 // pred_fallthru
      _
    %p349 = scmp.lt.s32.totalorder %s18, 2
    // Predicated region
    $region45: #{ssm_block_forward.4} parent=5 // pred_check
      %p350 = pneg %p349
    $region46: #{ssm_block_forward.4} parent=5 // pred_check_branch
      %352 = sbr.rel (%p350) target = $region48
    $region47: #{ssm_block_forward.4} parent=5 // pred_region
      // Predicated region
      $region49: #{ssm_block_forward.4} parent=47 // pred_check
        %p353 = pneg %p52
      $region50: #{ssm_block_forward.4} parent=47 // pred_check_branch
        %355 = sbr.rel (%p353) target = $region52
      $region51: #{ssm_block_forward.4} parent=47 // pred_region
        %p356 = scmp.lt.s32.totalorder %s25, 1
        %s357 = scalar_select %p356, %s25, 1
        %p358 = scmp.lt.s32.totalorder %s26, 0
        %s359 = scalar_select %p358, %s26, 0
        %s360 = smul.addr %s357, 8
        %s361 = sadd.s32 %s359, %s360
        %s362 = scalar_lea.vmem %s0, %s361
      $region52: #{ssm_block_forward.4} parent=47 // pred_fallthru
        _
      // Predicated region
      $region53: #{ssm_block_forward.4} parent=47 // pred_check
        %p363 = pneg %p80
      $region54: #{ssm_block_forward.4} parent=47 // pred_check_branch
        %365 = sbr.rel (%p363) target = $region56
      $region55: #{ssm_block_forward.4} parent=47 // pred_region
        %p366 = scmp.lt.s32.totalorder %s25, 1
        %s367 = scalar_select %p366, %s25, 1
        %p368 = scmp.lt.s32.totalorder %s26, 0
        %s369 = scalar_select %p368, %s26, 0
        %s370 = smul.addr %s367, 4
        %s371 = sadd.s32 %s369, %s370
        %s372 = scalar_lea.vmem %s1, %s371
      $region56: #{ssm_block_forward.4} parent=47 // pred_fallthru
        _
    $region48: #{ssm_block_forward.4} parent=5 // pred_fallthru
      _
    %p373 = scmp.le.s32.totalorder 1, %s18
    %p374 = scmp.lt.s32.totalorder %s18, 3
    %p375 = pnand %p373, %p374
    %p376 = pneg %p375
    // Predicated region
    $region57: #{ssm_block_forward.4} parent=5 // pred_check
      _
    $region58: #{ssm_block_forward.4} parent=5 // pred_check_branch
      %378 = sbr.rel (%p375) target = $region60
    $region59: #{ssm_block_forward.4} parent=5 // pred_region
      %s379 = ssub.s32 %s18, 1
      %p380 = scmp.lt.s32.totalorder %s27, 1
      %s381 = scalar_select %p380, %s27, 1
      %p382 = scmp.lt.s32.totalorder %s28, 0
      %s383 = scalar_select %p382, %s28, 0
      %s384 = smul.addr %s381, 8
      %s385 = sadd.s32 %s383, %s384
      %s386 = scalar_lea.vmem %s0, %s385
      %p387 = pneg %p58
      %p388 = pneg %p55
      %p389 = scmp.lt.s32.totalorder %s27, 1
      %s390 = scalar_select %p389, %s27, 1
      %p391 = scmp.lt.s32.totalorder %s28, 0
      %s392 = scalar_select %p391, %s28, 0
      %s393 = smul.addr %s390, 4
      %s394 = sadd.s32 %s392, %s393
      %s395 = scalar_lea.vmem %s1, %s394
      %p396 = pneg %p86
      %p397 = pneg %p83
      %p398 = pneg %p107
      %p399 = pneg %p104
      %p400 = pneg %p128
      %p401 = pneg %p125
      %p402 = pneg %p149
      %p403 = pneg %p146
      %p404 = pneg %p170
      %p405 = pneg %p167
      %p406 = pneg %p191
      %p407 = pneg %p188
      %p408 = pneg %p212
      %p409 = pneg %p209
      %p410 = pneg %p233
      %p411 = pneg %p230
      %p412 = pneg %p254
      %p413 = pneg %p251
      %p414 = pneg %p282
      %p415 = pneg %p279
      %p416 = scmp.lt.s32.totalorder %s27, 1
      %s417 = scalar_select %p416, %s27, 1
      %p418 = scmp.lt.s32.totalorder %s28, 0
      %s419 = scalar_select %p418, %s28, 0
      %s420 = sadd.s32 %s419, %s417
      %s421 = smul.addr %s420, 4
      %s422 = scalar_lea.vmem %s10, %s421
      %p423 = pneg %p310
      %p424 = pneg %p307
      %p425 = scmp.lt.s32.totalorder %s27, 1
      %s426 = scalar_select %p425, %s27, 1
      %p427 = scmp.lt.s32.totalorder %s28, 0
      %s428 = scalar_select %p427, %s28, 0
      %s429 = sadd.s32 %s428, %s426
      %s430 = smul.addr %s429, 4
      %s431 = scalar_lea.vmem %s11, %s430
      %p432 = scmp.lt.s32.totalorder %s27, 1
      %s433 = scalar_select %p432, %s27, 1
      %p434 = scmp.lt.s32.totalorder %s28, 0
      %s435 = scalar_select %p434, %s28, 0
      %s436 = smul.addr %s433, 8
      %s437 = sadd.s32 %s435, %s436
      %s438 = scalar_lea.vmem %s0, %s437
      %p439 = scmp.lt.s32.totalorder %s27, 1
      %s440 = scalar_select %p439, %s27, 1
      %p441 = scmp.lt.s32.totalorder %s28, 0
      %s442 = scalar_select %p441, %s28, 0
      %s443 = smul.addr %s440, 4
      %s444 = sadd.s32 %s442, %s443
      %s445 = scalar_lea.vmem %s1, %s444
      %p446 = scmp.lt.s32.totalorder %s27, 1
      %s447 = scalar_select %p446, %s27, 1
      %p448 = scmp.lt.s32.totalorder %s28, 0
      %s449 = scalar_select %p448, %s28, 0
      %s450 = sadd.s32 %s449, %s447
      %s451 = smul.addr %s450, 4
      %s452 = scalar_lea.vmem %s10, %s451
      %p453 = scmp.lt.s32.totalorder %s27, 1
      %s454 = scalar_select %p453, %s27, 1
      %p455 = scmp.lt.s32.totalorder %s28, 0
      %s456 = scalar_select %p455, %s28, 0
      %s457 = sadd.s32 %s456, %s454
      %s458 = smul.addr %s457, 4
      %s459 = scalar_lea.vmem %s11, %s458
      %v461 = vld [vmem:[%s2] sm:$0x3]
      %v462 = vld [vmem:[%s3] sm:$0xf]
      %v463 = vld [vmem:[%s4] sm:$0x3]
      %v464 = vld [vmem:[%s5] sm:$0xf]
      %v465 = vld [vmem:[%s6] sm:$0x1]
      %v466 = vld [vmem:[%s7] sm:$0x3]
      %v467 = vld [vmem:[%s8] sm:$0x1]
      %v468 = vld [vmem:[%s9] sm:$0x3]
      %v469 = vld [vmem:[%s438] sm:$0x1]
      %v470 = vld [vmem:[%s438 + $0x1] sm:$0x1]
      %v471 = vld [vmem:[%s438 + $0x2] sm:$0x1]
      %v472 = vld [vmem:[%s438 + $0x3] sm:$0x1]
      %v473 = vld [vmem:[%s438 + $0x4] sm:$0x1]
      %v474 = vld [vmem:[%s438 + $0x5] sm:$0x1]
      %v475 = vld [vmem:[%s438 + $0x6] sm:$0x1]
      %v476 = vld [vmem:[%s438 + $0x7] sm:$0x1]
      %v477 = vld [vmem:[%s445] sm:$0x1]
      %v478 = vld [vmem:[%s445 + $0x1] sm:$0x1]
      %v479 = vld [vmem:[%s445 + $0x2] sm:$0x1]
      %v480 = vld [vmem:[%s445 + $0x3] sm:$0x1]
      %v490 = vunpack.c.l.s4 1966171168
      %v491 = vunpack.c.0.s8 %v490
      %v492 = vlaneseq
      %v493 = vshrl.u32 %v492, 7
      %v494 = vsub.s32 %v491, %v493
      %v495 = vrot.slane %v469, %v494
      %v497 = vunpack.c.l.s4 1966171168
      %v498 = vunpack.c.0.s8 %v497
      %v499 = vlaneseq
      %v500 = vshrl.u32 %v499, 7
      %v501 = vsub.s32 %v498, %v500
      %v502 = vrot.slane %v495, %v501
      %v504 = vunpack.c.l.s4 1966171168
      %v505 = vunpack.c.0.s8 %v504
      %v506 = vlaneseq
      %v507 = vshrl.u32 %v506, 7
      %v508 = vsub.s32 %v505, %v507
      %v509 = vrot.slane %v470, %v508
      %v511 = vunpack.c.l.s4 1966171168
      %v512 = vunpack.c.0.s8 %v511
      %v513 = vlaneseq
      %v514 = vshrl.u32 %v513, 7
      %v515 = vsub.s32 %v512, %v514
      %v516 = vrot.slane %v509, %v515
      %v518 = vunpack.c.l.s4 1966171168
      %v519 = vunpack.c.0.s8 %v518
      %v520 = vlaneseq
      %v521 = vshrl.u32 %v520, 7
      %v522 = vsub.s32 %v519, %v521
      %v523 = vrot.slane %v471, %v522
      %v525 = vunpack.c.l.s4 1966171168
      %v526 = vunpack.c.0.s8 %v525
      %v527 = vlaneseq
      %v528 = vshrl.u32 %v527, 7
      %v529 = vsub.s32 %v526, %v528
      %v530 = vrot.slane %v523, %v529
      %v532 = vunpack.c.l.s4 1966171168
      %v533 = vunpack.c.0.s8 %v532
      %v534 = vlaneseq
      %v535 = vshrl.u32 %v534, 7
      %v536 = vsub.s32 %v533, %v535
      %v537 = vrot.slane %v472, %v536
      %v539 = vunpack.c.l.s4 1966171168
      %v540 = vunpack.c.0.s8 %v539
      %v541 = vlaneseq
      %v542 = vshrl.u32 %v541, 7
      %v543 = vsub.s32 %v540, %v542
      %v544 = vrot.slane %v537, %v543
      %v546 = vunpack.c.l.s4 1966171168
      %v547 = vunpack.c.0.s8 %v546
      %v548 = vlaneseq
      %v549 = vshrl.u32 %v548, 7
      %v550 = vsub.s32 %v547, %v549
      %v551 = vrot.slane %v473, %v550
      %v553 = vunpack.c.l.s4 1966171168
      %v554 = vunpack.c.0.s8 %v553
      %v555 = vlaneseq
      %v556 = vshrl.u32 %v555, 7
      %v557 = vsub.s32 %v554, %v556
      %v558 = vrot.slane %v551, %v557
      %v560 = vunpack.c.l.s4 1966171168
      %v561 = vunpack.c.0.s8 %v560
      %v562 = vlaneseq
      %v563 = vshrl.u32 %v562, 7
      %v564 = vsub.s32 %v561, %v563
      %v565 = vrot.slane %v474, %v564
      %v567 = vunpack.c.l.s4 1966171168
      %v568 = vunpack.c.0.s8 %v567
      %v569 = vlaneseq
      %v570 = vshrl.u32 %v569, 7
      %v571 = vsub.s32 %v568, %v570
      %v572 = vrot.slane %v565, %v571
      %v574 = vunpack.c.l.s4 1966171168
      %v575 = vunpack.c.0.s8 %v574
      %v576 = vlaneseq
      %v577 = vshrl.u32 %v576, 7
      %v578 = vsub.s32 %v575, %v577
      %v579 = vrot.slane %v475, %v578
      %v581 = vunpack.c.l.s4 1966171168
      %v582 = vunpack.c.0.s8 %v581
      %v583 = vlaneseq
      %v584 = vshrl.u32 %v583, 7
      %v585 = vsub.s32 %v582, %v584
      %v586 = vrot.slane %v579, %v585
      %v588 = vunpack.c.l.s4 1966171168
      %v589 = vunpack.c.0.s8 %v588
      %v590 = vlaneseq
      %v591 = vshrl.u32 %v590, 7
      %v592 = vsub.s32 %v589, %v591
      %v593 = vrot.slane %v476, %v592
      %v595 = vunpack.c.l.s4 1966171168
      %v596 = vunpack.c.0.s8 %v595
      %v597 = vlaneseq
      %v598 = vshrl.u32 %v597, 7
      %v599 = vsub.s32 %v596, %v598
      %v600 = vrot.slane %v593, %v599
      %v601 = vunpack.c.l.b16 %v502
      %v602 = vunpack.c.l.b16 %v516
      %v603 = vunpack.c.l.b16 %v530
      %v604 = vunpack.c.l.b16 %v544
      %v605 = vunpack.c.l.b16 %v558
      %v606 = vunpack.c.l.b16 %v572
      %v607 = vunpack.c.l.b16 %v586
      %v608 = vunpack.c.l.b16 %v600
      %v609 = vrot.slane %v602, 7
      %vm610 = vcmask 1041409
      %v611 = vsel %vm610, %v609, %v601
      %v612 = vrot.slane %v603, 6
      %vm613 = vcmask 1042434
      %v614 = vsel %vm613, %v612, %v611
      %v615 = vrot.slane %v604, 5
      %vm616 = vcmask 1043459
      %v617 = vsel %vm616, %v615, %v614
      %v618 = vrot.slane %v605, 4
      %vm619 = vcmask 1044484
      %v620 = vsel %vm619, %v618, %v617
      %v621 = vrot.slane %v606, 3
      %vm622 = vcmask 1045509
      %v623 = vsel %vm622, %v621, %v620
      %v624 = vrot.slane %v607, 2
      %vm625 = vcmask 1046534
      %v626 = vsel %vm625, %v624, %v623
      %v627 = vrot.slane %v608, 1
      %vm628 = vcmask 1047559
      %v629 = vsel %vm628, %v627, %v626
      %v630 = vpack.c.b16 %v629, %v629
      %632 = vxpose.xlu0.c.b16.start [1/8] %v630, 128
      %633 = vxpose.xlu0.c.b16.cont [2/8] 0, 128
      %634 = vxpose.xlu0.c.b16.cont [3/8] 0, 128
      %635 = vxpose.xlu0.c.b16.cont [4/8] 0, 128
      %636 = vxpose.xlu0.c.b16.cont [5/8] 0, 128
      %637 = vxpose.xlu0.c.b16.cont [6/8] 0, 128
      %638 = vxpose.xlu0.c.b16.cont [7/8] 0, 128
      %639 = vxpose.xlu0.c.b16.end [8/8] 0, 128
      %v640 = vpop.trf.xlu0
      %v641 = vpop.trf.xlu0
      %v642 = vpop.trf.xlu0
      %v643 = vpop.trf.xlu0
      %v644 = vpop.trf.xlu0
      %v645 = vpop.trf.xlu0
      %v646 = vpop.trf.xlu0
      %v647 = vpop.trf.xlu0
      %vm648 = vcmask 64512
      %v650 = vsel %vm648, %v640, 0
      %v653 = vsel %vm648, %v641, 0
      %v656 = vsel %vm648, %v642, 0
      %v659 = vsel %vm648, %v643, 0
      %v662 = vsel %vm648, %v644, 0
      %v665 = vsel %vm648, %v645, 0
      %v668 = vsel %vm648, %v646, 0
      %v671 = vsel %vm648, %v647, 0
      %v674 = vsel %vm648, %v461, 0
      %676 = vmatprep.subr.bf16.mxu0 0
      %677 = vmatpush1.bf16.xpose.msra.mxu0 %v674
      %678 = vmatprep.subr.bf16.mxu0 0
      %679 = vmatpush1.bf16.xpose.msra.mxu0 0
      %680 = vmatprep.subr.bf16.mxu0 0
      %681 = vmatpush1.bf16.xpose.msra.mxu0 0
      %682 = vmatprep.subr.bf16.mxu0 0
      %683 = vmatpush1.bf16.xpose.msra.mxu0 0
      %684 = vmatprep.subr.bf16.mxu0 0
      %685 = vmatpush1.bf16.xpose.msra.mxu0 0
      %686 = vmatprep.subr.bf16.mxu0 0
      %687 = vmatpush1.bf16.xpose.msra.mxu0 0
      %688 = vmatprep.subr.bf16.mxu0 0
      %689 = vmatpush1.bf16.xpose.msra.mxu0 0
      %690 = vmatprep.subr.bf16.mxu0 0
      %691 = vmatpush1.bf16.xpose.msra.mxu0 0
      %692 = vmatprep.subr.bf16.mxu0 0
      %693 = vmatpush1.bf16.xpose.msra.mxu0 0
      %694 = vmatprep.subr.bf16.mxu0 0
      %695 = vmatpush1.bf16.xpose.msra.mxu0 0
      %696 = vmatprep.subr.bf16.mxu0 0
      %697 = vmatpush1.bf16.xpose.msra.mxu0 0
      %698 = vmatprep.subr.bf16.mxu0 0
      %699 = vmatpush1.bf16.xpose.msra.mxu0 0
      %700 = vmatprep.subr.bf16.mxu0 0
      %701 = vmatpush1.bf16.xpose.msra.mxu0 0
      %702 = vmatprep.subr.bf16.mxu0 0
      %703 = vmatpush1.bf16.xpose.msra.mxu0 0
      %704 = vmatprep.subr.bf16.mxu0 0
      %705 = vmatpush1.bf16.xpose.msra.mxu0 0
      %706 = vmatprep.subr.bf16.mxu0 0
      %707 = vmatpush1.bf16.xpose.msra.mxu0 0
      %708 = vmatprep.mubr.bf16.mxu0 0
      %709 = vmatmul.mubr.bf16.gmra.mrb[0].mxu0 %v650
      %v710 = vpop.f32.mrb[0].mxu0
      %v711 = vadd.f32 0.0, %v710
      %v712 = vpop.f32.mrb[0].mxu0
      %v713 = vpop.f32.mrb[0].mxu0
      %v714 = vadd.f32 0.0, %v713
      %v715 = vpop.f32.mrb[0].mxu0
      %716 = vmatprep.mubr.bf16.mxu0 0
      %717 = vmatmul.mubr.bf16.gmra.mrb[0].mxu0 %v653
      %v718 = vpop.f32.mrb[0].mxu0
      %v719 = vadd.f32 0.0, %v718
      %v720 = vpop.f32.mrb[0].mxu0
      %v721 = vpop.f32.mrb[0].mxu0
      %v722 = vadd.f32 0.0, %v721
      %v723 = vpop.f32.mrb[0].mxu0
      %724 = vmatprep.mubr.bf16.mxu0 0
      %725 = vmatmul.mubr.bf16.gmra.mrb[0].mxu0 %v656
      %v726 = vpop.f32.mrb[0].mxu0
      %v727 = vadd.f32 0.0, %v726
      %v728 = vpop.f32.mrb[0].mxu0
      %v729 = vpop.f32.mrb[0].mxu0
      %v730 = vadd.f32 0.0, %v729
      %v731 = vpop.f32.mrb[0].mxu0
      %732 = vmatprep.mubr.bf16.mxu0 0
      %733 = vmatmul.mubr.bf16.gmra.mrb[0].mxu0 %v659
      %v734 = vpop.f32.mrb[0].mxu0
      %v735 = vadd.f32 0.0, %v734
      %v736 = vpop.f32.mrb[0].mxu0
      %v737 = vpop.f32.mrb[0].mxu0
      %v738 = vadd.f32 0.0, %v737
      %v739 = vpop.f32.mrb[0].mxu0
      %740 = vmatprep.mubr.bf16.mxu0 0
      %741 = vmatmul.mubr.bf16.gmra.mrb[0].mxu0 %v662
      %v742 = vpop.f32.mrb[0].mxu0
      %v743 = vadd.f32 0.0, %v742
      %v744 = vpop.f32.mrb[0].mxu0
      %v745 = vpop.f32.mrb[0].mxu0
      %v746 = vadd.f32 0.0, %v745
      %v747 = vpop.f32.mrb[0].mxu0
      %748 = vmatprep.mubr.bf16.mxu0 0
      %749 = vmatmul.mubr.bf16.gmra.mrb[0].mxu0 %v665
      %v750 = vpop.f32.mrb[0].mxu0
      %v751 = vadd.f32 0.0, %v750
      %v752 = vpop.f32.mrb[0].mxu0
      %v753 = vpop.f32.mrb[0].mxu0
      %v754 = vadd.f32 0.0, %v753
      %v755 = vpop.f32.mrb[0].mxu0
      %756 = vmatprep.mubr.bf16.mxu0 0
      %757 = vmatmul.mubr.bf16.gmra.mrb[0].mxu0 %v668
      %v758 = vpop.f32.mrb[0].mxu0
      %v759 = vadd.f32 0.0, %v758
      %v760 = vpop.f32.mrb[0].mxu0
      %v761 = vpop.f32.mrb[0].mxu0
      %v762 = vadd.f32 0.0, %v761
      %v763 = vpop.f32.mrb[0].mxu0
      %764 = vmatprep.mubr.bf16.mxu0 0
      %765 = vmatmul.mubr.bf16.gmra.mrb[0].mxu0 %v671
      %v766 = vpop.f32.mrb[0].mxu0
      %v767 = vadd.f32 0.0, %v766
      %v768 = vpop.f32.mrb[0].mxu0
      %v769 = vpop.f32.mrb[0].mxu0
      %v770 = vadd.f32 0.0, %v769
      %v771 = vpop.f32.mrb[0].mxu0
      %772 = vdwg.mxu0
      %773 = vxpose.xlu0.b32.start [1/16] %v711, 128
      %774 = vxpose.xlu0.b32.cont [2/16] %v714, 128
      %775 = vxpose.xlu0.b32.cont [3/16] %v719, 128
      %776 = vxpose.xlu0.b32.cont [4/16] %v722, 128
      %777 = vxpose.xlu0.b32.cont [5/16] %v727, 128
      %778 = vxpose.xlu0.b32.cont [6/16] %v730, 128
      %779 = vxpose.xlu0.b32.cont [7/16] %v735, 128
      %780 = vxpose.xlu0.b32.cont [8/16] %v738, 128
      %781 = vxpose.xlu0.b32.cont [9/16] %v743, 128
      %782 = vxpose.xlu0.b32.cont [10/16] %v746, 128
      %783 = vxpose.xlu0.b32.cont [11/16] %v751, 128
      %784 = vxpose.xlu0.b32.cont [12/16] %v754, 128
      %785 = vxpose.xlu0.b32.cont [13/16] %v759, 128
      %786 = vxpose.xlu0.b32.cont [14/16] %v762, 128
      %787 = vxpose.xlu0.b32.cont [15/16] %v767, 128
      %788 = vxpose.xlu0.b32.end [16/16] %v770, 128
      %v789 = vpop.trf.xlu0
      %v790 = vpop.trf.xlu0
      %v791 = vpop.trf.xlu0
      %v792 = vpop.trf.xlu0
      %v793 = vpop.trf.xlu0
      %v794 = vpop.trf.xlu0
      %v795 = vpop.trf.xlu0
      %v796 = vpop.trf.xlu0
      %v797 = vpop.trf.xlu0
      %v798 = vpop.trf.xlu0
      %v799 = vpop.trf.xlu0
      %v800 = vpop.trf.xlu0
      %v801 = vpop.trf.xlu0
      %v802 = vpop.trf.xlu0
      %v803 = vpop.trf.xlu0
      %v804 = vpop.trf.xlu0
      %806 = vset.pattern.permute.xlu0 0
      %807 = vperm.xlu0 %806, %v462
      %v808 = vpop.permute.xlu0 %807
      %v810 = vadd.f32 %v789, %v808
      %v816 = vunpack.c.l.s4 1966171168
      %v817 = vunpack.c.0.s8 %v816
      %v818 = vlaneseq
      %v819 = vshrl.u32 %v818, 7
      %v820 = vsub.s32 %v817, %v819
      %v821 = vrot.slane %v477, %v820
      %v823 = vunpack.c.l.s4 1966171168
      %v824 = vunpack.c.0.s8 %v823
      %v825 = vlaneseq
      %v826 = vshrl.u32 %v825, 7
      %v827 = vsub.s32 %v824, %v826
      %v828 = vrot.slane %v821, %v827
      %v830 = vunpack.c.l.s4 1966171168
      %v831 = vunpack.c.0.s8 %v830
      %v832 = vlaneseq
      %v833 = vshrl.u32 %v832, 7
      %v834 = vsub.s32 %v831, %v833
      %v835 = vrot.slane %v478, %v834
      %v837 = vunpack.c.l.s4 1966171168
      %v838 = vunpack.c.0.s8 %v837
      %v839 = vlaneseq
      %v840 = vshrl.u32 %v839, 7
      %v841 = vsub.s32 %v838, %v840
      %v842 = vrot.slane %v835, %v841
      %v844 = vunpack.c.l.s4 1966171168
      %v845 = vunpack.c.0.s8 %v844
      %v846 = vlaneseq
      %v847 = vshrl.u32 %v846, 7
      %v848 = vsub.s32 %v845, %v847
      %v849 = vrot.slane %v479, %v848
      %v851 = vunpack.c.l.s4 1966171168
      %v852 = vunpack.c.0.s8 %v851
      %v853 = vlaneseq
      %v854 = vshrl.u32 %v853, 7
      %v855 = vsub.s32 %v852, %v854
      %v856 = vrot.slane %v849, %v855
      %v858 = vunpack.c.l.s4 1966171168
      %v859 = vunpack.c.0.s8 %v858
      %v860 = vlaneseq
      %v861 = vshrl.u32 %v860, 7
      %v862 = vsub.s32 %v859, %v861
      %v863 = vrot.slane %v480, %v862
      %v865 = vunpack.c.l.s4 1966171168
      %v866 = vunpack.c.0.s8 %v865
      %v867 = vlaneseq
      %v868 = vshrl.u32 %v867, 7
      %v869 = vsub.s32 %v866, %v868
      %v870 = vrot.slane %v863, %v869
      %v871 = vunpack.c.l.b16 %v828
      %v872 = vunpack.c.l.b16 %v842
      %v873 = vunpack.c.l.b16 %v856
      %v874 = vunpack.c.l.b16 %v870
      %v875 = vrot.slane %v872, 7
      %v876 = vsel %vm610, %v875, %v871
      %v877 = vrot.slane %v873, 6
      %v878 = vsel %vm613, %v877, %v876
      %v879 = vrot.slane %v874, 5
      %v880 = vsel %vm616, %v879, %v878
      %v881 = vpack.c.b16 %v880, %v880
      %883 = vxpose.xlu0.c.b16.start [1/8] %v881, 128
      %884 = vxpose.xlu0.c.b16.cont [2/8] 0, 128
      %885 = vxpose.xlu0.c.b16.cont [3/8] 0, 128
      %886 = vxpose.xlu0.c.b16.cont [4/8] 0, 128
      %887 = vxpose.xlu0.c.b16.cont [5/8] 0, 128
      %888 = vxpose.xlu0.c.b16.cont [6/8] 0, 128
      %889 = vxpose.xlu0.c.b16.cont [7/8] 0, 128
      %890 = vxpose.xlu0.c.b16.end [8/8] 0, 128
      %v891 = vpop.trf.xlu0
      %v892 = vpop.trf.xlu0
      %v893 = vpop.trf.xlu0
      %v894 = vpop.trf.xlu0
      %v895 = vpop.trf.xlu0
      %v896 = vpop.trf.xlu0
      %v897 = vpop.trf.xlu0
      %v898 = vpop.trf.xlu0
      %vm899 = vcmask 31744
      %v901 = vsel %vm899, %v891, 0
      %v904 = vsel %vm899, %v892, 0
      %v907 = vsel %vm899, %v893, 0
      %v910 = vsel %vm899, %v894, 0
      %v913 = vsel %vm899, %v895, 0
      %v916 = vsel %vm899, %v896, 0
      %v919 = vsel %vm899, %v897, 0
      %v922 = vsel %vm899, %v898, 0
      %v925 = vsel %vm899, %v463, 0
      %927 = vmatprep.subr.bf16.mxu0 0
      %928 = vmatpush1.bf16.xpose.msra.mxu0 %v925
      %929 = vmatprep.subr.bf16.mxu0 0
      %930 = vmatpush1.bf16.xpose.msra.mxu0 0
      %931 = vmatprep.subr.bf16.mxu0 0
      %932 = vmatpush1.bf16.xpose.msra.mxu0 0
      %933 = vmatprep.subr.bf16.mxu0 0
      %934 = vmatpush1.bf16.xpose.msra.mxu0 0
      %935 = vmatprep.subr.bf16.mxu0 0
      %936 = vmatpush1.bf16.xpose.msra.mxu0 0
      %937 = vmatprep.subr.bf16.mxu0 0
      %938 = vmatpush1.bf16.xpose.msra.mxu0 0
      %939 = vmatprep.subr.bf16.mxu0 0
      %940 = vmatpush1.bf16.xpose.msra.mxu0 0
      %941 = vmatprep.subr.bf16.mxu0 0
      %942 = vmatpush1.bf16.xpose.msra.mxu0 0
      %943 = vmatprep.subr.bf16.mxu0 0
      %944 = vmatpush1.bf16.xpose.msra.mxu0 0
      %945 = vmatprep.subr.bf16.mxu0 0
      %946 = vmatpush1.bf16.xpose.msra.mxu0 0
      %947 = vmatprep.subr.bf16.mxu0 0
      %948 = vmatpush1.bf16.xpose.msra.mxu0 0
      %949 = vmatprep.subr.bf16.mxu0 0
      %950 = vmatpush1.bf16.xpose.msra.mxu0 0
      %951 = vmatprep.subr.bf16.mxu0 0
      %952 = vmatpush1.bf16.xpose.msra.mxu0 0
      %953 = vmatprep.subr.bf16.mxu0 0
      %954 = vmatpush1.bf16.xpose.msra.mxu0 0
      %955 = vmatprep.subr.bf16.mxu0 0
      %956 = vmatpush1.bf16.xpose.msra.mxu0 0
      %957 = vmatprep.subr.bf16.mxu0 0
      %958 = vmatpush1.bf16.xpose.msra.mxu0 0
      %959 = vmatprep.mubr.bf16.mxu0 0
      %960 = vmatmul.mubr.bf16.gmra.mrb[0].mxu0 %v901
      %v961 = vpop.f32.mrb[0].mxu0
      %v962 = vadd.f32 0.0, %v961
      %v963 = vpop.f32.mrb[0].mxu0
      %v964 = vpop.f32.mrb[0].mxu0
      %v965 = vadd.f32 0.0, %v964
      %v966 = vpop.f32.mrb[0].mxu0
      %967 = vmatprep.mubr.bf16.mxu0 0
      %968 = vmatmul.mubr.bf16.gmra.mrb[0].mxu0 %v904
      %v969 = vpop.f32.mrb[0].mxu0
      %v970 = vadd.f32 0.0, %v969
      %v971 = vpop.f32.mrb[0].mxu0
      %v972 = vpop.f32.mrb[0].mxu0
      %v973 = vadd.f32 0.0, %v972
      %v974 = vpop.f32.mrb[0].mxu0
      %975 = vmatprep.mubr.bf16.mxu0 0
      %976 = vmatmul.mubr.bf16.gmra.mrb[0].mxu0 %v907
      %v977 = vpop.f32.mrb[0].mxu0
      %v978 = vadd.f32 0.0, %v977
      %v979 = vpop.f32.mrb[0].mxu0
      %v980 = vpop.f32.mrb[0].mxu0
      %v981 = vadd.f32 0.0, %v980
      %v982 = vpop.f32.mrb[0].mxu0
      %983 = vmatprep.mubr.bf16.mxu0 0
      %984 = vmatmul.mubr.bf16.gmra.mrb[0].mxu0 %v910
      %v985 = vpop.f32.mrb[0].mxu0
      %v986 = vadd.f32 0.0, %v985
      %v987 = vpop.f32.mrb[0].mxu0
      %v988 = vpop.f32.mrb[0].mxu0
      %v989 = vadd.f32 0.0, %v988
      %v990 = vpop.f32.mrb[0].mxu0
      %991 = vmatprep.mubr.bf16.mxu0 0
      %992 = vmatmul.mubr.bf16.gmra.mrb[0].mxu0 %v913
      %v993 = vpop.f32.mrb[0].mxu0
      %v994 = vadd.f32 0.0, %v993
      %v995 = vpop.f32.mrb[0].mxu0
      %v996 = vpop.f32.mrb[0].mxu0
      %v997 = vadd.f32 0.0, %v996
      %v998 = vpop.f32.mrb[0].mxu0
      %999 = vmatprep.mubr.bf16.mxu0 0
      %1000 = vmatmul.mubr.bf16.gmra.mrb[0].mxu0 %v916
      %v1001 = vpop.f32.mrb[0].mxu0
      %v1002 = vadd.f32 0.0, %v1001
      %v1003 = vpop.f32.mrb[0].mxu0
      %v1004 = vpop.f32.mrb[0].mxu0
      %v1005 = vadd.f32 0.0, %v1004
      %v1006 = vpop.f32.mrb[0].mxu0
      %1007 = vmatprep.mubr.bf16.mxu0 0
      %1008 = vmatmul.mubr.bf16.gmra.mrb[0].mxu0 %v919
      %v1009 = vpop.f32.mrb[0].mxu0
      %v1010 = vadd.f32 0.0, %v1009
      %v1011 = vpop.f32.mrb[0].mxu0
      %v1012 = vpop.f32.mrb[0].mxu0
      %v1013 = vadd.f32 0.0, %v1012
      %v1014 = vpop.f32.mrb[0].mxu0
      %1015 = vmatprep.mubr.bf16.mxu0 0
      %1016 = vmatmul.mubr.bf16.gmra.mrb[0].mxu0 %v922
      %v1017 = vpop.f32.mrb[0].mxu0
      %v1018 = vadd.f32 0.0, %v1017
      %v1019 = vpop.f32.mrb[0].mxu0
      %v1020 = vpop.f32.mrb[0].mxu0
      %v1021 = vadd.f32 0.0, %v1020
      %v1022 = vpop.f32.mrb[0].mxu0
      %1023 = vdwg.mxu0
      %1024 = vxpose.xlu0.b32.start [1/16] %v962, 128
      %1025 = vxpose.xlu0.b32.cont [2/16] %v965, 128
      %1026 = vxpose.xlu0.b32.cont [3/16] %v970, 128
      %1027 = vxpose.xlu0.b32.cont [4/16] %v973, 128
      %1028 = vxpose.xlu0.b32.cont [5/16] %v978, 128
      %1029 = vxpose.xlu0.b32.cont [6/16] %v981, 128
      %1030 = vxpose.xlu0.b32.cont [7/16] %v986, 128
      %1031 = vxpose.xlu0.b32.cont [8/16] %v989, 128
      %1032 = vxpose.xlu0.b32.cont [9/16] %v994, 128
      %1033 = vxpose.xlu0.b32.cont [10/16] %v997, 128
      %1034 = vxpose.xlu0.b32.cont [11/16] %v1002, 128
      %1035 = vxpose.xlu0.b32.cont [12/16] %v1005, 128
      %1036 = vxpose.xlu0.b32.cont [13/16] %v1010, 128
      %1037 = vxpose.xlu0.b32.cont [14/16] %v1013, 128
      %1038 = vxpose.xlu0.b32.cont [15/16] %v1018, 128
      %1039 = vxpose.xlu0.b32.end [16/16] %v1021, 128
      %v1040 = vpop.trf.xlu0
      %v1041 = vpop.trf.xlu0
      %v1042 = vpop.trf.xlu0
      %v1043 = vpop.trf.xlu0
      %v1044 = vpop.trf.xlu0
      %v1045 = vpop.trf.xlu0
      %v1046 = vpop.trf.xlu0
      %v1047 = vpop.trf.xlu0
      %v1048 = vpop.trf.xlu0
      %v1049 = vpop.trf.xlu0
      %v1050 = vpop.trf.xlu0
      %v1051 = vpop.trf.xlu0
      %v1052 = vpop.trf.xlu0
      %v1053 = vpop.trf.xlu0
      %v1054 = vpop.trf.xlu0
      %v1055 = vpop.trf.xlu0
      %1057 = vset.pattern.permute.xlu0 0
      %1058 = vperm.xlu0 %1057, %v464
      %v1059 = vpop.permute.xlu0 %1058
      %v1061 = vadd.f32 %v1040, %v1059
      %v1062 = vpack.c.bf16 %v810, %v810
      %v1063 = vpack.c.bf16 %v1061, %v1061
      %v1065 = vsel %vm899, %v465, 0
      %1067 = vmatprep.subr.bf16.mxu0 0
      %1068 = vmatpush1.bf16.xpose.msra.mxu0 %v1065
      %1069 = vmatprep.subr.bf16.mxu0 0
      %1070 = vmatpush1.bf16.xpose.msra.mxu0 0
      %1071 = vmatprep.subr.bf16.mxu0 0
      %1072 = vmatpush1.bf16.xpose.msra.mxu0 0
      %1073 = vmatprep.subr.bf16.mxu0 0
      %1074 = vmatpush1.bf16.xpose.msra.mxu0 0
      %1075 = vmatprep.subr.bf16.mxu0 0
      %1076 = vmatpush1.bf16.xpose.msra.mxu0 0
      %1077 = vmatprep.subr.bf16.mxu0 0
      %1078 = vmatpush1.bf16.xpose.msra.mxu0 0
      %1079 = vmatprep.subr.bf16.mxu0 0
      %1080 = vmatpush1.bf16.xpose.msra.mxu0 0
      %1081 = vmatprep.subr.bf16.mxu0 0
      %1082 = vmatpush1.bf16.xpose.msra.mxu0 0
      %1083 = vmatprep.subr.bf16.mxu0 0
      %1084 = vmatpush1.bf16.xpose.msra.mxu0 0
      %1085 = vmatprep.subr.bf16.mxu0 0
      %1086 = vmatpush1.bf16.xpose.msra.mxu0 0
      %1087 = vmatprep.subr.bf16.mxu0 0
      %1088 = vmatpush1.bf16.xpose.msra.mxu0 0
      %1089 = vmatprep.subr.bf16.mxu0 0
      %1090 = vmatpush1.bf16.xpose.msra.mxu0 0
      %1091 = vmatprep.subr.bf16.mxu0 0
      %1092 = vmatpush1.bf16.xpose.msra.mxu0 0
      %1093 = vmatprep.subr.bf16.mxu0 0
      %1094 = vmatpush1.bf16.xpose.msra.mxu0 0
      %1095 = vmatprep.subr.bf16.mxu0 0
      %1096 = vmatpush1.bf16.xpose.msra.mxu0 0
      %1097 = vmatprep.subr.bf16.mxu0 0
      %1098 = vmatpush1.bf16.xpose.msra.mxu0 0
      %1099 = vmatprep.mubr.bf16.mxu0 0
      %1100 = vmatmul.mubr.bf16.gmra.mrb[0].mxu0 %v901
      %v1101 = vpop.f32.mrb[0].mxu0
      %v1102 = vadd.f32 0.0, %v1101
      %v1103 = vpop.f32.mrb[0].mxu0
      %v1104 = vpop.f32.mrb[0].mxu0
      %v1105 = vadd.f32 0.0, %v1104
      %v1106 = vpop.f32.mrb[0].mxu0
      %1107 = vmatprep.mubr.bf16.mxu0 0
      %1108 = vmatmul.mubr.bf16.gmra.mrb[0].mxu0 %v904
      %v1109 = vpop.f32.mrb[0].mxu0
      %v1110 = vadd.f32 0.0, %v1109
      %v1111 = vpop.f32.mrb[0].mxu0
      %v1112 = vpop.f32.mrb[0].mxu0
      %v1113 = vadd.f32 0.0, %v1112
      %v1114 = vpop.f32.mrb[0].mxu0
      %1115 = vmatprep.mubr.bf16.mxu0 0
      %1116 = vmatmul.mubr.bf16.gmra.mrb[0].mxu0 %v907
      %v1117 = vpop.f32.mrb[0].mxu0
      %v1118 = vadd.f32 0.0, %v1117
      %v1119 = vpop.f32.mrb[0].mxu0
      %v1120 = vpop.f32.mrb[0].mxu0
      %v1121 = vadd.f32 0.0, %v1120
      %v1122 = vpop.f32.mrb[0].mxu0
      %1123 = vmatprep.mubr.bf16.mxu0 0
      %1124 = vmatmul.mubr.bf16.gmra.mrb[0].mxu0 %v910
      %v1125 = vpop.f32.mrb[0].mxu0
      %v1126 = vadd.f32 0.0, %v1125
      %v1127 = vpop.f32.mrb[0].mxu0
      %v1128 = vpop.f32.mrb[0].mxu0
      %v1129 = vadd.f32 0.0, %v1128
      %v1130 = vpop.f32.mrb[0].mxu0
      %1131 = vmatprep.mubr.bf16.mxu0 0
      %1132 = vmatmul.mubr.bf16.gmra.mrb[0].mxu0 %v913
      %v1133 = vpop.f32.mrb[0].mxu0
      %v1134 = vadd.f32 0.0, %v1133
      %v1135 = vpop.f32.mrb[0].mxu0
      %v1136 = vpop.f32.mrb[0].mxu0
      %v1137 = vadd.f32 0.0, %v1136
      %v1138 = vpop.f32.mrb[0].mxu0
      %1139 = vmatprep.mubr.bf16.mxu0 0
      %1140 = vmatmul.mubr.bf16.gmra.mrb[0].mxu0 %v916
      %v1141 = vpop.f32.mrb[0].mxu0
      %v1142 = vadd.f32 0.0, %v1141
      %v1143 = vpop.f32.mrb[0].mxu0
      %v1144 = vpop.f32.mrb[0].mxu0
      %v1145 = vadd.f32 0.0, %v1144
      %v1146 = vpop.f32.mrb[0].mxu0
      %1147 = vmatprep.mubr.bf16.mxu0 0
      %1148 = vmatmul.mubr.bf16.gmra.mrb[0].mxu0 %v919
      %v1149 = vpop.f32.mrb[0].mxu0
      %v1150 = vadd.f32 0.0, %v1149
      %v1151 = vpop.f32.mrb[0].mxu0
      %v1152 = vpop.f32.mrb[0].mxu0
      %v1153 = vadd.f32 0.0, %v1152
      %v1154 = vpop.f32.mrb[0].mxu0
      %1155 = vmatprep.mubr.bf16.mxu0 0
      %1156 = vmatmul.mubr.bf16.gmra.mrb[0].mxu0 %v922
      %v1157 = vpop.f32.mrb[0].mxu0
      %v1158 = vadd.f32 0.0, %v1157
      %v1159 = vpop.f32.mrb[0].mxu0
      %v1160 = vpop.f32.mrb[0].mxu0
      %v1161 = vadd.f32 0.0, %v1160
      %v1162 = vpop.f32.mrb[0].mxu0
      %1163 = vdwg.mxu0
      %1164 = vxpose.xlu0.b32.start [1/16] %v1102, 128
      %1165 = vxpose.xlu0.b32.cont [2/16] %v1105, 128
      %1166 = vxpose.xlu0.b32.cont [3/16] %v1110, 128
      %1167 = vxpose.xlu0.b32.cont [4/16] %v1113, 128
      %1168 = vxpose.xlu0.b32.cont [5/16] %v1118, 128
      %1169 = vxpose.xlu0.b32.cont [6/16] %v1121, 128
      %1170 = vxpose.xlu0.b32.cont [7/16] %v1126, 128
      %1171 = vxpose.xlu0.b32.cont [8/16] %v1129, 128
      %1172 = vxpose.xlu0.b32.cont [9/16] %v1134, 128
      %1173 = vxpose.xlu0.b32.cont [10/16] %v1137, 128
      %1174 = vxpose.xlu0.b32.cont [11/16] %v1142, 128
      %1175 = vxpose.xlu0.b32.cont [12/16] %v1145, 128
      %1176 = vxpose.xlu0.b32.cont [13/16] %v1150, 128
      %1177 = vxpose.xlu0.b32.cont [14/16] %v1153, 128
      %1178 = vxpose.xlu0.b32.cont [15/16] %v1158, 128
      %1179 = vxpose.xlu0.b32.end [16/16] %v1161, 128
      %v1180 = vpop.trf.xlu0
      %v1181 = vpop.trf.xlu0
      %v1182 = vpop.trf.xlu0
      %v1183 = vpop.trf.xlu0
      %v1184 = vpop.trf.xlu0
      %v1185 = vpop.trf.xlu0
      %v1186 = vpop.trf.xlu0
      %v1187 = vpop.trf.xlu0
      %v1188 = vpop.trf.xlu0
      %v1189 = vpop.trf.xlu0
      %v1190 = vpop.trf.xlu0
      %v1191 = vpop.trf.xlu0
      %v1192 = vpop.trf.xlu0
      %v1193 = vpop.trf.xlu0
      %v1194 = vpop.trf.xlu0
      %v1195 = vpop.trf.xlu0
      %1197 = vset.pattern.permute.xlu0 0
      %1198 = vperm.xlu0 %1197, %v466
      %v1199 = vpop.permute.xlu0 %1198
      %v1201 = vadd.f32 %v1180, %v1199
      %v1203 = vsel %vm899, %v467, 0
      %1205 = vmatprep.subr.bf16.mxu0 0
      %1206 = vmatpush1.bf16.xpose.msra.mxu0 %v1203
      %1207 = vmatprep.subr.bf16.mxu0 0
      %1208 = vmatpush1.bf16.xpose.msra.mxu0 0
      %1209 = vmatprep.subr.bf16.mxu0 0
      %1210 = vmatpush1.bf16.xpose.msra.mxu0 0
      %1211 = vmatprep.subr.bf16.mxu0 0
      %1212 = vmatpush1.bf16.xpose.msra.mxu0 0
      %1213 = vmatprep.subr.bf16.mxu0 0
      %1214 = vmatpush1.bf16.xpose.msra.mxu0 0
      %1215 = vmatprep.subr.bf16.mxu0 0
      %1216 = vmatpush1.bf16.xpose.msra.mxu0 0
      %1217 = vmatprep.subr.bf16.mxu0 0
      %1218 = vmatpush1.bf16.xpose.msra.mxu0 0
      %1219 = vmatprep.subr.bf16.mxu0 0
      %1220 = vmatpush1.bf16.xpose.msra.mxu0 0
      %1221 = vmatprep.subr.bf16.mxu0 0
      %1222 = vmatpush1.bf16.xpose.msra.mxu0 0
      %1223 = vmatprep.subr.bf16.mxu0 0
      %1224 = vmatpush1.bf16.xpose.msra.mxu0 0
      %1225 = vmatprep.subr.bf16.mxu0 0
      %1226 = vmatpush1.bf16.xpose.msra.mxu0 0
      %1227 = vmatprep.subr.bf16.mxu0 0
      %1228 = vmatpush1.bf16.xpose.msra.mxu0 0
      %1229 = vmatprep.subr.bf16.mxu0 0
      %1230 = vmatpush1.bf16.xpose.msra.mxu0 0
      %1231 = vmatprep.subr.bf16.mxu0 0
      %1232 = vmatpush1.bf16.xpose.msra.mxu0 0
      %1233 = vmatprep.subr.bf16.mxu0 0
      %1234 = vmatpush1.bf16.xpose.msra.mxu0 0
      %1235 = vmatprep.subr.bf16.mxu0 0
      %1236 = vmatpush1.bf16.xpose.msra.mxu0 0
      %1237 = vmatprep.mubr.bf16.mxu0 0
      %1238 = vmatmul.mubr.bf16.gmra.mrb[0].mxu0 %v901
      %v1239 = vpop.f32.mrb[0].mxu0
      %v1240 = vadd.f32 0.0, %v1239
      %v1241 = vpop.f32.mrb[0].mxu0
      %v1242 = vpop.f32.mrb[0].mxu0
      %v1243 = vadd.f32 0.0, %v1242
      %v1244 = vpop.f32.mrb[0].mxu0
      %1245 = vmatprep.mubr.bf16.mxu0 0
      %1246 = vmatmul.mubr.bf16.gmra.mrb[0].mxu0 %v904
      %v1247 = vpop.f32.mrb[0].mxu0
      %v1248 = vadd.f32 0.0, %v1247
      %v1249 = vpop.f32.mrb[0].mxu0
      %v1250 = vpop.f32.mrb[0].mxu0
      %v1251 = vadd.f32 0.0, %v1250
      %v1252 = vpop.f32.mrb[0].mxu0
      %1253 = vmatprep.mubr.bf16.mxu0 0
      %1254 = vmatmul.mubr.bf16.gmra.mrb[0].mxu0 %v907
      %v1255 = vpop.f32.mrb[0].mxu0
      %v1256 = vadd.f32 0.0, %v1255
      %v1257 = vpop.f32.mrb[0].mxu0
      %v1258 = vpop.f32.mrb[0].mxu0
      %v1259 = vadd.f32 0.0, %v1258
      %v1260 = vpop.f32.mrb[0].mxu0
      %1261 = vmatprep.mubr.bf16.mxu0 0
      %1262 = vmatmul.mubr.bf16.gmra.mrb[0].mxu0 %v910
      %v1263 = vpop.f32.mrb[0].mxu0
      %v1264 = vadd.f32 0.0, %v1263
      %v1265 = vpop.f32.mrb[0].mxu0
      %v1266 = vpop.f32.mrb[0].mxu0
      %v1267 = vadd.f32 0.0, %v1266
      %v1268 = vpop.f32.mrb[0].mxu0
      %1269 = vmatprep.mubr.bf16.mxu0 0
      %1270 = vmatmul.mubr.bf16.gmra.mrb[0].mxu0 %v913
      %v1271 = vpop.f32.mrb[0].mxu0
      %v1272 = vadd.f32 0.0, %v1271
      %v1273 = vpop.f32.mrb[0].mxu0
      %v1274 = vpop.f32.mrb[0].mxu0
      %v1275 = vadd.f32 0.0, %v1274
      %v1276 = vpop.f32.mrb[0].mxu0
      %1277 = vmatprep.mubr.bf16.mxu0 0
      %1278 = vmatmul.mubr.bf16.gmra.mrb[0].mxu0 %v916
      %v1279 = vpop.f32.mrb[0].mxu0
      %v1280 = vadd.f32 0.0, %v1279
      %v1281 = vpop.f32.mrb[0].mxu0
      %v1282 = vpop.f32.mrb[0].mxu0
      %v1283 = vadd.f32 0.0, %v1282
      %v1284 = vpop.f32.mrb[0].mxu0
      %1285 = vmatprep.mubr.bf16.mxu0 0
      %1286 = vmatmul.mubr.bf16.gmra.mrb[0].mxu0 %v919
      %v1287 = vpop.f32.mrb[0].mxu0
      %v1288 = vadd.f32 0.0, %v1287
      %v1289 = vpop.f32.mrb[0].mxu0
      %v1290 = vpop.f32.mrb[0].mxu0
      %v1291 = vadd.f32 0.0, %v1290
      %v1292 = vpop.f32.mrb[0].mxu0
      %1293 = vmatprep.mubr.bf16.mxu0 0
      %1294 = vmatmul.mubr.bf16.gmra.mrb[0].mxu0 %v922
      %v1295 = vpop.f32.mrb[0].mxu0
      %v1296 = vadd.f32 0.0, %v1295
      %v1297 = vpop.f32.mrb[0].mxu0
      %v1298 = vpop.f32.mrb[0].mxu0
      %v1299 = vadd.f32 0.0, %v1298
      %v1300 = vpop.f32.mrb[0].mxu0
      %1301 = vdwg.mxu0
      %1302 = vxpose.xlu0.b32.start [1/16] %v1240, 128
      %1303 = vxpose.xlu0.b32.cont [2/16] %v1243, 128
      %1304 = vxpose.xlu0.b32.cont [3/16] %v1248, 128
      %1305 = vxpose.xlu0.b32.cont [4/16] %v1251, 128
      %1306 = vxpose.xlu0.b32.cont [5/16] %v1256, 128
      %1307 = vxpose.xlu0.b32.cont [6/16] %v1259, 128
      %1308 = vxpose.xlu0.b32.cont [7/16] %v1264, 128
      %1309 = vxpose.xlu0.b32.cont [8/16] %v1267, 128
      %1310 = vxpose.xlu0.b32.cont [9/16] %v1272, 128
      %1311 = vxpose.xlu0.b32.cont [10/16] %v1275, 128
      %1312 = vxpose.xlu0.b32.cont [11/16] %v1280, 128
      %1313 = vxpose.xlu0.b32.cont [12/16] %v1283, 128
      %1314 = vxpose.xlu0.b32.cont [13/16] %v1288, 128
      %1315 = vxpose.xlu0.b32.cont [14/16] %v1291, 128
      %1316 = vxpose.xlu0.b32.cont [15/16] %v1296, 128
      %1317 = vxpose.xlu0.b32.end [16/16] %v1299, 128
      %v1318 = vpop.trf.xlu0
      %v1319 = vpop.trf.xlu0
      %v1320 = vpop.trf.xlu0
      %v1321 = vpop.trf.xlu0
      %v1322 = vpop.trf.xlu0
      %v1323 = vpop.trf.xlu0
      %v1324 = vpop.trf.xlu0
      %v1325 = vpop.trf.xlu0
      %v1326 = vpop.trf.xlu0
      %v1327 = vpop.trf.xlu0
      %v1328 = vpop.trf.xlu0
      %v1329 = vpop.trf.xlu0
      %v1330 = vpop.trf.xlu0
      %v1331 = vpop.trf.xlu0
      %v1332 = vpop.trf.xlu0
      %v1333 = vpop.trf.xlu0
      %1335 = vset.pattern.permute.xlu0 0
      %1336 = vperm.xlu0 %1335, %v468
      %v1337 = vpop.permute.xlu0 %1336
      %v1339 = vadd.f32 %v1318, %v1337
      %v1340 = vpack.c.bf16 %v1201, %v1201
      %1341 = vst [vmem:[#allocation2] sm:$0x1] %v1340
      %v1342 = vpack.c.bf16 %v1339, %v1339
      %1343 = vst [vmem:[#allocation3] sm:$0x1] %v1342
      %v1344 = vld [vmem:[%s438] sm:$0x1]
      %v1345 = vld [vmem:[%s438 + $0x1] sm:$0x1]
      %v1346 = vld [vmem:[%s438 + $0x2] sm:$0x1]
      %v1347 = vld [vmem:[%s438 + $0x3] sm:$0x1]
      %v1348 = vld [vmem:[%s438 + $0x4] sm:$0x1]
      %v1349 = vld [vmem:[%s438 + $0x5] sm:$0x1]
      %v1350 = vld [vmem:[%s438 + $0x6] sm:$0x1]
      %v1351 = vld [vmem:[%s438 + $0x7] sm:$0x1]
      %v1352 = vld [vmem:[%s445] sm:$0x1]
      %v1353 = vld [vmem:[%s445 + $0x1] sm:$0x1]
      %v1354 = vld [vmem:[%s445 + $0x2] sm:$0x1]
      %v1355 = vld [vmem:[%s445 + $0x3] sm:$0x1]
      %v1365 = vunpack.c.l.s4 1966171168
      %v1366 = vunpack.c.0.s8 %v1365
      %v1367 = vlaneseq
      %v1368 = vshrl.u32 %v1367, 7
      %v1369 = vsub.s32 %v1366, %v1368
      %v1370 = vrot.slane %v1344, %v1369
      %v1372 = vunpack.c.l.s4 1966171168
      %v1373 = vunpack.c.0.s8 %v1372
      %v1374 = vlaneseq
      %v1375 = vshrl.u32 %v1374, 7
      %v1376 = vsub.s32 %v1373, %v1375
      %v1377 = vrot.slane %v1370, %v1376
      %v1379 = vunpack.c.l.s4 1966171168
      %v1380 = vunpack.c.0.s8 %v1379
      %v1381 = vlaneseq
      %v1382 = vshrl.u32 %v1381, 7
      %v1383 = vsub.s32 %v1380, %v1382
      %v1384 = vrot.slane %v1345, %v1383
      %v1386 = vunpack.c.l.s4 1966171168
      %v1387 = vunpack.c.0.s8 %v1386
      %v1388 = vlaneseq
      %v1389 = vshrl.u32 %v1388, 7
      %v1390 = vsub.s32 %v1387, %v1389
      %v1391 = vrot.slane %v1384, %v1390
      %v1393 = vunpack.c.l.s4 1966171168
      %v1394 = vunpack.c.0.s8 %v1393
      %v1395 = vlaneseq
      %v1396 = vshrl.u32 %v1395, 7
      %v1397 = vsub.s32 %v1394, %v1396
      %v1398 = vrot.slane %v1346, %v1397
      %v1400 = vunpack.c.l.s4 1966171168
      %v1401 = vunpack.c.0.s8 %v1400
      %v1402 = vlaneseq
      %v1403 = vshrl.u32 %v1402, 7
      %v1404 = vsub.s32 %v1401, %v1403
      %v1405 = vrot.slane %v1398, %v1404
      %v1407 = vunpack.c.l.s4 1966171168
      %v1408 = vunpack.c.0.s8 %v1407
      %v1409 = vlaneseq
      %v1410 = vshrl.u32 %v1409, 7
      %v1411 = vsub.s32 %v1408, %v1410
      %v1412 = vrot.slane %v1347, %v1411
      %v1414 = vunpack.c.l.s4 1966171168
      %v1415 = vunpack.c.0.s8 %v1414
      %v1416 = vlaneseq
      %v1417 = vshrl.u32 %v1416, 7
      %v1418 = vsub.s32 %v1415, %v1417
      %v1419 = vrot.slane %v1412, %v1418
      %v1421 = vunpack.c.l.s4 1966171168
      %v1422 = vunpack.c.0.s8 %v1421
      %v1423 = vlaneseq
      %v1424 = vshrl.u32 %v1423, 7
      %v1425 = vsub.s32 %v1422, %v1424
      %v1426 = vrot.slane %v1348, %v1425
      %v1428 = vunpack.c.l.s4 1966171168
      %v1429 = vunpack.c.0.s8 %v1428
      %v1430 = vlaneseq
      %v1431 = vshrl.u32 %v1430, 7
      %v1432 = vsub.s32 %v1429, %v1431
      %v1433 = vrot.slane %v1426, %v1432
      %v1435 = vunpack.c.l.s4 1966171168
      %v1436 = vunpack.c.0.s8 %v1435
      %v1437 = vlaneseq
      %v1438 = vshrl.u32 %v1437, 7
      %v1439 = vsub.s32 %v1436, %v1438
      %v1440 = vrot.slane %v1349, %v1439
      %v1442 = vunpack.c.l.s4 1966171168
      %v1443 = vunpack.c.0.s8 %v1442
      %v1444 = vlaneseq
      %v1445 = vshrl.u32 %v1444, 7
      %v1446 = vsub.s32 %v1443, %v1445
      %v1447 = vrot.slane %v1440, %v1446
      %v1449 = vunpack.c.l.s4 1966171168
      %v1450 = vunpack.c.0.s8 %v1449
      %v1451 = vlaneseq
      %v1452 = vshrl.u32 %v1451, 7
      %v1453 = vsub.s32 %v1450, %v1452
      %v1454 = vrot.slane %v1350, %v1453
      %v1456 = vunpack.c.l.s4 1966171168
      %v1457 = vunpack.c.0.s8 %v1456
      %v1458 = vlaneseq
      %v1459 = vshrl.u32 %v1458, 7
      %v1460 = vsub.s32 %v1457, %v1459
      %v1461 = vrot.slane %v1454, %v1460
      %v1463 = vunpack.c.l.s4 1966171168
      %v1464 = vunpack.c.0.s8 %v1463
      %v1465 = vlaneseq
      %v1466 = vshrl.u32 %v1465, 7
      %v1467 = vsub.s32 %v1464, %v1466
      %v1468 = vrot.slane %v1351, %v1467
      %v1470 = vunpack.c.l.s4 1966171168
      %v1471 = vunpack.c.0.s8 %v1470
      %v1472 = vlaneseq
      %v1473 = vshrl.u32 %v1472, 7
      %v1474 = vsub.s32 %v1471, %v1473
      %v1475 = vrot.slane %v1468, %v1474
      %v1476 = vunpack.c.l.b16 %v1377
      %v1477 = vunpack.c.l.b16 %v1391
      %v1478 = vunpack.c.l.b16 %v1405
      %v1479 = vunpack.c.l.b16 %v1419
      %v1480 = vunpack.c.l.b16 %v1433
      %v1481 = vunpack.c.l.b16 %v1447
      %v1482 = vunpack.c.l.b16 %v1461
      %v1483 = vunpack.c.l.b16 %v1475
      %v1484 = vrot.slane %v1476, 1
      %v1485 = vsel %vm610, %v1477, %v1484
      %v1486 = vrot.slane %v1478, 7
      %v1487 = vsel %vm613, %v1486, %v1485
      %v1488 = vrot.slane %v1479, 6
      %v1489 = vsel %vm616, %v1488, %v1487
      %v1490 = vrot.slane %v1480, 5
      %v1491 = vsel %vm619, %v1490, %v1489
      %v1492 = vrot.slane %v1481, 4
      %v1493 = vsel %vm622, %v1492, %v1491
      %v1494 = vrot.slane %v1482, 3
      %v1495 = vsel %vm625, %v1494, %v1493
      %v1496 = vrot.slane %v1483, 2
      %v1497 = vsel %vm628, %v1496, %v1495
      %v1498 = vpack.c.b16 %v1497, %v1497
      %1500 = vxpose.xlu0.c.b16.start [1/8] %v1498, 128
      %1501 = vxpose.xlu0.c.b16.cont [2/8] 0, 128
      %1502 = vxpose.xlu0.c.b16.cont [3/8] 0, 128
      %1503 = vxpose.xlu0.c.b16.cont [4/8] 0, 128
      %1504 = vxpose.xlu0.c.b16.cont [5/8] 0, 128
      %1505 = vxpose.xlu0.c.b16.cont [6/8] 0, 128
      %1506 = vxpose.xlu0.c.b16.cont [7/8] 0, 128
      %1507 = vxpose.xlu0.c.b16.end [8/8] 0, 128
      %v1508 = vpop.trf.xlu0
      %v1509 = vpop.trf.xlu0
      %v1510 = vpop.trf.xlu0
      %v1511 = vpop.trf.xlu0
      %v1512 = vpop.trf.xlu0
      %v1513 = vpop.trf.xlu0
      %v1514 = vpop.trf.xlu0
      %v1515 = vpop.trf.xlu0
      %v1517 = vsel %vm648, %v1508, 0
      %v1520 = vsel %vm648, %v1509, 0
      %v1523 = vsel %vm648, %v1510, 0
      %v1526 = vsel %vm648, %v1511, 0
      %v1529 = vsel %vm648, %v1512, 0
      %v1532 = vsel %vm648, %v1513, 0
      %v1535 = vsel %vm648, %v1514, 0
      %v1538 = vsel %vm648, %v1515, 0
      %1540 = vmatprep.subr.bf16.mxu0 0
      %1541 = vmatpush1.bf16.xpose.msra.mxu0 %v674
      %1542 = vmatprep.subr.bf16.mxu0 0
      %1543 = vmatpush1.bf16.xpose.msra.mxu0 0
      %1544 = vmatprep.subr.bf16.mxu0 0
      %1545 = vmatpush1.bf16.xpose.msra.mxu0 0
      %1546 = vmatprep.subr.bf16.mxu0 0
      %1547 = vmatpush1.bf16.xpose.msra.mxu0 0
      %1548 = vmatprep.subr.bf16.mxu0 0
      %1549 = vmatpush1.bf16.xpose.msra.mxu0 0
      %1550 = vmatprep.subr.bf16.mxu0 0
      %1551 = vmatpush1.bf16.xpose.msra.mxu0 0
      %1552 = vmatprep.subr.bf16.mxu0 0
      %1553 = vmatpush1.bf16.xpose.msra.mxu0 0
      %1554 = vmatprep.subr.bf16.mxu0 0
      %1555 = vmatpush1.bf16.xpose.msra.mxu0 0
      %1556 = vmatprep.subr.bf16.mxu0 0
      %1557 = vmatpush1.bf16.xpose.msra.mxu0 0
      %1558 = vmatprep.subr.bf16.mxu0 0
      %1559 = vmatpush1.bf16.xpose.msra.mxu0 0
      %1560 = vmatprep.subr.bf16.mxu0 0
      %1561 = vmatpush1.bf16.xpose.msra.mxu0 0
      %1562 = vmatprep.subr.bf16.mxu0 0
      %1563 = vmatpush1.bf16.xpose.msra.mxu0 0
      %1564 = vmatprep.subr.bf16.mxu0 0
      %1565 = vmatpush1.bf16.xpose.msra.mxu0 0
      %1566 = vmatprep.subr.bf16.mxu0 0
      %1567 = vmatpush1.bf16.xpose.msra.mxu0 0
      %1568 = vmatprep.subr.bf16.mxu0 0
      %1569 = vmatpush1.bf16.xpose.msra.mxu0 0
      %1570 = vmatprep.subr.bf16.mxu0 0
      %1571 = vmatpush1.bf16.xpose.msra.mxu0 0
      %1572 = vmatprep.mubr.bf16.mxu0 0
      %1573 = vmatmul.mubr.bf16.gmra.mrb[0].mxu0 %v1517
      %v1574 = vpop.f32.mrb[0].mxu0
      %v1575 = vadd.f32 0.0, %v1574
      %v1576 = vpop.f32.mrb[0].mxu0
      %v1577 = vpop.f32.mrb[0].mxu0
      %v1578 = vadd.f32 0.0, %v1577
      %v1579 = vpop.f32.mrb[0].mxu0
      %1580 = vmatprep.mubr.bf16.mxu0 0
      %1581 = vmatmul.mubr.bf16.gmra.mrb[0].mxu0 %v1520
      %v1582 = vpop.f32.mrb[0].mxu0
      %v1583 = vadd.f32 0.0, %v1582
      %v1584 = vpop.f32.mrb[0].mxu0
      %v1585 = vpop.f32.mrb[0].mxu0
      %v1586 = vadd.f32 0.0, %v1585
      %v1587 = vpop.f32.mrb[0].mxu0
      %1588 = vmatprep.mubr.bf16.mxu0 0
      %1589 = vmatmul.mubr.bf16.gmra.mrb[0].mxu0 %v1523
      %v1590 = vpop.f32.mrb[0].mxu0
      %v1591 = vadd.f32 0.0, %v1590
      %v1592 = vpop.f32.mrb[0].mxu0
      %v1593 = vpop.f32.mrb[0].mxu0
      %v1594 = vadd.f32 0.0, %v1593
      %v1595 = vpop.f32.mrb[0].mxu0
      %1596 = vmatprep.mubr.bf16.mxu0 0
      %1597 = vmatmul.mubr.bf16.gmra.mrb[0].mxu0 %v1526
      %v1598 = vpop.f32.mrb[0].mxu0
      %v1599 = vadd.f32 0.0, %v1598
      %v1600 = vpop.f32.mrb[0].mxu0
      %v1601 = vpop.f32.mrb[0].mxu0
      %v1602 = vadd.f32 0.0, %v1601
      %v1603 = vpop.f32.mrb[0].mxu0
      %1604 = vmatprep.mubr.bf16.mxu0 0
      %1605 = vmatmul.mubr.bf16.gmra.mrb[0].mxu0 %v1529
      %v1606 = vpop.f32.mrb[0].mxu0
      %v1607 = vadd.f32 0.0, %v1606
      %v1608 = vpop.f32.mrb[0].mxu0
      %v1609 = vpop.f32.mrb[0].mxu0
      %v1610 = vadd.f32 0.0, %v1609
      %v1611 = vpop.f32.mrb[0].mxu0
      %1612 = vmatprep.mubr.bf16.mxu0 0
      %1613 = vmatmul.mubr.bf16.gmra.mrb[0].mxu0 %v1532
      %v1614 = vpop.f32.mrb[0].mxu0
      %v1615 = vadd.f32 0.0, %v1614
      %v1616 = vpop.f32.mrb[0].mxu0
      %v1617 = vpop.f32.mrb[0].mxu0
      %v1618 = vadd.f32 0.0, %v1617
      %v1619 = vpop.f32.mrb[0].mxu0
      %1620 = vmatprep.mubr.bf16.mxu0 0
      %1621 = vmatmul.mubr.bf16.gmra.mrb[0].mxu0 %v1535
      %v1622 = vpop.f32.mrb[0].mxu0
      %v1623 = vadd.f32 0.0, %v1622
      %v1624 = vpop.f32.mrb[0].mxu0
      %v1625 = vpop.f32.mrb[0].mxu0
      %v1626 = vadd.f32 0.0, %v1625
      %v1627 = vpop.f32.mrb[0].mxu0
      %1628 = vmatprep.mubr.bf16.mxu0 0
      %1629 = vmatmul.mubr.bf16.gmra.mrb[0].mxu0 %v1538
      %v1630 = vpop.f32.mrb[0].mxu0
      %v1631 = vadd.f32 0.0, %v1630
      %v1632 = vpop.f32.mrb[0].mxu0
      %v1633 = vpop.f32.mrb[0].mxu0
      %v1634 = vadd.f32 0.0, %v1633
      %v1635 = vpop.f32.mrb[0].mxu0
      %1636 = vdwg.mxu0
      %1637 = vxpose.xlu0.b32.start [1/16] %v1575, 128
      %1638 = vxpose.xlu0.b32.cont [2/16] %v1578, 128
      %1639 = vxpose.xlu0.b32.cont [3/16] %v1583, 128
      %1640 = vxpose.xlu0.b32.cont [4/16] %v1586, 128
      %1641 = vxpose.xlu0.b32.cont [5/16] %v1591, 128
      %1642 = vxpose.xlu0.b32.cont [6/16] %v1594, 128
      %1643 = vxpose.xlu0.b32.cont [7/16] %v1599, 128
      %1644 = vxpose.xlu0.b32.cont [8/16] %v1602, 128
      %1645 = vxpose.xlu0.b32.cont [9/16] %v1607, 128
      %1646 = vxpose.xlu0.b32.cont [10/16] %v1610, 128
      %1647 = vxpose.xlu0.b32.cont [11/16] %v1615, 128
      %1648 = vxpose.xlu0.b32.cont [12/16] %v1618, 128
      %1649 = vxpose.xlu0.b32.cont [13/16] %v1623, 128
      %1650 = vxpose.xlu0.b32.cont [14/16] %v1626, 128
      %1651 = vxpose.xlu0.b32.cont [15/16] %v1631, 128
      %1652 = vxpose.xlu0.b32.end [16/16] %v1634, 128
      %v1653 = vpop.trf.xlu0
      %v1654 = vpop.trf.xlu0
      %v1655 = vpop.trf.xlu0
      %v1656 = vpop.trf.xlu0
      %v1657 = vpop.trf.xlu0
      %v1658 = vpop.trf.xlu0
      %v1659 = vpop.trf.xlu0
      %v1660 = vpop.trf.xlu0
      %v1661 = vpop.trf.xlu0
      %v1662 = vpop.trf.xlu0
      %v1663 = vpop.trf.xlu0
      %v1664 = vpop.trf.xlu0
      %v1665 = vpop.trf.xlu0
      %v1666 = vpop.trf.xlu0
      %v1667 = vpop.trf.xlu0
      %v1668 = vpop.trf.xlu0
      %v1669 = vadd.f32 %v1653, %v808
      %v1675 = vunpack.c.l.s4 1966171168
      %v1676 = vunpack.c.0.s8 %v1675
      %v1677 = vlaneseq
      %v1678 = vshrl.u32 %v1677, 7
      %v1679 = vsub.s32 %v1676, %v1678
      %v1680 = vrot.slane %v1352, %v1679
      %v1682 = vunpack.c.l.s4 1966171168
      %v1683 = vunpack.c.0.s8 %v1682
      %v1684 = vlaneseq
      %v1685 = vshrl.u32 %v1684, 7
      %v1686 = vsub.s32 %v1683, %v1685
      %v1687 = vrot.slane %v1680, %v1686
      %v1689 = vunpack.c.l.s4 1966171168
      %v1690 = vunpack.c.0.s8 %v1689
      %v1691 = vlaneseq
      %v1692 = vshrl.u32 %v1691, 7
      %v1693 = vsub.s32 %v1690, %v1692
      %v1694 = vrot.slane %v1353, %v1693
      %v1696 = vunpack.c.l.s4 1966171168
      %v1697 = vunpack.c.0.s8 %v1696
      %v1698 = vlaneseq
      %v1699 = vshrl.u32 %v1698, 7
      %v1700 = vsub.s32 %v1697, %v1699
      %v1701 = vrot.slane %v1694, %v1700
      %v1703 = vunpack.c.l.s4 1966171168
      %v1704 = vunpack.c.0.s8 %v1703
      %v1705 = vlaneseq
      %v1706 = vshrl.u32 %v1705, 7
      %v1707 = vsub.s32 %v1704, %v1706
      %v1708 = vrot.slane %v1354, %v1707
      %v1710 = vunpack.c.l.s4 1966171168
      %v1711 = vunpack.c.0.s8 %v1710
      %v1712 = vlaneseq
      %v1713 = vshrl.u32 %v1712, 7
      %v1714 = vsub.s32 %v1711, %v1713
      %v1715 = vrot.slane %v1708, %v1714
      %v1717 = vunpack.c.l.s4 1966171168
      %v1718 = vunpack.c.0.s8 %v1717
      %v1719 = vlaneseq
      %v1720 = vshrl.u32 %v1719, 7
      %v1721 = vsub.s32 %v1718, %v1720
      %v1722 = vrot.slane %v1355, %v1721
      %v1724 = vunpack.c.l.s4 1966171168
      %v1725 = vunpack.c.0.s8 %v1724
      %v1726 = vlaneseq
      %v1727 = vshrl.u32 %v1726, 7
      %v1728 = vsub.s32 %v1725, %v1727
      %v1729 = vrot.slane %v1722, %v1728
      %v1730 = vunpack.c.l.b16 %v1687
      %v1731 = vunpack.c.l.b16 %v1701
      %v1732 = vunpack.c.l.b16 %v1715
      %v1733 = vunpack.c.l.b16 %v1729
      %v1734 = vrot.slane %v1730, 1
      %v1735 = vsel %vm610, %v1731, %v1734
      %v1736 = vrot.slane %v1732, 7
      %v1737 = vsel %vm613, %v1736, %v1735
      %v1738 = vrot.slane %v1733, 6
      %v1739 = vsel %vm616, %v1738, %v1737
      %v1740 = vpack.c.b16 %v1739, %v1739
      %1742 = vxpose.xlu0.c.b16.start [1/8] %v1740, 128
      %1743 = vxpose.xlu0.c.b16.cont [2/8] 0, 128
      %1744 = vxpose.xlu0.c.b16.cont [3/8] 0, 128
      %1745 = vxpose.xlu0.c.b16.cont [4/8] 0, 128
      %1746 = vxpose.xlu0.c.b16.cont [5/8] 0, 128
      %1747 = vxpose.xlu0.c.b16.cont [6/8] 0, 128
      %1748 = vxpose.xlu0.c.b16.cont [7/8] 0, 128
      %1749 = vxpose.xlu0.c.b16.end [8/8] 0, 128
      %v1750 = vpop.trf.xlu0
      %v1751 = vpop.trf.xlu0
      %v1752 = vpop.trf.xlu0
      %v1753 = vpop.trf.xlu0
      %v1754 = vpop.trf.xlu0
      %v1755 = vpop.trf.xlu0
      %v1756 = vpop.trf.xlu0
      %v1757 = vpop.trf.xlu0
      %v1759 = vsel %vm899, %v1750, 0
      %v1762 = vsel %vm899, %v1751, 0
      %v1765 = vsel %vm899, %v1752, 0
      %v1768 = vsel %vm899, %v1753, 0
      %v1771 = vsel %vm899, %v1754, 0
      %v1774 = vsel %vm899, %v1755, 0
      %v1777 = vsel %vm899, %v1756, 0
      %v1780 = vsel %vm899, %v1757, 0
      %1782 = vmatprep.subr.bf16.mxu0 0
      %1783 = vmatpush1.bf16.xpose.msra.mxu0 %v925
      %1784 = vmatprep.subr.bf16.mxu0 0
      %1785 = vmatpush1.bf16.xpose.msra.mxu0 0
      %1786 = vmatprep.subr.bf16.mxu0 0
      %1787 = vmatpush1.bf16.xpose.msra.mxu0 0
      %1788 = vmatprep.subr.bf16.mxu0 0
      %1789 = vmatpush1.bf16.xpose.msra.mxu0 0
      %1790 = vmatprep.subr.bf16.mxu0 0
      %1791 = vmatpush1.bf16.xpose.msra.mxu0 0
      %1792 = vmatprep.subr.bf16.mxu0 0
      %1793 = vmatpush1.bf16.xpose.msra.mxu0 0
      %1794 = vmatprep.subr.bf16.mxu0 0
      %1795 = vmatpush1.bf16.xpose.msra.mxu0 0
      %1796 = vmatprep.subr.bf16.mxu0 0
      %1797 = vmatpush1.bf16.xpose.msra.mxu0 0
      %1798 = vmatprep.subr.bf16.mxu0 0
      %1799 = vmatpush1.bf16.xpose.msra.mxu0 0
      %1800 = vmatprep.subr.bf16.mxu0 0
      %1801 = vmatpush1.bf16.xpose.msra.mxu0 0
      %1802 = vmatprep.subr.bf16.mxu0 0
      %1803 = vmatpush1.bf16.xpose.msra.mxu0 0
      %1804 = vmatprep.subr.bf16.mxu0 0
      %1805 = vmatpush1.bf16.xpose.msra.mxu0 0
      %1806 = vmatprep.subr.bf16.mxu0 0
      %1807 = vmatpush1.bf16.xpose.msra.mxu0 0
      %1808 = vmatprep.subr.bf16.mxu0 0
      %1809 = vmatpush1.bf16.xpose.msra.mxu0 0
      %1810 = vmatprep.subr.bf16.mxu0 0
      %1811 = vmatpush1.bf16.xpose.msra.mxu0 0
      %1812 = vmatprep.subr.bf16.mxu0 0
      %1813 = vmatpush1.bf16.xpose.msra.mxu0 0
      %1814 = vmatprep.mubr.bf16.mxu0 0
      %1815 = vmatmul.mubr.bf16.gmra.mrb[0].mxu0 %v1759
      %v1816 = vpop.f32.mrb[0].mxu0
      %v1817 = vadd.f32 0.0, %v1816
      %v1818 = vpop.f32.mrb[0].mxu0
      %v1819 = vpop.f32.mrb[0].mxu0
      %v1820 = vadd.f32 0.0, %v1819
      %v1821 = vpop.f32.mrb[0].mxu0
      %1822 = vmatprep.mubr.bf16.mxu0 0
      %1823 = vmatmul.mubr.bf16.gmra.mrb[0].mxu0 %v1762
      %v1824 = vpop.f32.mrb[0].mxu0
      %v1825 = vadd.f32 0.0, %v1824
      %v1826 = vpop.f32.mrb[0].mxu0
      %v1827 = vpop.f32.mrb[0].mxu0
      %v1828 = vadd.f32 0.0, %v1827
      %v1829 = vpop.f32.mrb[0].mxu0
      %1830 = vmatprep.mubr.bf16.mxu0 0
      %1831 = vmatmul.mubr.bf16.gmra.mrb[0].mxu0 %v1765
      %v1832 = vpop.f32.mrb[0].mxu0
      %v1833 = vadd.f32 0.0, %v1832
      %v1834 = vpop.f32.mrb[0].mxu0
      %v1835 = vpop.f32.mrb[0].mxu0
      %v1836 = vadd.f32 0.0, %v1835
      %v1837 = vpop.f32.mrb[0].mxu0
      %1838 = vmatprep.mubr.bf16.mxu0 0
      %1839 = vmatmul.mubr.bf16.gmra.mrb[0].mxu0 %v1768
      %v1840 = vpop.f32.mrb[0].mxu0
      %v1841 = vadd.f32 0.0, %v1840
      %v1842 = vpop.f32.mrb[0].mxu0
      %v1843 = vpop.f32.mrb[0].mxu0
      %v1844 = vadd.f32 0.0, %v1843
      %v1845 = vpop.f32.mrb[0].mxu0
      %1846 = vmatprep.mubr.bf16.mxu0 0
      %1847 = vmatmul.mubr.bf16.gmra.mrb[0].mxu0 %v1771
      %v1848 = vpop.f32.mrb[0].mxu0
      %v1849 = vadd.f32 0.0, %v1848
      %v1850 = vpop.f32.mrb[0].mxu0
      %v1851 = vpop.f32.mrb[0].mxu0
      %v1852 = vadd.f32 0.0, %v1851
      %v1853 = vpop.f32.mrb[0].mxu0
      %1854 = vmatprep.mubr.bf16.mxu0 0
      %1855 = vmatmul.mubr.bf16.gmra.mrb[0].mxu0 %v1774
      %v1856 = vpop.f32.mrb[0].mxu0
      %v1857 = vadd.f32 0.0, %v1856
      %v1858 = vpop.f32.mrb[0].mxu0
      %v1859 = vpop.f32.mrb[0].mxu0
      %v1860 = vadd.f32 0.0, %v1859
      %v1861 = vpop.f32.mrb[0].mxu0
      %1862 = vmatprep.mubr.bf16.mxu0 0
      %1863 = vmatmul.mubr.bf16.gmra.mrb[0].mxu0 %v1777
      %v1864 = vpop.f32.mrb[0].mxu0
      %v1865 = vadd.f32 0.0, %v1864
      %v1866 = vpop.f32.mrb[0].mxu0
      %v1867 = vpop.f32.mrb[0].mxu0
      %v1868 = vadd.f32 0.0, %v1867
      %v1869 = vpop.f32.mrb[0].mxu0
      %1870 = vmatprep.mubr.bf16.mxu0 0
      %1871 = vmatmul.mubr.bf16.gmra.mrb[0].mxu0 %v1780
      %v1872 = vpop.f32.mrb[0].mxu0
      %v1873 = vadd.f32 0.0, %v1872
      %v1874 = vpop.f32.mrb[0].mxu0
      %v1875 = vpop.f32.mrb[0].mxu0
      %v1876 = vadd.f32 0.0, %v1875
      %v1877 = vpop.f32.mrb[0].mxu0
      %1878 = vdwg.mxu0
      %1879 = vxpose.xlu0.b32.start [1/16] %v1817, 128
      %1880 = vxpose.xlu0.b32.cont [2/16] %v1820, 128
      %1881 = vxpose.xlu0.b32.cont [3/16] %v1825, 128
      %1882 = vxpose.xlu0.b32.cont [4/16] %v1828, 128
      %1883 = vxpose.xlu0.b32.cont [5/16] %v1833, 128
      %1884 = vxpose.xlu0.b32.cont [6/16] %v1836, 128
      %1885 = vxpose.xlu0.b32.cont [7/16] %v1841, 128
      %1886 = vxpose.xlu0.b32.cont [8/16] %v1844, 128
      %1887 = vxpose.xlu0.b32.cont [9/16] %v1849, 128
      %1888 = vxpose.xlu0.b32.cont [10/16] %v1852, 128
      %1889 = vxpose.xlu0.b32.cont [11/16] %v1857, 128
      %1890 = vxpose.xlu0.b32.cont [12/16] %v1860, 128
      %1891 = vxpose.xlu0.b32.cont [13/16] %v1865, 128
      %1892 = vxpose.xlu0.b32.cont [14/16] %v1868, 128
      %1893 = vxpose.xlu0.b32.cont [15/16] %v1873, 128
      %1894 = vxpose.xlu0.b32.end [16/16] %v1876, 128
      %v1895 = vpop.trf.xlu0
      %v1896 = vpop.trf.xlu0
      %v1897 = vpop.trf.xlu0
      %v1898 = vpop.trf.xlu0
      %v1899 = vpop.trf.xlu0
      %v1900 = vpop.trf.xlu0
      %v1901 = vpop.trf.xlu0
      %v1902 = vpop.trf.xlu0
      %v1903 = vpop.trf.xlu0
      %v1904 = vpop.trf.xlu0
      %v1905 = vpop.trf.xlu0
      %v1906 = vpop.trf.xlu0
      %v1907 = vpop.trf.xlu0
      %v1908 = vpop.trf.xlu0
      %v1909 = vpop.trf.xlu0
      %v1910 = vpop.trf.xlu0
      %v1911 = vadd.f32 %v1895, %v1059
      %v1912 = vpack.c.bf16 %v1669, %v1669
      %v1913 = vpack.c.bf16 %v1911, %v1911
      %1914 = vmatprep.subr.bf16.mxu0 0
      %1915 = vmatpush1.bf16.xpose.msra.mxu0 %v1913
      %1916 = vmatprep.subr.bf16.mxu0 0
      %1917 = vmatpush1.bf16.xpose.msra.mxu0 0
      %1918 = vmatprep.subr.bf16.mxu0 0
      %1919 = vmatpush1.bf16.xpose.msra.mxu0 0
      %1920 = vmatprep.subr.bf16.mxu0 0
      %1921 = vmatpush1.bf16.xpose.msra.mxu0 0
      %1922 = vmatprep.subr.bf16.mxu0 0
      %1923 = vmatpush1.bf16.xpose.msra.mxu0 0
      %1924 = vmatprep.subr.bf16.mxu0 0
      %1925 = vmatpush1.bf16.xpose.msra.mxu0 0
      %1926 = vmatprep.subr.bf16.mxu0 0
      %1927 = vmatpush1.bf16.xpose.msra.mxu0 0
      %1928 = vmatprep.subr.bf16.mxu0 0
      %1929 = vmatpush1.bf16.xpose.msra.mxu0 0
      %1930 = vmatprep.subr.bf16.mxu0 0
      %1931 = vmatpush1.bf16.xpose.msra.mxu0 0
      %1932 = vmatprep.subr.bf16.mxu0 0
      %1933 = vmatpush1.bf16.xpose.msra.mxu0 0
      %1934 = vmatprep.subr.bf16.mxu0 0
      %1935 = vmatpush1.bf16.xpose.msra.mxu0 0
      %1936 = vmatprep.subr.bf16.mxu0 0
      %1937 = vmatpush1.bf16.xpose.msra.mxu0 0
      %1938 = vmatprep.subr.bf16.mxu0 0
      %1939 = vmatpush1.bf16.xpose.msra.mxu0 0
      %1940 = vmatprep.subr.bf16.mxu0 0
      %1941 = vmatpush1.bf16.xpose.msra.mxu0 0
      %1942 = vmatprep.subr.bf16.mxu0 0
      %1943 = vmatpush1.bf16.xpose.msra.mxu0 0
      %1944 = vmatprep.subr.bf16.mxu0 0
      %1945 = vmatpush1.bf16.xpose.msra.mxu0 0
      %1946 = vmatprep.mubr.bf16.mxu0 0
      %1947 = vmatmul.mubr.bf16.gmra.mrb[0].mxu0 %v1912
      %v1948 = vpop.f32.mrb[0].mxu0
      %v1949 = vadd.f32 0.0, %v1948
      %v1950 = vpop.f32.mrb[0].mxu0
      %v1951 = vpop.f32.mrb[0].mxu0
      %v1952 = vpop.f32.mrb[0].mxu0
      %1953 = vdwg.mxu0
      %1954 = vmatprep.subr.bf16.mxu0 0
      %1955 = vmatpush1.bf16.xpose.msra.mxu0 %v1063
      %1956 = vmatprep.subr.bf16.mxu0 0
      %1957 = vmatpush1.bf16.xpose.msra.mxu0 0
      %1958 = vmatprep.subr.bf16.mxu0 0
      %1959 = vmatpush1.bf16.xpose.msra.mxu0 0
      %1960 = vmatprep.subr.bf16.mxu0 0
      %1961 = vmatpush1.bf16.xpose.msra.mxu0 0
      %1962 = vmatprep.subr.bf16.mxu0 0
      %1963 = vmatpush1.bf16.xpose.msra.mxu0 0
      %1964 = vmatprep.subr.bf16.mxu0 0
      %1965 = vmatpush1.bf16.xpose.msra.mxu0 0
      %1966 = vmatprep.subr.bf16.mxu0 0
      %1967 = vmatpush1.bf16.xpose.msra.mxu0 0
      %1968 = vmatprep.subr.bf16.mxu0 0
      %1969 = vmatpush1.bf16.xpose.msra.mxu0 0
      %1970 = vmatprep.subr.bf16.mxu0 0
      %1971 = vmatpush1.bf16.xpose.msra.mxu0 0
      %1972 = vmatprep.subr.bf16.mxu0 0
      %1973 = vmatpush1.bf16.xpose.msra.mxu0 0
      %1974 = vmatprep.subr.bf16.mxu0 0
      %1975 = vmatpush1.bf16.xpose.msra.mxu0 0
      %1976 = vmatprep.subr.bf16.mxu0 0
      %1977 = vmatpush1.bf16.xpose.msra.mxu0 0
      %1978 = vmatprep.subr.bf16.mxu0 0
      %1979 = vmatpush1.bf16.xpose.msra.mxu0 0
      %1980 = vmatprep.subr.bf16.mxu0 0
      %1981 = vmatpush1.bf16.xpose.msra.mxu0 0
      %1982 = vmatprep.subr.bf16.mxu0 0
      %1983 = vmatpush1.bf16.xpose.msra.mxu0 0
      %1984 = vmatprep.subr.bf16.mxu0 0
      %1985 = vmatpush1.bf16.xpose.msra.mxu0 0
      %1986 = vmatprep.mubr.bf16.mxu0 0
      %1987 = vmatmul.mubr.bf16.gmra.mrb[0].mxu0 %v1062
      %v1988 = vpop.f32.mrb[0].mxu0
      %v1989 = vadd.f32 %v1949, %v1988
      %v1990 = vpop.f32.mrb[0].mxu0
      %v1991 = vpop.f32.mrb[0].mxu0
      %v1992 = vpop.f32.mrb[0].mxu0
      %1993 = vdwg.mxu0
      %1994 = vmatprep.subr.bf16.mxu0 0
      %1995 = vmatpush1.bf16.xpose.msra.mxu0 %v1065
      %1996 = vmatprep.subr.bf16.mxu0 0
      %1997 = vmatpush1.bf16.xpose.msra.mxu0 0
      %1998 = vmatprep.subr.bf16.mxu0 0
      %1999 = vmatpush1.bf16.xpose.msra.mxu0 0
      %2000 = vmatprep.subr.bf16.mxu0 0
      %2001 = vmatpush1.bf16.xpose.msra.mxu0 0
      %2002 = vmatprep.subr.bf16.mxu0 0
      %2003 = vmatpush1.bf16.xpose.msra.mxu0 0
      %2004 = vmatprep.subr.bf16.mxu0 0
      %2005 = vmatpush1.bf16.xpose.msra.mxu0 0
      %2006 = vmatprep.subr.bf16.mxu0 0
      %2007 = vmatpush1.bf16.xpose.msra.mxu0 0
      %2008 = vmatprep.subr.bf16.mxu0 0
      %2009 = vmatpush1.bf16.xpose.msra.mxu0 0
      %2010 = vmatprep.subr.bf16.mxu0 0
      %2011 = vmatpush1.bf16.xpose.msra.mxu0 0
      %2012 = vmatprep.subr.bf16.mxu0 0
      %2013 = vmatpush1.bf16.xpose.msra.mxu0 0
      %2014 = vmatprep.subr.bf16.mxu0 0
      %2015 = vmatpush1.bf16.xpose.msra.mxu0 0
      %2016 = vmatprep.subr.bf16.mxu0 0
      %2017 = vmatpush1.bf16.xpose.msra.mxu0 0
      %2018 = vmatprep.subr.bf16.mxu0 0
      %2019 = vmatpush1.bf16.xpose.msra.mxu0 0
      %2020 = vmatprep.subr.bf16.mxu0 0
      %2021 = vmatpush1.bf16.xpose.msra.mxu0 0
      %2022 = vmatprep.subr.bf16.mxu0 0
      %2023 = vmatpush1.bf16.xpose.msra.mxu0 0
      %2024 = vmatprep.subr.bf16.mxu0 0
      %2025 = vmatpush1.bf16.xpose.msra.mxu0 0
      %2026 = vmatprep.mubr.bf16.mxu0 0
      %2027 = vmatmul.mubr.bf16.gmra.mrb[0].mxu0 %v1759
      %v2028 = vpop.f32.mrb[0].mxu0
      %v2029 = vadd.f32 0.0, %v2028
      %v2030 = vpop.f32.mrb[0].mxu0
      %v2031 = vpop.f32.mrb[0].mxu0
      %v2032 = vadd.f32 0.0, %v2031
      %v2033 = vpop.f32.mrb[0].mxu0
      %2034 = vmatprep.mubr.bf16.mxu0 0
      %2035 = vmatmul.mubr.bf16.gmra.mrb[0].mxu0 %v1762
      %v2036 = vpop.f32.mrb[0].mxu0
      %v2037 = vadd.f32 0.0, %v2036
      %v2038 = vpop.f32.mrb[0].mxu0
      %v2039 = vpop.f32.mrb[0].mxu0
      %v2040 = vadd.f32 0.0, %v2039
      %v2041 = vpop.f32.mrb[0].mxu0
      %2042 = vmatprep.mubr.bf16.mxu0 0
      %2043 = vmatmul.mubr.bf16.gmra.mrb[0].mxu0 %v1765
      %v2044 = vpop.f32.mrb[0].mxu0
      %v2045 = vadd.f32 0.0, %v2044
      %v2046 = vpop.f32.mrb[0].mxu0
      %v2047 = vpop.f32.mrb[0].mxu0
      %v2048 = vadd.f32 0.0, %v2047
      %v2049 = vpop.f32.mrb[0].mxu0
      %2050 = vmatprep.mubr.bf16.mxu0 0
      %2051 = vmatmul.mubr.bf16.gmra.mrb[0].mxu0 %v1768
      %v2052 = vpop.f32.mrb[0].mxu0
      %v2053 = vadd.f32 0.0, %v2052
      %v2054 = vpop.f32.mrb[0].mxu0
      %v2055 = vpop.f32.mrb[0].mxu0
      %v2056 = vadd.f32 0.0, %v2055
      %v2057 = vpop.f32.mrb[0].mxu0
      %2058 = vmatprep.mubr.bf16.mxu0 0
      %2059 = vmatmul.mubr.bf16.gmra.mrb[0].mxu0 %v1771
      %v2060 = vpop.f32.mrb[0].mxu0
      %v2061 = vadd.f32 0.0, %v2060
      %v2062 = vpop.f32.mrb[0].mxu0
      %v2063 = vpop.f32.mrb[0].mxu0
      %v2064 = vadd.f32 0.0, %v2063
      %v2065 = vpop.f32.mrb[0].mxu0
      %2066 = vmatprep.mubr.bf16.mxu0 0
      %2067 = vmatmul.mubr.bf16.gmra.mrb[0].mxu0 %v1774
      %v2068 = vpop.f32.mrb[0].mxu0
      %v2069 = vadd.f32 0.0, %v2068
      %v2070 = vpop.f32.mrb[0].mxu0
      %v2071 = vpop.f32.mrb[0].mxu0
      %v2072 = vadd.f32 0.0, %v2071
      %v2073 = vpop.f32.mrb[0].mxu0
      %2074 = vmatprep.mubr.bf16.mxu0 0
      %2075 = vmatmul.mubr.bf16.gmra.mrb[0].mxu0 %v1777
      %v2076 = vpop.f32.mrb[0].mxu0
      %v2077 = vadd.f32 0.0, %v2076
      %v2078 = vpop.f32.mrb[0].mxu0
      %v2079 = vpop.f32.mrb[0].mxu0
      %v2080 = vadd.f32 0.0, %v2079
      %v2081 = vpop.f32.mrb[0].mxu0
      %2082 = vmatprep.mubr.bf16.mxu0 0
      %2083 = vmatmul.mubr.bf16.gmra.mrb[0].mxu0 %v1780
      %v2084 = vpop.f32.mrb[0].mxu0
      %v2085 = vadd.f32 0.0, %v2084
      %v2086 = vpop.f32.mrb[0].mxu0
      %v2087 = vpop.f32.mrb[0].mxu0
      %v2088 = vadd.f32 0.0, %v2087
      %v2089 = vpop.f32.mrb[0].mxu0
      %2090 = vdwg.mxu0
      %2091 = vxpose.xlu0.b32.start [1/16] %v2029, 128
      %2092 = vxpose.xlu0.b32.cont [2/16] %v2032, 128
      %2093 = vxpose.xlu0.b32.cont [3/16] %v2037, 128
      %2094 = vxpose.xlu0.b32.cont [4/16] %v2040, 128
      %2095 = vxpose.xlu0.b32.cont [5/16] %v2045, 128
      %2096 = vxpose.xlu0.b32.cont [6/16] %v2048, 128
      %2097 = vxpose.xlu0.b32.cont [7/16] %v2053, 128
      %2098 = vxpose.xlu0.b32.cont [8/16] %v2056, 128
      %2099 = vxpose.xlu0.b32.cont [9/16] %v2061, 128
      %2100 = vxpose.xlu0.b32.cont [10/16] %v2064, 128
      %2101 = vxpose.xlu0.b32.cont [11/16] %v2069, 128
      %2102 = vxpose.xlu0.b32.cont [12/16] %v2072, 128
      %2103 = vxpose.xlu0.b32.cont [13/16] %v2077, 128
      %2104 = vxpose.xlu0.b32.cont [14/16] %v2080, 128
      %2105 = vxpose.xlu0.b32.cont [15/16] %v2085, 128
      %2106 = vxpose.xlu0.b32.end [16/16] %v2088, 128
      %v2107 = vpop.trf.xlu0
      %v2108 = vpop.trf.xlu0
      %v2109 = vpop.trf.xlu0
      %v2110 = vpop.trf.xlu0
      %v2111 = vpop.trf.xlu0
      %v2112 = vpop.trf.xlu0
      %v2113 = vpop.trf.xlu0
      %v2114 = vpop.trf.xlu0
      %v2115 = vpop.trf.xlu0
      %v2116 = vpop.trf.xlu0
      %v2117 = vpop.trf.xlu0
      %v2118 = vpop.trf.xlu0
      %v2119 = vpop.trf.xlu0
      %v2120 = vpop.trf.xlu0
      %v2121 = vpop.trf.xlu0
      %v2122 = vpop.trf.xlu0
      %v2123 = vadd.f32 %v2107, %v1199
      %2124 = vmatprep.subr.bf16.mxu0 0
      %2125 = vmatpush1.bf16.xpose.msra.mxu0 %v1203
      %2126 = vmatprep.subr.bf16.mxu0 0
      %2127 = vmatpush1.bf16.xpose.msra.mxu0 0
      %2128 = vmatprep.subr.bf16.mxu0 0
      %2129 = vmatpush1.bf16.xpose.msra.mxu0 0
      %2130 = vmatprep.subr.bf16.mxu0 0
      %2131 = vmatpush1.bf16.xpose.msra.mxu0 0
      %2132 = vmatprep.subr.bf16.mxu0 0
      %2133 = vmatpush1.bf16.xpose.msra.mxu0 0
      %2134 = vmatprep.subr.bf16.mxu0 0
      %2135 = vmatpush1.bf16.xpose.msra.mxu0 0
      %2136 = vmatprep.subr.bf16.mxu0 0
      %2137 = vmatpush1.bf16.xpose.msra.mxu0 0
      %2138 = vmatprep.subr.bf16.mxu0 0
      %2139 = vmatpush1.bf16.xpose.msra.mxu0 0
      %2140 = vmatprep.subr.bf16.mxu0 0
      %2141 = vmatpush1.bf16.xpose.msra.mxu0 0
      %2142 = vmatprep.subr.bf16.mxu0 0
      %2143 = vmatpush1.bf16.xpose.msra.mxu0 0
      %2144 = vmatprep.subr.bf16.mxu0 0
      %2145 = vmatpush1.bf16.xpose.msra.mxu0 0
      %2146 = vmatprep.subr.bf16.mxu0 0
      %2147 = vmatpush1.bf16.xpose.msra.mxu0 0
      %2148 = vmatprep.subr.bf16.mxu0 0
      %2149 = vmatpush1.bf16.xpose.msra.mxu0 0
      %2150 = vmatprep.subr.bf16.mxu0 0
      %2151 = vmatpush1.bf16.xpose.msra.mxu0 0
      %2152 = vmatprep.subr.bf16.mxu0 0
      %2153 = vmatpush1.bf16.xpose.msra.mxu0 0
      %2154 = vmatprep.subr.bf16.mxu0 0
      %2155 = vmatpush1.bf16.xpose.msra.mxu0 0
      %2156 = vmatprep.mubr.bf16.mxu0 0
      %2157 = vmatmul.mubr.bf16.gmra.mrb[0].mxu0 %v1759
      %v2158 = vpop.f32.mrb[0].mxu0
      %v2159 = vadd.f32 0.0, %v2158
      %v2160 = vpop.f32.mrb[0].mxu0
      %v2161 = vpop.f32.mrb[0].mxu0
      %v2162 = vadd.f32 0.0, %v2161
      %v2163 = vpop.f32.mrb[0].mxu0
      %2164 = vmatprep.mubr.bf16.mxu0 0
      %2165 = vmatmul.mubr.bf16.gmra.mrb[0].mxu0 %v1762
      %v2166 = vpop.f32.mrb[0].mxu0
      %v2167 = vadd.f32 0.0, %v2166
      %v2168 = vpop.f32.mrb[0].mxu0
      %v2169 = vpop.f32.mrb[0].mxu0
      %v2170 = vadd.f32 0.0, %v2169
      %v2171 = vpop.f32.mrb[0].mxu0
      %2172 = vmatprep.mubr.bf16.mxu0 0
      %2173 = vmatmul.mubr.bf16.gmra.mrb[0].mxu0 %v1765
      %v2174 = vpop.f32.mrb[0].mxu0
      %v2175 = vadd.f32 0.0, %v2174
      %v2176 = vpop.f32.mrb[0].mxu0
      %v2177 = vpop.f32.mrb[0].mxu0
      %v2178 = vadd.f32 0.0, %v2177
      %v2179 = vpop.f32.mrb[0].mxu0
      %2180 = vmatprep.mubr.bf16.mxu0 0
      %2181 = vmatmul.mubr.bf16.gmra.mrb[0].mxu0 %v1768
      %v2182 = vpop.f32.mrb[0].mxu0
      %v2183 = vadd.f32 0.0, %v2182
      %v2184 = vpop.f32.mrb[0].mxu0
      %v2185 = vpop.f32.mrb[0].mxu0
      %v2186 = vadd.f32 0.0, %v2185
      %v2187 = vpop.f32.mrb[0].mxu0
      %2188 = vmatprep.mubr.bf16.mxu0 0
      %2189 = vmatmul.mubr.bf16.gmra.mrb[0].mxu0 %v1771
      %v2190 = vpop.f32.mrb[0].mxu0
      %v2191 = vadd.f32 0.0, %v2190
      %v2192 = vpop.f32.mrb[0].mxu0
      %v2193 = vpop.f32.mrb[0].mxu0
      %v2194 = vadd.f32 0.0, %v2193
      %v2195 = vpop.f32.mrb[0].mxu0
      %2196 = vmatprep.mubr.bf16.mxu0 0
      %2197 = vmatmul.mubr.bf16.gmra.mrb[0].mxu0 %v1774
      %v2198 = vpop.f32.mrb[0].mxu0
      %v2199 = vadd.f32 0.0, %v2198
      %v2200 = vpop.f32.mrb[0].mxu0
      %v2201 = vpop.f32.mrb[0].mxu0
      %v2202 = vadd.f32 0.0, %v2201
      %v2203 = vpop.f32.mrb[0].mxu0
      %2204 = vmatprep.mubr.bf16.mxu0 0
      %2205 = vmatmul.mubr.bf16.gmra.mrb[0].mxu0 %v1777
      %v2206 = vpop.f32.mrb[0].mxu0
      %v2207 = vadd.f32 0.0, %v2206
      %v2208 = vpop.f32.mrb[0].mxu0
      %v2209 = vpop.f32.mrb[0].mxu0
      %v2210 = vadd.f32 0.0, %v2209
      %v2211 = vpop.f32.mrb[0].mxu0
      %2212 = vmatprep.mubr.bf16.mxu0 0
      %2213 = vmatmul.mubr.bf16.gmra.mrb[0].mxu0 %v1780
      %v2214 = vpop.f32.mrb[0].mxu0
      %v2215 = vadd.f32 0.0, %v2214
      %v2216 = vpop.f32.mrb[0].mxu0
      %v2217 = vpop.f32.mrb[0].mxu0
      %v2218 = vadd.f32 0.0, %v2217
      %v2219 = vpop.f32.mrb[0].mxu0
      %2220 = vdwg.mxu0
      %2221 = vxpose.xlu0.b32.start [1/16] %v2159, 128
      %2222 = vxpose.xlu0.b32.cont [2/16] %v2162, 128
      %2223 = vxpose.xlu0.b32.cont [3/16] %v2167, 128
      %2224 = vxpose.xlu0.b32.cont [4/16] %v2170, 128
      %2225 = vxpose.xlu0.b32.cont [5/16] %v2175, 128
      %2226 = vxpose.xlu0.b32.cont [6/16] %v2178, 128
      %2227 = vxpose.xlu0.b32.cont [7/16] %v2183, 128
      %2228 = vxpose.xlu0.b32.cont [8/16] %v2186, 128
      %2229 = vxpose.xlu0.b32.cont [9/16] %v2191, 128
      %2230 = vxpose.xlu0.b32.cont [10/16] %v2194, 128
      %2231 = vxpose.xlu0.b32.cont [11/16] %v2199, 128
      %2232 = vxpose.xlu0.b32.cont [12/16] %v2202, 128
      %2233 = vxpose.xlu0.b32.cont [13/16] %v2207, 128
      %2234 = vxpose.xlu0.b32.cont [14/16] %v2210, 128
      %2235 = vxpose.xlu0.b32.cont [15/16] %v2215, 128
      %2236 = vxpose.xlu0.b32.end [16/16] %v2218, 128
      %v2237 = vpop.trf.xlu0
      %v2238 = vpop.trf.xlu0
      %v2239 = vpop.trf.xlu0
      %v2240 = vpop.trf.xlu0
      %v2241 = vpop.trf.xlu0
      %v2242 = vpop.trf.xlu0
      %v2243 = vpop.trf.xlu0
      %v2244 = vpop.trf.xlu0
      %v2245 = vpop.trf.xlu0
      %v2246 = vpop.trf.xlu0
      %v2247 = vpop.trf.xlu0
      %v2248 = vpop.trf.xlu0
      %v2249 = vpop.trf.xlu0
      %v2250 = vpop.trf.xlu0
      %v2251 = vpop.trf.xlu0
      %v2252 = vpop.trf.xlu0
      %v2253 = vadd.f32 %v2237, %v1337
      %v2254 = vpack.c.bf16 %v2123, %v2123
      %v2257 = vunpack.c.l.s4 1983009808
      %v2258 = vunpack.c.0.s8 %v2257
      %v2259 = vlaneseq
      %v2260 = vshrl.u32 %v2259, 7
      %v2261 = vsub.s32 %v2258, %v2260
      %v2262 = vrot.slane %v2254, %v2261
      %v2263 = vrot.slane %v2262, 7
      %2265 = vst [vmem:[#allocation2] sm:$0x2] %v2263
      %v2266 = vpack.c.bf16 %v2253, %v2253
      %v2269 = vunpack.c.l.s4 1983009808
      %v2270 = vunpack.c.0.s8 %v2269
      %v2271 = vlaneseq
      %v2272 = vshrl.u32 %v2271, 7
      %v2273 = vsub.s32 %v2270, %v2272
      %v2274 = vrot.slane %v2266, %v2273
      %v2275 = vrot.slane %v2274, 7
      %2277 = vst [vmem:[#allocation3] sm:$0x2] %v2275
      %v2278 = vld [vmem:[#allocation2] sm:$0x3]
      %v2279 = vld [vmem:[#allocation3] sm:$0x3]
      %2280 = vmatprep.subr.bf16.mxu0 0
      %2281 = vmatpush1.bf16.xpose.msra.mxu0 %v2279
      %2282 = vmatprep.subr.bf16.mxu0 0
      %2283 = vmatpush1.bf16.xpose.msra.mxu0 0
      %2284 = vmatprep.subr.bf16.mxu0 0
      %2285 = vmatpush1.bf16.xpose.msra.mxu0 0
      %2286 = vmatprep.subr.bf16.mxu0 0
      %2287 = vmatpush1.bf16.xpose.msra.mxu0 0
      %2288 = vmatprep.subr.bf16.mxu0 0
      %2289 = vmatpush1.bf16.xpose.msra.mxu0 0
      %2290 = vmatprep.subr.bf16.mxu0 0
      %2291 = vmatpush1.bf16.xpose.msra.mxu0 0
      %2292 = vmatprep.subr.bf16.mxu0 0
      %2293 = vmatpush1.bf16.xpose.msra.mxu0 0
      %2294 = vmatprep.subr.bf16.mxu0 0
      %2295 = vmatpush1.bf16.xpose.msra.mxu0 0
      %2296 = vmatprep.subr.bf16.mxu0 0
      %2297 = vmatpush1.bf16.xpose.msra.mxu0 0
      %2298 = vmatprep.subr.bf16.mxu0 0
      %2299 = vmatpush1.bf16.xpose.msra.mxu0 0
      %2300 = vmatprep.subr.bf16.mxu0 0
      %2301 = vmatpush1.bf16.xpose.msra.mxu0 0
      %2302 = vmatprep.subr.bf16.mxu0 0
      %2303 = vmatpush1.bf16.xpose.msra.mxu0 0
      %2304 = vmatprep.subr.bf16.mxu0 0
      %2305 = vmatpush1.bf16.xpose.msra.mxu0 0
      %2306 = vmatprep.subr.bf16.mxu0 0
      %2307 = vmatpush1.bf16.xpose.msra.mxu0 0
      %2308 = vmatprep.subr.bf16.mxu0 0
      %2309 = vmatpush1.bf16.xpose.msra.mxu0 0
      %2310 = vmatprep.subr.bf16.mxu0 0
      %2311 = vmatpush1.bf16.xpose.msra.mxu0 0
      %2312 = vmatprep.mubr.bf16.mxu0 0
      %2313 = vmatmul.mubr.bf16.gmra.mrb[0].mxu0 %v2278
      %v2314 = vpop.f32.mrb[0].mxu0
      %v2315 = vadd.f32 0.0, %v2314
      %v2316 = vpop.f32.mrb[0].mxu0
      %v2317 = vpop.f32.mrb[0].mxu0
      %v2318 = vpop.f32.mrb[0].mxu0
      %2319 = vdwg.mxu0
      %vm2320 = vcmask 27648
      %2321 = vst.msk [vmem:[%s452] sm:$0xf] %vm2320, %v1989
      %2322 = vst.msk [vmem:[%s459] sm:$0xf] %vm2320, %v2315
      %p2323 = scmp.lt.s32.totalorder %s27, 1
      %s2324 = scalar_select %p2323, %s27, 1
      %p2325 = scmp.lt.s32.totalorder %s28, 0
      %s2326 = scalar_select %p2325, %s28, 0
      %s2327 = sadd.s32 %s2326, %s2324
      %s2328 = smul.addr %s2327, 4
      %s2329 = scalar_lea.vmem %s10, %s2328
      %p2330 = scmp.lt.s32.totalorder %s27, 1
      %s2331 = scalar_select %p2330, %s27, 1
      %p2332 = scmp.lt.s32.totalorder %s28, 0
      %s2333 = scalar_select %p2332, %s28, 0
      %s2334 = sadd.s32 %s2333, %s2331
      %s2335 = smul.addr %s2334, 4
      %s2336 = scalar_lea.vmem %s11, %s2335
      // Predicated region
      $region61: #{ssm_block_forward.4} parent=59 // pred_check
        %p2337 = pneg %p279
      $region62: #{ssm_block_forward.4} parent=59 // pred_check_branch
        %2339 = sbr.rel (%p2337) target = $region64
      $region63: #{ssm_block_forward.4} parent=59 // pred_region
        _
      $region64: #{ssm_block_forward.4} parent=59 // pred_fallthru
        _
      // Predicated region
      $region65: #{ssm_block_forward.4} parent=59 // pred_check
        %p2340 = pneg %p307
      $region66: #{ssm_block_forward.4} parent=59 // pred_check_branch
        %2342 = sbr.rel (%p2340) target = $region68
      $region67: #{ssm_block_forward.4} parent=59 // pred_region
        _
      $region68: #{ssm_block_forward.4} parent=59 // pred_fallthru
        _
    $region60: #{ssm_block_forward.4} parent=5 // pred_fallthru
      _
    %p2343 = scmp.le.s32.totalorder 2, %s18
    // Predicated region
    $region69: #{ssm_block_forward.4} parent=5 // pred_check
      %p2344 = pneg %p2343
    $region70: #{ssm_block_forward.4} parent=5 // pred_check_branch
      %2346 = sbr.rel (%p2344) target = $region72
    $region71: #{ssm_block_forward.4} parent=5 // pred_region
      %s2347 = ssub.s32 %s18, 2
      // Predicated region
      $region73: #{ssm_block_forward.4} parent=71 // pred_check
        %p2348 = pneg %p285
      $region74: #{ssm_block_forward.4} parent=71 // pred_check_branch
        %2350 = sbr.rel (%p2348) target = $region76
      $region75: #{ssm_block_forward.4} parent=71 // pred_region
        %p2351 = scmp.lt.s32.totalorder %s29, 1
        %s2352 = scalar_select %p2351, %s29, 1
        %p2353 = scmp.lt.s32.totalorder %s30, 0
        %s2354 = scalar_select %p2353, %s30, 0
        %s2355 = sadd.s32 %s2354, %s2352
        %s2356 = smul.addr %s2355, 4
        %s2357 = scalar_lea.vmem %s10, %s2356
      $region76: #{ssm_block_forward.4} parent=71 // pred_fallthru
        _
      // Predicated region
      $region77: #{ssm_block_forward.4} parent=71 // pred_check
        %p2358 = pneg %p313
      $region78: #{ssm_block_forward.4} parent=71 // pred_check_branch
        %2360 = sbr.rel (%p2358) target = $region80
      $region79: #{ssm_block_forward.4} parent=71 // pred_region
        %p2361 = scmp.lt.s32.totalorder %s29, 1
        %s2362 = scalar_select %p2361, %s29, 1
        %p2363 = scmp.lt.s32.totalorder %s30, 0
        %s2364 = scalar_select %p2363, %s30, 0
        %s2365 = sadd.s32 %s2364, %s2362
        %s2366 = smul.addr %s2365, 4
        %s2367 = scalar_lea.vmem %s11, %s2366
      $region80: #{ssm_block_forward.4} parent=71 // pred_fallthru
        _
    $region72: #{ssm_block_forward.4} parent=5 // pred_fallthru
      _
  $region6: #{ssm_block_forward.4} parent=0 // loop_footer
    %s22 = sadd.s32 1, %s18
  $region7: #{ssm_block_forward.4} parent=0 // loop_footer_branch
    %17 = sbr.rel target = $region3
  $region8: #{ssm_block_forward.4} parent=0 // loop_exit
    _

// kernel: ssm_block_forward.6
$region0: #{ssm_block_forward.6}
  #allocation0 [shape = 'u32[]', space=smem, size = 0x4, offset = 0x4, fixed_abs, tag = 'smem constant byte address 0x4 - core index']
  #allocation1 [shape = 'u32[144,128]{1,0:T(1,128)}', space=vmem, size = 0x12000, scoped, tag = 'internal scratch']
  #allocation2 [shape = 'bf16[1,4,128]{2,1,0:T(4,128)(2,1)}', space=vmem, size = 0x400, scoped, tag = 'scratch operand']
  %s0 = inlined_call_operand.vmem [shape: bf16[2,8,2,128], index: 0, kind: input, shape index: {}]
  %s1 = inlined_call_operand.vmem [shape: bf16[2,8,2,128], index: 1, kind: input, shape index: {}]
  %s2 = inlined_call_operand.vmem [shape: f32[1,8,1], index: 2, kind: input, shape index: {}]
  %s3 = inlined_call_operand.vmem [shape: f32[1,8,1], index: 3, kind: input, shape index: {}]
  %s4 = inlined_call_operand.vmem [shape: bf16[2,8], index: 4, kind: input, shape index: {}]
  %s5 = inlined_call_operand.vmem [shape: bf16[2,2,8,4], index: 5, kind: input, shape index: {}]
  %s6 = inlined_call_operand.vmem [shape: f32[2,2,8,1], index: 6, kind: input, shape index: {}]
  %s7 = inlined_call_operand.vmem [shape: bf16[2,8,2,128], index: 7, kind: output, shape index: {0}]
  %s8 = inlined_call_operand.vmem [shape: bf16[2,8,2,128], index: 8, kind: output, shape index: {1}]
  %s9 = inlined_call_operand.vmem [shape: f32[2,1,2,8], index: 9, kind: output, shape index: {2}]
  %10 = xla_tuple %s7, %s8, %s9
  %s11 = sld [smem:[#allocation0]]
  $region77: #{ssm_block_forward.6} parent=0
    _
  %s13 = ssub.s32 1, %s11
  %s14 = scalar_select 0, %s13, %s11
  loop: start=0, step=1, limit=4
  $region2: #{ssm_block_forward.6} parent=0 // loop_pre_header
    _
  $region3: #{ssm_block_forward.6} parent=0 // loop_header
    %s16 = sphi 0, %s20
    %p17 = scmp.ge.s32.totalorder %s16, 4
    %s23 = sphi 0, %s35
    %s24 = sphi 0, %s31
    %s25 = sphi 0, %s23
    %s26 = sphi 0, %s24
    %s27 = sphi 0, %s25
    %s28 = sphi 0, %s26
    %s40 = sphi 0, %s42
    %s43 = sphi 0, %s40
    %s44 = sphi 0, %s43
    %s60 = sphi 0, %s44
    %s68 = sphi 0, %s70
    %s71 = sphi 0, %s68
    %s72 = sphi 0, %s71
    %s88 = sphi 0, %s72
    %s92 = sphi 0, %s92
    %s94 = sphi 0, %s92
    %s95 = sphi 0, %s94
    %s109 = sphi 0, %s95
    %s113 = sphi 0, %s113
    %s115 = sphi 0, %s113
    %s116 = sphi 0, %s115
    %s130 = sphi 0, %s116
    %s134 = sphi 0, %s134
    %s136 = sphi 0, %s134
    %s137 = sphi 0, %s136
    %s151 = sphi 0, %s137
    %s157 = sphi 0, %s159
    %s160 = sphi 0, %s157
    %s161 = sphi 0, %s160
    %s177 = sphi 0, %s161
    %s183 = sphi 0, %s185
    %s186 = sphi 0, %s183
    %s187 = sphi 0, %s186
    %s203 = sphi 0, %s187
    %s211 = sphi 0, %s213
    %s214 = sphi 0, %s211
    %s215 = sphi 0, %s214
    %s231 = sphi 0, %s215
    %s239 = sphi 0, %s241
    %s242 = sphi 0, %s239
    %s243 = sphi 0, %s242
    %s259 = sphi 0, %s243
    %s267 = sphi 0, %s269
    %s270 = sphi 0, %s267
    %s271 = sphi 0, %s270
    %s287 = sphi 0, %s271
  $region4: #{ssm_block_forward.6} parent=0 // loop_header_branch
    %19 = sbr.rel (%p17) target = $region8
  $region5: #{ssm_block_forward.6} parent=0 // loop_body
    %s21 = ssub.s32 %s16, 1
    %s22 = ssub.s32 %s16, 2
    %s29 = sadd.s32 1, %s24
    %p30 = scmp.ge.s32.totalorder %s29, 1
    %s31 = scalar_select %p30, 0, %s29
    %s32 = sadd.s32 1, %s23
    %s33 = scalar_select %p30, %s32, %s23
    %p34 = scmp.ge.s32.totalorder %s33, 2
    %s35 = scalar_select %p34, 0, %s33
    %s36 = ssub.s32 %s23, %s35
    %s37 = ssub.s32 %s24, %s31
    %s38 = sor.u32 %s36, %s37
    %p39 = scmp.eq.s32.totalorder %s38, 0
    %s41 = sadd.s32 %s40, 1
    %s42 = scalar_select %p39, %s40, %s41
    %p45 = pneg %p39
    %p46 = scmp.eq.s32.totalorder %s16, 1
    %p47 = por %p45, %p46
    %p48 = scmp.ne.s32.totalorder %s40, %s43
    %p49 = scmp.eq.s32.totalorder %s16, 0
    %p50 = por %p48, %p49
    %p51 = scmp.ne.s32.totalorder %s40, %s43
    %p52 = scmp.eq.s32.totalorder %s21, 1
    %p53 = por %p51, %p52
    %p54 = scmp.ne.s32.totalorder %s43, %s44
    %p55 = scmp.eq.s32.totalorder %s21, 0
    %p56 = por %p54, %p55
    %p57 = scmp.ne.s32.totalorder %s43, %s44
    %p58 = scmp.eq.s32.totalorder %s22, 1
    %p59 = por %p57, %p58
    %p61 = scmp.ne.s32.totalorder %s44, %s60
    %p62 = scmp.eq.s32.totalorder %s22, 0
    %p63 = por %p61, %p62
    %s64 = ssub.s32 %s23, %s35
    %s65 = ssub.s32 %s24, %s31
    %s66 = sor.u32 %s64, %s65
    %p67 = scmp.eq.s32.totalorder %s66, 0
    %s69 = sadd.s32 %s68, 1
    %s70 = scalar_select %p67, %s68, %s69
    %p73 = pneg %p67
    %p74 = scmp.eq.s32.totalorder %s16, 1
    %p75 = por %p73, %p74
    %p76 = scmp.ne.s32.totalorder %s68, %s71
    %p77 = scmp.eq.s32.totalorder %s16, 0
    %p78 = por %p76, %p77
    %p79 = scmp.ne.s32.totalorder %s68, %s71
    %p80 = scmp.eq.s32.totalorder %s21, 1
    %p81 = por %p79, %p80
    %p82 = scmp.ne.s32.totalorder %s71, %s72
    %p83 = scmp.eq.s32.totalorder %s21, 0
    %p84 = por %p82, %p83
    %p85 = scmp.ne.s32.totalorder %s71, %s72
    %p86 = scmp.eq.s32.totalorder %s22, 1
    %p87 = por %p85, %p86
    %p89 = scmp.ne.s32.totalorder %s72, %s88
    %p90 = scmp.eq.s32.totalorder %s22, 0
    %p91 = por %p89, %p90
    %s93 = sadd.s32 %s92, 1
    %p96 = scmp.eq.s32.totalorder %s16, 1
    %p97 = scmp.ne.s32.totalorder %s92, %s94
    %p98 = scmp.eq.s32.totalorder %s16, 0
    %p99 = por %p97, %p98
    %p100 = scmp.ne.s32.totalorder %s92, %s94
    %p101 = scmp.eq.s32.totalorder %s21, 1
    %p102 = por %p100, %p101
    %p103 = scmp.ne.s32.totalorder %s94, %s95
    %p104 = scmp.eq.s32.totalorder %s21, 0
    %p105 = por %p103, %p104
    %p106 = scmp.ne.s32.totalorder %s94, %s95
    %p107 = scmp.eq.s32.totalorder %s22, 1
    %p108 = por %p106, %p107
    %p110 = scmp.ne.s32.totalorder %s95, %s109
    %p111 = scmp.eq.s32.totalorder %s22, 0
    %p112 = por %p110, %p111
    %s114 = sadd.s32 %s113, 1
    %p117 = scmp.eq.s32.totalorder %s16, 1
    %p118 = scmp.ne.s32.totalorder %s113, %s115
    %p119 = scmp.eq.s32.totalorder %s16, 0
    %p120 = por %p118, %p119
    %p121 = scmp.ne.s32.totalorder %s113, %s115
    %p122 = scmp.eq.s32.totalorder %s21, 1
    %p123 = por %p121, %p122
    %p124 = scmp.ne.s32.totalorder %s115, %s116
    %p125 = scmp.eq.s32.totalorder %s21, 0
    %p126 = por %p124, %p125
    %p127 = scmp.ne.s32.totalorder %s115, %s116
    %p128 = scmp.eq.s32.totalorder %s22, 1
    %p129 = por %p127, %p128
    %p131 = scmp.ne.s32.totalorder %s116, %s130
    %p132 = scmp.eq.s32.totalorder %s22, 0
    %p133 = por %p131, %p132
    %s135 = sadd.s32 %s134, 1
    %p138 = scmp.eq.s32.totalorder %s16, 1
    %p139 = scmp.ne.s32.totalorder %s134, %s136
    %p140 = scmp.eq.s32.totalorder %s16, 0
    %p141 = por %p139, %p140
    %p142 = scmp.ne.s32.totalorder %s134, %s136
    %p143 = scmp.eq.s32.totalorder %s21, 1
    %p144 = por %p142, %p143
    %p145 = scmp.ne.s32.totalorder %s136, %s137
    %p146 = scmp.eq.s32.totalorder %s21, 0
    %p147 = por %p145, %p146
    %p148 = scmp.ne.s32.totalorder %s136, %s137
    %p149 = scmp.eq.s32.totalorder %s22, 1
    %p150 = por %p148, %p149
    %p152 = scmp.ne.s32.totalorder %s137, %s151
    %p153 = scmp.eq.s32.totalorder %s22, 0
    %p154 = por %p152, %p153
    %s155 = ssub.s32 %s23, %s35
    %p156 = scmp.eq.s32.totalorder %s155, 0
    %s158 = sadd.s32 %s157, 1
    %s159 = scalar_select %p156, %s157, %s158
    %p162 = pneg %p156
    %p163 = scmp.eq.s32.totalorder %s16, 1
    %p164 = por %p162, %p163
    %p165 = scmp.ne.s32.totalorder %s157, %s160
    %p166 = scmp.eq.s32.totalorder %s16, 0
    %p167 = por %p165, %p166
    %p168 = scmp.ne.s32.totalorder %s157, %s160
    %p169 = scmp.eq.s32.totalorder %s21, 1
    %p170 = por %p168, %p169
    %p171 = scmp.ne.s32.totalorder %s160, %s161
    %p172 = scmp.eq.s32.totalorder %s21, 0
    %p173 = por %p171, %p172
    %p174 = scmp.ne.s32.totalorder %s160, %s161
    %p175 = scmp.eq.s32.totalorder %s22, 1
    %p176 = por %p174, %p175
    %p178 = scmp.ne.s32.totalorder %s161, %s177
    %p179 = scmp.eq.s32.totalorder %s22, 0
    %p180 = por %p178, %p179
    %s181 = ssub.s32 %s23, %s35
    %p182 = scmp.eq.s32.totalorder %s181, 0
    %s184 = sadd.s32 %s183, 1
    %s185 = scalar_select %p182, %s183, %s184
    %p188 = pneg %p182
    %p189 = scmp.eq.s32.totalorder %s16, 1
    %p190 = por %p188, %p189
    %p191 = scmp.ne.s32.totalorder %s183, %s186
    %p192 = scmp.eq.s32.totalorder %s16, 0
    %p193 = por %p191, %p192
    %p194 = scmp.ne.s32.totalorder %s183, %s186
    %p195 = scmp.eq.s32.totalorder %s21, 1
    %p196 = por %p194, %p195
    %p197 = scmp.ne.s32.totalorder %s186, %s187
    %p198 = scmp.eq.s32.totalorder %s21, 0
    %p199 = por %p197, %p198
    %p200 = scmp.ne.s32.totalorder %s186, %s187
    %p201 = scmp.eq.s32.totalorder %s22, 1
    %p202 = por %p200, %p201
    %p204 = scmp.ne.s32.totalorder %s187, %s203
    %p205 = scmp.eq.s32.totalorder %s22, 0
    %p206 = por %p204, %p205
    %s207 = ssub.s32 %s23, %s35
    %s208 = ssub.s32 %s24, %s31
    %s209 = sor.u32 %s207, %s208
    %p210 = scmp.eq.s32.totalorder %s209, 0
    %s212 = sadd.s32 %s211, 1
    %s213 = scalar_select %p210, %s211, %s212
    %p216 = pneg %p210
    %p217 = scmp.eq.s32.totalorder %s16, 1
    %p218 = por %p216, %p217
    %p219 = scmp.ne.s32.totalorder %s211, %s214
    %p220 = scmp.eq.s32.totalorder %s16, 0
    %p221 = por %p219, %p220
    %p222 = scmp.ne.s32.totalorder %s211, %s214
    %p223 = scmp.eq.s32.totalorder %s21, 1
    %p224 = por %p222, %p223
    %p225 = scmp.ne.s32.totalorder %s214, %s215
    %p226 = scmp.eq.s32.totalorder %s21, 0
    %p227 = por %p225, %p226
    %p228 = scmp.ne.s32.totalorder %s214, %s215
    %p229 = scmp.eq.s32.totalorder %s22, 1
    %p230 = por %p228, %p229
    %p232 = scmp.ne.s32.totalorder %s215, %s231
    %p233 = scmp.eq.s32.totalorder %s22, 0
    %p234 = por %p232, %p233
    %s235 = ssub.s32 %s23, %s35
    %s236 = ssub.s32 %s24, %s31
    %s237 = sor.u32 %s235, %s236
    %p238 = scmp.eq.s32.totalorder %s237, 0
    %s240 = sadd.s32 %s239, 1
    %s241 = scalar_select %p238, %s239, %s240
    %p244 = pneg %p238
    %p245 = scmp.eq.s32.totalorder %s16, 1
    %p246 = por %p244, %p245
    %p247 = scmp.ne.s32.totalorder %s239, %s242
    %p248 = scmp.eq.s32.totalorder %s16, 0
    %p249 = por %p247, %p248
    %p250 = scmp.ne.s32.totalorder %s239, %s242
    %p251 = scmp.eq.s32.totalorder %s21, 1
    %p252 = por %p250, %p251
    %p253 = scmp.ne.s32.totalorder %s242, %s243
    %p254 = scmp.eq.s32.totalorder %s21, 0
    %p255 = por %p253, %p254
    %p256 = scmp.ne.s32.totalorder %s242, %s243
    %p257 = scmp.eq.s32.totalorder %s22, 1
    %p258 = por %p256, %p257
    %p260 = scmp.ne.s32.totalorder %s243, %s259
    %p261 = scmp.eq.s32.totalorder %s22, 0
    %p262 = por %p260, %p261
    %s263 = ssub.s32 %s23, %s35
    %s264 = ssub.s32 %s24, %s31
    %s265 = sor.u32 %s263, %s264
    %p266 = scmp.eq.s32.totalorder %s265, 0
    %s268 = sadd.s32 %s267, 1
    %s269 = scalar_select %p266, %s267, %s268
    %p272 = pneg %p266
    %p273 = scmp.eq.s32.totalorder %s16, 1
    %p274 = por %p272, %p273
    %p275 = scmp.ne.s32.totalorder %s267, %s270
    %p276 = scmp.eq.s32.totalorder %s16, 0
    %p277 = por %p275, %p276
    %p278 = scmp.ne.s32.totalorder %s267, %s270
    %p279 = scmp.eq.s32.totalorder %s21, 1
    %p280 = por %p278, %p279
    %p281 = scmp.ne.s32.totalorder %s270, %s271
    %p282 = scmp.eq.s32.totalorder %s21, 0
    %p283 = por %p281, %p282
    %p284 = scmp.ne.s32.totalorder %s270, %s271
    %p285 = scmp.eq.s32.totalorder %s22, 1
    %p286 = por %p284, %p285
    %p288 = scmp.ne.s32.totalorder %s271, %s287
    %p289 = scmp.eq.s32.totalorder %s22, 0
    %p290 = por %p288, %p289
    %p291 = scmp.le.s32.totalorder 1, %s16
    %p292 = scmp.lt.s32.totalorder %s16, 3
    %p293 = pnand %p291, %p292
    %p294 = pneg %p293
    // Predicated region
    $region9: #{ssm_block_forward.6} parent=5 // pred_check
      _
    $region10: #{ssm_block_forward.6} parent=5 // pred_check_branch
      %296 = sbr.rel (%p293) target = $region12
    $region11: #{ssm_block_forward.6} parent=5 // pred_region
      %s297 = ssub.s32 %s16, 1
      // Predicated region
      $region13: #{ssm_block_forward.6} parent=11 // pred_check
        %p298 = pneg %p105
      $region14: #{ssm_block_forward.6} parent=11 // pred_check_branch
        %300 = sbr.rel (%p298) target = $region16
      $region15: #{ssm_block_forward.6} parent=11 // pred_region
        _
      $region16: #{ssm_block_forward.6} parent=11 // pred_fallthru
        _
      // Predicated region
      $region17: #{ssm_block_forward.6} parent=11 // pred_check
        %p301 = pneg %p126
      $region18: #{ssm_block_forward.6} parent=11 // pred_check_branch
        %303 = sbr.rel (%p301) target = $region20
      $region19: #{ssm_block_forward.6} parent=11 // pred_region
        _
      $region20: #{ssm_block_forward.6} parent=11 // pred_fallthru
        _
      // Predicated region
      $region21: #{ssm_block_forward.6} parent=11 // pred_check
        %p304 = pneg %p147
      $region22: #{ssm_block_forward.6} parent=11 // pred_check_branch
        %306 = sbr.rel (%p304) target = $region24
      $region23: #{ssm_block_forward.6} parent=11 // pred_region
        _
      $region24: #{ssm_block_forward.6} parent=11 // pred_fallthru
        _
    $region12: #{ssm_block_forward.6} parent=5 // pred_fallthru
      _
    %p307 = scmp.lt.s32.totalorder %s16, 2
    // Predicated region
    $region25: #{ssm_block_forward.6} parent=5 // pred_check
      %p308 = pneg %p307
    $region26: #{ssm_block_forward.6} parent=5 // pred_check_branch
      %310 = sbr.rel (%p308) target = $region28
    $region27: #{ssm_block_forward.6} parent=5 // pred_region
      // Predicated region
      $region29: #{ssm_block_forward.6} parent=27 // pred_check
        %p311 = pneg %p50
      $region30: #{ssm_block_forward.6} parent=27 // pred_check_branch
        %313 = sbr.rel (%p311) target = $region32
      $region31: #{ssm_block_forward.6} parent=27 // pred_region
        %p314 = scmp.lt.s32.totalorder %s23, 1
        %s315 = scalar_select %p314, %s23, 1
        %p316 = scmp.lt.s32.totalorder %s24, 0
        %s317 = scalar_select %p316, %s24, 0
        %s318 = smul.addr %s315, 8
        %s319 = sadd.s32 %s317, %s318
        %s320 = scalar_lea.vmem %s0, %s319
      $region32: #{ssm_block_forward.6} parent=27 // pred_fallthru
        _
      // Predicated region
      $region33: #{ssm_block_forward.6} parent=27 // pred_check
        %p321 = pneg %p78
      $region34: #{ssm_block_forward.6} parent=27 // pred_check_branch
        %323 = sbr.rel (%p321) target = $region36
      $region35: #{ssm_block_forward.6} parent=27 // pred_region
        %p324 = scmp.lt.s32.totalorder %s23, 1
        %s325 = scalar_select %p324, %s23, 1
        %p326 = scmp.lt.s32.totalorder %s24, 0
        %s327 = scalar_select %p326, %s24, 0
        %s328 = smul.addr %s325, 8
        %s329 = sadd.s32 %s327, %s328
        %s330 = scalar_lea.vmem %s1, %s329
      $region36: #{ssm_block_forward.6} parent=27 // pred_fallthru
        _
      // Predicated region
      $region37: #{ssm_block_forward.6} parent=27 // pred_check
        %p331 = pneg %p167
      $region38: #{ssm_block_forward.6} parent=27 // pred_check_branch
        %333 = sbr.rel (%p331) target = $region40
      $region39: #{ssm_block_forward.6} parent=27 // pred_region
        %p334 = scmp.lt.s32.totalorder %s23, 1
        %s335 = scalar_select %p334, %s23, 1
        %s336 = smul.addr %s335, 2
        %s337 = smul.addr %s336, 4
        %s338 = scalar_lea.vmem %s5, %s337
      $region40: #{ssm_block_forward.6} parent=27 // pred_fallthru
        _
      // Predicated region
      $region41: #{ssm_block_forward.6} parent=27 // pred_check
        %p339 = pneg %p193
      $region42: #{ssm_block_forward.6} parent=27 // pred_check_branch
        %341 = sbr.rel (%p339) target = $region44
      $region43: #{ssm_block_forward.6} parent=27 // pred_region
        %p342 = scmp.lt.s32.totalorder %s23, 1
        %s343 = scalar_select %p342, %s23, 1
        %s344 = smul.addr %s343, 2
        %s345 = smul.addr %s344, 8
        %s346 = scalar_lea.vmem %s6, %s345
      $region44: #{ssm_block_forward.6} parent=27 // pred_fallthru
        _
    $region28: #{ssm_block_forward.6} parent=5 // pred_fallthru
      _
    %p347 = scmp.le.s32.totalorder 1, %s16
    %p348 = scmp.lt.s32.totalorder %s16, 3
    %p349 = pnand %p347, %p348
    %p350 = pneg %p349
    // Predicated region
    $region45: #{ssm_block_forward.6} parent=5 // pred_check
      _
    $region46: #{ssm_block_forward.6} parent=5 // pred_check_branch
      %352 = sbr.rel (%p349) target = $region48
    $region47: #{ssm_block_forward.6} parent=5 // pred_region
      %s353 = ssub.s32 %s16, 1
      %p354 = scmp.lt.s32.totalorder %s25, 1
      %s355 = scalar_select %p354, %s25, 1
      %p356 = scmp.lt.s32.totalorder %s26, 0
      %s357 = scalar_select %p356, %s26, 0
      %s358 = smul.addr %s355, 8
      %s359 = sadd.s32 %s357, %s358
      %s360 = scalar_lea.vmem %s0, %s359
      %p361 = pneg %p56
      %p362 = pneg %p53
      %p363 = scmp.lt.s32.totalorder %s25, 1
      %s364 = scalar_select %p363, %s25, 1
      %p365 = scmp.lt.s32.totalorder %s26, 0
      %s366 = scalar_select %p365, %s26, 0
      %s367 = smul.addr %s364, 8
      %s368 = sadd.s32 %s366, %s367
      %s369 = scalar_lea.vmem %s1, %s368
      %p370 = pneg %p84
      %p371 = pneg %p81
      %p372 = pneg %p105
      %p373 = pneg %p102
      %p374 = pneg %p126
      %p375 = pneg %p123
      %p376 = pneg %p147
      %p377 = pneg %p144
      %p378 = scmp.lt.s32.totalorder %s25, 1
      %s379 = scalar_select %p378, %s25, 1
      %s380 = smul.addr %s379, 2
      %s381 = smul.addr %s380, 4
      %s382 = scalar_lea.vmem %s5, %s381
      %p383 = pneg %p173
      %p384 = pneg %p170
      %p385 = scmp.lt.s32.totalorder %s25, 1
      %s386 = scalar_select %p385, %s25, 1
      %s387 = smul.addr %s386, 2
      %s388 = smul.addr %s387, 8
      %s389 = scalar_lea.vmem %s6, %s388
      %p390 = pneg %p199
      %p391 = pneg %p196
      %p392 = pneg %p227
      %p393 = pneg %p224
      %p394 = scmp.lt.s32.totalorder %s25, 1
      %s395 = scalar_select %p394, %s25, 1
      %p396 = scmp.lt.s32.totalorder %s26, 0
      %s397 = scalar_select %p396, %s26, 0
      %s398 = smul.addr %s395, 8
      %s399 = sadd.s32 %s397, %s398
      %s400 = scalar_lea.vmem %s7, %s399
      %p401 = pneg %p255
      %p402 = pneg %p252
      %p403 = scmp.lt.s32.totalorder %s25, 1
      %s404 = scalar_select %p403, %s25, 1
      %p405 = scmp.lt.s32.totalorder %s26, 0
      %s406 = scalar_select %p405, %s26, 0
      %s407 = smul.addr %s404, 8
      %s408 = sadd.s32 %s406, %s407
      %s409 = scalar_lea.vmem %s8, %s408
      %p410 = pneg %p283
      %p411 = pneg %p280
      %p412 = scmp.lt.s32.totalorder %s25, 1
      %s413 = scalar_select %p412, %s25, 1
      %p414 = scmp.lt.s32.totalorder %s26, 0
      %s415 = scalar_select %p414, %s26, 0
      %s416 = sadd.s32 %s415, %s413
      %s417 = smul.addr %s416, 2
      %s418 = scalar_lea.vmem %s9, %s417
      %p419 = scmp.lt.s32.totalorder %s25, 1
      %s420 = scalar_select %p419, %s25, 1
      %p421 = scmp.lt.s32.totalorder %s26, 0
      %s422 = scalar_select %p421, %s26, 0
      %s423 = smul.addr %s420, 8
      %s424 = sadd.s32 %s422, %s423
      %s425 = scalar_lea.vmem %s0, %s424
      %p426 = scmp.lt.s32.totalorder %s25, 1
      %s427 = scalar_select %p426, %s25, 1
      %p428 = scmp.lt.s32.totalorder %s26, 0
      %s429 = scalar_select %p428, %s26, 0
      %s430 = smul.addr %s427, 8
      %s431 = sadd.s32 %s429, %s430
      %s432 = scalar_lea.vmem %s1, %s431
      %p433 = scmp.lt.s32.totalorder %s25, 1
      %s434 = scalar_select %p433, %s25, 1
      %s435 = smul.addr %s434, 2
      %s436 = smul.addr %s435, 4
      %s437 = scalar_lea.vmem %s5, %s436
      %p438 = scmp.lt.s32.totalorder %s25, 1
      %s439 = scalar_select %p438, %s25, 1
      %s440 = smul.addr %s439, 2
      %s441 = smul.addr %s440, 8
      %s442 = scalar_lea.vmem %s6, %s441
      %p443 = scmp.lt.s32.totalorder %s25, 1
      %s444 = scalar_select %p443, %s25, 1
      %p445 = scmp.lt.s32.totalorder %s26, 0
      %s446 = scalar_select %p445, %s26, 0
      %s447 = smul.addr %s444, 8
      %s448 = sadd.s32 %s446, %s447
      %s449 = scalar_lea.vmem %s7, %s448
      %p450 = scmp.lt.s32.totalorder %s25, 1
      %s451 = scalar_select %p450, %s25, 1
      %p452 = scmp.lt.s32.totalorder %s26, 0
      %s453 = scalar_select %p452, %s26, 0
      %s454 = smul.addr %s451, 8
      %s455 = sadd.s32 %s453, %s454
      %s456 = scalar_lea.vmem %s8, %s455
      %p457 = scmp.lt.s32.totalorder %s25, 1
      %s458 = scalar_select %p457, %s25, 1
      %p459 = scmp.lt.s32.totalorder %s26, 0
      %s460 = scalar_select %p459, %s26, 0
      %s461 = sadd.s32 %s460, %s458
      %s462 = smul.addr %s461, 2
      %s463 = scalar_lea.vmem %s9, %s462
      %v465 = vld [vmem:[%s2] sm:$0xff]
      %v466 = vld [vmem:[%s3] sm:$0xff]
      %v467 = vld [vmem:[%s4] sm:$0x1]
      %v468 = vld [vmem:[%s425] sm:$0x1]
      %v469 = vld [vmem:[%s425 + $0x1] sm:$0x1]
      %v470 = vld [vmem:[%s425 + $0x2] sm:$0x1]
      %v471 = vld [vmem:[%s425 + $0x3] sm:$0x1]
      %v472 = vld [vmem:[%s425 + $0x4] sm:$0x1]
      %v473 = vld [vmem:[%s425 + $0x5] sm:$0x1]
      %v474 = vld [vmem:[%s425 + $0x6] sm:$0x1]
      %v475 = vld [vmem:[%s425 + $0x7] sm:$0x1]
      %v476 = vunpack.c.l.bf16 %v468
      %v477 = vunpack.c.l.bf16 %v469
      %v478 = vunpack.c.l.bf16 %v470
      %v479 = vunpack.c.l.bf16 %v471
      %v480 = vunpack.c.l.bf16 %v472
      %v481 = vunpack.c.l.bf16 %v473
      %v482 = vunpack.c.l.bf16 %v474
      %v483 = vunpack.c.l.bf16 %v475
      %485 = vset.pattern.permute.xlu0 0
      %486 = vperm.xlu0 %485, %v465
      %v487 = vpop.permute.xlu0 %486
      %v489 = vunpack.c.l.s4 269488144
      %v490 = vunpack.c.0.s8 %v489
      %v491 = vlaneseq
      %v492 = vshrl.u32 %v491, 7
      %v493 = vsub.s32 %v490, %v492
      %v494 = vrot.slane %v487, %v493
      %v496 = vunpack.c.l.s4 842150450
      %v497 = vunpack.c.0.s8 %v496
      %v498 = vlaneseq
      %v499 = vshrl.u32 %v498, 7
      %v500 = vsub.s32 %v497, %v499
      %v501 = vrot.slane %v487, %v500
      %v503 = vunpack.c.l.s4 1414812756
      %v504 = vunpack.c.0.s8 %v503
      %v505 = vlaneseq
      %v506 = vshrl.u32 %v505, 7
      %v507 = vsub.s32 %v504, %v506
      %v508 = vrot.slane %v487, %v507
      %v510 = vunpack.c.l.s4 1987475062
      %v511 = vunpack.c.0.s8 %v510
      %v512 = vlaneseq
      %v513 = vshrl.u32 %v512, 7
      %v514 = vsub.s32 %v511, %v513
      %v515 = vrot.slane %v487, %v514
      %v516 = vrot.slane %v494, 1
      %v517 = vrot.slane %v501, 1
      %v518 = vrot.slane %v508, 1
      %v519 = vrot.slane %v515, 1
      %v528 = vmul.f32 %v476, %v494
      %v529 = vmul.f32 %v477, %v516
      %v530 = vmul.f32 %v478, %v501
      %v531 = vmul.f32 %v479, %v517
      %v532 = vmul.f32 %v480, %v508
      %v533 = vmul.f32 %v481, %v518
      %v534 = vmul.f32 %v482, %v515
      %v535 = vmul.f32 %v483, %v519
      %537 = vset.pattern.permute.xlu0 0
      %538 = vperm.xlu0 %537, %v466
      %v539 = vpop.permute.xlu0 %538
      %v541 = vunpack.c.l.s4 269488144
      %v542 = vunpack.c.0.s8 %v541
      %v543 = vlaneseq
      %v544 = vshrl.u32 %v543, 7
      %v545 = vsub.s32 %v542, %v544
      %v546 = vrot.slane %v539, %v545
      %v548 = vunpack.c.l.s4 842150450
      %v549 = vunpack.c.0.s8 %v548
      %v550 = vlaneseq
      %v551 = vshrl.u32 %v550, 7
      %v552 = vsub.s32 %v549, %v551
      %v553 = vrot.slane %v539, %v552
      %v555 = vunpack.c.l.s4 1414812756
      %v556 = vunpack.c.0.s8 %v555
      %v557 = vlaneseq
      %v558 = vshrl.u32 %v557, 7
      %v559 = vsub.s32 %v556, %v558
      %v560 = vrot.slane %v539, %v559
      %v562 = vunpack.c.l.s4 1987475062
      %v563 = vunpack.c.0.s8 %v562
      %v564 = vlaneseq
      %v565 = vshrl.u32 %v564, 7
      %v566 = vsub.s32 %v563, %v565
      %v567 = vrot.slane %v539, %v566
      %v568 = vrot.slane %v546, 1
      %v569 = vrot.slane %v553, 1
      %v570 = vrot.slane %v560, 1
      %v571 = vrot.slane %v567, 1
      %v580 = vadd.f32 %v528, %v546
      %v581 = vadd.f32 %v529, %v568
      %v582 = vadd.f32 %v530, %v553
      %v583 = vadd.f32 %v531, %v569
      %v584 = vadd.f32 %v532, %v560
      %v585 = vadd.f32 %v533, %v570
      %v586 = vadd.f32 %v534, %v567
      %v587 = vadd.f32 %v535, %v571
      %v588 = vsub.f32 0.0, %v580
      %v589 = vsub.f32 0.0, %v581
      %v590 = vsub.f32 0.0, %v582
      %v591 = vsub.f32 0.0, %v583
      %v592 = vsub.f32 0.0, %v584
      %v593 = vsub.f32 0.0, %v585
      %v594 = vsub.f32 0.0, %v586
      %v595 = vsub.f32 0.0, %v587
      %v596 = vmul.f32 %v588, 1.442695
      %v597 = vpow.pop %v596
      %v598 = vmul.f32 %v589, 1.442695
      %v599 = vpow.pop %v598
      %v600 = vmul.f32 %v590, 1.442695
      %v601 = vpow.pop %v600
      %v602 = vmul.f32 %v591, 1.442695
      %v603 = vpow.pop %v602
      %v604 = vmul.f32 %v592, 1.442695
      %v605 = vpow.pop %v604
      %v606 = vmul.f32 %v593, 1.442695
      %v607 = vpow.pop %v606
      %v608 = vmul.f32 %v594, 1.442695
      %v609 = vpow.pop %v608
      %v610 = vmul.f32 %v595, 1.442695
      %v611 = vpow.pop %v610
      %v612 = vadd.f32 %v597, 1.0
      %v613 = vadd.f32 %v599, 1.0
      %v614 = vadd.f32 %v601, 1.0
      %v615 = vadd.f32 %v603, 1.0
      %v616 = vadd.f32 %v605, 1.0
      %v617 = vadd.f32 %v607, 1.0
      %v618 = vadd.f32 %v609, 1.0
      %v619 = vadd.f32 %v611, 1.0
      %v620 = vrcp.pop %v612
      %v621 = vrcp.pop %v613
      %v622 = vrcp.pop %v614
      %v623 = vrcp.pop %v615
      %v624 = vrcp.pop %v616
      %v625 = vrcp.pop %v617
      %v626 = vrcp.pop %v618
      %v627 = vrcp.pop %v619
      %v628 = vld [vmem:[%s432] sm:$0x1]
      %v629 = vld [vmem:[%s432 + $0x1] sm:$0x1]
      %v630 = vld [vmem:[%s432 + $0x2] sm:$0x1]
      %v631 = vld [vmem:[%s432 + $0x3] sm:$0x1]
      %v632 = vld [vmem:[%s432 + $0x4] sm:$0x1]
      %v633 = vld [vmem:[%s432 + $0x5] sm:$0x1]
      %v634 = vld [vmem:[%s432 + $0x6] sm:$0x1]
      %v635 = vld [vmem:[%s432 + $0x7] sm:$0x1]
      %v636 = vunpack.c.l.bf16 %v628
      %v637 = vunpack.c.l.bf16 %v629
      %v638 = vunpack.c.l.bf16 %v630
      %v639 = vunpack.c.l.bf16 %v631
      %v640 = vunpack.c.l.bf16 %v632
      %v641 = vunpack.c.l.bf16 %v633
      %v642 = vunpack.c.l.bf16 %v634
      %v643 = vunpack.c.l.bf16 %v635
      %v644 = vsub.f32 %v580, %v636
      %v645 = vsub.f32 %v581, %v637
      %v646 = vsub.f32 %v582, %v638
      %v647 = vsub.f32 %v583, %v639
      %v648 = vsub.f32 %v584, %v640
      %v649 = vsub.f32 %v585, %v641
      %v650 = vsub.f32 %v586, %v642
      %v651 = vsub.f32 %v587, %v643
      %v652 = vmul.f32 %v620, %v644
      %v653 = vmul.f32 %v621, %v645
      %v654 = vmul.f32 %v622, %v646
      %v655 = vmul.f32 %v623, %v647
      %v656 = vmul.f32 %v624, %v648
      %v657 = vmul.f32 %v625, %v649
      %v658 = vmul.f32 %v626, %v650
      %v659 = vmul.f32 %v627, %v651
      %v660 = vadd.f32 %v636, %v652
      %v661 = vadd.f32 %v637, %v653
      %v662 = vadd.f32 %v638, %v654
      %v663 = vadd.f32 %v639, %v655
      %v664 = vadd.f32 %v640, %v656
      %v665 = vadd.f32 %v641, %v657
      %v666 = vadd.f32 %v642, %v658
      %v667 = vadd.f32 %v643, %v659
      %v668 = vpack.c.bf16 %v660, %v660
      %v669 = vpack.c.bf16 %v661, %v661
      %v670 = vpack.c.bf16 %v662, %v662
      %v671 = vpack.c.bf16 %v663, %v663
      %v672 = vpack.c.bf16 %v664, %v664
      %v673 = vpack.c.bf16 %v665, %v665
      %v674 = vpack.c.bf16 %v666, %v666
      %v675 = vpack.c.bf16 %v667, %v667
      %vm676 = vcmask 1040384
      %vm677 = vsmask.f32 256
      %vm678 = vmand %vm676, %vm677
      %v679 = vld [vmem:[%s449] sm:$0x1]
      %v680 = vsel %vm678, %v668, %v679
      %681 = vst [vmem:[%s449] sm:$0x1] %v680
      %v682 = vld [vmem:[%s449 + $0x1] sm:$0x1]
      %v683 = vsel %vm678, %v669, %v682
      %684 = vst [vmem:[%s449 + $0x1] sm:$0x1] %v683
      %v685 = vld [vmem:[%s449 + $0x2] sm:$0x1]
      %v686 = vsel %vm678, %v670, %v685
      %687 = vst [vmem:[%s449 + $0x2] sm:$0x1] %v686
      %v688 = vld [vmem:[%s449 + $0x3] sm:$0x1]
      %v689 = vsel %vm678, %v671, %v688
      %690 = vst [vmem:[%s449 + $0x3] sm:$0x1] %v689
      %v691 = vld [vmem:[%s449 + $0x4] sm:$0x1]
      %v692 = vsel %vm678, %v672, %v691
      %693 = vst [vmem:[%s449 + $0x4] sm:$0x1] %v692
      %v694 = vld [vmem:[%s449 + $0x5] sm:$0x1]
      %v695 = vsel %vm678, %v673, %v694
      %696 = vst [vmem:[%s449 + $0x5] sm:$0x1] %v695
      %v697 = vld [vmem:[%s449 + $0x6] sm:$0x1]
      %v698 = vsel %vm678, %v674, %v697
      %699 = vst [vmem:[%s449 + $0x6] sm:$0x1] %v698
      %v700 = vld [vmem:[%s449 + $0x7] sm:$0x1]
      %v701 = vsel %vm678, %v675, %v700
      %702 = vst [vmem:[%s449 + $0x7] sm:$0x1] %v701
      %v711 = vunpack.c.l.b16 %v668
      %v712 = vunpack.c.l.b16 %v669
      %v713 = vunpack.c.l.b16 %v670
      %v714 = vunpack.c.l.b16 %v671
      %v715 = vunpack.c.l.b16 %v672
      %v716 = vunpack.c.l.b16 %v673
      %v717 = vunpack.c.l.b16 %v674
      %v718 = vunpack.c.l.b16 %v675
      %v719 = vrot.slane %v712, 7
      %vm720 = vcmask 1041409
      %v721 = vsel %vm720, %v719, %v711
      %v722 = vrot.slane %v713, 6
      %vm723 = vcmask 1042434
      %v724 = vsel %vm723, %v722, %v721
      %v725 = vrot.slane %v714, 5
      %vm726 = vcmask 1043459
      %v727 = vsel %vm726, %v725, %v724
      %v728 = vrot.slane %v715, 4
      %vm729 = vcmask 1044484
      %v730 = vsel %vm729, %v728, %v727
      %v731 = vrot.slane %v716, 3
      %vm732 = vcmask 1045509
      %v733 = vsel %vm732, %v731, %v730
      %v734 = vrot.slane %v717, 2
      %vm735 = vcmask 1046534
      %v736 = vsel %vm735, %v734, %v733
      %v737 = vrot.slane %v718, 1
      %vm738 = vcmask 1047559
      %v739 = vsel %vm738, %v737, %v736
      %v740 = vpack.c.b16 %v739, %v739
      %742 = vxpose.xlu0.c.b16.start [1/8] %v740, 128
      %743 = vxpose.xlu0.c.b16.cont [2/8] 0, 128
      %744 = vxpose.xlu0.c.b16.cont [3/8] 0, 128
      %745 = vxpose.xlu0.c.b16.cont [4/8] 0, 128
      %746 = vxpose.xlu0.c.b16.cont [5/8] 0, 128
      %747 = vxpose.xlu0.c.b16.cont [6/8] 0, 128
      %748 = vxpose.xlu0.c.b16.cont [7/8] 0, 128
      %749 = vxpose.xlu0.c.b16.end [8/8] 0, 128
      %v750 = vpop.trf.xlu0
      %v751 = vpop.trf.xlu0
      %v752 = vpop.trf.xlu0
      %v753 = vpop.trf.xlu0
      %v754 = vpop.trf.xlu0
      %v755 = vpop.trf.xlu0
      %v756 = vpop.trf.xlu0
      %v757 = vpop.trf.xlu0
      %vm758 = vcmask 64512
      %v760 = vsel %vm758, %v750, 0
      %v763 = vsel %vm758, %v751, 0
      %v766 = vsel %vm758, %v752, 0
      %v769 = vsel %vm758, %v753, 0
      %v772 = vsel %vm758, %v754, 0
      %v775 = vsel %vm758, %v755, 0
      %v778 = vsel %vm758, %v756, 0
      %v781 = vsel %vm758, %v757, 0
      %v784 = vsel %vm758, %v467, 0
      %786 = vmatprep.subr.bf16.mxu0 0
      %787 = vmatpush1.bf16.xpose.msra.mxu0 %v784
      %788 = vmatprep.subr.bf16.mxu0 0
      %789 = vmatpush1.bf16.xpose.msra.mxu0 0
      %790 = vmatprep.subr.bf16.mxu0 0
      %791 = vmatpush1.bf16.xpose.msra.mxu0 0
      %792 = vmatprep.subr.bf16.mxu0 0
      %793 = vmatpush1.bf16.xpose.msra.mxu0 0
      %794 = vmatprep.subr.bf16.mxu0 0
      %795 = vmatpush1.bf16.xpose.msra.mxu0 0
      %796 = vmatprep.subr.bf16.mxu0 0
      %797 = vmatpush1.bf16.xpose.msra.mxu0 0
      %798 = vmatprep.subr.bf16.mxu0 0
      %799 = vmatpush1.bf16.xpose.msra.mxu0 0
      %800 = vmatprep.subr.bf16.mxu0 0
      %801 = vmatpush1.bf16.xpose.msra.mxu0 0
      %802 = vmatprep.subr.bf16.mxu0 0
      %803 = vmatpush1.bf16.xpose.msra.mxu0 0
      %804 = vmatprep.subr.bf16.mxu0 0
      %805 = vmatpush1.bf16.xpose.msra.mxu0 0
      %806 = vmatprep.subr.bf16.mxu0 0
      %807 = vmatpush1.bf16.xpose.msra.mxu0 0
      %808 = vmatprep.subr.bf16.mxu0 0
      %809 = vmatpush1.bf16.xpose.msra.mxu0 0
      %810 = vmatprep.subr.bf16.mxu0 0
      %811 = vmatpush1.bf16.xpose.msra.mxu0 0
      %812 = vmatprep.subr.bf16.mxu0 0
      %813 = vmatpush1.bf16.xpose.msra.mxu0 0
      %814 = vmatprep.subr.bf16.mxu0 0
      %815 = vmatpush1.bf16.xpose.msra.mxu0 0
      %816 = vmatprep.subr.bf16.mxu0 0
      %817 = vmatpush1.bf16.xpose.msra.mxu0 0
      %818 = vmatprep.mubr.bf16.mxu0 0
      %819 = vmatmul.mubr.bf16.gmra.mrb[0].mxu0 %v760
      %v820 = vpop.f32.mrb[0].mxu0
      %v821 = vadd.f32 0.0, %v820
      %v822 = vpop.f32.mrb[0].mxu0
      %v823 = vpop.f32.mrb[0].mxu0
      %v824 = vadd.f32 0.0, %v823
      %v825 = vpop.f32.mrb[0].mxu0
      %826 = vmatprep.mubr.bf16.mxu0 0
      %827 = vmatmul.mubr.bf16.gmra.mrb[0].mxu0 %v763
      %v828 = vpop.f32.mrb[0].mxu0
      %v829 = vadd.f32 0.0, %v828
      %v830 = vpop.f32.mrb[0].mxu0
      %v831 = vpop.f32.mrb[0].mxu0
      %v832 = vadd.f32 0.0, %v831
      %v833 = vpop.f32.mrb[0].mxu0
      %834 = vmatprep.mubr.bf16.mxu0 0
      %835 = vmatmul.mubr.bf16.gmra.mrb[0].mxu0 %v766
      %v836 = vpop.f32.mrb[0].mxu0
      %v837 = vadd.f32 0.0, %v836
      %v838 = vpop.f32.mrb[0].mxu0
      %v839 = vpop.f32.mrb[0].mxu0
      %v840 = vadd.f32 0.0, %v839
      %v841 = vpop.f32.mrb[0].mxu0
      %842 = vmatprep.mubr.bf16.mxu0 0
      %843 = vmatmul.mubr.bf16.gmra.mrb[0].mxu0 %v769
      %v844 = vpop.f32.mrb[0].mxu0
      %v845 = vadd.f32 0.0, %v844
      %v846 = vpop.f32.mrb[0].mxu0
      %v847 = vpop.f32.mrb[0].mxu0
      %v848 = vadd.f32 0.0, %v847
      %v849 = vpop.f32.mrb[0].mxu0
      %850 = vmatprep.mubr.bf16.mxu0 0
      %851 = vmatmul.mubr.bf16.gmra.mrb[0].mxu0 %v772
      %v852 = vpop.f32.mrb[0].mxu0
      %v853 = vadd.f32 0.0, %v852
      %v854 = vpop.f32.mrb[0].mxu0
      %v855 = vpop.f32.mrb[0].mxu0
      %v856 = vadd.f32 0.0, %v855
      %v857 = vpop.f32.mrb[0].mxu0
      %858 = vmatprep.mubr.bf16.mxu0 0
      %859 = vmatmul.mubr.bf16.gmra.mrb[0].mxu0 %v775
      %v860 = vpop.f32.mrb[0].mxu0
      %v861 = vadd.f32 0.0, %v860
      %v862 = vpop.f32.mrb[0].mxu0
      %v863 = vpop.f32.mrb[0].mxu0
      %v864 = vadd.f32 0.0, %v863
      %v865 = vpop.f32.mrb[0].mxu0
      %866 = vmatprep.mubr.bf16.mxu0 0
      %867 = vmatmul.mubr.bf16.gmra.mrb[0].mxu0 %v778
      %v868 = vpop.f32.mrb[0].mxu0
      %v869 = vadd.f32 0.0, %v868
      %v870 = vpop.f32.mrb[0].mxu0
      %v871 = vpop.f32.mrb[0].mxu0
      %v872 = vadd.f32 0.0, %v871
      %v873 = vpop.f32.mrb[0].mxu0
      %874 = vmatprep.mubr.bf16.mxu0 0
      %875 = vmatmul.mubr.bf16.gmra.mrb[0].mxu0 %v781
      %v876 = vpop.f32.mrb[0].mxu0
      %v877 = vadd.f32 0.0, %v876
      %v878 = vpop.f32.mrb[0].mxu0
      %v879 = vpop.f32.mrb[0].mxu0
      %v880 = vadd.f32 0.0, %v879
      %v881 = vpop.f32.mrb[0].mxu0
      %882 = vdwg.mxu0
      %883 = vxpose.xlu0.b32.start [1/16] %v821, 128
      %884 = vxpose.xlu0.b32.cont [2/16] %v824, 128
      %885 = vxpose.xlu0.b32.cont [3/16] %v829, 128
      %886 = vxpose.xlu0.b32.cont [4/16] %v832, 128
      %887 = vxpose.xlu0.b32.cont [5/16] %v837, 128
      %888 = vxpose.xlu0.b32.cont [6/16] %v840, 128
      %889 = vxpose.xlu0.b32.cont [7/16] %v845, 128
      %890 = vxpose.xlu0.b32.cont [8/16] %v848, 128
      %891 = vxpose.xlu0.b32.cont [9/16] %v853, 128
      %892 = vxpose.xlu0.b32.cont [10/16] %v856, 128
      %893 = vxpose.xlu0.b32.cont [11/16] %v861, 128
      %894 = vxpose.xlu0.b32.cont [12/16] %v864, 128
      %895 = vxpose.xlu0.b32.cont [13/16] %v869, 128
      %896 = vxpose.xlu0.b32.cont [14/16] %v872, 128
      %897 = vxpose.xlu0.b32.cont [15/16] %v877, 128
      %898 = vxpose.xlu0.b32.end [16/16] %v880, 128
      %v899 = vpop.trf.xlu0
      %v900 = vpop.trf.xlu0
      %v901 = vpop.trf.xlu0
      %v902 = vpop.trf.xlu0
      %v903 = vpop.trf.xlu0
      %v904 = vpop.trf.xlu0
      %v905 = vpop.trf.xlu0
      %v906 = vpop.trf.xlu0
      %v907 = vpop.trf.xlu0
      %v908 = vpop.trf.xlu0
      %v909 = vpop.trf.xlu0
      %v910 = vpop.trf.xlu0
      %v911 = vpop.trf.xlu0
      %v912 = vpop.trf.xlu0
      %v913 = vpop.trf.xlu0
      %v914 = vpop.trf.xlu0
      %v915 = vpack.c.bf16 %v899, %v899
      %916 = vst [vmem:[#allocation2] sm:$0x1] %v915
      %v917 = vld [vmem:[%s425] sm:$0x1]
      %v918 = vld [vmem:[%s425 + $0x1] sm:$0x1]
      %v919 = vld [vmem:[%s425 + $0x2] sm:$0x1]
      %v920 = vld [vmem:[%s425 + $0x3] sm:$0x1]
      %v921 = vld [vmem:[%s425 + $0x4] sm:$0x1]
      %v922 = vld [vmem:[%s425 + $0x5] sm:$0x1]
      %v923 = vld [vmem:[%s425 + $0x6] sm:$0x1]
      %v924 = vld [vmem:[%s425 + $0x7] sm:$0x1]
      %v925 = vunpack.c.l.bf16 %v917
      %v926 = vunpack.c.l.bf16 %v918
      %v927 = vunpack.c.l.bf16 %v919
      %v928 = vunpack.c.l.bf16 %v920
      %v929 = vunpack.c.l.bf16 %v921
      %v930 = vunpack.c.l.bf16 %v922
      %v931 = vunpack.c.l.bf16 %v923
      %v932 = vunpack.c.l.bf16 %v924
      %v933 = vrot.slane %v494, 7
      %v934 = vrot.slane %v501, 7
      %v935 = vrot.slane %v508, 7
      %v936 = vrot.slane %v515, 7
      %v941 = vmul.f32 %v925, %v933
      %v942 = vmul.f32 %v926, %v494
      %v943 = vmul.f32 %v927, %v934
      %v944 = vmul.f32 %v928, %v501
      %v945 = vmul.f32 %v929, %v935
      %v946 = vmul.f32 %v930, %v508
      %v947 = vmul.f32 %v931, %v936
      %v948 = vmul.f32 %v932, %v515
      %v949 = vrot.slane %v546, 7
      %v950 = vrot.slane %v553, 7
      %v951 = vrot.slane %v560, 7
      %v952 = vrot.slane %v567, 7
      %v957 = vadd.f32 %v941, %v949
      %v958 = vadd.f32 %v942, %v546
      %v959 = vadd.f32 %v943, %v950
      %v960 = vadd.f32 %v944, %v553
      %v961 = vadd.f32 %v945, %v951
      %v962 = vadd.f32 %v946, %v560
      %v963 = vadd.f32 %v947, %v952
      %v964 = vadd.f32 %v948, %v567
      %v965 = vsub.f32 0.0, %v957
      %v966 = vsub.f32 0.0, %v958
      %v967 = vsub.f32 0.0, %v959
      %v968 = vsub.f32 0.0, %v960
      %v969 = vsub.f32 0.0, %v961
      %v970 = vsub.f32 0.0, %v962
      %v971 = vsub.f32 0.0, %v963
      %v972 = vsub.f32 0.0, %v964
      %v973 = vmul.f32 %v965, 1.442695
      %v974 = vpow.pop %v973
      %v975 = vmul.f32 %v966, 1.442695
      %v976 = vpow.pop %v975
      %v977 = vmul.f32 %v967, 1.442695
      %v978 = vpow.pop %v977
      %v979 = vmul.f32 %v968, 1.442695
      %v980 = vpow.pop %v979
      %v981 = vmul.f32 %v969, 1.442695
      %v982 = vpow.pop %v981
      %v983 = vmul.f32 %v970, 1.442695
      %v984 = vpow.pop %v983
      %v985 = vmul.f32 %v971, 1.442695
      %v986 = vpow.pop %v985
      %v987 = vmul.f32 %v972, 1.442695
      %v988 = vpow.pop %v987
      %v989 = vadd.f32 %v974, 1.0
      %v990 = vadd.f32 %v976, 1.0
      %v991 = vadd.f32 %v978, 1.0
      %v992 = vadd.f32 %v980, 1.0
      %v993 = vadd.f32 %v982, 1.0
      %v994 = vadd.f32 %v984, 1.0
      %v995 = vadd.f32 %v986, 1.0
      %v996 = vadd.f32 %v988, 1.0
      %v997 = vrcp.pop %v989
      %v998 = vrcp.pop %v990
      %v999 = vrcp.pop %v991
      %v1000 = vrcp.pop %v992
      %v1001 = vrcp.pop %v993
      %v1002 = vrcp.pop %v994
      %v1003 = vrcp.pop %v995
      %v1004 = vrcp.pop %v996
      %v1005 = vld [vmem:[%s432] sm:$0x1]
      %v1006 = vld [vmem:[%s432 + $0x1] sm:$0x1]
      %v1007 = vld [vmem:[%s432 + $0x2] sm:$0x1]
      %v1008 = vld [vmem:[%s432 + $0x3] sm:$0x1]
      %v1009 = vld [vmem:[%s432 + $0x4] sm:$0x1]
      %v1010 = vld [vmem:[%s432 + $0x5] sm:$0x1]
      %v1011 = vld [vmem:[%s432 + $0x6] sm:$0x1]
      %v1012 = vld [vmem:[%s432 + $0x7] sm:$0x1]
      %v1013 = vunpack.c.l.bf16 %v1005
      %v1014 = vunpack.c.l.bf16 %v1006
      %v1015 = vunpack.c.l.bf16 %v1007
      %v1016 = vunpack.c.l.bf16 %v1008
      %v1017 = vunpack.c.l.bf16 %v1009
      %v1018 = vunpack.c.l.bf16 %v1010
      %v1019 = vunpack.c.l.bf16 %v1011
      %v1020 = vunpack.c.l.bf16 %v1012
      %v1021 = vsub.f32 %v957, %v1013
      %v1022 = vsub.f32 %v958, %v1014
      %v1023 = vsub.f32 %v959, %v1015
      %v1024 = vsub.f32 %v960, %v1016
      %v1025 = vsub.f32 %v961, %v1017
      %v1026 = vsub.f32 %v962, %v1018
      %v1027 = vsub.f32 %v963, %v1019
      %v1028 = vsub.f32 %v964, %v1020
      %v1029 = vmul.f32 %v997, %v1021
      %v1030 = vmul.f32 %v998, %v1022
      %v1031 = vmul.f32 %v999, %v1023
      %v1032 = vmul.f32 %v1000, %v1024
      %v1033 = vmul.f32 %v1001, %v1025
      %v1034 = vmul.f32 %v1002, %v1026
      %v1035 = vmul.f32 %v1003, %v1027
      %v1036 = vmul.f32 %v1004, %v1028
      %v1037 = vadd.f32 %v1013, %v1029
      %v1038 = vadd.f32 %v1014, %v1030
      %v1039 = vadd.f32 %v1015, %v1031
      %v1040 = vadd.f32 %v1016, %v1032
      %v1041 = vadd.f32 %v1017, %v1033
      %v1042 = vadd.f32 %v1018, %v1034
      %v1043 = vadd.f32 %v1019, %v1035
      %v1044 = vadd.f32 %v1020, %v1036
      %v1045 = vpack.c.bf16 %v1037, %v1037
      %v1046 = vpack.c.bf16 %v1038, %v1038
      %v1047 = vpack.c.bf16 %v1039, %v1039
      %v1048 = vpack.c.bf16 %v1040, %v1040
      %v1049 = vpack.c.bf16 %v1041, %v1041
      %v1050 = vpack.c.bf16 %v1042, %v1042
      %v1051 = vpack.c.bf16 %v1043, %v1043
      %v1052 = vpack.c.bf16 %v1044, %v1044
      %vm1053 = vsmask.f32 7938
      %vm1054 = vmand %vm676, %vm1053
      %v1055 = vld [vmem:[%s449] sm:$0x1]
      %v1056 = vsel %vm1054, %v1045, %v1055
      %1057 = vst [vmem:[%s449] sm:$0x1] %v1056
      %v1058 = vld [vmem:[%s449 + $0x1] sm:$0x1]
      %v1059 = vsel %vm1054, %v1046, %v1058
      %1060 = vst [vmem:[%s449 + $0x1] sm:$0x1] %v1059
      %v1061 = vld [vmem:[%s449 + $0x2] sm:$0x1]
      %v1062 = vsel %vm1054, %v1047, %v1061
      %1063 = vst [vmem:[%s449 + $0x2] sm:$0x1] %v1062
      %v1064 = vld [vmem:[%s449 + $0x3] sm:$0x1]
      %v1065 = vsel %vm1054, %v1048, %v1064
      %1066 = vst [vmem:[%s449 + $0x3] sm:$0x1] %v1065
      %v1067 = vld [vmem:[%s449 + $0x4] sm:$0x1]
      %v1068 = vsel %vm1054, %v1049, %v1067
      %1069 = vst [vmem:[%s449 + $0x4] sm:$0x1] %v1068
      %v1070 = vld [vmem:[%s449 + $0x5] sm:$0x1]
      %v1071 = vsel %vm1054, %v1050, %v1070
      %1072 = vst [vmem:[%s449 + $0x5] sm:$0x1] %v1071
      %v1073 = vld [vmem:[%s449 + $0x6] sm:$0x1]
      %v1074 = vsel %vm1054, %v1051, %v1073
      %1075 = vst [vmem:[%s449 + $0x6] sm:$0x1] %v1074
      %v1076 = vld [vmem:[%s449 + $0x7] sm:$0x1]
      %v1077 = vsel %vm1054, %v1052, %v1076
      %1078 = vst [vmem:[%s449 + $0x7] sm:$0x1] %v1077
      %v1087 = vunpack.c.l.b16 %v1045
      %v1088 = vunpack.c.l.b16 %v1046
      %v1089 = vunpack.c.l.b16 %v1047
      %v1090 = vunpack.c.l.b16 %v1048
      %v1091 = vunpack.c.l.b16 %v1049
      %v1092 = vunpack.c.l.b16 %v1050
      %v1093 = vunpack.c.l.b16 %v1051
      %v1094 = vunpack.c.l.b16 %v1052
      %v1095 = vrot.slane %v1087, 1
      %v1096 = vsel %vm720, %v1088, %v1095
      %v1097 = vrot.slane %v1089, 7
      %v1098 = vsel %vm723, %v1097, %v1096
      %v1099 = vrot.slane %v1090, 6
      %v1100 = vsel %vm726, %v1099, %v1098
      %v1101 = vrot.slane %v1091, 5
      %v1102 = vsel %vm729, %v1101, %v1100
      %v1103 = vrot.slane %v1092, 4
      %v1104 = vsel %vm732, %v1103, %v1102
      %v1105 = vrot.slane %v1093, 3
      %v1106 = vsel %vm735, %v1105, %v1104
      %v1107 = vrot.slane %v1094, 2
      %v1108 = vsel %vm738, %v1107, %v1106
      %v1109 = vpack.c.b16 %v1108, %v1108
      %1111 = vxpose.xlu0.c.b16.start [1/8] %v1109, 128
      %1112 = vxpose.xlu0.c.b16.cont [2/8] 0, 128
      %1113 = vxpose.xlu0.c.b16.cont [3/8] 0, 128
      %1114 = vxpose.xlu0.c.b16.cont [4/8] 0, 128
      %1115 = vxpose.xlu0.c.b16.cont [5/8] 0, 128
      %1116 = vxpose.xlu0.c.b16.cont [6/8] 0, 128
      %1117 = vxpose.xlu0.c.b16.cont [7/8] 0, 128
      %1118 = vxpose.xlu0.c.b16.end [8/8] 0, 128
      %v1119 = vpop.trf.xlu0
      %v1120 = vpop.trf.xlu0
      %v1121 = vpop.trf.xlu0
      %v1122 = vpop.trf.xlu0
      %v1123 = vpop.trf.xlu0
      %v1124 = vpop.trf.xlu0
      %v1125 = vpop.trf.xlu0
      %v1126 = vpop.trf.xlu0
      %v1128 = vsel %vm758, %v1119, 0
      %v1131 = vsel %vm758, %v1120, 0
      %v1134 = vsel %vm758, %v1121, 0
      %v1137 = vsel %vm758, %v1122, 0
      %v1140 = vsel %vm758, %v1123, 0
      %v1143 = vsel %vm758, %v1124, 0
      %v1146 = vsel %vm758, %v1125, 0
      %v1149 = vsel %vm758, %v1126, 0
      %1151 = vmatprep.subr.bf16.mxu0 0
      %1152 = vmatpush1.bf16.xpose.msra.mxu0 %v784
      %1153 = vmatprep.subr.bf16.mxu0 0
      %1154 = vmatpush1.bf16.xpose.msra.mxu0 0
      %1155 = vmatprep.subr.bf16.mxu0 0
      %1156 = vmatpush1.bf16.xpose.msra.mxu0 0
      %1157 = vmatprep.subr.bf16.mxu0 0
      %1158 = vmatpush1.bf16.xpose.msra.mxu0 0
      %1159 = vmatprep.subr.bf16.mxu0 0
      %1160 = vmatpush1.bf16.xpose.msra.mxu0 0
      %1161 = vmatprep.subr.bf16.mxu0 0
      %1162 = vmatpush1.bf16.xpose.msra.mxu0 0
      %1163 = vmatprep.subr.bf16.mxu0 0
      %1164 = vmatpush1.bf16.xpose.msra.mxu0 0
      %1165 = vmatprep.subr.bf16.mxu0 0
      %1166 = vmatpush1.bf16.xpose.msra.mxu0 0
      %1167 = vmatprep.subr.bf16.mxu0 0
      %1168 = vmatpush1.bf16.xpose.msra.mxu0 0
      %1169 = vmatprep.subr.bf16.mxu0 0
      %1170 = vmatpush1.bf16.xpose.msra.mxu0 0
      %1171 = vmatprep.subr.bf16.mxu0 0
      %1172 = vmatpush1.bf16.xpose.msra.mxu0 0
      %1173 = vmatprep.subr.bf16.mxu0 0
      %1174 = vmatpush1.bf16.xpose.msra.mxu0 0
      %1175 = vmatprep.subr.bf16.mxu0 0
      %1176 = vmatpush1.bf16.xpose.msra.mxu0 0
      %1177 = vmatprep.subr.bf16.mxu0 0
      %1178 = vmatpush1.bf16.xpose.msra.mxu0 0
      %1179 = vmatprep.subr.bf16.mxu0 0
      %1180 = vmatpush1.bf16.xpose.msra.mxu0 0
      %1181 = vmatprep.subr.bf16.mxu0 0
      %1182 = vmatpush1.bf16.xpose.msra.mxu0 0
      %1183 = vmatprep.mubr.bf16.mxu0 0
      %1184 = vmatmul.mubr.bf16.gmra.mrb[0].mxu0 %v1128
      %v1185 = vpop.f32.mrb[0].mxu0
      %v1186 = vadd.f32 0.0, %v1185
      %v1187 = vpop.f32.mrb[0].mxu0
      %v1188 = vpop.f32.mrb[0].mxu0
      %v1189 = vadd.f32 0.0, %v1188
      %v1190 = vpop.f32.mrb[0].mxu0
      %1191 = vmatprep.mubr.bf16.mxu0 0
      %1192 = vmatmul.mubr.bf16.gmra.mrb[0].mxu0 %v1131
      %v1193 = vpop.f32.mrb[0].mxu0
      %v1194 = vadd.f32 0.0, %v1193
      %v1195 = vpop.f32.mrb[0].mxu0
      %v1196 = vpop.f32.mrb[0].mxu0
      %v1197 = vadd.f32 0.0, %v1196
      %v1198 = vpop.f32.mrb[0].mxu0
      %1199 = vmatprep.mubr.bf16.mxu0 0
      %1200 = vmatmul.mubr.bf16.gmra.mrb[0].mxu0 %v1134
      %v1201 = vpop.f32.mrb[0].mxu0
      %v1202 = vadd.f32 0.0, %v1201
      %v1203 = vpop.f32.mrb[0].mxu0
      %v1204 = vpop.f32.mrb[0].mxu0
      %v1205 = vadd.f32 0.0, %v1204
      %v1206 = vpop.f32.mrb[0].mxu0
      %1207 = vmatprep.mubr.bf16.mxu0 0
      %1208 = vmatmul.mubr.bf16.gmra.mrb[0].mxu0 %v1137
      %v1209 = vpop.f32.mrb[0].mxu0
      %v1210 = vadd.f32 0.0, %v1209
      %v1211 = vpop.f32.mrb[0].mxu0
      %v1212 = vpop.f32.mrb[0].mxu0
      %v1213 = vadd.f32 0.0, %v1212
      %v1214 = vpop.f32.mrb[0].mxu0
      %1215 = vmatprep.mubr.bf16.mxu0 0
      %1216 = vmatmul.mubr.bf16.gmra.mrb[0].mxu0 %v1140
      %v1217 = vpop.f32.mrb[0].mxu0
      %v1218 = vadd.f32 0.0, %v1217
      %v1219 = vpop.f32.mrb[0].mxu0
      %v1220 = vpop.f32.mrb[0].mxu0
      %v1221 = vadd.f32 0.0, %v1220
      %v1222 = vpop.f32.mrb[0].mxu0
      %1223 = vmatprep.mubr.bf16.mxu0 0
      %1224 = vmatmul.mubr.bf16.gmra.mrb[0].mxu0 %v1143
      %v1225 = vpop.f32.mrb[0].mxu0
      %v1226 = vadd.f32 0.0, %v1225
      %v1227 = vpop.f32.mrb[0].mxu0
      %v1228 = vpop.f32.mrb[0].mxu0
      %v1229 = vadd.f32 0.0, %v1228
      %v1230 = vpop.f32.mrb[0].mxu0
      %1231 = vmatprep.mubr.bf16.mxu0 0
      %1232 = vmatmul.mubr.bf16.gmra.mrb[0].mxu0 %v1146
      %v1233 = vpop.f32.mrb[0].mxu0
      %v1234 = vadd.f32 0.0, %v1233
      %v1235 = vpop.f32.mrb[0].mxu0
      %v1236 = vpop.f32.mrb[0].mxu0
      %v1237 = vadd.f32 0.0, %v1236
      %v1238 = vpop.f32.mrb[0].mxu0
      %1239 = vmatprep.mubr.bf16.mxu0 0
      %1240 = vmatmul.mubr.bf16.gmra.mrb[0].mxu0 %v1149
      %v1241 = vpop.f32.mrb[0].mxu0
      %v1242 = vadd.f32 0.0, %v1241
      %v1243 = vpop.f32.mrb[0].mxu0
      %v1244 = vpop.f32.mrb[0].mxu0
      %v1245 = vadd.f32 0.0, %v1244
      %v1246 = vpop.f32.mrb[0].mxu0
      %1247 = vdwg.mxu0
      %1248 = vxpose.xlu0.b32.start [1/16] %v1186, 128
      %1249 = vxpose.xlu0.b32.cont [2/16] %v1189, 128
      %1250 = vxpose.xlu0.b32.cont [3/16] %v1194, 128
      %1251 = vxpose.xlu0.b32.cont [4/16] %v1197, 128
      %1252 = vxpose.xlu0.b32.cont [5/16] %v1202, 128
      %1253 = vxpose.xlu0.b32.cont [6/16] %v1205, 128
      %1254 = vxpose.xlu0.b32.cont [7/16] %v1210, 128
      %1255 = vxpose.xlu0.b32.cont [8/16] %v1213, 128
      %1256 = vxpose.xlu0.b32.cont [9/16] %v1218, 128
      %1257 = vxpose.xlu0.b32.cont [10/16] %v1221, 128
      %1258 = vxpose.xlu0.b32.cont [11/16] %v1226, 128
      %1259 = vxpose.xlu0.b32.cont [12/16] %v1229, 128
      %1260 = vxpose.xlu0.b32.cont [13/16] %v1234, 128
      %1261 = vxpose.xlu0.b32.cont [14/16] %v1237, 128
      %1262 = vxpose.xlu0.b32.cont [15/16] %v1242, 128
      %1263 = vxpose.xlu0.b32.end [16/16] %v1245, 128
      %v1264 = vpop.trf.xlu0
      %v1265 = vpop.trf.xlu0
      %v1266 = vpop.trf.xlu0
      %v1267 = vpop.trf.xlu0
      %v1268 = vpop.trf.xlu0
      %v1269 = vpop.trf.xlu0
      %v1270 = vpop.trf.xlu0
      %v1271 = vpop.trf.xlu0
      %v1272 = vpop.trf.xlu0
      %v1273 = vpop.trf.xlu0
      %v1274 = vpop.trf.xlu0
      %v1275 = vpop.trf.xlu0
      %v1276 = vpop.trf.xlu0
      %v1277 = vpop.trf.xlu0
      %v1278 = vpop.trf.xlu0
      %v1279 = vpop.trf.xlu0
      %v1280 = vpack.c.bf16 %v1264, %v1264
      %v1283 = vunpack.c.l.s4 1983009808
      %v1284 = vunpack.c.0.s8 %v1283
      %v1285 = vlaneseq
      %v1286 = vshrl.u32 %v1285, 7
      %v1287 = vsub.s32 %v1284, %v1286
      %v1288 = vrot.slane %v1280, %v1287
      %v1289 = vrot.slane %v1288, 7
      %1291 = vst [vmem:[#allocation2] sm:$0x2] %v1289
      %v1292 = vld [vmem:[#allocation2] sm:$0x3]
      %v1293 = vld [vmem:[%s437] sm:$0xf]
      %v1294 = vld [vmem:[%s442] sm:$0xff]
      %1296 = vset.pattern.permute.xlu0 0
      %1297 = vperm.xlu0 %1296, %v1294
      %v1298 = vpop.permute.xlu0 %1297
      %vm1300 = vcmask 31744
      %v1302 = vsel %vm1300, %v1293, 0
      %vm1304 = vcmask 1041408
      %v1306 = vsel %vm1304, %v1292, 0
      %1308 = vmatprep.subr.bf16.mxu0 0
      %1309 = vmatpush1.bf16.msra.mxu0 %v1306
      %1310 = vmatprep.subr.bf16.mxu0 0
      %1311 = vmatpush1.bf16.msra.mxu0 0
      %1312 = vmatprep.subr.bf16.mxu0 0
      %1313 = vmatpush1.bf16.msra.mxu0 0
      %1314 = vmatprep.subr.bf16.mxu0 0
      %1315 = vmatpush1.bf16.msra.mxu0 0
      %1316 = vmatprep.subr.bf16.mxu0 0
      %1317 = vmatpush1.bf16.msra.mxu0 0
      %1318 = vmatprep.subr.bf16.mxu0 0
      %1319 = vmatpush1.bf16.msra.mxu0 0
      %1320 = vmatprep.subr.bf16.mxu0 0
      %1321 = vmatpush1.bf16.msra.mxu0 0
      %1322 = vmatprep.subr.bf16.mxu0 0
      %1323 = vmatpush1.bf16.msra.mxu0 0
      %1324 = vmatprep.subr.bf16.mxu0 0
      %1325 = vmatpush1.bf16.msra.mxu0 0
      %1326 = vmatprep.subr.bf16.mxu0 0
      %1327 = vmatpush1.bf16.msra.mxu0 0
      %1328 = vmatprep.subr.bf16.mxu0 0
      %1329 = vmatpush1.bf16.msra.mxu0 0
      %1330 = vmatprep.subr.bf16.mxu0 0
      %1331 = vmatpush1.bf16.msra.mxu0 0
      %1332 = vmatprep.subr.bf16.mxu0 0
      %1333 = vmatpush1.bf16.msra.mxu0 0
      %1334 = vmatprep.subr.bf16.mxu0 0
      %1335 = vmatpush1.bf16.msra.mxu0 0
      %1336 = vmatprep.subr.bf16.mxu0 0
      %1337 = vmatpush1.bf16.msra.mxu0 0
      %1338 = vmatprep.subr.bf16.mxu0 0
      %1339 = vmatpush1.bf16.msra.mxu0 0
      %1340 = vmatprep.mubr.bf16.mxu0 0
      %1341 = vmatmul.mubr.bf16.gmra.mrb[0].mxu0 %v1302
      %v1342 = vpop.f32.mrb[0].mxu0
      %v1343 = vadd.f32 %v1298, %v1342
      %v1344 = vpop.f32.mrb[0].mxu0
      %v1345 = vpop.f32.mrb[0].mxu0
      %v1346 = vpop.f32.mrb[0].mxu0
      %1347 = vdwg.mxu0
      %v1348 = vpack.c.bf16 %v1343, %v1343
      %v1351 = vunpack.c.l.s4 1966171168
      %v1352 = vunpack.c.0.s8 %v1351
      %v1353 = vlaneseq
      %v1354 = vshrl.u32 %v1353, 7
      %v1355 = vsub.s32 %v1352, %v1354
      %v1356 = vrot.slane %v1348, %v1355
      %v1357 = vcombine.high %v1356, %v1356
      %v1359 = vunpack.c.l.s4 1966171168
      %v1360 = vunpack.c.0.s8 %v1359
      %v1361 = vlaneseq
      %v1362 = vshrl.u32 %v1361, 7
      %v1363 = vsub.s32 %v1360, %v1362
      %v1364 = vrot.slane %v1356, %v1363
      %v1366 = vunpack.c.l.s4 1966171168
      %v1367 = vunpack.c.0.s8 %v1366
      %v1368 = vlaneseq
      %v1369 = vshrl.u32 %v1368, 7
      %v1370 = vsub.s32 %v1367, %v1369
      %v1371 = vrot.slane %v1357, %v1370
      %v1372 = vcombine.high %v1364, %v1364
      %v1373 = vcombine.high %v1371, %v1371
      %v1374 = vunpack.i.l.s16 %v1364
      %v1375 = vunpack.i.h.s16 %v1364
      %v1376 = vunpack.i.l.s16 %v1371
      %v1377 = vunpack.i.h.s16 %v1371
      %v1378 = vunpack.i.l.s16 %v1372
      %v1379 = vunpack.i.h.s16 %v1372
      %v1380 = vunpack.i.l.s16 %v1373
      %v1381 = vunpack.i.h.s16 %v1373
      %v1382 = vpack.i.b16 %v1374, %v1374
      %v1383 = vpack.i.b16 %v1375, %v1375
      %v1384 = vpack.i.b16 %v1376, %v1376
      %v1385 = vpack.i.b16 %v1377, %v1377
      %v1386 = vpack.i.b16 %v1378, %v1378
      %v1387 = vpack.i.b16 %v1379, %v1379
      %v1388 = vpack.i.b16 %v1380, %v1380
      %v1389 = vpack.i.b16 %v1381, %v1381
      %v1398 = vld [vmem:[%s456] sm:$0x1]
      %v1399 = vsel %vm678, %v1382, %v1398
      %1400 = vst [vmem:[%s456] sm:$0x1] %v1399
      %v1401 = vld [vmem:[%s456 + $0x1] sm:$0x1]
      %v1402 = vsel %vm678, %v1383, %v1401
      %1403 = vst [vmem:[%s456 + $0x1] sm:$0x1] %v1402
      %v1404 = vld [vmem:[%s456 + $0x2] sm:$0x1]
      %v1405 = vsel %vm678, %v1384, %v1404
      %1406 = vst [vmem:[%s456 + $0x2] sm:$0x1] %v1405
      %v1407 = vld [vmem:[%s456 + $0x3] sm:$0x1]
      %v1408 = vsel %vm678, %v1385, %v1407
      %1409 = vst [vmem:[%s456 + $0x3] sm:$0x1] %v1408
      %v1410 = vld [vmem:[%s456 + $0x4] sm:$0x1]
      %v1411 = vsel %vm678, %v1386, %v1410
      %1412 = vst [vmem:[%s456 + $0x4] sm:$0x1] %v1411
      %v1413 = vld [vmem:[%s456 + $0x5] sm:$0x1]
      %v1414 = vsel %vm678, %v1387, %v1413
      %1415 = vst [vmem:[%s456 + $0x5] sm:$0x1] %v1414
      %v1416 = vld [vmem:[%s456 + $0x6] sm:$0x1]
      %v1417 = vsel %vm678, %v1388, %v1416
      %1418 = vst [vmem:[%s456 + $0x6] sm:$0x1] %v1417
      %v1419 = vld [vmem:[%s456 + $0x7] sm:$0x1]
      %v1420 = vsel %vm678, %v1389, %v1419
      %1421 = vst [vmem:[%s456 + $0x7] sm:$0x1] %v1420
      %1422 = vadd.xlane.f32.xlu0 %v1343
      %v1423 = vpop.xlane.xlu0 %1422
      %v1424 = vmul.f32 %v1343, %v1343
      %1425 = vadd.xlane.f32.xlu0 %v1424
      %v1426 = vpop.xlane.xlu0 %1425
      %s1427 = scalar_lea.vmem %s437, 4
      %v1428 = vld [vmem:[%s1427] sm:$0xf]
      %s1429 = scalar_lea.vmem %s442, 8
      %v1430 = vld [vmem:[%s1429] sm:$0xff]
      %1432 = vset.pattern.permute.xlu0 0
      %1433 = vperm.xlu0 %1432, %v1430
      %v1434 = vpop.permute.xlu0 %1433
      %v1437 = vsel %vm1300, %v1428, 0
      %1439 = vmatprep.subr.bf16.mxu0 0
      %1440 = vmatpush1.bf16.msra.mxu0 %v1306
      %1441 = vmatprep.subr.bf16.mxu0 0
      %1442 = vmatpush1.bf16.msra.mxu0 0
      %1443 = vmatprep.subr.bf16.mxu0 0
      %1444 = vmatpush1.bf16.msra.mxu0 0
      %1445 = vmatprep.subr.bf16.mxu0 0
      %1446 = vmatpush1.bf16.msra.mxu0 0
      %1447 = vmatprep.subr.bf16.mxu0 0
      %1448 = vmatpush1.bf16.msra.mxu0 0
      %1449 = vmatprep.subr.bf16.mxu0 0
      %1450 = vmatpush1.bf16.msra.mxu0 0
      %1451 = vmatprep.subr.bf16.mxu0 0
      %1452 = vmatpush1.bf16.msra.mxu0 0
      %1453 = vmatprep.subr.bf16.mxu0 0
      %1454 = vmatpush1.bf16.msra.mxu0 0
      %1455 = vmatprep.subr.bf16.mxu0 0
      %1456 = vmatpush1.bf16.msra.mxu0 0
      %1457 = vmatprep.subr.bf16.mxu0 0
      %1458 = vmatpush1.bf16.msra.mxu0 0
      %1459 = vmatprep.subr.bf16.mxu0 0
      %1460 = vmatpush1.bf16.msra.mxu0 0
      %1461 = vmatprep.subr.bf16.mxu0 0
      %1462 = vmatpush1.bf16.msra.mxu0 0
      %1463 = vmatprep.subr.bf16.mxu0 0
      %1464 = vmatpush1.bf16.msra.mxu0 0
      %1465 = vmatprep.subr.bf16.mxu0 0
      %1466 = vmatpush1.bf16.msra.mxu0 0
      %1467 = vmatprep.subr.bf16.mxu0 0
      %1468 = vmatpush1.bf16.msra.mxu0 0
      %1469 = vmatprep.subr.bf16.mxu0 0
      %1470 = vmatpush1.bf16.msra.mxu0 0
      %1471 = vmatprep.mubr.bf16.mxu0 0
      %1472 = vmatmul.mubr.bf16.gmra.mrb[0].mxu0 %v1437
      %v1473 = vpop.f32.mrb[0].mxu0
      %v1474 = vadd.f32 %v1434, %v1473
      %v1475 = vpop.f32.mrb[0].mxu0
      %v1476 = vpop.f32.mrb[0].mxu0
      %v1477 = vpop.f32.mrb[0].mxu0
      %1478 = vdwg.mxu0
      %v1479 = vpack.c.bf16 %v1474, %v1474
      %v1482 = vunpack.c.l.s4 1966171168
      %v1483 = vunpack.c.0.s8 %v1482
      %v1484 = vlaneseq
      %v1485 = vshrl.u32 %v1484, 7
      %v1486 = vsub.s32 %v1483, %v1485
      %v1487 = vrot.slane %v1479, %v1486
      %v1488 = vcombine.high %v1487, %v1487
      %v1490 = vunpack.c.l.s4 1966171168
      %v1491 = vunpack.c.0.s8 %v1490
      %v1492 = vlaneseq
      %v1493 = vshrl.u32 %v1492, 7
      %v1494 = vsub.s32 %v1491, %v1493
      %v1495 = vrot.slane %v1487, %v1494
      %v1497 = vunpack.c.l.s4 1966171168
      %v1498 = vunpack.c.0.s8 %v1497
      %v1499 = vlaneseq
      %v1500 = vshrl.u32 %v1499, 7
      %v1501 = vsub.s32 %v1498, %v1500
      %v1502 = vrot.slane %v1488, %v1501
      %v1503 = vcombine.high %v1495, %v1495
      %v1504 = vcombine.high %v1502, %v1502
      %v1505 = vunpack.i.l.s16 %v1495
      %v1506 = vunpack.i.h.s16 %v1495
      %v1507 = vunpack.i.l.s16 %v1502
      %v1508 = vunpack.i.h.s16 %v1502
      %v1509 = vunpack.i.l.s16 %v1503
      %v1510 = vunpack.i.h.s16 %v1503
      %v1511 = vunpack.i.l.s16 %v1504
      %v1512 = vunpack.i.h.s16 %v1504
      %v1513 = vpack.i.b16 %v1505, %v1505
      %v1514 = vpack.i.b16 %v1506, %v1506
      %v1515 = vpack.i.b16 %v1507, %v1507
      %v1516 = vpack.i.b16 %v1508, %v1508
      %v1517 = vpack.i.b16 %v1509, %v1509
      %v1518 = vpack.i.b16 %v1510, %v1510
      %v1519 = vpack.i.b16 %v1511, %v1511
      %v1520 = vpack.i.b16 %v1512, %v1512
      %v1529 = vld [vmem:[%s456] sm:$0x1]
      %v1530 = vsel %vm1054, %v1513, %v1529
      %1531 = vst [vmem:[%s456] sm:$0x1] %v1530
      %v1532 = vld [vmem:[%s456 + $0x1] sm:$0x1]
      %v1533 = vsel %vm1054, %v1514, %v1532
      %1534 = vst [vmem:[%s456 + $0x1] sm:$0x1] %v1533
      %v1535 = vld [vmem:[%s456 + $0x2] sm:$0x1]
      %v1536 = vsel %vm1054, %v1515, %v1535
      %1537 = vst [vmem:[%s456 + $0x2] sm:$0x1] %v1536
      %v1538 = vld [vmem:[%s456 + $0x3] sm:$0x1]
      %v1539 = vsel %vm1054, %v1516, %v1538
      %1540 = vst [vmem:[%s456 + $0x3] sm:$0x1] %v1539
      %v1541 = vld [vmem:[%s456 + $0x4] sm:$0x1]
      %v1542 = vsel %vm1054, %v1517, %v1541
      %1543 = vst [vmem:[%s456 + $0x4] sm:$0x1] %v1542
      %v1544 = vld [vmem:[%s456 + $0x5] sm:$0x1]
      %v1545 = vsel %vm1054, %v1518, %v1544
      %1546 = vst [vmem:[%s456 + $0x5] sm:$0x1] %v1545
      %v1547 = vld [vmem:[%s456 + $0x6] sm:$0x1]
      %v1548 = vsel %vm1054, %v1519, %v1547
      %1549 = vst [vmem:[%s456 + $0x6] sm:$0x1] %v1548
      %v1550 = vld [vmem:[%s456 + $0x7] sm:$0x1]
      %v1551 = vsel %vm1054, %v1520, %v1550
      %1552 = vst [vmem:[%s456 + $0x7] sm:$0x1] %v1551
      %1553 = vadd.xlane.f32.xlu0 %v1474
      %v1554 = vpop.xlane.xlu0 %1553
      %v1555 = vmul.f32 %v1474, %v1474
      %1556 = vadd.xlane.f32.xlu0 %v1555
      %v1557 = vpop.xlane.xlu0 %1556
      %v1558 = vadd.f32 %v1423, %v1554
      %v1559 = vadd.f32 %v1426, %v1557
      %v1561 = vlaneseq
      %v1562 = vand.u32 %v1561, 127
      %v1563 = vlaneseq
      %v1564 = vshrl.u32 %v1563, 7
      %v1565 = vsub.s32 %v1562, %v1564
      %v1566 = vrot.slane %v1558, %v1565
      %vm1568 = vcmask 57344
      %1569 = vst.msk [vmem:[%s463] sm:$0x1] %vm1568, %v1566
      %v1571 = vlaneseq
      %v1572 = vshrl.u32 %v1571, 7
      %v1573 = vsub.s32 %v1562, %v1572
      %v1574 = vrot.slane %v1559, %v1573
      %1576 = vst.msk [vmem:[%s463 + $0x1] sm:$0x1] %vm1568, %v1574
      %p1577 = scmp.lt.s32.totalorder %s25, 1
      %s1578 = scalar_select %p1577, %s25, 1
      %p1579 = scmp.lt.s32.totalorder %s26, 0
      %s1580 = scalar_select %p1579, %s26, 0
      %s1581 = smul.addr %s1578, 8
      %s1582 = sadd.s32 %s1580, %s1581
      %s1583 = scalar_lea.vmem %s7, %s1582
      %p1584 = scmp.lt.s32.totalorder %s25, 1
      %s1585 = scalar_select %p1584, %s25, 1
      %p1586 = scmp.lt.s32.totalorder %s26, 0
      %s1587 = scalar_select %p1586, %s26, 0
      %s1588 = smul.addr %s1585, 8
      %s1589 = sadd.s32 %s1587, %s1588
      %s1590 = scalar_lea.vmem %s8, %s1589
      %p1591 = scmp.lt.s32.totalorder %s25, 1
      %s1592 = scalar_select %p1591, %s25, 1
      %p1593 = scmp.lt.s32.totalorder %s26, 0
      %s1594 = scalar_select %p1593, %s26, 0
      %s1595 = sadd.s32 %s1594, %s1592
      %s1596 = smul.addr %s1595, 2
      %s1597 = scalar_lea.vmem %s9, %s1596
      // Predicated region
      $region49: #{ssm_block_forward.6} parent=47 // pred_check
        %p1598 = pneg %p224
      $region50: #{ssm_block_forward.6} parent=47 // pred_check_branch
        %1600 = sbr.rel (%p1598) target = $region52
      $region51: #{ssm_block_forward.6} parent=47 // pred_region
        _
      $region52: #{ssm_block_forward.6} parent=47 // pred_fallthru
        _
      // Predicated region
      $region53: #{ssm_block_forward.6} parent=47 // pred_check
        %p1601 = pneg %p252
      $region54: #{ssm_block_forward.6} parent=47 // pred_check_branch
        %1603 = sbr.rel (%p1601) target = $region56
      $region55: #{ssm_block_forward.6} parent=47 // pred_region
        _
      $region56: #{ssm_block_forward.6} parent=47 // pred_fallthru
        _
      // Predicated region
      $region57: #{ssm_block_forward.6} parent=47 // pred_check
        %p1604 = pneg %p280
      $region58: #{ssm_block_forward.6} parent=47 // pred_check_branch
        %1606 = sbr.rel (%p1604) target = $region60
      $region59: #{ssm_block_forward.6} parent=47 // pred_region
        _
      $region60: #{ssm_block_forward.6} parent=47 // pred_fallthru
        _
    $region48: #{ssm_block_forward.6} parent=5 // pred_fallthru
      _
    %p1607 = scmp.le.s32.totalorder 2, %s16
    // Predicated region
    $region61: #{ssm_block_forward.6} parent=5 // pred_check
      %p1608 = pneg %p1607
    $region62: #{ssm_block_forward.6} parent=5 // pred_check_branch
      %1610 = sbr.rel (%p1608) target = $region64
    $region63: #{ssm_block_forward.6} parent=5 // pred_region
      %s1611 = ssub.s32 %s16, 2
      // Predicated region
      $region65: #{ssm_block_forward.6} parent=63 // pred_check
        %p1612 = pneg %p230
      $region66: #{ssm_block_forward.6} parent=63 // pred_check_branch
        %1614 = sbr.rel (%p1612) target = $region68
      $region67: #{ssm_block_forward.6} parent=63 // pred_region
        %p1615 = scmp.lt.s32.totalorder %s27, 1
        %s1616 = scalar_select %p1615, %s27, 1
        %p1617 = scmp.lt.s32.totalorder %s28, 0
        %s1618 = scalar_select %p1617, %s28, 0
        %s1619 = smul.addr %s1616, 8
        %s1620 = sadd.s32 %s1618, %s1619
        %s1621 = scalar_lea.vmem %s7, %s1620
      $region68: #{ssm_block_forward.6} parent=63 // pred_fallthru
        _
      // Predicated region
      $region69: #{ssm_block_forward.6} parent=63 // pred_check
        %p1622 = pneg %p258
      $region70: #{ssm_block_forward.6} parent=63 // pred_check_branch
        %1624 = sbr.rel (%p1622) target = $region72
      $region71: #{ssm_block_forward.6} parent=63 // pred_region
        %p1625 = scmp.lt.s32.totalorder %s27, 1
        %s1626 = scalar_select %p1625, %s27, 1
        %p1627 = scmp.lt.s32.totalorder %s28, 0
        %s1628 = scalar_select %p1627, %s28, 0
        %s1629 = smul.addr %s1626, 8
        %s1630 = sadd.s32 %s1628, %s1629
        %s1631 = scalar_lea.vmem %s8, %s1630
      $region72: #{ssm_block_forward.6} parent=63 // pred_fallthru
        _
      // Predicated region
      $region73: #{ssm_block_forward.6} parent=63 // pred_check
        %p1632 = pneg %p286
      $region74: #{ssm_block_forward.6} parent=63 // pred_check_branch
        %1634 = sbr.rel (%p1632) target = $region76
      $region75: #{ssm_block_forward.6} parent=63 // pred_region
        %p1635 = scmp.lt.s32.totalorder %s27, 1
        %s1636 = scalar_select %p1635, %s27, 1
        %p1637 = scmp.lt.s32.totalorder %s28, 0
        %s1638 = scalar_select %p1637, %s28, 0
        %s1639 = sadd.s32 %s1638, %s1636
        %s1640 = smul.addr %s1639, 2
        %s1641 = scalar_lea.vmem %s9, %s1640
      $region76: #{ssm_block_forward.6} parent=63 // pred_fallthru
        _
    $region64: #{ssm_block_forward.6} parent=5 // pred_fallthru
      _
  $region6: #{ssm_block_forward.6} parent=0 // loop_footer
    %s20 = sadd.s32 1, %s16
  $region7: #{ssm_block_forward.6} parent=0 // loop_footer_branch
    %15 = sbr.rel target = $region3
  $region8: #{ssm_block_forward.6} parent=0 // loop_exit
    _

</llo_original>
